<compile_context>
chip_gen: v6e
topology: v6e:2x2x1
jax: 0.10.0
libtpu: 0.0.40
codegen_flags: <defaults>
</compile_context>

<pallas_src>
import functools

import jax
import jax.numpy as jnp
from jax import lax
from jax.experimental import pallas as pl
from jax.experimental.pallas import tpu as pltpu


def _sam_kernel(x_ref, ximg_ref, w12_ref, b1_ref, b2_ref, w3_ref, b3_ref,
                out1_ref, img_ref,
                xscr, imgscr, *, H, W, K, P, CF):
    """Fused SAM forward, one batch element per grid step (channel-major).

    Ref shapes:
      x_ref    : (1, CF, H, W)        VMEM
      ximg_ref : (1, 3, H, W)         VMEM
      w12_ref  : (CF*K*K*(CF+3),)     SMEM  fused conv1||conv2 weights [ci,ky,kx,co]
      b1_ref   : (CF,)                SMEM
      b2_ref   : (3,)                 SMEM
      w3_ref   : (3*K*K*CF,)          SMEM  conv3 weights [ci,ky,kx,co]
      b3_ref   : (CF,)                SMEM
      out1_ref : (1, CF, H, W)        VMEM
      img_ref  : (1, 3, H, W)         VMEM
      xscr     : (CF, H+2P, W+2P)     VMEM scratch (zero-halo input for conv1/2)
      imgscr   : (3, H+2P, W+2P)      VMEM scratch (zero-halo input for conv3)
    """
    f32 = jnp.float32
    Hp, Wp = H + 2 * P, W + 2 * P
    CO = CF + 3  # fused conv1+conv2 output channels

    # ---- stage x into the padded scratch; zero ONLY the P-wide halo ring ----
    # (the halo is re-zeroed every step: with "parallel" batch semantics each
    #  TensorCore owns its own scratch, so a one-time init at program_id==0
    #  would be unsafe; the border is only 2 rows + 2 short columns per
    #  channel.  Column strips only cover the interior rows — the full-width
    #  row strips already own the corners.)
    xscr[:, 0:P, :] = jnp.zeros((CF, P, Wp), f32)
    xscr[:, P + H:Hp, :] = jnp.zeros((CF, P, Wp), f32)
    xscr[:, P:P + H, 0:P] = jnp.zeros((CF, H, P), f32)
    xscr[:, P:P + H, P + W:Wp] = jnp.zeros((CF, H, P), f32)
    xscr[:, P:P + H, P:P + W] = x_ref[0]

    imgscr[:, 0:P, :] = jnp.zeros((3, P, Wp), f32)
    imgscr[:, P + H:Hp, :] = jnp.zeros((3, P, Wp), f32)
    imgscr[:, P:P + H, 0:P] = jnp.zeros((3, H, P), f32)
    imgscr[:, P:P + H, P + W:Wp] = jnp.zeros((3, H, P), f32)

    # ---- conv1 + conv2 fused: one pass over the K*K*CF input taps -----------
    # Channel depths are tiny, so a 3..CF-deep MXU contraction would waste
    # >97% of the systolic array; instead each tap is a scalar-broadcast FMA
    # on the VPU over a lane-dense (H, W) plane.  Each patch slice is hoisted
    # and reused for all CF+3 output channels.  Biases (and the x_img residual
    # for the conv2 branch) are folded into the accumulator initialization.
    acc = [jnp.full((H, W), b1_ref[o], f32) for o in range(CF)]
    acc += [ximg_ref[0, j].astype(f32) + b2_ref[j] for j in range(3)]

    for c in range(CF):
        for ky in range(K):
            for kx in range(K):
                patch = xscr[c, ky:ky + H, kx:kx + W]          # (H, W)
                base = ((c * K + ky) * K + kx) * CO
                for o in range(CO):
                    acc[o] = acc[o] + w12_ref[base + o] * patch

    # img planes (conv2 + bias + x_img, already accumulated): store + re-stage
    # into the padded scratch for conv3.
    for j in range(3):
        img_j = acc[CF + j]
        img_ref[0, j] = img_j.astype(img_ref.dtype)
        imgscr[j, P:P + H, P:P + W] = img_j

    # ---- conv3 (3 -> CF) + sigmoid gate + residual ---------------------------
    acc3 = [jnp.full((H, W), b3_ref[o], f32) for o in range(CF)]
    for c in range(3):
        for ky in range(K):
            for kx in range(K):
                patch = imgscr[c, ky:ky + H, kx:kx + W]        # (H, W)
                base = ((c * K + ky) * K + kx) * CF
                for o in range(CF):
                    acc3[o] = acc3[o] + w3_ref[base + o] * patch

    for o in range(CF):
        x2 = jax.nn.sigmoid(acc3[o])                           # EUP slot
        out1_ref[0, o] = (acc[o] * x2 + x_ref[0, o]).astype(out1_ref.dtype)


def sam_forward(x, x_img, params):
    """Fused SAM forward.  Inputs/outputs in NCHW (PyTorch convention).

    No layout transposes and no HBM zero-padding in the wrapper: the kernel
    consumes NCHW directly and builds the conv halo in VMEM.
    """
    w1, b1, w2, b2, w3, b3 = params
    B, CF, H, W = x.shape
    K = w1.shape[0]
    P = K // 2
    Hp, Wp = H + 2 * P, W + 2 * P
    CO = CF + 3

    # conv1 || conv2 fused weights, reordered to [ci, ky, kx, co] and flattened
    # so the kernel reads per-tap scalars from SMEM.
    w12 = jnp.concatenate([w1, w2], axis=3)                      # (K, K, CF, CF+3)
    w12_flat = jnp.transpose(w12, (2, 0, 1, 3)).reshape(-1)      # (CF*K*K*CO,)
    w3_flat = jnp.transpose(w3, (2, 0, 1, 3)).reshape(-1)        # (3*K*K*CF,)

    kernel = functools.partial(_sam_kernel, H=H, W=W, K=K, P=P, CF=CF)
    smem = pl.BlockSpec(memory_space=pltpu.MemorySpace.SMEM)

    out1, img = pl.pallas_call(
        kernel,
        grid=(B,),
        in_specs=[
            pl.BlockSpec((1, CF, H, W), lambda b: (b, 0, 0, 0)),   # x
            pl.BlockSpec((1, 3, H, W), lambda b: (b, 0, 0, 0)),    # x_img
            smem,   # w12_flat
            smem,   # b1
            smem,   # b2
            smem,   # w3_flat
            smem,   # b3
        ],
        out_specs=(
            pl.BlockSpec((1, CF, H, W), lambda b: (b, 0, 0, 0)),   # out1
            pl.BlockSpec((1, 3, H, W), lambda b: (b, 0, 0, 0)),    # img
        ),
        out_shape=(
            jax.ShapeDtypeStruct((B, CF, H, W), jnp.float32),
            jax.ShapeDtypeStruct((B, 3, H, W), jnp.float32),
        ),
        scratch_shapes=[
            pltpu.VMEM((CF, Hp, Wp), jnp.float32),
            pltpu.VMEM((3, Hp, Wp), jnp.float32),
        ],
        compiler_params=pltpu.CompilerParams(
            # batch elements are fully independent -> shard across the two
            # TensorCores on v7x (harmless no-op on single-TC v5e/v6e).
            dimension_semantics=("parallel",),
            vmem_limit_bytes=40 * 1024 * 1024,
        ),
    )(x, x_img, w12_flat, b1, b2, w3_flat, b3)

    return out1, img


# ----------------------- pure-JAX reference (for checking) -----------------------
def _conv_ref(x_nchw, w_hwio, b, pad):
    y = lax.conv_general_dilated(
        x_nchw, w_hwio, window_strides=(1, 1),
        padding=[(pad, pad), (pad, pad)],
        dimension_numbers=('NCHW', 'HWIO', 'NCHW'))
    return y + b.reshape(1, -1, 1, 1)


def sam_reference(x, x_img, params):
    w1, b1, w2, b2, w3, b3 = params
    P = w1.shape[0] // 2
    x1 = _conv_ref(x, w1, b1, P)
    img = _conv_ref(x, w2, b2, P) + x_img
    x2 = jax.nn.sigmoid(_conv_ref(img, w3, b3, P))
    return x1 * x2 + x, img


if __name__ == "__main__":
    B, CF, H, W = 2, 4, 16, 16
    K = 3

    key = jax.random.PRNGKey(0)
    ks = jax.random.split(key, 8)
    x = jax.random.normal(ks[0], (B, CF, H, W), jnp.float32)
    x_img = jax.random.normal(ks[1], (B, 3, H, W), jnp.float32)

    # Deterministic parameter init (HWIO-per-tap layout: (K, K, Cin, Cout)).
    scale = 0.1
    w1 = scale * jax.random.normal(ks[2], (K, K, CF, CF), jnp.float32)
    b1 = scale * jax.random.normal(ks[3], (CF,), jnp.float32)
    w2 = scale * jax.random.normal(ks[4], (K, K, CF, 3), jnp.float32)
    b2 = scale * jax.random.normal(ks[5], (3,), jnp.float32)
    w3 = scale * jax.random.normal(ks[6], (K, K, 3, CF), jnp.float32)
    b3 = scale * jax.random.normal(ks[7], (CF,), jnp.float32)
    params = (w1, b1, w2, b2, w3, b3)

    out1, img = sam_forward(x, x_img, params)
    jax.block_until_ready((out1, img))

    ref1, ref_img = sam_reference(x, x_img, params)
    assert out1.shape == (B, CF, H, W) and img.shape == (B, 3, H, W)
    assert jnp.allclose(out1, ref1, atol=1e-4, rtol=1e-4)
    assert jnp.allclose(img, ref_img, atol=1e-4, rtol=1e-4)

    print("KERNEL_OK")
</pallas_src>

<mosaic_0001>
module attributes {stable_mosaic.version = 11 : i64} {
  func.func @_sam_kernel(%arg0: i32, %arg1: memref<1x4x16x16xf32, #tpu.memory_space<vmem>>, %arg2: memref<1x3x16x16xf32, #tpu.memory_space<vmem>>, %arg3: memref<252xf32, #tpu.memory_space<smem>>, %arg4: memref<4xf32, #tpu.memory_space<smem>>, %arg5: memref<3xf32, #tpu.memory_space<smem>>, %arg6: memref<108xf32, #tpu.memory_space<smem>>, %arg7: memref<4xf32, #tpu.memory_space<smem>>, %arg8: memref<1x4x16x16xf32, #tpu.memory_space<vmem>>, %arg9: memref<1x3x16x16xf32, #tpu.memory_space<vmem>>, %arg10: memref<4x18x18xf32, #tpu.memory_space<vmem>>, %arg11: memref<3x18x18xf32, #tpu.memory_space<vmem>>) attributes {dimension_semantics = [#tpu.dimension_semantics<parallel>], iteration_bounds = array<i64: 2>, scalar_prefetch = 0 : i64, scratch_operands = 2 : i64, tpu.core_type = #tpu.core_type<tc>, window_params = [{transform_indices = @transform_0, window_bounds = array<i64: 1, 4, 16, 16>}, {transform_indices = @transform_1, window_bounds = array<i64: 1, 3, 16, 16>}, {transform_indices = @transform_2, window_bounds = array<i64: 252>}, {transform_indices = @transform_3, window_bounds = array<i64: 4>}, {transform_indices = @transform_4, window_bounds = array<i64: 3>}, {transform_indices = @transform_5, window_bounds = array<i64: 108>}, {transform_indices = @transform_6, window_bounds = array<i64: 4>}, {transform_indices = @transform_7, window_bounds = array<i64: 1, 4, 16, 16>}, {transform_indices = @transform_8, window_bounds = array<i64: 1, 3, 16, 16>}]} {
    %cst = arith.constant 0.000000e+00 : f32
    %0 = vector.broadcast %cst : f32 to vector<4x1x18xf32>
    %c0 = arith.constant 0 : index
    %c0_0 = arith.constant 0 : index
    %c0_1 = arith.constant 0 : index
    %1 = vector.load %arg10[%c0, %c0_0, %c0_1] : memref<4x18x18xf32, #tpu.memory_space<vmem>>, vector<4x1x18xf32>
    tpu.vector_store %arg10[%c0, %c0_0, %c0_1], %0 {strides = array<i32>} : memref<4x18x18xf32, #tpu.memory_space<vmem>>, vector<4x1x18xf32>,
    %cst_2 = arith.constant 0.000000e+00 : f32
    %2 = vector.broadcast %cst_2 : f32 to vector<4x1x18xf32>
    %c0_3 = arith.constant 0 : index
    %c17 = arith.constant 17 : index
    %c0_4 = arith.constant 0 : index
    %3 = vector.load %arg10[%c0_3, %c17, %c0_4] : memref<4x18x18xf32, #tpu.memory_space<vmem>>, vector<4x1x18xf32>
    tpu.vector_store %arg10[%c0_3, %c17, %c0_4], %2 {strides = array<i32>} : memref<4x18x18xf32, #tpu.memory_space<vmem>>, vector<4x1x18xf32>,
    %cst_5 = arith.constant 0.000000e+00 : f32
    %4 = vector.broadcast %cst_5 : f32 to vector<4x16x1xf32>
    %c0_6 = arith.constant 0 : index
    %c1 = arith.constant 1 : index
    %c0_7 = arith.constant 0 : index
    %5 = vector.load %arg10[%c0_6, %c1, %c0_7] : memref<4x18x18xf32, #tpu.memory_space<vmem>>, vector<4x16x1xf32>
    tpu.vector_store %arg10[%c0_6, %c1, %c0_7], %4 {strides = array<i32>} : memref<4x18x18xf32, #tpu.memory_space<vmem>>, vector<4x16x1xf32>,
    %cst_8 = arith.constant 0.000000e+00 : f32
    %6 = vector.broadcast %cst_8 : f32 to vector<4x16x1xf32>
    %c0_9 = arith.constant 0 : index
    %c1_10 = arith.constant 1 : index
    %c17_11 = arith.constant 17 : index
    %7 = vector.load %arg10[%c0_9, %c1_10, %c17_11] : memref<4x18x18xf32, #tpu.memory_space<vmem>>, vector<4x16x1xf32>
    tpu.vector_store %arg10[%c0_9, %c1_10, %c17_11], %6 {strides = array<i32>} : memref<4x18x18xf32, #tpu.memory_space<vmem>>, vector<4x16x1xf32>,
    %c0_12 = arith.constant 0 : index
    %c0_13 = arith.constant 0 : index
    %c0_14 = arith.constant 0 : index
    %c0_15 = arith.constant 0 : index
    %8 = vector.load %arg1[%c0_12, %c0_13, %c0_14, %c0_15] : memref<1x4x16x16xf32, #tpu.memory_space<vmem>>, vector<1x4x16x16xf32>
    %9 = vector.shape_cast %8 : vector<1x4x16x16xf32> to vector<4x16x16xf32>
    %c0_16 = arith.constant 0 : index
    %c1_17 = arith.constant 1 : index
    %c1_18 = arith.constant 1 : index
    %10 = vector.load %arg10[%c0_16, %c1_17, %c1_18] : memref<4x18x18xf32, #tpu.memory_space<vmem>>, vector<4x16x16xf32>
    tpu.vector_store %arg10[%c0_16, %c1_17, %c1_18], %9 {strides = array<i32>} : memref<4x18x18xf32, #tpu.memory_space<vmem>>, vector<4x16x16xf32>,
    %cst_19 = arith.constant 0.000000e+00 : f32
    %11 = vector.broadcast %cst_19 : f32 to vector<3x1x18xf32>
    %c0_20 = arith.constant 0 : index
    %c0_21 = arith.constant 0 : index
    %c0_22 = arith.constant 0 : index
    %12 = vector.load %arg11[%c0_20, %c0_21, %c0_22] : memref<3x18x18xf32, #tpu.memory_space<vmem>>, vector<3x1x18xf32>
    tpu.vector_store %arg11[%c0_20, %c0_21, %c0_22], %11 {strides = array<i32>} : memref<3x18x18xf32, #tpu.memory_space<vmem>>, vector<3x1x18xf32>,
    %cst_23 = arith.constant 0.000000e+00 : f32
    %13 = vector.broadcast %cst_23 : f32 to vector<3x1x18xf32>
    %c0_24 = arith.constant 0 : index
    %c17_25 = arith.constant 17 : index
    %c0_26 = arith.constant 0 : index
    %14 = vector.load %arg11[%c0_24, %c17_25, %c0_26] : memref<3x18x18xf32, #tpu.memory_space<vmem>>, vector<3x1x18xf32>
    tpu.vector_store %arg11[%c0_24, %c17_25, %c0_26], %13 {strides = array<i32>} : memref<3x18x18xf32, #tpu.memory_space<vmem>>, vector<3x1x18xf32>,
    %cst_27 = arith.constant 0.000000e+00 : f32
    %15 = vector.broadcast %cst_27 : f32 to vector<3x16x1xf32>
    %c0_28 = arith.constant 0 : index
    %c1_29 = arith.constant 1 : index
    %c0_30 = arith.constant 0 : index
    %16 = vector.load %arg11[%c0_28, %c1_29, %c0_30] : memref<3x18x18xf32, #tpu.memory_space<vmem>>, vector<3x16x1xf32>
    tpu.vector_store %arg11[%c0_28, %c1_29, %c0_30], %15 {strides = array<i32>} : memref<3x18x18xf32, #tpu.memory_space<vmem>>, vector<3x16x1xf32>,
    %cst_31 = arith.constant 0.000000e+00 : f32
    %17 = vector.broadcast %cst_31 : f32 to vector<3x16x1xf32>
    %c0_32 = arith.constant 0 : index
    %c1_33 = arith.constant 1 : index
    %c17_34 = arith.constant 17 : index
    %18 = vector.load %arg11[%c0_32, %c1_33, %c17_34] : memref<3x18x18xf32, #tpu.memory_space<vmem>>, vector<3x16x1xf32>
    tpu.vector_store %arg11[%c0_32, %c1_33, %c17_34], %17 {strides = array<i32>} : memref<3x18x18xf32, #tpu.memory_space<vmem>>, vector<3x16x1xf32>,
    %c0_35 = arith.constant 0 : index
    %19 = memref.load %arg4[%c0_35] : memref<4xf32, #tpu.memory_space<smem>>
    %20 = vector.broadcast %19 : f32 to vector<16x16xf32>
    %c1_36 = arith.constant 1 : index
    %21 = memref.load %arg4[%c1_36] : memref<4xf32, #tpu.memory_space<smem>>
    %22 = vector.broadcast %21 : f32 to vector<16x16xf32>
    %c2 = arith.constant 2 : index
    %23 = memref.load %arg4[%c2] : memref<4xf32, #tpu.memory_space<smem>>
    %24 = vector.broadcast %23 : f32 to vector<16x16xf32>
    %c3 = arith.constant 3 : index
    %25 = memref.load %arg4[%c3] : memref<4xf32, #tpu.memory_space<smem>>
    %26 = vector.broadcast %25 : f32 to vector<16x16xf32>
    %c0_37 = arith.constant 0 : index
    %c0_38 = arith.constant 0 : index
    %c0_39 = arith.constant 0 : index
    %c0_40 = arith.constant 0 : index
    %27 = vector.load %arg2[%c0_37, %c0_38, %c0_39, %c0_40] : memref<1x3x16x16xf32, #tpu.memory_space<vmem>>, vector<1x1x16x16xf32>
    %28 = vector.shape_cast %27 : vector<1x1x16x16xf32> to vector<16x16xf32>
    %c0_41 = arith.constant 0 : index
    %29 = memref.load %arg5[%c0_41] : memref<3xf32, #tpu.memory_space<smem>>
    %30 = vector.broadcast %29 : f32 to vector<16x16xf32>
    %31 = arith.addf %28, %30 : vector<16x16xf32>
    %c0_42 = arith.constant 0 : index
    %c1_43 = arith.constant 1 : index
    %c0_44 = arith.constant 0 : index
    %c0_45 = arith.constant 0 : index
    %32 = vector.load %arg2[%c0_42, %c1_43, %c0_44, %c0_45] : memref<1x3x16x16xf32, #tpu.memory_space<vmem>>, vector<1x1x16x16xf32>
    %33 = vector.shape_cast %32 : vector<1x1x16x16xf32> to vector<16x16xf32>
    %c1_46 = arith.constant 1 : index
    %34 = memref.load %arg5[%c1_46] : memref<3xf32, #tpu.memory_space<smem>>
    %35 = vector.broadcast %34 : f32 to vector<16x16xf32>
    %36 = arith.addf %33, %35 : vector<16x16xf32>
    %c0_47 = arith.constant 0 : index
    %c2_48 = arith.constant 2 : index
    %c0_49 = arith.constant 0 : index
    %c0_50 = arith.constant 0 : index
    %37 = vector.load %arg2[%c0_47, %c2_48, %c0_49, %c0_50] : memref<1x3x16x16xf32, #tpu.memory_space<vmem>>, vector<1x1x16x16xf32>
    %38 = vector.shape_cast %37 : vector<1x1x16x16xf32> to vector<16x16xf32>
    %c2_51 = arith.constant 2 : index
    %39 = memref.load %arg5[%c2_51] : memref<3xf32, #tpu.memory_space<smem>>
    %40 = vector.broadcast %39 : f32 to vector<16x16xf32>
    %41 = arith.addf %38, %40 : vector<16x16xf32>
    %c0_52 = arith.constant 0 : index
    %c0_53 = arith.constant 0 : index
    %c0_54 = arith.constant 0 : index
    %42 = vector.load %arg10[%c0_52, %c0_53, %c0_54] : memref<4x18x18xf32, #tpu.memory_space<vmem>>, vector<1x16x16xf32>
    %43 = vector.shape_cast %42 : vector<1x16x16xf32> to vector<16x16xf32>
    %c0_55 = arith.constant 0 : index
    %44 = memref.load %arg3[%c0_55] : memref<252xf32, #tpu.memory_space<smem>>
    %45 = vector.broadcast %44 : f32 to vector<16x16xf32>
    %46 = arith.mulf %45, %43 : vector<16x16xf32>
    %47 = arith.addf %20, %46 : vector<16x16xf32>
    %c1_56 = arith.constant 1 : index
    %48 = memref.load %arg3[%c1_56] : memref<252xf32, #tpu.memory_space<smem>>
    %49 = vector.broadcast %48 : f32 to vector<16x16xf32>
    %50 = arith.mulf %49, %43 : vector<16x16xf32>
    %51 = arith.addf %22, %50 : vector<16x16xf32>
    %c2_57 = arith.constant 2 : index
    %52 = memref.load %arg3[%c2_57] : memref<252xf32, #tpu.memory_space<smem>>
    %53 = vector.broadcast %52 : f32 to vector<16x16xf32>
    %54 = arith.mulf %53, %43 : vector<16x16xf32>
    %55 = arith.addf %24, %54 : vector<16x16xf32>
    %c3_58 = arith.constant 3 : index
    %56 = memref.load %arg3[%c3_58] : memref<252xf32, #tpu.memory_space<smem>>
    %57 = vector.broadcast %56 : f32 to vector<16x16xf32>
    %58 = arith.mulf %57, %43 : vector<16x16xf32>
    %59 = arith.addf %26, %58 : vector<16x16xf32>
    %c4 = arith.constant 4 : index
    %60 = memref.load %arg3[%c4] : memref<252xf32, #tpu.memory_space<smem>>
    %61 = vector.broadcast %60 : f32 to vector<16x16xf32>
    %62 = arith.mulf %61, %43 : vector<16x16xf32>
    %63 = arith.addf %31, %62 : vector<16x16xf32>
    %c5 = arith.constant 5 : index
    %64 = memref.load %arg3[%c5] : memref<252xf32, #tpu.memory_space<smem>>
    %65 = vector.broadcast %64 : f32 to vector<16x16xf32>
    %66 = arith.mulf %65, %43 : vector<16x16xf32>
    %67 = arith.addf %36, %66 : vector<16x16xf32>
    %c6 = arith.constant 6 : index
    %68 = memref.load %arg3[%c6] : memref<252xf32, #tpu.memory_space<smem>>
    %69 = vector.broadcast %68 : f32 to vector<16x16xf32>
    %70 = arith.mulf %69, %43 : vector<16x16xf32>
    %71 = arith.addf %41, %70 : vector<16x16xf32>
    %c0_59 = arith.constant 0 : index
    %c0_60 = arith.constant 0 : index
    %c1_61 = arith.constant 1 : index
    %72 = vector.load %arg10[%c0_59, %c0_60, %c1_61] : memref<4x18x18xf32, #tpu.memory_space<vmem>>, vector<1x16x16xf32>
    %73 = vector.shape_cast %72 : vector<1x16x16xf32> to vector<16x16xf32>
    %c7 = arith.constant 7 : index
    %74 = memref.load %arg3[%c7] : memref<252xf32, #tpu.memory_space<smem>>
    %75 = vector.broadcast %74 : f32 to vector<16x16xf32>
    %76 = arith.mulf %75, %73 : vector<16x16xf32>
    %77 = arith.addf %47, %76 : vector<16x16xf32>
    %c8 = arith.constant 8 : index
    %78 = memref.load %arg3[%c8] : memref<252xf32, #tpu.memory_space<smem>>
    %79 = vector.broadcast %78 : f32 to vector<16x16xf32>
    %80 = arith.mulf %79, %73 : vector<16x16xf32>
    %81 = arith.addf %51, %80 : vector<16x16xf32>
    %c9 = arith.constant 9 : index
    %82 = memref.load %arg3[%c9] : memref<252xf32, #tpu.memory_space<smem>>
    %83 = vector.broadcast %82 : f32 to vector<16x16xf32>
    %84 = arith.mulf %83, %73 : vector<16x16xf32>
    %85 = arith.addf %55, %84 : vector<16x16xf32>
    %c10 = arith.constant 10 : index
    %86 = memref.load %arg3[%c10] : memref<252xf32, #tpu.memory_space<smem>>
    %87 = vector.broadcast %86 : f32 to vector<16x16xf32>
    %88 = arith.mulf %87, %73 : vector<16x16xf32>
    %89 = arith.addf %59, %88 : vector<16x16xf32>
    %c11 = arith.constant 11 : index
    %90 = memref.load %arg3[%c11] : memref<252xf32, #tpu.memory_space<smem>>
    %91 = vector.broadcast %90 : f32 to vector<16x16xf32>
    %92 = arith.mulf %91, %73 : vector<16x16xf32>
    %93 = arith.addf %63, %92 : vector<16x16xf32>
    %c12 = arith.constant 12 : index
    %94 = memref.load %arg3[%c12] : memref<252xf32, #tpu.memory_space<smem>>
    %95 = vector.broadcast %94 : f32 to vector<16x16xf32>
    %96 = arith.mulf %95, %73 : vector<16x16xf32>
    %97 = arith.addf %67, %96 : vector<16x16xf32>
    %c13 = arith.constant 13 : index
    %98 = memref.load %arg3[%c13] : memref<252xf32, #tpu.memory_space<smem>>
    %99 = vector.broadcast %98 : f32 to vector<16x16xf32>
    %100 = arith.mulf %99, %73 : vector<16x16xf32>
    %101 = arith.addf %71, %100 : vector<16x16xf32>
    %c0_62 = arith.constant 0 : index
    %c0_63 = arith.constant 0 : index
    %c2_64 = arith.constant 2 : index
    %102 = vector.load %arg10[%c0_62, %c0_63, %c2_64] : memref<4x18x18xf32, #tpu.memory_space<vmem>>, vector<1x16x16xf32>
    %103 = vector.shape_cast %102 : vector<1x16x16xf32> to vector<16x16xf32>
    %c14 = arith.constant 14 : index
    %104 = memref.load %arg3[%c14] : memref<252xf32, #tpu.memory_space<smem>>
    %105 = vector.broadcast %104 : f32 to vector<16x16xf32>
    %106 = arith.mulf %105, %103 : vector<16x16xf32>
    %107 = arith.addf %77, %106 : vector<16x16xf32>
    %c15 = arith.constant 15 : index
    %108 = memref.load %arg3[%c15] : memref<252xf32, #tpu.memory_space<smem>>
    %109 = vector.broadcast %108 : f32 to vector<16x16xf32>
    %110 = arith.mulf %109, %103 : vector<16x16xf32>
    %111 = arith.addf %81, %110 : vector<16x16xf32>
    %c16 = arith.constant 16 : index
    %112 = memref.load %arg3[%c16] : memref<252xf32, #tpu.memory_space<smem>>
    %113 = vector.broadcast %112 : f32 to vector<16x16xf32>
    %114 = arith.mulf %113, %103 : vector<16x16xf32>
    %115 = arith.addf %85, %114 : vector<16x16xf32>
    %c17_65 = arith.constant 17 : index
    %116 = memref.load %arg3[%c17_65] : memref<252xf32, #tpu.memory_space<smem>>
    %117 = vector.broadcast %116 : f32 to vector<16x16xf32>
    %118 = arith.mulf %117, %103 : vector<16x16xf32>
    %119 = arith.addf %89, %118 : vector<16x16xf32>
    %c18 = arith.constant 18 : index
    %120 = memref.load %arg3[%c18] : memref<252xf32, #tpu.memory_space<smem>>
    %121 = vector.broadcast %120 : f32 to vector<16x16xf32>
    %122 = arith.mulf %121, %103 : vector<16x16xf32>
    %123 = arith.addf %93, %122 : vector<16x16xf32>
    %c19 = arith.constant 19 : index
    %124 = memref.load %arg3[%c19] : memref<252xf32, #tpu.memory_space<smem>>
    %125 = vector.broadcast %124 : f32 to vector<16x16xf32>
    %126 = arith.mulf %125, %103 : vector<16x16xf32>
    %127 = arith.addf %97, %126 : vector<16x16xf32>
    %c20 = arith.constant 20 : index
    %128 = memref.load %arg3[%c20] : memref<252xf32, #tpu.memory_space<smem>>
    %129 = vector.broadcast %128 : f32 to vector<16x16xf32>
    %130 = arith.mulf %129, %103 : vector<16x16xf32>
    %131 = arith.addf %101, %130 : vector<16x16xf32>
    %c0_66 = arith.constant 0 : index
    %c1_67 = arith.constant 1 : index
    %c0_68 = arith.constant 0 : index
    %132 = vector.load %arg10[%c0_66, %c1_67, %c0_68] : memref<4x18x18xf32, #tpu.memory_space<vmem>>, vector<1x16x16xf32>
    %133 = vector.shape_cast %132 : vector<1x16x16xf32> to vector<16x16xf32>
    %c21 = arith.constant 21 : index
    %134 = memref.load %arg3[%c21] : memref<252xf32, #tpu.memory_space<smem>>
    %135 = vector.broadcast %134 : f32 to vector<16x16xf32>
    %136 = arith.mulf %135, %133 : vector<16x16xf32>
    %137 = arith.addf %107, %136 : vector<16x16xf32>
    %c22 = arith.constant 22 : index
    %138 = memref.load %arg3[%c22] : memref<252xf32, #tpu.memory_space<smem>>
    %139 = vector.broadcast %138 : f32 to vector<16x16xf32>
    %140 = arith.mulf %139, %133 : vector<16x16xf32>
    %141 = arith.addf %111, %140 : vector<16x16xf32>
    %c23 = arith.constant 23 : index
    %142 = memref.load %arg3[%c23] : memref<252xf32, #tpu.memory_space<smem>>
    %143 = vector.broadcast %142 : f32 to vector<16x16xf32>
    %144 = arith.mulf %143, %133 : vector<16x16xf32>
    %145 = arith.addf %115, %144 : vector<16x16xf32>
    %c24 = arith.constant 24 : index
    %146 = memref.load %arg3[%c24] : memref<252xf32, #tpu.memory_space<smem>>
    %147 = vector.broadcast %146 : f32 to vector<16x16xf32>
    %148 = arith.mulf %147, %133 : vector<16x16xf32>
    %149 = arith.addf %119, %148 : vector<16x16xf32>
    %c25 = arith.constant 25 : index
    %150 = memref.load %arg3[%c25] : memref<252xf32, #tpu.memory_space<smem>>
    %151 = vector.broadcast %150 : f32 to vector<16x16xf32>
    %152 = arith.mulf %151, %133 : vector<16x16xf32>
    %153 = arith.addf %123, %152 : vector<16x16xf32>
    %c26 = arith.constant 26 : index
    %154 = memref.load %arg3[%c26] : memref<252xf32, #tpu.memory_space<smem>>
    %155 = vector.broadcast %154 : f32 to vector<16x16xf32>
    %156 = arith.mulf %155, %133 : vector<16x16xf32>
    %157 = arith.addf %127, %156 : vector<16x16xf32>
    %c27 = arith.constant 27 : index
    %158 = memref.load %arg3[%c27] : memref<252xf32, #tpu.memory_space<smem>>
    %159 = vector.broadcast %158 : f32 to vector<16x16xf32>
    %160 = arith.mulf %159, %133 : vector<16x16xf32>
    %161 = arith.addf %131, %160 : vector<16x16xf32>
    %c0_69 = arith.constant 0 : index
    %c1_70 = arith.constant 1 : index
    %c1_71 = arith.constant 1 : index
    %162 = vector.load %arg10[%c0_69, %c1_70, %c1_71] : memref<4x18x18xf32, #tpu.memory_space<vmem>>, vector<1x16x16xf32>
    %163 = vector.shape_cast %162 : vector<1x16x16xf32> to vector<16x16xf32>
    %c28 = arith.constant 28 : index
    %164 = memref.load %arg3[%c28] : memref<252xf32, #tpu.memory_space<smem>>
    %165 = vector.broadcast %164 : f32 to vector<16x16xf32>
    %166 = arith.mulf %165, %163 : vector<16x16xf32>
    %167 = arith.addf %137, %166 : vector<16x16xf32>
    %c29 = arith.constant 29 : index
    %168 = memref.load %arg3[%c29] : memref<252xf32, #tpu.memory_space<smem>>
    %169 = vector.broadcast %168 : f32 to vector<16x16xf32>
    %170 = arith.mulf %169, %163 : vector<16x16xf32>
    %171 = arith.addf %141, %170 : vector<16x16xf32>
    %c30 = arith.constant 30 : index
    %172 = memref.load %arg3[%c30] : memref<252xf32, #tpu.memory_space<smem>>
    %173 = vector.broadcast %172 : f32 to vector<16x16xf32>
    %174 = arith.mulf %173, %163 : vector<16x16xf32>
    %175 = arith.addf %145, %174 : vector<16x16xf32>
    %c31 = arith.constant 31 : index
    %176 = memref.load %arg3[%c31] : memref<252xf32, #tpu.memory_space<smem>>
    %177 = vector.broadcast %176 : f32 to vector<16x16xf32>
    %178 = arith.mulf %177, %163 : vector<16x16xf32>
    %179 = arith.addf %149, %178 : vector<16x16xf32>
    %c32 = arith.constant 32 : index
    %180 = memref.load %arg3[%c32] : memref<252xf32, #tpu.memory_space<smem>>
    %181 = vector.broadcast %180 : f32 to vector<16x16xf32>
    %182 = arith.mulf %181, %163 : vector<16x16xf32>
    %183 = arith.addf %153, %182 : vector<16x16xf32>
    %c33 = arith.constant 33 : index
    %184 = memref.load %arg3[%c33] : memref<252xf32, #tpu.memory_space<smem>>
    %185 = vector.broadcast %184 : f32 to vector<16x16xf32>
    %186 = arith.mulf %185, %163 : vector<16x16xf32>
    %187 = arith.addf %157, %186 : vector<16x16xf32>
    %c34 = arith.constant 34 : index
    %188 = memref.load %arg3[%c34] : memref<252xf32, #tpu.memory_space<smem>>
    %189 = vector.broadcast %188 : f32 to vector<16x16xf32>
    %190 = arith.mulf %189, %163 : vector<16x16xf32>
    %191 = arith.addf %161, %190 : vector<16x16xf32>
    %c0_72 = arith.constant 0 : index
    %c1_73 = arith.constant 1 : index
    %c2_74 = arith.constant 2 : index
    %192 = vector.load %arg10[%c0_72, %c1_73, %c2_74] : memref<4x18x18xf32, #tpu.memory_space<vmem>>, vector<1x16x16xf32>
    %193 = vector.shape_cast %192 : vector<1x16x16xf32> to vector<16x16xf32>
    %c35 = arith.constant 35 : index
    %194 = memref.load %arg3[%c35] : memref<252xf32, #tpu.memory_space<smem>>
    %195 = vector.broadcast %194 : f32 to vector<16x16xf32>
    %196 = arith.mulf %195, %193 : vector<16x16xf32>
    %197 = arith.addf %167, %196 : vector<16x16xf32>
    %c36 = arith.constant 36 : index
    %198 = memref.load %arg3[%c36] : memref<252xf32, #tpu.memory_space<smem>>
    %199 = vector.broadcast %198 : f32 to vector<16x16xf32>
    %200 = arith.mulf %199, %193 : vector<16x16xf32>
    %201 = arith.addf %171, %200 : vector<16x16xf32>
    %c37 = arith.constant 37 : index
    %202 = memref.load %arg3[%c37] : memref<252xf32, #tpu.memory_space<smem>>
    %203 = vector.broadcast %202 : f32 to vector<16x16xf32>
    %204 = arith.mulf %203, %193 : vector<16x16xf32>
    %205 = arith.addf %175, %204 : vector<16x16xf32>
    %c38 = arith.constant 38 : index
    %206 = memref.load %arg3[%c38] : memref<252xf32, #tpu.memory_space<smem>>
    %207 = vector.broadcast %206 : f32 to vector<16x16xf32>
    %208 = arith.mulf %207, %193 : vector<16x16xf32>
    %209 = arith.addf %179, %208 : vector<16x16xf32>
    %c39 = arith.constant 39 : index
    %210 = memref.load %arg3[%c39] : memref<252xf32, #tpu.memory_space<smem>>
    %211 = vector.broadcast %210 : f32 to vector<16x16xf32>
    %212 = arith.mulf %211, %193 : vector<16x16xf32>
    %213 = arith.addf %183, %212 : vector<16x16xf32>
    %c40 = arith.constant 40 : index
    %214 = memref.load %arg3[%c40] : memref<252xf32, #tpu.memory_space<smem>>
    %215 = vector.broadcast %214 : f32 to vector<16x16xf32>
    %216 = arith.mulf %215, %193 : vector<16x16xf32>
    %217 = arith.addf %187, %216 : vector<16x16xf32>
    %c41 = arith.constant 41 : index
    %218 = memref.load %arg3[%c41] : memref<252xf32, #tpu.memory_space<smem>>
    %219 = vector.broadcast %218 : f32 to vector<16x16xf32>
    %220 = arith.mulf %219, %193 : vector<16x16xf32>
    %221 = arith.addf %191, %220 : vector<16x16xf32>
    %c0_75 = arith.constant 0 : index
    %c2_76 = arith.constant 2 : index
    %c0_77 = arith.constant 0 : index
    %222 = vector.load %arg10[%c0_75, %c2_76, %c0_77] : memref<4x18x18xf32, #tpu.memory_space<vmem>>, vector<1x16x16xf32>
    %223 = vector.shape_cast %222 : vector<1x16x16xf32> to vector<16x16xf32>
    %c42 = arith.constant 42 : index
    %224 = memref.load %arg3[%c42] : memref<252xf32, #tpu.memory_space<smem>>
    %225 = vector.broadcast %224 : f32 to vector<16x16xf32>
    %226 = arith.mulf %225, %223 : vector<16x16xf32>
    %227 = arith.addf %197, %226 : vector<16x16xf32>
    %c43 = arith.constant 43 : index
    %228 = memref.load %arg3[%c43] : memref<252xf32, #tpu.memory_space<smem>>
    %229 = vector.broadcast %228 : f32 to vector<16x16xf32>
    %230 = arith.mulf %229, %223 : vector<16x16xf32>
    %231 = arith.addf %201, %230 : vector<16x16xf32>
    %c44 = arith.constant 44 : index
    %232 = memref.load %arg3[%c44] : memref<252xf32, #tpu.memory_space<smem>>
    %233 = vector.broadcast %232 : f32 to vector<16x16xf32>
    %234 = arith.mulf %233, %223 : vector<16x16xf32>
    %235 = arith.addf %205, %234 : vector<16x16xf32>
    %c45 = arith.constant 45 : index
    %236 = memref.load %arg3[%c45] : memref<252xf32, #tpu.memory_space<smem>>
    %237 = vector.broadcast %236 : f32 to vector<16x16xf32>
    %238 = arith.mulf %237, %223 : vector<16x16xf32>
    %239 = arith.addf %209, %238 : vector<16x16xf32>
    %c46 = arith.constant 46 : index
    %240 = memref.load %arg3[%c46] : memref<252xf32, #tpu.memory_space<smem>>
    %241 = vector.broadcast %240 : f32 to vector<16x16xf32>
    %242 = arith.mulf %241, %223 : vector<16x16xf32>
    %243 = arith.addf %213, %242 : vector<16x16xf32>
    %c47 = arith.constant 47 : index
    %244 = memref.load %arg3[%c47] : memref<252xf32, #tpu.memory_space<smem>>
    %245 = vector.broadcast %244 : f32 to vector<16x16xf32>
    %246 = arith.mulf %245, %223 : vector<16x16xf32>
    %247 = arith.addf %217, %246 : vector<16x16xf32>
    %c48 = arith.constant 48 : index
    %248 = memref.load %arg3[%c48] : memref<252xf32, #tpu.memory_space<smem>>
    %249 = vector.broadcast %248 : f32 to vector<16x16xf32>
    %250 = arith.mulf %249, %223 : vector<16x16xf32>
    %251 = arith.addf %221, %250 : vector<16x16xf32>
    %c0_78 = arith.constant 0 : index
    %c2_79 = arith.constant 2 : index
    %c1_80 = arith.constant 1 : index
    %252 = vector.load %arg10[%c0_78, %c2_79, %c1_80] : memref<4x18x18xf32, #tpu.memory_space<vmem>>, vector<1x16x16xf32>
    %253 = vector.shape_cast %252 : vector<1x16x16xf32> to vector<16x16xf32>
    %c49 = arith.constant 49 : index
    %254 = memref.load %arg3[%c49] : memref<252xf32, #tpu.memory_space<smem>>
    %255 = vector.broadcast %254 : f32 to vector<16x16xf32>
    %256 = arith.mulf %255, %253 : vector<16x16xf32>
    %257 = arith.addf %227, %256 : vector<16x16xf32>
    %c50 = arith.constant 50 : index
    %258 = memref.load %arg3[%c50] : memref<252xf32, #tpu.memory_space<smem>>
    %259 = vector.broadcast %258 : f32 to vector<16x16xf32>
    %260 = arith.mulf %259, %253 : vector<16x16xf32>
    %261 = arith.addf %231, %260 : vector<16x16xf32>
    %c51 = arith.constant 51 : index
    %262 = memref.load %arg3[%c51] : memref<252xf32, #tpu.memory_space<smem>>
    %263 = vector.broadcast %262 : f32 to vector<16x16xf32>
    %264 = arith.mulf %263, %253 : vector<16x16xf32>
    %265 = arith.addf %235, %264 : vector<16x16xf32>
    %c52 = arith.constant 52 : index
    %266 = memref.load %arg3[%c52] : memref<252xf32, #tpu.memory_space<smem>>
    %267 = vector.broadcast %266 : f32 to vector<16x16xf32>
    %268 = arith.mulf %267, %253 : vector<16x16xf32>
    %269 = arith.addf %239, %268 : vector<16x16xf32>
    %c53 = arith.constant 53 : index
    %270 = memref.load %arg3[%c53] : memref<252xf32, #tpu.memory_space<smem>>
    %271 = vector.broadcast %270 : f32 to vector<16x16xf32>
    %272 = arith.mulf %271, %253 : vector<16x16xf32>
    %273 = arith.addf %243, %272 : vector<16x16xf32>
    %c54 = arith.constant 54 : index
    %274 = memref.load %arg3[%c54] : memref<252xf32, #tpu.memory_space<smem>>
    %275 = vector.broadcast %274 : f32 to vector<16x16xf32>
    %276 = arith.mulf %275, %253 : vector<16x16xf32>
    %277 = arith.addf %247, %276 : vector<16x16xf32>
    %c55 = arith.constant 55 : index
    %278 = memref.load %arg3[%c55] : memref<252xf32, #tpu.memory_space<smem>>
    %279 = vector.broadcast %278 : f32 to vector<16x16xf32>
    %280 = arith.mulf %279, %253 : vector<16x16xf32>
    %281 = arith.addf %251, %280 : vector<16x16xf32>
    %c0_81 = arith.constant 0 : index
    %c2_82 = arith.constant 2 : index
    %c2_83 = arith.constant 2 : index
    %282 = vector.load %arg10[%c0_81, %c2_82, %c2_83] : memref<4x18x18xf32, #tpu.memory_space<vmem>>, vector<1x16x16xf32>
    %283 = vector.shape_cast %282 : vector<1x16x16xf32> to vector<16x16xf32>
    %c56 = arith.constant 56 : index
    %284 = memref.load %arg3[%c56] : memref<252xf32, #tpu.memory_space<smem>>
    %285 = vector.broadcast %284 : f32 to vector<16x16xf32>
    %286 = arith.mulf %285, %283 : vector<16x16xf32>
    %287 = arith.addf %257, %286 : vector<16x16xf32>
    %c57 = arith.constant 57 : index
    %288 = memref.load %arg3[%c57] : memref<252xf32, #tpu.memory_space<smem>>
    %289 = vector.broadcast %288 : f32 to vector<16x16xf32>
    %290 = arith.mulf %289, %283 : vector<16x16xf32>
    %291 = arith.addf %261, %290 : vector<16x16xf32>
    %c58 = arith.constant 58 : index
    %292 = memref.load %arg3[%c58] : memref<252xf32, #tpu.memory_space<smem>>
    %293 = vector.broadcast %292 : f32 to vector<16x16xf32>
    %294 = arith.mulf %293, %283 : vector<16x16xf32>
    %295 = arith.addf %265, %294 : vector<16x16xf32>
    %c59 = arith.constant 59 : index
    %296 = memref.load %arg3[%c59] : memref<252xf32, #tpu.memory_space<smem>>
    %297 = vector.broadcast %296 : f32 to vector<16x16xf32>
    %298 = arith.mulf %297, %283 : vector<16x16xf32>
    %299 = arith.addf %269, %298 : vector<16x16xf32>
    %c60 = arith.constant 60 : index
    %300 = memref.load %arg3[%c60] : memref<252xf32, #tpu.memory_space<smem>>
    %301 = vector.broadcast %300 : f32 to vector<16x16xf32>
    %302 = arith.mulf %301, %283 : vector<16x16xf32>
    %303 = arith.addf %273, %302 : vector<16x16xf32>
    %c61 = arith.constant 61 : index
    %304 = memref.load %arg3[%c61] : memref<252xf32, #tpu.memory_space<smem>>
    %305 = vector.broadcast %304 : f32 to vector<16x16xf32>
    %306 = arith.mulf %305, %283 : vector<16x16xf32>
    %307 = arith.addf %277, %306 : vector<16x16xf32>
    %c62 = arith.constant 62 : index
    %308 = memref.load %arg3[%c62] : memref<252xf32, #tpu.memory_space<smem>>
    %309 = vector.broadcast %308 : f32 to vector<16x16xf32>
    %310 = arith.mulf %309, %283 : vector<16x16xf32>
    %311 = arith.addf %281, %310 : vector<16x16xf32>
    %c1_84 = arith.constant 1 : index
    %c0_85 = arith.constant 0 : index
    %c0_86 = arith.constant 0 : index
    %312 = vector.load %arg10[%c1_84, %c0_85, %c0_86] : memref<4x18x18xf32, #tpu.memory_space<vmem>>, vector<1x16x16xf32>
    %313 = vector.shape_cast %312 : vector<1x16x16xf32> to vector<16x16xf32>
    %c63 = arith.constant 63 : index
    %314 = memref.load %arg3[%c63] : memref<252xf32, #tpu.memory_space<smem>>
    %315 = vector.broadcast %314 : f32 to vector<16x16xf32>
    %316 = arith.mulf %315, %313 : vector<16x16xf32>
    %317 = arith.addf %287, %316 : vector<16x16xf32>
    %c64 = arith.constant 64 : index
    %318 = memref.load %arg3[%c64] : memref<252xf32, #tpu.memory_space<smem>>
    %319 = vector.broadcast %318 : f32 to vector<16x16xf32>
    %320 = arith.mulf %319, %313 : vector<16x16xf32>
    %321 = arith.addf %291, %320 : vector<16x16xf32>
    %c65 = arith.constant 65 : index
    %322 = memref.load %arg3[%c65] : memref<252xf32, #tpu.memory_space<smem>>
    %323 = vector.broadcast %322 : f32 to vector<16x16xf32>
    %324 = arith.mulf %323, %313 : vector<16x16xf32>
    %325 = arith.addf %295, %324 : vector<16x16xf32>
    %c66 = arith.constant 66 : index
    %326 = memref.load %arg3[%c66] : memref<252xf32, #tpu.memory_space<smem>>
    %327 = vector.broadcast %326 : f32 to vector<16x16xf32>
    %328 = arith.mulf %327, %313 : vector<16x16xf32>
    %329 = arith.addf %299, %328 : vector<16x16xf32>
    %c67 = arith.constant 67 : index
    %330 = memref.load %arg3[%c67] : memref<252xf32, #tpu.memory_space<smem>>
    %331 = vector.broadcast %330 : f32 to vector<16x16xf32>
    %332 = arith.mulf %331, %313 : vector<16x16xf32>
    %333 = arith.addf %303, %332 : vector<16x16xf32>
    %c68 = arith.constant 68 : index
    %334 = memref.load %arg3[%c68] : memref<252xf32, #tpu.memory_space<smem>>
    %335 = vector.broadcast %334 : f32 to vector<16x16xf32>
    %336 = arith.mulf %335, %313 : vector<16x16xf32>
    %337 = arith.addf %307, %336 : vector<16x16xf32>
    %c69 = arith.constant 69 : index
    %338 = memref.load %arg3[%c69] : memref<252xf32, #tpu.memory_space<smem>>
    %339 = vector.broadcast %338 : f32 to vector<16x16xf32>
    %340 = arith.mulf %339, %313 : vector<16x16xf32>
    %341 = arith.addf %311, %340 : vector<16x16xf32>
    %c1_87 = arith.constant 1 : index
    %c0_88 = arith.constant 0 : index
    %c1_89 = arith.constant 1 : index
    %342 = vector.load %arg10[%c1_87, %c0_88, %c1_89] : memref<4x18x18xf32, #tpu.memory_space<vmem>>, vector<1x16x16xf32>
    %343 = vector.shape_cast %342 : vector<1x16x16xf32> to vector<16x16xf32>
    %c70 = arith.constant 70 : index
    %344 = memref.load %arg3[%c70] : memref<252xf32, #tpu.memory_space<smem>>
    %345 = vector.broadcast %344 : f32 to vector<16x16xf32>
    %346 = arith.mulf %345, %343 : vector<16x16xf32>
    %347 = arith.addf %317, %346 : vector<16x16xf32>
    %c71 = arith.constant 71 : index
    %348 = memref.load %arg3[%c71] : memref<252xf32, #tpu.memory_space<smem>>
    %349 = vector.broadcast %348 : f32 to vector<16x16xf32>
    %350 = arith.mulf %349, %343 : vector<16x16xf32>
    %351 = arith.addf %321, %350 : vector<16x16xf32>
    %c72 = arith.constant 72 : index
    %352 = memref.load %arg3[%c72] : memref<252xf32, #tpu.memory_space<smem>>
    %353 = vector.broadcast %352 : f32 to vector<16x16xf32>
    %354 = arith.mulf %353, %343 : vector<16x16xf32>
    %355 = arith.addf %325, %354 : vector<16x16xf32>
    %c73 = arith.constant 73 : index
    %356 = memref.load %arg3[%c73] : memref<252xf32, #tpu.memory_space<smem>>
    %357 = vector.broadcast %356 : f32 to vector<16x16xf32>
    %358 = arith.mulf %357, %343 : vector<16x16xf32>
    %359 = arith.addf %329, %358 : vector<16x16xf32>
    %c74 = arith.constant 74 : index
    %360 = memref.load %arg3[%c74] : memref<252xf32, #tpu.memory_space<smem>>
    %361 = vector.broadcast %360 : f32 to vector<16x16xf32>
    %362 = arith.mulf %361, %343 : vector<16x16xf32>
    %363 = arith.addf %333, %362 : vector<16x16xf32>
    %c75 = arith.constant 75 : index
    %364 = memref.load %arg3[%c75] : memref<252xf32, #tpu.memory_space<smem>>
    %365 = vector.broadcast %364 : f32 to vector<16x16xf32>
    %366 = arith.mulf %365, %343 : vector<16x16xf32>
    %367 = arith.addf %337, %366 : vector<16x16xf32>
    %c76 = arith.constant 76 : index
    %368 = memref.load %arg3[%c76] : memref<252xf32, #tpu.memory_space<smem>>
    %369 = vector.broadcast %368 : f32 to vector<16x16xf32>
    %370 = arith.mulf %369, %343 : vector<16x16xf32>
    %371 = arith.addf %341, %370 : vector<16x16xf32>
    %c1_90 = arith.constant 1 : index
    %c0_91 = arith.constant 0 : index
    %c2_92 = arith.constant 2 : index
    %372 = vector.load %arg10[%c1_90, %c0_91, %c2_92] : memref<4x18x18xf32, #tpu.memory_space<vmem>>, vector<1x16x16xf32>
    %373 = vector.shape_cast %372 : vector<1x16x16xf32> to vector<16x16xf32>
    %c77 = arith.constant 77 : index
    %374 = memref.load %arg3[%c77] : memref<252xf32, #tpu.memory_space<smem>>
    %375 = vector.broadcast %374 : f32 to vector<16x16xf32>
    %376 = arith.mulf %375, %373 : vector<16x16xf32>
    %377 = arith.addf %347, %376 : vector<16x16xf32>
    %c78 = arith.constant 78 : index
    %378 = memref.load %arg3[%c78] : memref<252xf32, #tpu.memory_space<smem>>
    %379 = vector.broadcast %378 : f32 to vector<16x16xf32>
    %380 = arith.mulf %379, %373 : vector<16x16xf32>
    %381 = arith.addf %351, %380 : vector<16x16xf32>
    %c79 = arith.constant 79 : index
    %382 = memref.load %arg3[%c79] : memref<252xf32, #tpu.memory_space<smem>>
    %383 = vector.broadcast %382 : f32 to vector<16x16xf32>
    %384 = arith.mulf %383, %373 : vector<16x16xf32>
    %385 = arith.addf %355, %384 : vector<16x16xf32>
    %c80 = arith.constant 80 : index
    %386 = memref.load %arg3[%c80] : memref<252xf32, #tpu.memory_space<smem>>
    %387 = vector.broadcast %386 : f32 to vector<16x16xf32>
    %388 = arith.mulf %387, %373 : vector<16x16xf32>
    %389 = arith.addf %359, %388 : vector<16x16xf32>
    %c81 = arith.constant 81 : index
    %390 = memref.load %arg3[%c81] : memref<252xf32, #tpu.memory_space<smem>>
    %391 = vector.broadcast %390 : f32 to vector<16x16xf32>
    %392 = arith.mulf %391, %373 : vector<16x16xf32>
    %393 = arith.addf %363, %392 : vector<16x16xf32>
    %c82 = arith.constant 82 : index
    %394 = memref.load %arg3[%c82] : memref<252xf32, #tpu.memory_space<smem>>
    %395 = vector.broadcast %394 : f32 to vector<16x16xf32>
    %396 = arith.mulf %395, %373 : vector<16x16xf32>
    %397 = arith.addf %367, %396 : vector<16x16xf32>
    %c83 = arith.constant 83 : index
    %398 = memref.load %arg3[%c83] : memref<252xf32, #tpu.memory_space<smem>>
    %399 = vector.broadcast %398 : f32 to vector<16x16xf32>
    %400 = arith.mulf %399, %373 : vector<16x16xf32>
    %401 = arith.addf %371, %400 : vector<16x16xf32>
    %c1_93 = arith.constant 1 : index
    %c1_94 = arith.constant 1 : index
    %c0_95 = arith.constant 0 : index
    %402 = vector.load %arg10[%c1_93, %c1_94, %c0_95] : memref<4x18x18xf32, #tpu.memory_space<vmem>>, vector<1x16x16xf32>
    %403 = vector.shape_cast %402 : vector<1x16x16xf32> to vector<16x16xf32>
    %c84 = arith.constant 84 : index
    %404 = memref.load %arg3[%c84] : memref<252xf32, #tpu.memory_space<smem>>
    %405 = vector.broadcast %404 : f32 to vector<16x16xf32>
    %406 = arith.mulf %405, %403 : vector<16x16xf32>
    %407 = arith.addf %377, %406 : vector<16x16xf32>
    %c85 = arith.constant 85 : index
    %408 = memref.load %arg3[%c85] : memref<252xf32, #tpu.memory_space<smem>>
    %409 = vector.broadcast %408 : f32 to vector<16x16xf32>
    %410 = arith.mulf %409, %403 : vector<16x16xf32>
    %411 = arith.addf %381, %410 : vector<16x16xf32>
    %c86 = arith.constant 86 : index
    %412 = memref.load %arg3[%c86] : memref<252xf32, #tpu.memory_space<smem>>
    %413 = vector.broadcast %412 : f32 to vector<16x16xf32>
    %414 = arith.mulf %413, %403 : vector<16x16xf32>
    %415 = arith.addf %385, %414 : vector<16x16xf32>
    %c87 = arith.constant 87 : index
    %416 = memref.load %arg3[%c87] : memref<252xf32, #tpu.memory_space<smem>>
    %417 = vector.broadcast %416 : f32 to vector<16x16xf32>
    %418 = arith.mulf %417, %403 : vector<16x16xf32>
    %419 = arith.addf %389, %418 : vector<16x16xf32>
    %c88 = arith.constant 88 : index
    %420 = memref.load %arg3[%c88] : memref<252xf32, #tpu.memory_space<smem>>
    %421 = vector.broadcast %420 : f32 to vector<16x16xf32>
    %422 = arith.mulf %421, %403 : vector<16x16xf32>
    %423 = arith.addf %393, %422 : vector<16x16xf32>
    %c89 = arith.constant 89 : index
    %424 = memref.load %arg3[%c89] : memref<252xf32, #tpu.memory_space<smem>>
    %425 = vector.broadcast %424 : f32 to vector<16x16xf32>
    %426 = arith.mulf %425, %403 : vector<16x16xf32>
    %427 = arith.addf %397, %426 : vector<16x16xf32>
    %c90 = arith.constant 90 : index
    %428 = memref.load %arg3[%c90] : memref<252xf32, #tpu.memory_space<smem>>
    %429 = vector.broadcast %428 : f32 to vector<16x16xf32>
    %430 = arith.mulf %429, %403 : vector<16x16xf32>
    %431 = arith.addf %401, %430 : vector<16x16xf32>
    %c1_96 = arith.constant 1 : index
    %c1_97 = arith.constant 1 : index
    %c1_98 = arith.constant 1 : index
    %432 = vector.load %arg10[%c1_96, %c1_97, %c1_98] : memref<4x18x18xf32, #tpu.memory_space<vmem>>, vector<1x16x16xf32>
    %433 = vector.shape_cast %432 : vector<1x16x16xf32> to vector<16x16xf32>
    %c91 = arith.constant 91 : index
    %434 = memref.load %arg3[%c91] : memref<252xf32, #tpu.memory_space<smem>>
    %435 = vector.broadcast %434 : f32 to vector<16x16xf32>
    %436 = arith.mulf %435, %433 : vector<16x16xf32>
    %437 = arith.addf %407, %436 : vector<16x16xf32>
    %c92 = arith.constant 92 : index
    %438 = memref.load %arg3[%c92] : memref<252xf32, #tpu.memory_space<smem>>
    %439 = vector.broadcast %438 : f32 to vector<16x16xf32>
    %440 = arith.mulf %439, %433 : vector<16x16xf32>
    %441 = arith.addf %411, %440 : vector<16x16xf32>
    %c93 = arith.constant 93 : index
    %442 = memref.load %arg3[%c93] : memref<252xf32, #tpu.memory_space<smem>>
    %443 = vector.broadcast %442 : f32 to vector<16x16xf32>
    %444 = arith.mulf %443, %433 : vector<16x16xf32>
    %445 = arith.addf %415, %444 : vector<16x16xf32>
    %c94 = arith.constant 94 : index
    %446 = memref.load %arg3[%c94] : memref<252xf32, #tpu.memory_space<smem>>
    %447 = vector.broadcast %446 : f32 to vector<16x16xf32>
    %448 = arith.mulf %447, %433 : vector<16x16xf32>
    %449 = arith.addf %419, %448 : vector<16x16xf32>
    %c95 = arith.constant 95 : index
    %450 = memref.load %arg3[%c95] : memref<252xf32, #tpu.memory_space<smem>>
    %451 = vector.broadcast %450 : f32 to vector<16x16xf32>
    %452 = arith.mulf %451, %433 : vector<16x16xf32>
    %453 = arith.addf %423, %452 : vector<16x16xf32>
    %c96 = arith.constant 96 : index
    %454 = memref.load %arg3[%c96] : memref<252xf32, #tpu.memory_space<smem>>
    %455 = vector.broadcast %454 : f32 to vector<16x16xf32>
    %456 = arith.mulf %455, %433 : vector<16x16xf32>
    %457 = arith.addf %427, %456 : vector<16x16xf32>
    %c97 = arith.constant 97 : index
    %458 = memref.load %arg3[%c97] : memref<252xf32, #tpu.memory_space<smem>>
    %459 = vector.broadcast %458 : f32 to vector<16x16xf32>
    %460 = arith.mulf %459, %433 : vector<16x16xf32>
    %461 = arith.addf %431, %460 : vector<16x16xf32>
    %c1_99 = arith.constant 1 : index
    %c1_100 = arith.constant 1 : index
    %c2_101 = arith.constant 2 : index
    %462 = vector.load %arg10[%c1_99, %c1_100, %c2_101] : memref<4x18x18xf32, #tpu.memory_space<vmem>>, vector<1x16x16xf32>
    %463 = vector.shape_cast %462 : vector<1x16x16xf32> to vector<16x16xf32>
    %c98 = arith.constant 98 : index
    %464 = memref.load %arg3[%c98] : memref<252xf32, #tpu.memory_space<smem>>
    %465 = vector.broadcast %464 : f32 to vector<16x16xf32>
    %466 = arith.mulf %465, %463 : vector<16x16xf32>
    %467 = arith.addf %437, %466 : vector<16x16xf32>
    %c99 = arith.constant 99 : index
    %468 = memref.load %arg3[%c99] : memref<252xf32, #tpu.memory_space<smem>>
    %469 = vector.broadcast %468 : f32 to vector<16x16xf32>
    %470 = arith.mulf %469, %463 : vector<16x16xf32>
    %471 = arith.addf %441, %470 : vector<16x16xf32>
    %c100 = arith.constant 100 : index
    %472 = memref.load %arg3[%c100] : memref<252xf32, #tpu.memory_space<smem>>
    %473 = vector.broadcast %472 : f32 to vector<16x16xf32>
    %474 = arith.mulf %473, %463 : vector<16x16xf32>
    %475 = arith.addf %445, %474 : vector<16x16xf32>
    %c101 = arith.constant 101 : index
    %476 = memref.load %arg3[%c101] : memref<252xf32, #tpu.memory_space<smem>>
    %477 = vector.broadcast %476 : f32 to vector<16x16xf32>
    %478 = arith.mulf %477, %463 : vector<16x16xf32>
    %479 = arith.addf %449, %478 : vector<16x16xf32>
    %c102 = arith.constant 102 : index
    %480 = memref.load %arg3[%c102] : memref<252xf32, #tpu.memory_space<smem>>
    %481 = vector.broadcast %480 : f32 to vector<16x16xf32>
    %482 = arith.mulf %481, %463 : vector<16x16xf32>
    %483 = arith.addf %453, %482 : vector<16x16xf32>
    %c103 = arith.constant 103 : index
    %484 = memref.load %arg3[%c103] : memref<252xf32, #tpu.memory_space<smem>>
    %485 = vector.broadcast %484 : f32 to vector<16x16xf32>
    %486 = arith.mulf %485, %463 : vector<16x16xf32>
    %487 = arith.addf %457, %486 : vector<16x16xf32>
    %c104 = arith.constant 104 : index
    %488 = memref.load %arg3[%c104] : memref<252xf32, #tpu.memory_space<smem>>
    %489 = vector.broadcast %488 : f32 to vector<16x16xf32>
    %490 = arith.mulf %489, %463 : vector<16x16xf32>
    %491 = arith.addf %461, %490 : vector<16x16xf32>
    %c1_102 = arith.constant 1 : index
    %c2_103 = arith.constant 2 : index
    %c0_104 = arith.constant 0 : index
    %492 = vector.load %arg10[%c1_102, %c2_103, %c0_104] : memref<4x18x18xf32, #tpu.memory_space<vmem>>, vector<1x16x16xf32>
    %493 = vector.shape_cast %492 : vector<1x16x16xf32> to vector<16x16xf32>
    %c105 = arith.constant 105 : index
    %494 = memref.load %arg3[%c105] : memref<252xf32, #tpu.memory_space<smem>>
    %495 = vector.broadcast %494 : f32 to vector<16x16xf32>
    %496 = arith.mulf %495, %493 : vector<16x16xf32>
    %497 = arith.addf %467, %496 : vector<16x16xf32>
    %c106 = arith.constant 106 : index
    %498 = memref.load %arg3[%c106] : memref<252xf32, #tpu.memory_space<smem>>
    %499 = vector.broadcast %498 : f32 to vector<16x16xf32>
    %500 = arith.mulf %499, %493 : vector<16x16xf32>
    %501 = arith.addf %471, %500 : vector<16x16xf32>
    %c107 = arith.constant 107 : index
    %502 = memref.load %arg3[%c107] : memref<252xf32, #tpu.memory_space<smem>>
    %503 = vector.broadcast %502 : f32 to vector<16x16xf32>
    %504 = arith.mulf %503, %493 : vector<16x16xf32>
    %505 = arith.addf %475, %504 : vector<16x16xf32>
    %c108 = arith.constant 108 : index
    %506 = memref.load %arg3[%c108] : memref<252xf32, #tpu.memory_space<smem>>
    %507 = vector.broadcast %506 : f32 to vector<16x16xf32>
    %508 = arith.mulf %507, %493 : vector<16x16xf32>
    %509 = arith.addf %479, %508 : vector<16x16xf32>
    %c109 = arith.constant 109 : index
    %510 = memref.load %arg3[%c109] : memref<252xf32, #tpu.memory_space<smem>>
    %511 = vector.broadcast %510 : f32 to vector<16x16xf32>
    %512 = arith.mulf %511, %493 : vector<16x16xf32>
    %513 = arith.addf %483, %512 : vector<16x16xf32>
    %c110 = arith.constant 110 : index
    %514 = memref.load %arg3[%c110] : memref<252xf32, #tpu.memory_space<smem>>
    %515 = vector.broadcast %514 : f32 to vector<16x16xf32>
    %516 = arith.mulf %515, %493 : vector<16x16xf32>
    %517 = arith.addf %487, %516 : vector<16x16xf32>
    %c111 = arith.constant 111 : index
    %518 = memref.load %arg3[%c111] : memref<252xf32, #tpu.memory_space<smem>>
    %519 = vector.broadcast %518 : f32 to vector<16x16xf32>
    %520 = arith.mulf %519, %493 : vector<16x16xf32>
    %521 = arith.addf %491, %520 : vector<16x16xf32>
    %c1_105 = arith.constant 1 : index
    %c2_106 = arith.constant 2 : index
    %c1_107 = arith.constant 1 : index
    %522 = vector.load %arg10[%c1_105, %c2_106, %c1_107] : memref<4x18x18xf32, #tpu.memory_space<vmem>>, vector<1x16x16xf32>
    %523 = vector.shape_cast %522 : vector<1x16x16xf32> to vector<16x16xf32>
    %c112 = arith.constant 112 : index
    %524 = memref.load %arg3[%c112] : memref<252xf32, #tpu.memory_space<smem>>
    %525 = vector.broadcast %524 : f32 to vector<16x16xf32>
    %526 = arith.mulf %525, %523 : vector<16x16xf32>
    %527 = arith.addf %497, %526 : vector<16x16xf32>
    %c113 = arith.constant 113 : index
    %528 = memref.load %arg3[%c113] : memref<252xf32, #tpu.memory_space<smem>>
    %529 = vector.broadcast %528 : f32 to vector<16x16xf32>
    %530 = arith.mulf %529, %523 : vector<16x16xf32>
    %531 = arith.addf %501, %530 : vector<16x16xf32>
    %c114 = arith.constant 114 : index
    %532 = memref.load %arg3[%c114] : memref<252xf32, #tpu.memory_space<smem>>
    %533 = vector.broadcast %532 : f32 to vector<16x16xf32>
    %534 = arith.mulf %533, %523 : vector<16x16xf32>
    %535 = arith.addf %505, %534 : vector<16x16xf32>
    %c115 = arith.constant 115 : index
    %536 = memref.load %arg3[%c115] : memref<252xf32, #tpu.memory_space<smem>>
    %537 = vector.broadcast %536 : f32 to vector<16x16xf32>
    %538 = arith.mulf %537, %523 : vector<16x16xf32>
    %539 = arith.addf %509, %538 : vector<16x16xf32>
    %c116 = arith.constant 116 : index
    %540 = memref.load %arg3[%c116] : memref<252xf32, #tpu.memory_space<smem>>
    %541 = vector.broadcast %540 : f32 to vector<16x16xf32>
    %542 = arith.mulf %541, %523 : vector<16x16xf32>
    %543 = arith.addf %513, %542 : vector<16x16xf32>
    %c117 = arith.constant 117 : index
    %544 = memref.load %arg3[%c117] : memref<252xf32, #tpu.memory_space<smem>>
    %545 = vector.broadcast %544 : f32 to vector<16x16xf32>
    %546 = arith.mulf %545, %523 : vector<16x16xf32>
    %547 = arith.addf %517, %546 : vector<16x16xf32>
    %c118 = arith.constant 118 : index
    %548 = memref.load %arg3[%c118] : memref<252xf32, #tpu.memory_space<smem>>
    %549 = vector.broadcast %548 : f32 to vector<16x16xf32>
    %550 = arith.mulf %549, %523 : vector<16x16xf32>
    %551 = arith.addf %521, %550 : vector<16x16xf32>
    %c1_108 = arith.constant 1 : index
    %c2_109 = arith.constant 2 : index
    %c2_110 = arith.constant 2 : index
    %552 = vector.load %arg10[%c1_108, %c2_109, %c2_110] : memref<4x18x18xf32, #tpu.memory_space<vmem>>, vector<1x16x16xf32>
    %553 = vector.shape_cast %552 : vector<1x16x16xf32> to vector<16x16xf32>
    %c119 = arith.constant 119 : index
    %554 = memref.load %arg3[%c119] : memref<252xf32, #tpu.memory_space<smem>>
    %555 = vector.broadcast %554 : f32 to vector<16x16xf32>
    %556 = arith.mulf %555, %553 : vector<16x16xf32>
    %557 = arith.addf %527, %556 : vector<16x16xf32>
    %c120 = arith.constant 120 : index
    %558 = memref.load %arg3[%c120] : memref<252xf32, #tpu.memory_space<smem>>
    %559 = vector.broadcast %558 : f32 to vector<16x16xf32>
    %560 = arith.mulf %559, %553 : vector<16x16xf32>
    %561 = arith.addf %531, %560 : vector<16x16xf32>
    %c121 = arith.constant 121 : index
    %562 = memref.load %arg3[%c121] : memref<252xf32, #tpu.memory_space<smem>>
    %563 = vector.broadcast %562 : f32 to vector<16x16xf32>
    %564 = arith.mulf %563, %553 : vector<16x16xf32>
    %565 = arith.addf %535, %564 : vector<16x16xf32>
    %c122 = arith.constant 122 : index
    %566 = memref.load %arg3[%c122] : memref<252xf32, #tpu.memory_space<smem>>
    %567 = vector.broadcast %566 : f32 to vector<16x16xf32>
    %568 = arith.mulf %567, %553 : vector<16x16xf32>
    %569 = arith.addf %539, %568 : vector<16x16xf32>
    %c123 = arith.constant 123 : index
    %570 = memref.load %arg3[%c123] : memref<252xf32, #tpu.memory_space<smem>>
    %571 = vector.broadcast %570 : f32 to vector<16x16xf32>
    %572 = arith.mulf %571, %553 : vector<16x16xf32>
    %573 = arith.addf %543, %572 : vector<16x16xf32>
    %c124 = arith.constant 124 : index
    %574 = memref.load %arg3[%c124] : memref<252xf32, #tpu.memory_space<smem>>
    %575 = vector.broadcast %574 : f32 to vector<16x16xf32>
    %576 = arith.mulf %575, %553 : vector<16x16xf32>
    %577 = arith.addf %547, %576 : vector<16x16xf32>
    %c125 = arith.constant 125 : index
    %578 = memref.load %arg3[%c125] : memref<252xf32, #tpu.memory_space<smem>>
    %579 = vector.broadcast %578 : f32 to vector<16x16xf32>
    %580 = arith.mulf %579, %553 : vector<16x16xf32>
    %581 = arith.addf %551, %580 : vector<16x16xf32>
    %c2_111 = arith.constant 2 : index
    %c0_112 = arith.constant 0 : index
    %c0_113 = arith.constant 0 : index
    %582 = vector.load %arg10[%c2_111, %c0_112, %c0_113] : memref<4x18x18xf32, #tpu.memory_space<vmem>>, vector<1x16x16xf32>
    %583 = vector.shape_cast %582 : vector<1x16x16xf32> to vector<16x16xf32>
    %c126 = arith.constant 126 : index
    %584 = memref.load %arg3[%c126] : memref<252xf32, #tpu.memory_space<smem>>
    %585 = vector.broadcast %584 : f32 to vector<16x16xf32>
    %586 = arith.mulf %585, %583 : vector<16x16xf32>
    %587 = arith.addf %557, %586 : vector<16x16xf32>
    %c127 = arith.constant 127 : index
    %588 = memref.load %arg3[%c127] : memref<252xf32, #tpu.memory_space<smem>>
    %589 = vector.broadcast %588 : f32 to vector<16x16xf32>
    %590 = arith.mulf %589, %583 : vector<16x16xf32>
    %591 = arith.addf %561, %590 : vector<16x16xf32>
    %c128 = arith.constant 128 : index
    %592 = memref.load %arg3[%c128] : memref<252xf32, #tpu.memory_space<smem>>
    %593 = vector.broadcast %592 : f32 to vector<16x16xf32>
    %594 = arith.mulf %593, %583 : vector<16x16xf32>
    %595 = arith.addf %565, %594 : vector<16x16xf32>
    %c129 = arith.constant 129 : index
    %596 = memref.load %arg3[%c129] : memref<252xf32, #tpu.memory_space<smem>>
    %597 = vector.broadcast %596 : f32 to vector<16x16xf32>
    %598 = arith.mulf %597, %583 : vector<16x16xf32>
    %599 = arith.addf %569, %598 : vector<16x16xf32>
    %c130 = arith.constant 130 : index
    %600 = memref.load %arg3[%c130] : memref<252xf32, #tpu.memory_space<smem>>
    %601 = vector.broadcast %600 : f32 to vector<16x16xf32>
    %602 = arith.mulf %601, %583 : vector<16x16xf32>
    %603 = arith.addf %573, %602 : vector<16x16xf32>
    %c131 = arith.constant 131 : index
    %604 = memref.load %arg3[%c131] : memref<252xf32, #tpu.memory_space<smem>>
    %605 = vector.broadcast %604 : f32 to vector<16x16xf32>
    %606 = arith.mulf %605, %583 : vector<16x16xf32>
    %607 = arith.addf %577, %606 : vector<16x16xf32>
    %c132 = arith.constant 132 : index
    %608 = memref.load %arg3[%c132] : memref<252xf32, #tpu.memory_space<smem>>
    %609 = vector.broadcast %608 : f32 to vector<16x16xf32>
    %610 = arith.mulf %609, %583 : vector<16x16xf32>
    %611 = arith.addf %581, %610 : vector<16x16xf32>
    %c2_114 = arith.constant 2 : index
    %c0_115 = arith.constant 0 : index
    %c1_116 = arith.constant 1 : index
    %612 = vector.load %arg10[%c2_114, %c0_115, %c1_116] : memref<4x18x18xf32, #tpu.memory_space<vmem>>, vector<1x16x16xf32>
    %613 = vector.shape_cast %612 : vector<1x16x16xf32> to vector<16x16xf32>
    %c133 = arith.constant 133 : index
    %614 = memref.load %arg3[%c133] : memref<252xf32, #tpu.memory_space<smem>>
    %615 = vector.broadcast %614 : f32 to vector<16x16xf32>
    %616 = arith.mulf %615, %613 : vector<16x16xf32>
    %617 = arith.addf %587, %616 : vector<16x16xf32>
    %c134 = arith.constant 134 : index
    %618 = memref.load %arg3[%c134] : memref<252xf32, #tpu.memory_space<smem>>
    %619 = vector.broadcast %618 : f32 to vector<16x16xf32>
    %620 = arith.mulf %619, %613 : vector<16x16xf32>
    %621 = arith.addf %591, %620 : vector<16x16xf32>
    %c135 = arith.constant 135 : index
    %622 = memref.load %arg3[%c135] : memref<252xf32, #tpu.memory_space<smem>>
    %623 = vector.broadcast %622 : f32 to vector<16x16xf32>
    %624 = arith.mulf %623, %613 : vector<16x16xf32>
    %625 = arith.addf %595, %624 : vector<16x16xf32>
    %c136 = arith.constant 136 : index
    %626 = memref.load %arg3[%c136] : memref<252xf32, #tpu.memory_space<smem>>
    %627 = vector.broadcast %626 : f32 to vector<16x16xf32>
    %628 = arith.mulf %627, %613 : vector<16x16xf32>
    %629 = arith.addf %599, %628 : vector<16x16xf32>
    %c137 = arith.constant 137 : index
    %630 = memref.load %arg3[%c137] : memref<252xf32, #tpu.memory_space<smem>>
    %631 = vector.broadcast %630 : f32 to vector<16x16xf32>
    %632 = arith.mulf %631, %613 : vector<16x16xf32>
    %633 = arith.addf %603, %632 : vector<16x16xf32>
    %c138 = arith.constant 138 : index
    %634 = memref.load %arg3[%c138] : memref<252xf32, #tpu.memory_space<smem>>
    %635 = vector.broadcast %634 : f32 to vector<16x16xf32>
    %636 = arith.mulf %635, %613 : vector<16x16xf32>
    %637 = arith.addf %607, %636 : vector<16x16xf32>
    %c139 = arith.constant 139 : index
    %638 = memref.load %arg3[%c139] : memref<252xf32, #tpu.memory_space<smem>>
    %639 = vector.broadcast %638 : f32 to vector<16x16xf32>
    %640 = arith.mulf %639, %613 : vector<16x16xf32>
    %641 = arith.addf %611, %640 : vector<16x16xf32>
    %c2_117 = arith.constant 2 : index
    %c0_118 = arith.constant 0 : index
    %c2_119 = arith.constant 2 : index
    %642 = vector.load %arg10[%c2_117, %c0_118, %c2_119] : memref<4x18x18xf32, #tpu.memory_space<vmem>>, vector<1x16x16xf32>
    %643 = vector.shape_cast %642 : vector<1x16x16xf32> to vector<16x16xf32>
    %c140 = arith.constant 140 : index
    %644 = memref.load %arg3[%c140] : memref<252xf32, #tpu.memory_space<smem>>
    %645 = vector.broadcast %644 : f32 to vector<16x16xf32>
    %646 = arith.mulf %645, %643 : vector<16x16xf32>
    %647 = arith.addf %617, %646 : vector<16x16xf32>
    %c141 = arith.constant 141 : index
    %648 = memref.load %arg3[%c141] : memref<252xf32, #tpu.memory_space<smem>>
    %649 = vector.broadcast %648 : f32 to vector<16x16xf32>
    %650 = arith.mulf %649, %643 : vector<16x16xf32>
    %651 = arith.addf %621, %650 : vector<16x16xf32>
    %c142 = arith.constant 142 : index
    %652 = memref.load %arg3[%c142] : memref<252xf32, #tpu.memory_space<smem>>
    %653 = vector.broadcast %652 : f32 to vector<16x16xf32>
    %654 = arith.mulf %653, %643 : vector<16x16xf32>
    %655 = arith.addf %625, %654 : vector<16x16xf32>
    %c143 = arith.constant 143 : index
    %656 = memref.load %arg3[%c143] : memref<252xf32, #tpu.memory_space<smem>>
    %657 = vector.broadcast %656 : f32 to vector<16x16xf32>
    %658 = arith.mulf %657, %643 : vector<16x16xf32>
    %659 = arith.addf %629, %658 : vector<16x16xf32>
    %c144 = arith.constant 144 : index
    %660 = memref.load %arg3[%c144] : memref<252xf32, #tpu.memory_space<smem>>
    %661 = vector.broadcast %660 : f32 to vector<16x16xf32>
    %662 = arith.mulf %661, %643 : vector<16x16xf32>
    %663 = arith.addf %633, %662 : vector<16x16xf32>
    %c145 = arith.constant 145 : index
    %664 = memref.load %arg3[%c145] : memref<252xf32, #tpu.memory_space<smem>>
    %665 = vector.broadcast %664 : f32 to vector<16x16xf32>
    %666 = arith.mulf %665, %643 : vector<16x16xf32>
    %667 = arith.addf %637, %666 : vector<16x16xf32>
    %c146 = arith.constant 146 : index
    %668 = memref.load %arg3[%c146] : memref<252xf32, #tpu.memory_space<smem>>
    %669 = vector.broadcast %668 : f32 to vector<16x16xf32>
    %670 = arith.mulf %669, %643 : vector<16x16xf32>
    %671 = arith.addf %641, %670 : vector<16x16xf32>
    %c2_120 = arith.constant 2 : index
    %c1_121 = arith.constant 1 : index
    %c0_122 = arith.constant 0 : index
    %672 = vector.load %arg10[%c2_120, %c1_121, %c0_122] : memref<4x18x18xf32, #tpu.memory_space<vmem>>, vector<1x16x16xf32>
    %673 = vector.shape_cast %672 : vector<1x16x16xf32> to vector<16x16xf32>
    %c147 = arith.constant 147 : index
    %674 = memref.load %arg3[%c147] : memref<252xf32, #tpu.memory_space<smem>>
    %675 = vector.broadcast %674 : f32 to vector<16x16xf32>
    %676 = arith.mulf %675, %673 : vector<16x16xf32>
    %677 = arith.addf %647, %676 : vector<16x16xf32>
    %c148 = arith.constant 148 : index
    %678 = memref.load %arg3[%c148] : memref<252xf32, #tpu.memory_space<smem>>
    %679 = vector.broadcast %678 : f32 to vector<16x16xf32>
    %680 = arith.mulf %679, %673 : vector<16x16xf32>
    %681 = arith.addf %651, %680 : vector<16x16xf32>
    %c149 = arith.constant 149 : index
    %682 = memref.load %arg3[%c149] : memref<252xf32, #tpu.memory_space<smem>>
    %683 = vector.broadcast %682 : f32 to vector<16x16xf32>
    %684 = arith.mulf %683, %673 : vector<16x16xf32>
    %685 = arith.addf %655, %684 : vector<16x16xf32>
    %c150 = arith.constant 150 : index
    %686 = memref.load %arg3[%c150] : memref<252xf32, #tpu.memory_space<smem>>
    %687 = vector.broadcast %686 : f32 to vector<16x16xf32>
    %688 = arith.mulf %687, %673 : vector<16x16xf32>
    %689 = arith.addf %659, %688 : vector<16x16xf32>
    %c151 = arith.constant 151 : index
    %690 = memref.load %arg3[%c151] : memref<252xf32, #tpu.memory_space<smem>>
    %691 = vector.broadcast %690 : f32 to vector<16x16xf32>
    %692 = arith.mulf %691, %673 : vector<16x16xf32>
    %693 = arith.addf %663, %692 : vector<16x16xf32>
    %c152 = arith.constant 152 : index
    %694 = memref.load %arg3[%c152] : memref<252xf32, #tpu.memory_space<smem>>
    %695 = vector.broadcast %694 : f32 to vector<16x16xf32>
    %696 = arith.mulf %695, %673 : vector<16x16xf32>
    %697 = arith.addf %667, %696 : vector<16x16xf32>
    %c153 = arith.constant 153 : index
    %698 = memref.load %arg3[%c153] : memref<252xf32, #tpu.memory_space<smem>>
    %699 = vector.broadcast %698 : f32 to vector<16x16xf32>
    %700 = arith.mulf %699, %673 : vector<16x16xf32>
    %701 = arith.addf %671, %700 : vector<16x16xf32>
    %c2_123 = arith.constant 2 : index
    %c1_124 = arith.constant 1 : index
    %c1_125 = arith.constant 1 : index
    %702 = vector.load %arg10[%c2_123, %c1_124, %c1_125] : memref<4x18x18xf32, #tpu.memory_space<vmem>>, vector<1x16x16xf32>
    %703 = vector.shape_cast %702 : vector<1x16x16xf32> to vector<16x16xf32>
    %c154 = arith.constant 154 : index
    %704 = memref.load %arg3[%c154] : memref<252xf32, #tpu.memory_space<smem>>
    %705 = vector.broadcast %704 : f32 to vector<16x16xf32>
    %706 = arith.mulf %705, %703 : vector<16x16xf32>
    %707 = arith.addf %677, %706 : vector<16x16xf32>
    %c155 = arith.constant 155 : index
    %708 = memref.load %arg3[%c155] : memref<252xf32, #tpu.memory_space<smem>>
    %709 = vector.broadcast %708 : f32 to vector<16x16xf32>
    %710 = arith.mulf %709, %703 : vector<16x16xf32>
    %711 = arith.addf %681, %710 : vector<16x16xf32>
    %c156 = arith.constant 156 : index
    %712 = memref.load %arg3[%c156] : memref<252xf32, #tpu.memory_space<smem>>
    %713 = vector.broadcast %712 : f32 to vector<16x16xf32>
    %714 = arith.mulf %713, %703 : vector<16x16xf32>
    %715 = arith.addf %685, %714 : vector<16x16xf32>
    %c157 = arith.constant 157 : index
    %716 = memref.load %arg3[%c157] : memref<252xf32, #tpu.memory_space<smem>>
    %717 = vector.broadcast %716 : f32 to vector<16x16xf32>
    %718 = arith.mulf %717, %703 : vector<16x16xf32>
    %719 = arith.addf %689, %718 : vector<16x16xf32>
    %c158 = arith.constant 158 : index
    %720 = memref.load %arg3[%c158] : memref<252xf32, #tpu.memory_space<smem>>
    %721 = vector.broadcast %720 : f32 to vector<16x16xf32>
    %722 = arith.mulf %721, %703 : vector<16x16xf32>
    %723 = arith.addf %693, %722 : vector<16x16xf32>
    %c159 = arith.constant 159 : index
    %724 = memref.load %arg3[%c159] : memref<252xf32, #tpu.memory_space<smem>>
    %725 = vector.broadcast %724 : f32 to vector<16x16xf32>
    %726 = arith.mulf %725, %703 : vector<16x16xf32>
    %727 = arith.addf %697, %726 : vector<16x16xf32>
    %c160 = arith.constant 160 : index
    %728 = memref.load %arg3[%c160] : memref<252xf32, #tpu.memory_space<smem>>
    %729 = vector.broadcast %728 : f32 to vector<16x16xf32>
    %730 = arith.mulf %729, %703 : vector<16x16xf32>
    %731 = arith.addf %701, %730 : vector<16x16xf32>
    %c2_126 = arith.constant 2 : index
    %c1_127 = arith.constant 1 : index
    %c2_128 = arith.constant 2 : index
    %732 = vector.load %arg10[%c2_126, %c1_127, %c2_128] : memref<4x18x18xf32, #tpu.memory_space<vmem>>, vector<1x16x16xf32>
    %733 = vector.shape_cast %732 : vector<1x16x16xf32> to vector<16x16xf32>
    %c161 = arith.constant 161 : index
    %734 = memref.load %arg3[%c161] : memref<252xf32, #tpu.memory_space<smem>>
    %735 = vector.broadcast %734 : f32 to vector<16x16xf32>
    %736 = arith.mulf %735, %733 : vector<16x16xf32>
    %737 = arith.addf %707, %736 : vector<16x16xf32>
    %c162 = arith.constant 162 : index
    %738 = memref.load %arg3[%c162] : memref<252xf32, #tpu.memory_space<smem>>
    %739 = vector.broadcast %738 : f32 to vector<16x16xf32>
    %740 = arith.mulf %739, %733 : vector<16x16xf32>
    %741 = arith.addf %711, %740 : vector<16x16xf32>
    %c163 = arith.constant 163 : index
    %742 = memref.load %arg3[%c163] : memref<252xf32, #tpu.memory_space<smem>>
    %743 = vector.broadcast %742 : f32 to vector<16x16xf32>
    %744 = arith.mulf %743, %733 : vector<16x16xf32>
    %745 = arith.addf %715, %744 : vector<16x16xf32>
    %c164 = arith.constant 164 : index
    %746 = memref.load %arg3[%c164] : memref<252xf32, #tpu.memory_space<smem>>
    %747 = vector.broadcast %746 : f32 to vector<16x16xf32>
    %748 = arith.mulf %747, %733 : vector<16x16xf32>
    %749 = arith.addf %719, %748 : vector<16x16xf32>
    %c165 = arith.constant 165 : index
    %750 = memref.load %arg3[%c165] : memref<252xf32, #tpu.memory_space<smem>>
    %751 = vector.broadcast %750 : f32 to vector<16x16xf32>
    %752 = arith.mulf %751, %733 : vector<16x16xf32>
    %753 = arith.addf %723, %752 : vector<16x16xf32>
    %c166 = arith.constant 166 : index
    %754 = memref.load %arg3[%c166] : memref<252xf32, #tpu.memory_space<smem>>
    %755 = vector.broadcast %754 : f32 to vector<16x16xf32>
    %756 = arith.mulf %755, %733 : vector<16x16xf32>
    %757 = arith.addf %727, %756 : vector<16x16xf32>
    %c167 = arith.constant 167 : index
    %758 = memref.load %arg3[%c167] : memref<252xf32, #tpu.memory_space<smem>>
    %759 = vector.broadcast %758 : f32 to vector<16x16xf32>
    %760 = arith.mulf %759, %733 : vector<16x16xf32>
    %761 = arith.addf %731, %760 : vector<16x16xf32>
    %c2_129 = arith.constant 2 : index
    %c2_130 = arith.constant 2 : index
    %c0_131 = arith.constant 0 : index
    %762 = vector.load %arg10[%c2_129, %c2_130, %c0_131] : memref<4x18x18xf32, #tpu.memory_space<vmem>>, vector<1x16x16xf32>
    %763 = vector.shape_cast %762 : vector<1x16x16xf32> to vector<16x16xf32>
    %c168 = arith.constant 168 : index
    %764 = memref.load %arg3[%c168] : memref<252xf32, #tpu.memory_space<smem>>
    %765 = vector.broadcast %764 : f32 to vector<16x16xf32>
    %766 = arith.mulf %765, %763 : vector<16x16xf32>
    %767 = arith.addf %737, %766 : vector<16x16xf32>
    %c169 = arith.constant 169 : index
    %768 = memref.load %arg3[%c169] : memref<252xf32, #tpu.memory_space<smem>>
    %769 = vector.broadcast %768 : f32 to vector<16x16xf32>
    %770 = arith.mulf %769, %763 : vector<16x16xf32>
    %771 = arith.addf %741, %770 : vector<16x16xf32>
    %c170 = arith.constant 170 : index
    %772 = memref.load %arg3[%c170] : memref<252xf32, #tpu.memory_space<smem>>
    %773 = vector.broadcast %772 : f32 to vector<16x16xf32>
    %774 = arith.mulf %773, %763 : vector<16x16xf32>
    %775 = arith.addf %745, %774 : vector<16x16xf32>
    %c171 = arith.constant 171 : index
    %776 = memref.load %arg3[%c171] : memref<252xf32, #tpu.memory_space<smem>>
    %777 = vector.broadcast %776 : f32 to vector<16x16xf32>
    %778 = arith.mulf %777, %763 : vector<16x16xf32>
    %779 = arith.addf %749, %778 : vector<16x16xf32>
    %c172 = arith.constant 172 : index
    %780 = memref.load %arg3[%c172] : memref<252xf32, #tpu.memory_space<smem>>
    %781 = vector.broadcast %780 : f32 to vector<16x16xf32>
    %782 = arith.mulf %781, %763 : vector<16x16xf32>
    %783 = arith.addf %753, %782 : vector<16x16xf32>
    %c173 = arith.constant 173 : index
    %784 = memref.load %arg3[%c173] : memref<252xf32, #tpu.memory_space<smem>>
    %785 = vector.broadcast %784 : f32 to vector<16x16xf32>
    %786 = arith.mulf %785, %763 : vector<16x16xf32>
    %787 = arith.addf %757, %786 : vector<16x16xf32>
    %c174 = arith.constant 174 : index
    %788 = memref.load %arg3[%c174] : memref<252xf32, #tpu.memory_space<smem>>
    %789 = vector.broadcast %788 : f32 to vector<16x16xf32>
    %790 = arith.mulf %789, %763 : vector<16x16xf32>
    %791 = arith.addf %761, %790 : vector<16x16xf32>
    %c2_132 = arith.constant 2 : index
    %c2_133 = arith.constant 2 : index
    %c1_134 = arith.constant 1 : index
    %792 = vector.load %arg10[%c2_132, %c2_133, %c1_134] : memref<4x18x18xf32, #tpu.memory_space<vmem>>, vector<1x16x16xf32>
    %793 = vector.shape_cast %792 : vector<1x16x16xf32> to vector<16x16xf32>
    %c175 = arith.constant 175 : index
    %794 = memref.load %arg3[%c175] : memref<252xf32, #tpu.memory_space<smem>>
    %795 = vector.broadcast %794 : f32 to vector<16x16xf32>
    %796 = arith.mulf %795, %793 : vector<16x16xf32>
    %797 = arith.addf %767, %796 : vector<16x16xf32>
    %c176 = arith.constant 176 : index
    %798 = memref.load %arg3[%c176] : memref<252xf32, #tpu.memory_space<smem>>
    %799 = vector.broadcast %798 : f32 to vector<16x16xf32>
    %800 = arith.mulf %799, %793 : vector<16x16xf32>
    %801 = arith.addf %771, %800 : vector<16x16xf32>
    %c177 = arith.constant 177 : index
    %802 = memref.load %arg3[%c177] : memref<252xf32, #tpu.memory_space<smem>>
    %803 = vector.broadcast %802 : f32 to vector<16x16xf32>
    %804 = arith.mulf %803, %793 : vector<16x16xf32>
    %805 = arith.addf %775, %804 : vector<16x16xf32>
    %c178 = arith.constant 178 : index
    %806 = memref.load %arg3[%c178] : memref<252xf32, #tpu.memory_space<smem>>
    %807 = vector.broadcast %806 : f32 to vector<16x16xf32>
    %808 = arith.mulf %807, %793 : vector<16x16xf32>
    %809 = arith.addf %779, %808 : vector<16x16xf32>
    %c179 = arith.constant 179 : index
    %810 = memref.load %arg3[%c179] : memref<252xf32, #tpu.memory_space<smem>>
    %811 = vector.broadcast %810 : f32 to vector<16x16xf32>
    %812 = arith.mulf %811, %793 : vector<16x16xf32>
    %813 = arith.addf %783, %812 : vector<16x16xf32>
    %c180 = arith.constant 180 : index
    %814 = memref.load %arg3[%c180] : memref<252xf32, #tpu.memory_space<smem>>
    %815 = vector.broadcast %814 : f32 to vector<16x16xf32>
    %816 = arith.mulf %815, %793 : vector<16x16xf32>
    %817 = arith.addf %787, %816 : vector<16x16xf32>
    %c181 = arith.constant 181 : index
    %818 = memref.load %arg3[%c181] : memref<252xf32, #tpu.memory_space<smem>>
    %819 = vector.broadcast %818 : f32 to vector<16x16xf32>
    %820 = arith.mulf %819, %793 : vector<16x16xf32>
    %821 = arith.addf %791, %820 : vector<16x16xf32>
    %c2_135 = arith.constant 2 : index
    %c2_136 = arith.constant 2 : index
    %c2_137 = arith.constant 2 : index
    %822 = vector.load %arg10[%c2_135, %c2_136, %c2_137] : memref<4x18x18xf32, #tpu.memory_space<vmem>>, vector<1x16x16xf32>
    %823 = vector.shape_cast %822 : vector<1x16x16xf32> to vector<16x16xf32>
    %c182 = arith.constant 182 : index
    %824 = memref.load %arg3[%c182] : memref<252xf32, #tpu.memory_space<smem>>
    %825 = vector.broadcast %824 : f32 to vector<16x16xf32>
    %826 = arith.mulf %825, %823 : vector<16x16xf32>
    %827 = arith.addf %797, %826 : vector<16x16xf32>
    %c183 = arith.constant 183 : index
    %828 = memref.load %arg3[%c183] : memref<252xf32, #tpu.memory_space<smem>>
    %829 = vector.broadcast %828 : f32 to vector<16x16xf32>
    %830 = arith.mulf %829, %823 : vector<16x16xf32>
    %831 = arith.addf %801, %830 : vector<16x16xf32>
    %c184 = arith.constant 184 : index
    %832 = memref.load %arg3[%c184] : memref<252xf32, #tpu.memory_space<smem>>
    %833 = vector.broadcast %832 : f32 to vector<16x16xf32>
    %834 = arith.mulf %833, %823 : vector<16x16xf32>
    %835 = arith.addf %805, %834 : vector<16x16xf32>
    %c185 = arith.constant 185 : index
    %836 = memref.load %arg3[%c185] : memref<252xf32, #tpu.memory_space<smem>>
    %837 = vector.broadcast %836 : f32 to vector<16x16xf32>
    %838 = arith.mulf %837, %823 : vector<16x16xf32>
    %839 = arith.addf %809, %838 : vector<16x16xf32>
    %c186 = arith.constant 186 : index
    %840 = memref.load %arg3[%c186] : memref<252xf32, #tpu.memory_space<smem>>
    %841 = vector.broadcast %840 : f32 to vector<16x16xf32>
    %842 = arith.mulf %841, %823 : vector<16x16xf32>
    %843 = arith.addf %813, %842 : vector<16x16xf32>
    %c187 = arith.constant 187 : index
    %844 = memref.load %arg3[%c187] : memref<252xf32, #tpu.memory_space<smem>>
    %845 = vector.broadcast %844 : f32 to vector<16x16xf32>
    %846 = arith.mulf %845, %823 : vector<16x16xf32>
    %847 = arith.addf %817, %846 : vector<16x16xf32>
    %c188 = arith.constant 188 : index
    %848 = memref.load %arg3[%c188] : memref<252xf32, #tpu.memory_space<smem>>
    %849 = vector.broadcast %848 : f32 to vector<16x16xf32>
    %850 = arith.mulf %849, %823 : vector<16x16xf32>
    %851 = arith.addf %821, %850 : vector<16x16xf32>
    %c3_138 = arith.constant 3 : index
    %c0_139 = arith.constant 0 : index
    %c0_140 = arith.constant 0 : index
    %852 = vector.load %arg10[%c3_138, %c0_139, %c0_140] : memref<4x18x18xf32, #tpu.memory_space<vmem>>, vector<1x16x16xf32>
    %853 = vector.shape_cast %852 : vector<1x16x16xf32> to vector<16x16xf32>
    %c189 = arith.constant 189 : index
    %854 = memref.load %arg3[%c189] : memref<252xf32, #tpu.memory_space<smem>>
    %855 = vector.broadcast %854 : f32 to vector<16x16xf32>
    %856 = arith.mulf %855, %853 : vector<16x16xf32>
    %857 = arith.addf %827, %856 : vector<16x16xf32>
    %c190 = arith.constant 190 : index
    %858 = memref.load %arg3[%c190] : memref<252xf32, #tpu.memory_space<smem>>
    %859 = vector.broadcast %858 : f32 to vector<16x16xf32>
    %860 = arith.mulf %859, %853 : vector<16x16xf32>
    %861 = arith.addf %831, %860 : vector<16x16xf32>
    %c191 = arith.constant 191 : index
    %862 = memref.load %arg3[%c191] : memref<252xf32, #tpu.memory_space<smem>>
    %863 = vector.broadcast %862 : f32 to vector<16x16xf32>
    %864 = arith.mulf %863, %853 : vector<16x16xf32>
    %865 = arith.addf %835, %864 : vector<16x16xf32>
    %c192 = arith.constant 192 : index
    %866 = memref.load %arg3[%c192] : memref<252xf32, #tpu.memory_space<smem>>
    %867 = vector.broadcast %866 : f32 to vector<16x16xf32>
    %868 = arith.mulf %867, %853 : vector<16x16xf32>
    %869 = arith.addf %839, %868 : vector<16x16xf32>
    %c193 = arith.constant 193 : index
    %870 = memref.load %arg3[%c193] : memref<252xf32, #tpu.memory_space<smem>>
    %871 = vector.broadcast %870 : f32 to vector<16x16xf32>
    %872 = arith.mulf %871, %853 : vector<16x16xf32>
    %873 = arith.addf %843, %872 : vector<16x16xf32>
    %c194 = arith.constant 194 : index
    %874 = memref.load %arg3[%c194] : memref<252xf32, #tpu.memory_space<smem>>
    %875 = vector.broadcast %874 : f32 to vector<16x16xf32>
    %876 = arith.mulf %875, %853 : vector<16x16xf32>
    %877 = arith.addf %847, %876 : vector<16x16xf32>
    %c195 = arith.constant 195 : index
    %878 = memref.load %arg3[%c195] : memref<252xf32, #tpu.memory_space<smem>>
    %879 = vector.broadcast %878 : f32 to vector<16x16xf32>
    %880 = arith.mulf %879, %853 : vector<16x16xf32>
    %881 = arith.addf %851, %880 : vector<16x16xf32>
    %c3_141 = arith.constant 3 : index
    %c0_142 = arith.constant 0 : index
    %c1_143 = arith.constant 1 : index
    %882 = vector.load %arg10[%c3_141, %c0_142, %c1_143] : memref<4x18x18xf32, #tpu.memory_space<vmem>>, vector<1x16x16xf32>
    %883 = vector.shape_cast %882 : vector<1x16x16xf32> to vector<16x16xf32>
    %c196 = arith.constant 196 : index
    %884 = memref.load %arg3[%c196] : memref<252xf32, #tpu.memory_space<smem>>
    %885 = vector.broadcast %884 : f32 to vector<16x16xf32>
    %886 = arith.mulf %885, %883 : vector<16x16xf32>
    %887 = arith.addf %857, %886 : vector<16x16xf32>
    %c197 = arith.constant 197 : index
    %888 = memref.load %arg3[%c197] : memref<252xf32, #tpu.memory_space<smem>>
    %889 = vector.broadcast %888 : f32 to vector<16x16xf32>
    %890 = arith.mulf %889, %883 : vector<16x16xf32>
    %891 = arith.addf %861, %890 : vector<16x16xf32>
    %c198 = arith.constant 198 : index
    %892 = memref.load %arg3[%c198] : memref<252xf32, #tpu.memory_space<smem>>
    %893 = vector.broadcast %892 : f32 to vector<16x16xf32>
    %894 = arith.mulf %893, %883 : vector<16x16xf32>
    %895 = arith.addf %865, %894 : vector<16x16xf32>
    %c199 = arith.constant 199 : index
    %896 = memref.load %arg3[%c199] : memref<252xf32, #tpu.memory_space<smem>>
    %897 = vector.broadcast %896 : f32 to vector<16x16xf32>
    %898 = arith.mulf %897, %883 : vector<16x16xf32>
    %899 = arith.addf %869, %898 : vector<16x16xf32>
    %c200 = arith.constant 200 : index
    %900 = memref.load %arg3[%c200] : memref<252xf32, #tpu.memory_space<smem>>
    %901 = vector.broadcast %900 : f32 to vector<16x16xf32>
    %902 = arith.mulf %901, %883 : vector<16x16xf32>
    %903 = arith.addf %873, %902 : vector<16x16xf32>
    %c201 = arith.constant 201 : index
    %904 = memref.load %arg3[%c201] : memref<252xf32, #tpu.memory_space<smem>>
    %905 = vector.broadcast %904 : f32 to vector<16x16xf32>
    %906 = arith.mulf %905, %883 : vector<16x16xf32>
    %907 = arith.addf %877, %906 : vector<16x16xf32>
    %c202 = arith.constant 202 : index
    %908 = memref.load %arg3[%c202] : memref<252xf32, #tpu.memory_space<smem>>
    %909 = vector.broadcast %908 : f32 to vector<16x16xf32>
    %910 = arith.mulf %909, %883 : vector<16x16xf32>
    %911 = arith.addf %881, %910 : vector<16x16xf32>
    %c3_144 = arith.constant 3 : index
    %c0_145 = arith.constant 0 : index
    %c2_146 = arith.constant 2 : index
    %912 = vector.load %arg10[%c3_144, %c0_145, %c2_146] : memref<4x18x18xf32, #tpu.memory_space<vmem>>, vector<1x16x16xf32>
    %913 = vector.shape_cast %912 : vector<1x16x16xf32> to vector<16x16xf32>
    %c203 = arith.constant 203 : index
    %914 = memref.load %arg3[%c203] : memref<252xf32, #tpu.memory_space<smem>>
    %915 = vector.broadcast %914 : f32 to vector<16x16xf32>
    %916 = arith.mulf %915, %913 : vector<16x16xf32>
    %917 = arith.addf %887, %916 : vector<16x16xf32>
    %c204 = arith.constant 204 : index
    %918 = memref.load %arg3[%c204] : memref<252xf32, #tpu.memory_space<smem>>
    %919 = vector.broadcast %918 : f32 to vector<16x16xf32>
    %920 = arith.mulf %919, %913 : vector<16x16xf32>
    %921 = arith.addf %891, %920 : vector<16x16xf32>
    %c205 = arith.constant 205 : index
    %922 = memref.load %arg3[%c205] : memref<252xf32, #tpu.memory_space<smem>>
    %923 = vector.broadcast %922 : f32 to vector<16x16xf32>
    %924 = arith.mulf %923, %913 : vector<16x16xf32>
    %925 = arith.addf %895, %924 : vector<16x16xf32>
    %c206 = arith.constant 206 : index
    %926 = memref.load %arg3[%c206] : memref<252xf32, #tpu.memory_space<smem>>
    %927 = vector.broadcast %926 : f32 to vector<16x16xf32>
    %928 = arith.mulf %927, %913 : vector<16x16xf32>
    %929 = arith.addf %899, %928 : vector<16x16xf32>
    %c207 = arith.constant 207 : index
    %930 = memref.load %arg3[%c207] : memref<252xf32, #tpu.memory_space<smem>>
    %931 = vector.broadcast %930 : f32 to vector<16x16xf32>
    %932 = arith.mulf %931, %913 : vector<16x16xf32>
    %933 = arith.addf %903, %932 : vector<16x16xf32>
    %c208 = arith.constant 208 : index
    %934 = memref.load %arg3[%c208] : memref<252xf32, #tpu.memory_space<smem>>
    %935 = vector.broadcast %934 : f32 to vector<16x16xf32>
    %936 = arith.mulf %935, %913 : vector<16x16xf32>
    %937 = arith.addf %907, %936 : vector<16x16xf32>
    %c209 = arith.constant 209 : index
    %938 = memref.load %arg3[%c209] : memref<252xf32, #tpu.memory_space<smem>>
    %939 = vector.broadcast %938 : f32 to vector<16x16xf32>
    %940 = arith.mulf %939, %913 : vector<16x16xf32>
    %941 = arith.addf %911, %940 : vector<16x16xf32>
    %c3_147 = arith.constant 3 : index
    %c1_148 = arith.constant 1 : index
    %c0_149 = arith.constant 0 : index
    %942 = vector.load %arg10[%c3_147, %c1_148, %c0_149] : memref<4x18x18xf32, #tpu.memory_space<vmem>>, vector<1x16x16xf32>
    %943 = vector.shape_cast %942 : vector<1x16x16xf32> to vector<16x16xf32>
    %c210 = arith.constant 210 : index
    %944 = memref.load %arg3[%c210] : memref<252xf32, #tpu.memory_space<smem>>
    %945 = vector.broadcast %944 : f32 to vector<16x16xf32>
    %946 = arith.mulf %945, %943 : vector<16x16xf32>
    %947 = arith.addf %917, %946 : vector<16x16xf32>
    %c211 = arith.constant 211 : index
    %948 = memref.load %arg3[%c211] : memref<252xf32, #tpu.memory_space<smem>>
    %949 = vector.broadcast %948 : f32 to vector<16x16xf32>
    %950 = arith.mulf %949, %943 : vector<16x16xf32>
    %951 = arith.addf %921, %950 : vector<16x16xf32>
    %c212 = arith.constant 212 : index
    %952 = memref.load %arg3[%c212] : memref<252xf32, #tpu.memory_space<smem>>
    %953 = vector.broadcast %952 : f32 to vector<16x16xf32>
    %954 = arith.mulf %953, %943 : vector<16x16xf32>
    %955 = arith.addf %925, %954 : vector<16x16xf32>
    %c213 = arith.constant 213 : index
    %956 = memref.load %arg3[%c213] : memref<252xf32, #tpu.memory_space<smem>>
    %957 = vector.broadcast %956 : f32 to vector<16x16xf32>
    %958 = arith.mulf %957, %943 : vector<16x16xf32>
    %959 = arith.addf %929, %958 : vector<16x16xf32>
    %c214 = arith.constant 214 : index
    %960 = memref.load %arg3[%c214] : memref<252xf32, #tpu.memory_space<smem>>
    %961 = vector.broadcast %960 : f32 to vector<16x16xf32>
    %962 = arith.mulf %961, %943 : vector<16x16xf32>
    %963 = arith.addf %933, %962 : vector<16x16xf32>
    %c215 = arith.constant 215 : index
    %964 = memref.load %arg3[%c215] : memref<252xf32, #tpu.memory_space<smem>>
    %965 = vector.broadcast %964 : f32 to vector<16x16xf32>
    %966 = arith.mulf %965, %943 : vector<16x16xf32>
    %967 = arith.addf %937, %966 : vector<16x16xf32>
    %c216 = arith.constant 216 : index
    %968 = memref.load %arg3[%c216] : memref<252xf32, #tpu.memory_space<smem>>
    %969 = vector.broadcast %968 : f32 to vector<16x16xf32>
    %970 = arith.mulf %969, %943 : vector<16x16xf32>
    %971 = arith.addf %941, %970 : vector<16x16xf32>
    %c3_150 = arith.constant 3 : index
    %c1_151 = arith.constant 1 : index
    %c1_152 = arith.constant 1 : index
    %972 = vector.load %arg10[%c3_150, %c1_151, %c1_152] : memref<4x18x18xf32, #tpu.memory_space<vmem>>, vector<1x16x16xf32>
    %973 = vector.shape_cast %972 : vector<1x16x16xf32> to vector<16x16xf32>
    %c217 = arith.constant 217 : index
    %974 = memref.load %arg3[%c217] : memref<252xf32, #tpu.memory_space<smem>>
    %975 = vector.broadcast %974 : f32 to vector<16x16xf32>
    %976 = arith.mulf %975, %973 : vector<16x16xf32>
    %977 = arith.addf %947, %976 : vector<16x16xf32>
    %c218 = arith.constant 218 : index
    %978 = memref.load %arg3[%c218] : memref<252xf32, #tpu.memory_space<smem>>
    %979 = vector.broadcast %978 : f32 to vector<16x16xf32>
    %980 = arith.mulf %979, %973 : vector<16x16xf32>
    %981 = arith.addf %951, %980 : vector<16x16xf32>
    %c219 = arith.constant 219 : index
    %982 = memref.load %arg3[%c219] : memref<252xf32, #tpu.memory_space<smem>>
    %983 = vector.broadcast %982 : f32 to vector<16x16xf32>
    %984 = arith.mulf %983, %973 : vector<16x16xf32>
    %985 = arith.addf %955, %984 : vector<16x16xf32>
    %c220 = arith.constant 220 : index
    %986 = memref.load %arg3[%c220] : memref<252xf32, #tpu.memory_space<smem>>
    %987 = vector.broadcast %986 : f32 to vector<16x16xf32>
    %988 = arith.mulf %987, %973 : vector<16x16xf32>
    %989 = arith.addf %959, %988 : vector<16x16xf32>
    %c221 = arith.constant 221 : index
    %990 = memref.load %arg3[%c221] : memref<252xf32, #tpu.memory_space<smem>>
    %991 = vector.broadcast %990 : f32 to vector<16x16xf32>
    %992 = arith.mulf %991, %973 : vector<16x16xf32>
    %993 = arith.addf %963, %992 : vector<16x16xf32>
    %c222 = arith.constant 222 : index
    %994 = memref.load %arg3[%c222] : memref<252xf32, #tpu.memory_space<smem>>
    %995 = vector.broadcast %994 : f32 to vector<16x16xf32>
    %996 = arith.mulf %995, %973 : vector<16x16xf32>
    %997 = arith.addf %967, %996 : vector<16x16xf32>
    %c223 = arith.constant 223 : index
    %998 = memref.load %arg3[%c223] : memref<252xf32, #tpu.memory_space<smem>>
    %999 = vector.broadcast %998 : f32 to vector<16x16xf32>
    %1000 = arith.mulf %999, %973 : vector<16x16xf32>
    %1001 = arith.addf %971, %1000 : vector<16x16xf32>
    %c3_153 = arith.constant 3 : index
    %c1_154 = arith.constant 1 : index
    %c2_155 = arith.constant 2 : index
    %1002 = vector.load %arg10[%c3_153, %c1_154, %c2_155] : memref<4x18x18xf32, #tpu.memory_space<vmem>>, vector<1x16x16xf32>
    %1003 = vector.shape_cast %1002 : vector<1x16x16xf32> to vector<16x16xf32>
    %c224 = arith.constant 224 : index
    %1004 = memref.load %arg3[%c224] : memref<252xf32, #tpu.memory_space<smem>>
    %1005 = vector.broadcast %1004 : f32 to vector<16x16xf32>
    %1006 = arith.mulf %1005, %1003 : vector<16x16xf32>
    %1007 = arith.addf %977, %1006 : vector<16x16xf32>
    %c225 = arith.constant 225 : index
    %1008 = memref.load %arg3[%c225] : memref<252xf32, #tpu.memory_space<smem>>
    %1009 = vector.broadcast %1008 : f32 to vector<16x16xf32>
    %1010 = arith.mulf %1009, %1003 : vector<16x16xf32>
    %1011 = arith.addf %981, %1010 : vector<16x16xf32>
    %c226 = arith.constant 226 : index
    %1012 = memref.load %arg3[%c226] : memref<252xf32, #tpu.memory_space<smem>>
    %1013 = vector.broadcast %1012 : f32 to vector<16x16xf32>
    %1014 = arith.mulf %1013, %1003 : vector<16x16xf32>
    %1015 = arith.addf %985, %1014 : vector<16x16xf32>
    %c227 = arith.constant 227 : index
    %1016 = memref.load %arg3[%c227] : memref<252xf32, #tpu.memory_space<smem>>
    %1017 = vector.broadcast %1016 : f32 to vector<16x16xf32>
    %1018 = arith.mulf %1017, %1003 : vector<16x16xf32>
    %1019 = arith.addf %989, %1018 : vector<16x16xf32>
    %c228 = arith.constant 228 : index
    %1020 = memref.load %arg3[%c228] : memref<252xf32, #tpu.memory_space<smem>>
    %1021 = vector.broadcast %1020 : f32 to vector<16x16xf32>
    %1022 = arith.mulf %1021, %1003 : vector<16x16xf32>
    %1023 = arith.addf %993, %1022 : vector<16x16xf32>
    %c229 = arith.constant 229 : index
    %1024 = memref.load %arg3[%c229] : memref<252xf32, #tpu.memory_space<smem>>
    %1025 = vector.broadcast %1024 : f32 to vector<16x16xf32>
    %1026 = arith.mulf %1025, %1003 : vector<16x16xf32>
    %1027 = arith.addf %997, %1026 : vector<16x16xf32>
    %c230 = arith.constant 230 : index
    %1028 = memref.load %arg3[%c230] : memref<252xf32, #tpu.memory_space<smem>>
    %1029 = vector.broadcast %1028 : f32 to vector<16x16xf32>
    %1030 = arith.mulf %1029, %1003 : vector<16x16xf32>
    %1031 = arith.addf %1001, %1030 : vector<16x16xf32>
    %c3_156 = arith.constant 3 : index
    %c2_157 = arith.constant 2 : index
    %c0_158 = arith.constant 0 : index
    %1032 = vector.load %arg10[%c3_156, %c2_157, %c0_158] : memref<4x18x18xf32, #tpu.memory_space<vmem>>, vector<1x16x16xf32>
    %1033 = vector.shape_cast %1032 : vector<1x16x16xf32> to vector<16x16xf32>
    %c231 = arith.constant 231 : index
    %1034 = memref.load %arg3[%c231] : memref<252xf32, #tpu.memory_space<smem>>
    %1035 = vector.broadcast %1034 : f32 to vector<16x16xf32>
    %1036 = arith.mulf %1035, %1033 : vector<16x16xf32>
    %1037 = arith.addf %1007, %1036 : vector<16x16xf32>
    %c232 = arith.constant 232 : index
    %1038 = memref.load %arg3[%c232] : memref<252xf32, #tpu.memory_space<smem>>
    %1039 = vector.broadcast %1038 : f32 to vector<16x16xf32>
    %1040 = arith.mulf %1039, %1033 : vector<16x16xf32>
    %1041 = arith.addf %1011, %1040 : vector<16x16xf32>
    %c233 = arith.constant 233 : index
    %1042 = memref.load %arg3[%c233] : memref<252xf32, #tpu.memory_space<smem>>
    %1043 = vector.broadcast %1042 : f32 to vector<16x16xf32>
    %1044 = arith.mulf %1043, %1033 : vector<16x16xf32>
    %1045 = arith.addf %1015, %1044 : vector<16x16xf32>
    %c234 = arith.constant 234 : index
    %1046 = memref.load %arg3[%c234] : memref<252xf32, #tpu.memory_space<smem>>
    %1047 = vector.broadcast %1046 : f32 to vector<16x16xf32>
    %1048 = arith.mulf %1047, %1033 : vector<16x16xf32>
    %1049 = arith.addf %1019, %1048 : vector<16x16xf32>
    %c235 = arith.constant 235 : index
    %1050 = memref.load %arg3[%c235] : memref<252xf32, #tpu.memory_space<smem>>
    %1051 = vector.broadcast %1050 : f32 to vector<16x16xf32>
    %1052 = arith.mulf %1051, %1033 : vector<16x16xf32>
    %1053 = arith.addf %1023, %1052 : vector<16x16xf32>
    %c236 = arith.constant 236 : index
    %1054 = memref.load %arg3[%c236] : memref<252xf32, #tpu.memory_space<smem>>
    %1055 = vector.broadcast %1054 : f32 to vector<16x16xf32>
    %1056 = arith.mulf %1055, %1033 : vector<16x16xf32>
    %1057 = arith.addf %1027, %1056 : vector<16x16xf32>
    %c237 = arith.constant 237 : index
    %1058 = memref.load %arg3[%c237] : memref<252xf32, #tpu.memory_space<smem>>
    %1059 = vector.broadcast %1058 : f32 to vector<16x16xf32>
    %1060 = arith.mulf %1059, %1033 : vector<16x16xf32>
    %1061 = arith.addf %1031, %1060 : vector<16x16xf32>
    %c3_159 = arith.constant 3 : index
    %c2_160 = arith.constant 2 : index
    %c1_161 = arith.constant 1 : index
    %1062 = vector.load %arg10[%c3_159, %c2_160, %c1_161] : memref<4x18x18xf32, #tpu.memory_space<vmem>>, vector<1x16x16xf32>
    %1063 = vector.shape_cast %1062 : vector<1x16x16xf32> to vector<16x16xf32>
    %c238 = arith.constant 238 : index
    %1064 = memref.load %arg3[%c238] : memref<252xf32, #tpu.memory_space<smem>>
    %1065 = vector.broadcast %1064 : f32 to vector<16x16xf32>
    %1066 = arith.mulf %1065, %1063 : vector<16x16xf32>
    %1067 = arith.addf %1037, %1066 : vector<16x16xf32>
    %c239 = arith.constant 239 : index
    %1068 = memref.load %arg3[%c239] : memref<252xf32, #tpu.memory_space<smem>>
    %1069 = vector.broadcast %1068 : f32 to vector<16x16xf32>
    %1070 = arith.mulf %1069, %1063 : vector<16x16xf32>
    %1071 = arith.addf %1041, %1070 : vector<16x16xf32>
    %c240 = arith.constant 240 : index
    %1072 = memref.load %arg3[%c240] : memref<252xf32, #tpu.memory_space<smem>>
    %1073 = vector.broadcast %1072 : f32 to vector<16x16xf32>
    %1074 = arith.mulf %1073, %1063 : vector<16x16xf32>
    %1075 = arith.addf %1045, %1074 : vector<16x16xf32>
    %c241 = arith.constant 241 : index
    %1076 = memref.load %arg3[%c241] : memref<252xf32, #tpu.memory_space<smem>>
    %1077 = vector.broadcast %1076 : f32 to vector<16x16xf32>
    %1078 = arith.mulf %1077, %1063 : vector<16x16xf32>
    %1079 = arith.addf %1049, %1078 : vector<16x16xf32>
    %c242 = arith.constant 242 : index
    %1080 = memref.load %arg3[%c242] : memref<252xf32, #tpu.memory_space<smem>>
    %1081 = vector.broadcast %1080 : f32 to vector<16x16xf32>
    %1082 = arith.mulf %1081, %1063 : vector<16x16xf32>
    %1083 = arith.addf %1053, %1082 : vector<16x16xf32>
    %c243 = arith.constant 243 : index
    %1084 = memref.load %arg3[%c243] : memref<252xf32, #tpu.memory_space<smem>>
    %1085 = vector.broadcast %1084 : f32 to vector<16x16xf32>
    %1086 = arith.mulf %1085, %1063 : vector<16x16xf32>
    %1087 = arith.addf %1057, %1086 : vector<16x16xf32>
    %c244 = arith.constant 244 : index
    %1088 = memref.load %arg3[%c244] : memref<252xf32, #tpu.memory_space<smem>>
    %1089 = vector.broadcast %1088 : f32 to vector<16x16xf32>
    %1090 = arith.mulf %1089, %1063 : vector<16x16xf32>
    %1091 = arith.addf %1061, %1090 : vector<16x16xf32>
    %c3_162 = arith.constant 3 : index
    %c2_163 = arith.constant 2 : index
    %c2_164 = arith.constant 2 : index
    %1092 = vector.load %arg10[%c3_162, %c2_163, %c2_164] : memref<4x18x18xf32, #tpu.memory_space<vmem>>, vector<1x16x16xf32>
    %1093 = vector.shape_cast %1092 : vector<1x16x16xf32> to vector<16x16xf32>
    %c245 = arith.constant 245 : index
    %1094 = memref.load %arg3[%c245] : memref<252xf32, #tpu.memory_space<smem>>
    %1095 = vector.broadcast %1094 : f32 to vector<16x16xf32>
    %1096 = arith.mulf %1095, %1093 : vector<16x16xf32>
    %1097 = arith.addf %1067, %1096 : vector<16x16xf32>
    %c246 = arith.constant 246 : index
    %1098 = memref.load %arg3[%c246] : memref<252xf32, #tpu.memory_space<smem>>
    %1099 = vector.broadcast %1098 : f32 to vector<16x16xf32>
    %1100 = arith.mulf %1099, %1093 : vector<16x16xf32>
    %1101 = arith.addf %1071, %1100 : vector<16x16xf32>
    %c247 = arith.constant 247 : index
    %1102 = memref.load %arg3[%c247] : memref<252xf32, #tpu.memory_space<smem>>
    %1103 = vector.broadcast %1102 : f32 to vector<16x16xf32>
    %1104 = arith.mulf %1103, %1093 : vector<16x16xf32>
    %1105 = arith.addf %1075, %1104 : vector<16x16xf32>
    %c248 = arith.constant 248 : index
    %1106 = memref.load %arg3[%c248] : memref<252xf32, #tpu.memory_space<smem>>
    %1107 = vector.broadcast %1106 : f32 to vector<16x16xf32>
    %1108 = arith.mulf %1107, %1093 : vector<16x16xf32>
    %1109 = arith.addf %1079, %1108 : vector<16x16xf32>
    %c249 = arith.constant 249 : index
    %1110 = memref.load %arg3[%c249] : memref<252xf32, #tpu.memory_space<smem>>
    %1111 = vector.broadcast %1110 : f32 to vector<16x16xf32>
    %1112 = arith.mulf %1111, %1093 : vector<16x16xf32>
    %1113 = arith.addf %1083, %1112 : vector<16x16xf32>
    %c250 = arith.constant 250 : index
    %1114 = memref.load %arg3[%c250] : memref<252xf32, #tpu.memory_space<smem>>
    %1115 = vector.broadcast %1114 : f32 to vector<16x16xf32>
    %1116 = arith.mulf %1115, %1093 : vector<16x16xf32>
    %1117 = arith.addf %1087, %1116 : vector<16x16xf32>
    %c251 = arith.constant 251 : index
    %1118 = memref.load %arg3[%c251] : memref<252xf32, #tpu.memory_space<smem>>
    %1119 = vector.broadcast %1118 : f32 to vector<16x16xf32>
    %1120 = arith.mulf %1119, %1093 : vector<16x16xf32>
    %1121 = arith.addf %1091, %1120 : vector<16x16xf32>
    %c0_165 = arith.constant 0 : index
    %c0_166 = arith.constant 0 : index
    %c0_167 = arith.constant 0 : index
    %c0_168 = arith.constant 0 : index
    %1122 = vector.load %arg9[%c0_165, %c0_166, %c0_167, %c0_168] : memref<1x3x16x16xf32, #tpu.memory_space<vmem>>, vector<1x1x16x16xf32>
    %1123 = vector.shape_cast %1122 : vector<1x1x16x16xf32> to vector<16x16xf32>
    %1124 = vector.shape_cast %1113 : vector<16x16xf32> to vector<1x1x16x16xf32>
    tpu.vector_store %arg9[%c0_165, %c0_166, %c0_167, %c0_168], %1124 {strides = array<i32>} : memref<1x3x16x16xf32, #tpu.memory_space<vmem>>, vector<1x1x16x16xf32>,
    %c0_169 = arith.constant 0 : index
    %c1_170 = arith.constant 1 : index
    %c1_171 = arith.constant 1 : index
    %1125 = vector.load %arg11[%c0_169, %c1_170, %c1_171] : memref<3x18x18xf32, #tpu.memory_space<vmem>>, vector<1x16x16xf32>
    %1126 = vector.shape_cast %1125 : vector<1x16x16xf32> to vector<16x16xf32>
    %1127 = vector.shape_cast %1113 : vector<16x16xf32> to vector<1x16x16xf32>
    tpu.vector_store %arg11[%c0_169, %c1_170, %c1_171], %1127 {strides = array<i32>} : memref<3x18x18xf32, #tpu.memory_space<vmem>>, vector<1x16x16xf32>,
    %c0_172 = arith.constant 0 : index
    %c1_173 = arith.constant 1 : index
    %c0_174 = arith.constant 0 : index
    %c0_175 = arith.constant 0 : index
    %1128 = vector.load %arg9[%c0_172, %c1_173, %c0_174, %c0_175] : memref<1x3x16x16xf32, #tpu.memory_space<vmem>>, vector<1x1x16x16xf32>
    %1129 = vector.shape_cast %1128 : vector<1x1x16x16xf32> to vector<16x16xf32>
    %1130 = vector.shape_cast %1117 : vector<16x16xf32> to vector<1x1x16x16xf32>
    tpu.vector_store %arg9[%c0_172, %c1_173, %c0_174, %c0_175], %1130 {strides = array<i32>} : memref<1x3x16x16xf32, #tpu.memory_space<vmem>>, vector<1x1x16x16xf32>,
    %c1_176 = arith.constant 1 : index
    %c1_177 = arith.constant 1 : index
    %c1_178 = arith.constant 1 : index
    %1131 = vector.load %arg11[%c1_176, %c1_177, %c1_178] : memref<3x18x18xf32, #tpu.memory_space<vmem>>, vector<1x16x16xf32>
    %1132 = vector.shape_cast %1131 : vector<1x16x16xf32> to vector<16x16xf32>
    %1133 = vector.shape_cast %1117 : vector<16x16xf32> to vector<1x16x16xf32>
    tpu.vector_store %arg11[%c1_176, %c1_177, %c1_178], %1133 {strides = array<i32>} : memref<3x18x18xf32, #tpu.memory_space<vmem>>, vector<1x16x16xf32>,
    %c0_179 = arith.constant 0 : index
    %c2_180 = arith.constant 2 : index
    %c0_181 = arith.constant 0 : index
    %c0_182 = arith.constant 0 : index
    %1134 = vector.load %arg9[%c0_179, %c2_180, %c0_181, %c0_182] : memref<1x3x16x16xf32, #tpu.memory_space<vmem>>, vector<1x1x16x16xf32>
    %1135 = vector.shape_cast %1134 : vector<1x1x16x16xf32> to vector<16x16xf32>
    %1136 = vector.shape_cast %1121 : vector<16x16xf32> to vector<1x1x16x16xf32>
    tpu.vector_store %arg9[%c0_179, %c2_180, %c0_181, %c0_182], %1136 {strides = array<i32>} : memref<1x3x16x16xf32, #tpu.memory_space<vmem>>, vector<1x1x16x16xf32>,
    %c2_183 = arith.constant 2 : index
    %c1_184 = arith.constant 1 : index
    %c1_185 = arith.constant 1 : index
    %1137 = vector.load %arg11[%c2_183, %c1_184, %c1_185] : memref<3x18x18xf32, #tpu.memory_space<vmem>>, vector<1x16x16xf32>
    %1138 = vector.shape_cast %1137 : vector<1x16x16xf32> to vector<16x16xf32>
    %1139 = vector.shape_cast %1121 : vector<16x16xf32> to vector<1x16x16xf32>
    tpu.vector_store %arg11[%c2_183, %c1_184, %c1_185], %1139 {strides = array<i32>} : memref<3x18x18xf32, #tpu.memory_space<vmem>>, vector<1x16x16xf32>,
    %c0_186 = arith.constant 0 : index
    %1140 = memref.load %arg7[%c0_186] : memref<4xf32, #tpu.memory_space<smem>>
    %1141 = vector.broadcast %1140 : f32 to vector<16x16xf32>
    %c1_187 = arith.constant 1 : index
    %1142 = memref.load %arg7[%c1_187] : memref<4xf32, #tpu.memory_space<smem>>
    %1143 = vector.broadcast %1142 : f32 to vector<16x16xf32>
    %c2_188 = arith.constant 2 : index
    %1144 = memref.load %arg7[%c2_188] : memref<4xf32, #tpu.memory_space<smem>>
    %1145 = vector.broadcast %1144 : f32 to vector<16x16xf32>
    %c3_189 = arith.constant 3 : index
    %1146 = memref.load %arg7[%c3_189] : memref<4xf32, #tpu.memory_space<smem>>
    %1147 = vector.broadcast %1146 : f32 to vector<16x16xf32>
    %c0_190 = arith.constant 0 : index
    %c0_191 = arith.constant 0 : index
    %c0_192 = arith.constant 0 : index
    %1148 = vector.load %arg11[%c0_190, %c0_191, %c0_192] : memref<3x18x18xf32, #tpu.memory_space<vmem>>, vector<1x16x16xf32>
    %1149 = vector.shape_cast %1148 : vector<1x16x16xf32> to vector<16x16xf32>
    %c0_193 = arith.constant 0 : index
    %1150 = memref.load %arg6[%c0_193] : memref<108xf32, #tpu.memory_space<smem>>
    %1151 = vector.broadcast %1150 : f32 to vector<16x16xf32>
    %1152 = arith.mulf %1151, %1149 : vector<16x16xf32>
    %1153 = arith.addf %1141, %1152 : vector<16x16xf32>
    %c1_194 = arith.constant 1 : index
    %1154 = memref.load %arg6[%c1_194] : memref<108xf32, #tpu.memory_space<smem>>
    %1155 = vector.broadcast %1154 : f32 to vector<16x16xf32>
    %1156 = arith.mulf %1155, %1149 : vector<16x16xf32>
    %1157 = arith.addf %1143, %1156 : vector<16x16xf32>
    %c2_195 = arith.constant 2 : index
    %1158 = memref.load %arg6[%c2_195] : memref<108xf32, #tpu.memory_space<smem>>
    %1159 = vector.broadcast %1158 : f32 to vector<16x16xf32>
    %1160 = arith.mulf %1159, %1149 : vector<16x16xf32>
    %1161 = arith.addf %1145, %1160 : vector<16x16xf32>
    %c3_196 = arith.constant 3 : index
    %1162 = memref.load %arg6[%c3_196] : memref<108xf32, #tpu.memory_space<smem>>
    %1163 = vector.broadcast %1162 : f32 to vector<16x16xf32>
    %1164 = arith.mulf %1163, %1149 : vector<16x16xf32>
    %1165 = arith.addf %1147, %1164 : vector<16x16xf32>
    %c0_197 = arith.constant 0 : index
    %c0_198 = arith.constant 0 : index
    %c1_199 = arith.constant 1 : index
    %1166 = vector.load %arg11[%c0_197, %c0_198, %c1_199] : memref<3x18x18xf32, #tpu.memory_space<vmem>>, vector<1x16x16xf32>
    %1167 = vector.shape_cast %1166 : vector<1x16x16xf32> to vector<16x16xf32>
    %c4_200 = arith.constant 4 : index
    %1168 = memref.load %arg6[%c4_200] : memref<108xf32, #tpu.memory_space<smem>>
    %1169 = vector.broadcast %1168 : f32 to vector<16x16xf32>
    %1170 = arith.mulf %1169, %1167 : vector<16x16xf32>
    %1171 = arith.addf %1153, %1170 : vector<16x16xf32>
    %c5_201 = arith.constant 5 : index
    %1172 = memref.load %arg6[%c5_201] : memref<108xf32, #tpu.memory_space<smem>>
    %1173 = vector.broadcast %1172 : f32 to vector<16x16xf32>
    %1174 = arith.mulf %1173, %1167 : vector<16x16xf32>
    %1175 = arith.addf %1157, %1174 : vector<16x16xf32>
    %c6_202 = arith.constant 6 : index
    %1176 = memref.load %arg6[%c6_202] : memref<108xf32, #tpu.memory_space<smem>>
    %1177 = vector.broadcast %1176 : f32 to vector<16x16xf32>
    %1178 = arith.mulf %1177, %1167 : vector<16x16xf32>
    %1179 = arith.addf %1161, %1178 : vector<16x16xf32>
    %c7_203 = arith.constant 7 : index
    %1180 = memref.load %arg6[%c7_203] : memref<108xf32, #tpu.memory_space<smem>>
    %1181 = vector.broadcast %1180 : f32 to vector<16x16xf32>
    %1182 = arith.mulf %1181, %1167 : vector<16x16xf32>
    %1183 = arith.addf %1165, %1182 : vector<16x16xf32>
    %c0_204 = arith.constant 0 : index
    %c0_205 = arith.constant 0 : index
    %c2_206 = arith.constant 2 : index
    %1184 = vector.load %arg11[%c0_204, %c0_205, %c2_206] : memref<3x18x18xf32, #tpu.memory_space<vmem>>, vector<1x16x16xf32>
    %1185 = vector.shape_cast %1184 : vector<1x16x16xf32> to vector<16x16xf32>
    %c8_207 = arith.constant 8 : index
    %1186 = memref.load %arg6[%c8_207] : memref<108xf32, #tpu.memory_space<smem>>
    %1187 = vector.broadcast %1186 : f32 to vector<16x16xf32>
    %1188 = arith.mulf %1187, %1185 : vector<16x16xf32>
    %1189 = arith.addf %1171, %1188 : vector<16x16xf32>
    %c9_208 = arith.constant 9 : index
    %1190 = memref.load %arg6[%c9_208] : memref<108xf32, #tpu.memory_space<smem>>
    %1191 = vector.broadcast %1190 : f32 to vector<16x16xf32>
    %1192 = arith.mulf %1191, %1185 : vector<16x16xf32>
    %1193 = arith.addf %1175, %1192 : vector<16x16xf32>
    %c10_209 = arith.constant 10 : index
    %1194 = memref.load %arg6[%c10_209] : memref<108xf32, #tpu.memory_space<smem>>
    %1195 = vector.broadcast %1194 : f32 to vector<16x16xf32>
    %1196 = arith.mulf %1195, %1185 : vector<16x16xf32>
    %1197 = arith.addf %1179, %1196 : vector<16x16xf32>
    %c11_210 = arith.constant 11 : index
    %1198 = memref.load %arg6[%c11_210] : memref<108xf32, #tpu.memory_space<smem>>
    %1199 = vector.broadcast %1198 : f32 to vector<16x16xf32>
    %1200 = arith.mulf %1199, %1185 : vector<16x16xf32>
    %1201 = arith.addf %1183, %1200 : vector<16x16xf32>
    %c0_211 = arith.constant 0 : index
    %c1_212 = arith.constant 1 : index
    %c0_213 = arith.constant 0 : index
    %1202 = vector.load %arg11[%c0_211, %c1_212, %c0_213] : memref<3x18x18xf32, #tpu.memory_space<vmem>>, vector<1x16x16xf32>
    %1203 = vector.shape_cast %1202 : vector<1x16x16xf32> to vector<16x16xf32>
    %c12_214 = arith.constant 12 : index
    %1204 = memref.load %arg6[%c12_214] : memref<108xf32, #tpu.memory_space<smem>>
    %1205 = vector.broadcast %1204 : f32 to vector<16x16xf32>
    %1206 = arith.mulf %1205, %1203 : vector<16x16xf32>
    %1207 = arith.addf %1189, %1206 : vector<16x16xf32>
    %c13_215 = arith.constant 13 : index
    %1208 = memref.load %arg6[%c13_215] : memref<108xf32, #tpu.memory_space<smem>>
    %1209 = vector.broadcast %1208 : f32 to vector<16x16xf32>
    %1210 = arith.mulf %1209, %1203 : vector<16x16xf32>
    %1211 = arith.addf %1193, %1210 : vector<16x16xf32>
    %c14_216 = arith.constant 14 : index
    %1212 = memref.load %arg6[%c14_216] : memref<108xf32, #tpu.memory_space<smem>>
    %1213 = vector.broadcast %1212 : f32 to vector<16x16xf32>
    %1214 = arith.mulf %1213, %1203 : vector<16x16xf32>
    %1215 = arith.addf %1197, %1214 : vector<16x16xf32>
    %c15_217 = arith.constant 15 : index
    %1216 = memref.load %arg6[%c15_217] : memref<108xf32, #tpu.memory_space<smem>>
    %1217 = vector.broadcast %1216 : f32 to vector<16x16xf32>
    %1218 = arith.mulf %1217, %1203 : vector<16x16xf32>
    %1219 = arith.addf %1201, %1218 : vector<16x16xf32>
    %c0_218 = arith.constant 0 : index
    %c1_219 = arith.constant 1 : index
    %c1_220 = arith.constant 1 : index
    %1220 = vector.load %arg11[%c0_218, %c1_219, %c1_220] : memref<3x18x18xf32, #tpu.memory_space<vmem>>, vector<1x16x16xf32>
    %1221 = vector.shape_cast %1220 : vector<1x16x16xf32> to vector<16x16xf32>
    %c16_221 = arith.constant 16 : index
    %1222 = memref.load %arg6[%c16_221] : memref<108xf32, #tpu.memory_space<smem>>
    %1223 = vector.broadcast %1222 : f32 to vector<16x16xf32>
    %1224 = arith.mulf %1223, %1221 : vector<16x16xf32>
    %1225 = arith.addf %1207, %1224 : vector<16x16xf32>
    %c17_222 = arith.constant 17 : index
    %1226 = memref.load %arg6[%c17_222] : memref<108xf32, #tpu.memory_space<smem>>
    %1227 = vector.broadcast %1226 : f32 to vector<16x16xf32>
    %1228 = arith.mulf %1227, %1221 : vector<16x16xf32>
    %1229 = arith.addf %1211, %1228 : vector<16x16xf32>
    %c18_223 = arith.constant 18 : index
    %1230 = memref.load %arg6[%c18_223] : memref<108xf32, #tpu.memory_space<smem>>
    %1231 = vector.broadcast %1230 : f32 to vector<16x16xf32>
    %1232 = arith.mulf %1231, %1221 : vector<16x16xf32>
    %1233 = arith.addf %1215, %1232 : vector<16x16xf32>
    %c19_224 = arith.constant 19 : index
    %1234 = memref.load %arg6[%c19_224] : memref<108xf32, #tpu.memory_space<smem>>
    %1235 = vector.broadcast %1234 : f32 to vector<16x16xf32>
    %1236 = arith.mulf %1235, %1221 : vector<16x16xf32>
    %1237 = arith.addf %1219, %1236 : vector<16x16xf32>
    %c0_225 = arith.constant 0 : index
    %c1_226 = arith.constant 1 : index
    %c2_227 = arith.constant 2 : index
    %1238 = vector.load %arg11[%c0_225, %c1_226, %c2_227] : memref<3x18x18xf32, #tpu.memory_space<vmem>>, vector<1x16x16xf32>
    %1239 = vector.shape_cast %1238 : vector<1x16x16xf32> to vector<16x16xf32>
    %c20_228 = arith.constant 20 : index
    %1240 = memref.load %arg6[%c20_228] : memref<108xf32, #tpu.memory_space<smem>>
    %1241 = vector.broadcast %1240 : f32 to vector<16x16xf32>
    %1242 = arith.mulf %1241, %1239 : vector<16x16xf32>
    %1243 = arith.addf %1225, %1242 : vector<16x16xf32>
    %c21_229 = arith.constant 21 : index
    %1244 = memref.load %arg6[%c21_229] : memref<108xf32, #tpu.memory_space<smem>>
    %1245 = vector.broadcast %1244 : f32 to vector<16x16xf32>
    %1246 = arith.mulf %1245, %1239 : vector<16x16xf32>
    %1247 = arith.addf %1229, %1246 : vector<16x16xf32>
    %c22_230 = arith.constant 22 : index
    %1248 = memref.load %arg6[%c22_230] : memref<108xf32, #tpu.memory_space<smem>>
    %1249 = vector.broadcast %1248 : f32 to vector<16x16xf32>
    %1250 = arith.mulf %1249, %1239 : vector<16x16xf32>
    %1251 = arith.addf %1233, %1250 : vector<16x16xf32>
    %c23_231 = arith.constant 23 : index
    %1252 = memref.load %arg6[%c23_231] : memref<108xf32, #tpu.memory_space<smem>>
    %1253 = vector.broadcast %1252 : f32 to vector<16x16xf32>
    %1254 = arith.mulf %1253, %1239 : vector<16x16xf32>
    %1255 = arith.addf %1237, %1254 : vector<16x16xf32>
    %c0_232 = arith.constant 0 : index
    %c2_233 = arith.constant 2 : index
    %c0_234 = arith.constant 0 : index
    %1256 = vector.load %arg11[%c0_232, %c2_233, %c0_234] : memref<3x18x18xf32, #tpu.memory_space<vmem>>, vector<1x16x16xf32>
    %1257 = vector.shape_cast %1256 : vector<1x16x16xf32> to vector<16x16xf32>
    %c24_235 = arith.constant 24 : index
    %1258 = memref.load %arg6[%c24_235] : memref<108xf32, #tpu.memory_space<smem>>
    %1259 = vector.broadcast %1258 : f32 to vector<16x16xf32>
    %1260 = arith.mulf %1259, %1257 : vector<16x16xf32>
    %1261 = arith.addf %1243, %1260 : vector<16x16xf32>
    %c25_236 = arith.constant 25 : index
    %1262 = memref.load %arg6[%c25_236] : memref<108xf32, #tpu.memory_space<smem>>
    %1263 = vector.broadcast %1262 : f32 to vector<16x16xf32>
    %1264 = arith.mulf %1263, %1257 : vector<16x16xf32>
    %1265 = arith.addf %1247, %1264 : vector<16x16xf32>
    %c26_237 = arith.constant 26 : index
    %1266 = memref.load %arg6[%c26_237] : memref<108xf32, #tpu.memory_space<smem>>
    %1267 = vector.broadcast %1266 : f32 to vector<16x16xf32>
    %1268 = arith.mulf %1267, %1257 : vector<16x16xf32>
    %1269 = arith.addf %1251, %1268 : vector<16x16xf32>
    %c27_238 = arith.constant 27 : index
    %1270 = memref.load %arg6[%c27_238] : memref<108xf32, #tpu.memory_space<smem>>
    %1271 = vector.broadcast %1270 : f32 to vector<16x16xf32>
    %1272 = arith.mulf %1271, %1257 : vector<16x16xf32>
    %1273 = arith.addf %1255, %1272 : vector<16x16xf32>
    %c0_239 = arith.constant 0 : index
    %c2_240 = arith.constant 2 : index
    %c1_241 = arith.constant 1 : index
    %1274 = vector.load %arg11[%c0_239, %c2_240, %c1_241] : memref<3x18x18xf32, #tpu.memory_space<vmem>>, vector<1x16x16xf32>
    %1275 = vector.shape_cast %1274 : vector<1x16x16xf32> to vector<16x16xf32>
    %c28_242 = arith.constant 28 : index
    %1276 = memref.load %arg6[%c28_242] : memref<108xf32, #tpu.memory_space<smem>>
    %1277 = vector.broadcast %1276 : f32 to vector<16x16xf32>
    %1278 = arith.mulf %1277, %1275 : vector<16x16xf32>
    %1279 = arith.addf %1261, %1278 : vector<16x16xf32>
    %c29_243 = arith.constant 29 : index
    %1280 = memref.load %arg6[%c29_243] : memref<108xf32, #tpu.memory_space<smem>>
    %1281 = vector.broadcast %1280 : f32 to vector<16x16xf32>
    %1282 = arith.mulf %1281, %1275 : vector<16x16xf32>
    %1283 = arith.addf %1265, %1282 : vector<16x16xf32>
    %c30_244 = arith.constant 30 : index
    %1284 = memref.load %arg6[%c30_244] : memref<108xf32, #tpu.memory_space<smem>>
    %1285 = vector.broadcast %1284 : f32 to vector<16x16xf32>
    %1286 = arith.mulf %1285, %1275 : vector<16x16xf32>
    %1287 = arith.addf %1269, %1286 : vector<16x16xf32>
    %c31_245 = arith.constant 31 : index
    %1288 = memref.load %arg6[%c31_245] : memref<108xf32, #tpu.memory_space<smem>>
    %1289 = vector.broadcast %1288 : f32 to vector<16x16xf32>
    %1290 = arith.mulf %1289, %1275 : vector<16x16xf32>
    %1291 = arith.addf %1273, %1290 : vector<16x16xf32>
    %c0_246 = arith.constant 0 : index
    %c2_247 = arith.constant 2 : index
    %c2_248 = arith.constant 2 : index
    %1292 = vector.load %arg11[%c0_246, %c2_247, %c2_248] : memref<3x18x18xf32, #tpu.memory_space<vmem>>, vector<1x16x16xf32>
    %1293 = vector.shape_cast %1292 : vector<1x16x16xf32> to vector<16x16xf32>
    %c32_249 = arith.constant 32 : index
    %1294 = memref.load %arg6[%c32_249] : memref<108xf32, #tpu.memory_space<smem>>
    %1295 = vector.broadcast %1294 : f32 to vector<16x16xf32>
    %1296 = arith.mulf %1295, %1293 : vector<16x16xf32>
    %1297 = arith.addf %1279, %1296 : vector<16x16xf32>
    %c33_250 = arith.constant 33 : index
    %1298 = memref.load %arg6[%c33_250] : memref<108xf32, #tpu.memory_space<smem>>
    %1299 = vector.broadcast %1298 : f32 to vector<16x16xf32>
    %1300 = arith.mulf %1299, %1293 : vector<16x16xf32>
    %1301 = arith.addf %1283, %1300 : vector<16x16xf32>
    %c34_251 = arith.constant 34 : index
    %1302 = memref.load %arg6[%c34_251] : memref<108xf32, #tpu.memory_space<smem>>
    %1303 = vector.broadcast %1302 : f32 to vector<16x16xf32>
    %1304 = arith.mulf %1303, %1293 : vector<16x16xf32>
    %1305 = arith.addf %1287, %1304 : vector<16x16xf32>
    %c35_252 = arith.constant 35 : index
    %1306 = memref.load %arg6[%c35_252] : memref<108xf32, #tpu.memory_space<smem>>
    %1307 = vector.broadcast %1306 : f32 to vector<16x16xf32>
    %1308 = arith.mulf %1307, %1293 : vector<16x16xf32>
    %1309 = arith.addf %1291, %1308 : vector<16x16xf32>
    %c1_253 = arith.constant 1 : index
    %c0_254 = arith.constant 0 : index
    %c0_255 = arith.constant 0 : index
    %1310 = vector.load %arg11[%c1_253, %c0_254, %c0_255] : memref<3x18x18xf32, #tpu.memory_space<vmem>>, vector<1x16x16xf32>
    %1311 = vector.shape_cast %1310 : vector<1x16x16xf32> to vector<16x16xf32>
    %c36_256 = arith.constant 36 : index
    %1312 = memref.load %arg6[%c36_256] : memref<108xf32, #tpu.memory_space<smem>>
    %1313 = vector.broadcast %1312 : f32 to vector<16x16xf32>
    %1314 = arith.mulf %1313, %1311 : vector<16x16xf32>
    %1315 = arith.addf %1297, %1314 : vector<16x16xf32>
    %c37_257 = arith.constant 37 : index
    %1316 = memref.load %arg6[%c37_257] : memref<108xf32, #tpu.memory_space<smem>>
    %1317 = vector.broadcast %1316 : f32 to vector<16x16xf32>
    %1318 = arith.mulf %1317, %1311 : vector<16x16xf32>
    %1319 = arith.addf %1301, %1318 : vector<16x16xf32>
    %c38_258 = arith.constant 38 : index
    %1320 = memref.load %arg6[%c38_258] : memref<108xf32, #tpu.memory_space<smem>>
    %1321 = vector.broadcast %1320 : f32 to vector<16x16xf32>
    %1322 = arith.mulf %1321, %1311 : vector<16x16xf32>
    %1323 = arith.addf %1305, %1322 : vector<16x16xf32>
    %c39_259 = arith.constant 39 : index
    %1324 = memref.load %arg6[%c39_259] : memref<108xf32, #tpu.memory_space<smem>>
    %1325 = vector.broadcast %1324 : f32 to vector<16x16xf32>
    %1326 = arith.mulf %1325, %1311 : vector<16x16xf32>
    %1327 = arith.addf %1309, %1326 : vector<16x16xf32>
    %c1_260 = arith.constant 1 : index
    %c0_261 = arith.constant 0 : index
    %c1_262 = arith.constant 1 : index
    %1328 = vector.load %arg11[%c1_260, %c0_261, %c1_262] : memref<3x18x18xf32, #tpu.memory_space<vmem>>, vector<1x16x16xf32>
    %1329 = vector.shape_cast %1328 : vector<1x16x16xf32> to vector<16x16xf32>
    %c40_263 = arith.constant 40 : index
    %1330 = memref.load %arg6[%c40_263] : memref<108xf32, #tpu.memory_space<smem>>
    %1331 = vector.broadcast %1330 : f32 to vector<16x16xf32>
    %1332 = arith.mulf %1331, %1329 : vector<16x16xf32>
    %1333 = arith.addf %1315, %1332 : vector<16x16xf32>
    %c41_264 = arith.constant 41 : index
    %1334 = memref.load %arg6[%c41_264] : memref<108xf32, #tpu.memory_space<smem>>
    %1335 = vector.broadcast %1334 : f32 to vector<16x16xf32>
    %1336 = arith.mulf %1335, %1329 : vector<16x16xf32>
    %1337 = arith.addf %1319, %1336 : vector<16x16xf32>
    %c42_265 = arith.constant 42 : index
    %1338 = memref.load %arg6[%c42_265] : memref<108xf32, #tpu.memory_space<smem>>
    %1339 = vector.broadcast %1338 : f32 to vector<16x16xf32>
    %1340 = arith.mulf %1339, %1329 : vector<16x16xf32>
    %1341 = arith.addf %1323, %1340 : vector<16x16xf32>
    %c43_266 = arith.constant 43 : index
    %1342 = memref.load %arg6[%c43_266] : memref<108xf32, #tpu.memory_space<smem>>
    %1343 = vector.broadcast %1342 : f32 to vector<16x16xf32>
    %1344 = arith.mulf %1343, %1329 : vector<16x16xf32>
    %1345 = arith.addf %1327, %1344 : vector<16x16xf32>
    %c1_267 = arith.constant 1 : index
    %c0_268 = arith.constant 0 : index
    %c2_269 = arith.constant 2 : index
    %1346 = vector.load %arg11[%c1_267, %c0_268, %c2_269] : memref<3x18x18xf32, #tpu.memory_space<vmem>>, vector<1x16x16xf32>
    %1347 = vector.shape_cast %1346 : vector<1x16x16xf32> to vector<16x16xf32>
    %c44_270 = arith.constant 44 : index
    %1348 = memref.load %arg6[%c44_270] : memref<108xf32, #tpu.memory_space<smem>>
    %1349 = vector.broadcast %1348 : f32 to vector<16x16xf32>
    %1350 = arith.mulf %1349, %1347 : vector<16x16xf32>
    %1351 = arith.addf %1333, %1350 : vector<16x16xf32>
    %c45_271 = arith.constant 45 : index
    %1352 = memref.load %arg6[%c45_271] : memref<108xf32, #tpu.memory_space<smem>>
    %1353 = vector.broadcast %1352 : f32 to vector<16x16xf32>
    %1354 = arith.mulf %1353, %1347 : vector<16x16xf32>
    %1355 = arith.addf %1337, %1354 : vector<16x16xf32>
    %c46_272 = arith.constant 46 : index
    %1356 = memref.load %arg6[%c46_272] : memref<108xf32, #tpu.memory_space<smem>>
    %1357 = vector.broadcast %1356 : f32 to vector<16x16xf32>
    %1358 = arith.mulf %1357, %1347 : vector<16x16xf32>
    %1359 = arith.addf %1341, %1358 : vector<16x16xf32>
    %c47_273 = arith.constant 47 : index
    %1360 = memref.load %arg6[%c47_273] : memref<108xf32, #tpu.memory_space<smem>>
    %1361 = vector.broadcast %1360 : f32 to vector<16x16xf32>
    %1362 = arith.mulf %1361, %1347 : vector<16x16xf32>
    %1363 = arith.addf %1345, %1362 : vector<16x16xf32>
    %c1_274 = arith.constant 1 : index
    %c1_275 = arith.constant 1 : index
    %c0_276 = arith.constant 0 : index
    %1364 = vector.load %arg11[%c1_274, %c1_275, %c0_276] : memref<3x18x18xf32, #tpu.memory_space<vmem>>, vector<1x16x16xf32>
    %1365 = vector.shape_cast %1364 : vector<1x16x16xf32> to vector<16x16xf32>
    %c48_277 = arith.constant 48 : index
    %1366 = memref.load %arg6[%c48_277] : memref<108xf32, #tpu.memory_space<smem>>
    %1367 = vector.broadcast %1366 : f32 to vector<16x16xf32>
    %1368 = arith.mulf %1367, %1365 : vector<16x16xf32>
    %1369 = arith.addf %1351, %1368 : vector<16x16xf32>
    %c49_278 = arith.constant 49 : index
    %1370 = memref.load %arg6[%c49_278] : memref<108xf32, #tpu.memory_space<smem>>
    %1371 = vector.broadcast %1370 : f32 to vector<16x16xf32>
    %1372 = arith.mulf %1371, %1365 : vector<16x16xf32>
    %1373 = arith.addf %1355, %1372 : vector<16x16xf32>
    %c50_279 = arith.constant 50 : index
    %1374 = memref.load %arg6[%c50_279] : memref<108xf32, #tpu.memory_space<smem>>
    %1375 = vector.broadcast %1374 : f32 to vector<16x16xf32>
    %1376 = arith.mulf %1375, %1365 : vector<16x16xf32>
    %1377 = arith.addf %1359, %1376 : vector<16x16xf32>
    %c51_280 = arith.constant 51 : index
    %1378 = memref.load %arg6[%c51_280] : memref<108xf32, #tpu.memory_space<smem>>
    %1379 = vector.broadcast %1378 : f32 to vector<16x16xf32>
    %1380 = arith.mulf %1379, %1365 : vector<16x16xf32>
    %1381 = arith.addf %1363, %1380 : vector<16x16xf32>
    %c1_281 = arith.constant 1 : index
    %c1_282 = arith.constant 1 : index
    %c1_283 = arith.constant 1 : index
    %1382 = vector.load %arg11[%c1_281, %c1_282, %c1_283] : memref<3x18x18xf32, #tpu.memory_space<vmem>>, vector<1x16x16xf32>
    %1383 = vector.shape_cast %1382 : vector<1x16x16xf32> to vector<16x16xf32>
    %c52_284 = arith.constant 52 : index
    %1384 = memref.load %arg6[%c52_284] : memref<108xf32, #tpu.memory_space<smem>>
    %1385 = vector.broadcast %1384 : f32 to vector<16x16xf32>
    %1386 = arith.mulf %1385, %1383 : vector<16x16xf32>
    %1387 = arith.addf %1369, %1386 : vector<16x16xf32>
    %c53_285 = arith.constant 53 : index
    %1388 = memref.load %arg6[%c53_285] : memref<108xf32, #tpu.memory_space<smem>>
    %1389 = vector.broadcast %1388 : f32 to vector<16x16xf32>
    %1390 = arith.mulf %1389, %1383 : vector<16x16xf32>
    %1391 = arith.addf %1373, %1390 : vector<16x16xf32>
    %c54_286 = arith.constant 54 : index
    %1392 = memref.load %arg6[%c54_286] : memref<108xf32, #tpu.memory_space<smem>>
    %1393 = vector.broadcast %1392 : f32 to vector<16x16xf32>
    %1394 = arith.mulf %1393, %1383 : vector<16x16xf32>
    %1395 = arith.addf %1377, %1394 : vector<16x16xf32>
    %c55_287 = arith.constant 55 : index
    %1396 = memref.load %arg6[%c55_287] : memref<108xf32, #tpu.memory_space<smem>>
    %1397 = vector.broadcast %1396 : f32 to vector<16x16xf32>
    %1398 = arith.mulf %1397, %1383 : vector<16x16xf32>
    %1399 = arith.addf %1381, %1398 : vector<16x16xf32>
    %c1_288 = arith.constant 1 : index
    %c1_289 = arith.constant 1 : index
    %c2_290 = arith.constant 2 : index
    %1400 = vector.load %arg11[%c1_288, %c1_289, %c2_290] : memref<3x18x18xf32, #tpu.memory_space<vmem>>, vector<1x16x16xf32>
    %1401 = vector.shape_cast %1400 : vector<1x16x16xf32> to vector<16x16xf32>
    %c56_291 = arith.constant 56 : index
    %1402 = memref.load %arg6[%c56_291] : memref<108xf32, #tpu.memory_space<smem>>
    %1403 = vector.broadcast %1402 : f32 to vector<16x16xf32>
    %1404 = arith.mulf %1403, %1401 : vector<16x16xf32>
    %1405 = arith.addf %1387, %1404 : vector<16x16xf32>
    %c57_292 = arith.constant 57 : index
    %1406 = memref.load %arg6[%c57_292] : memref<108xf32, #tpu.memory_space<smem>>
    %1407 = vector.broadcast %1406 : f32 to vector<16x16xf32>
    %1408 = arith.mulf %1407, %1401 : vector<16x16xf32>
    %1409 = arith.addf %1391, %1408 : vector<16x16xf32>
    %c58_293 = arith.constant 58 : index
    %1410 = memref.load %arg6[%c58_293] : memref<108xf32, #tpu.memory_space<smem>>
    %1411 = vector.broadcast %1410 : f32 to vector<16x16xf32>
    %1412 = arith.mulf %1411, %1401 : vector<16x16xf32>
    %1413 = arith.addf %1395, %1412 : vector<16x16xf32>
    %c59_294 = arith.constant 59 : index
    %1414 = memref.load %arg6[%c59_294] : memref<108xf32, #tpu.memory_space<smem>>
    %1415 = vector.broadcast %1414 : f32 to vector<16x16xf32>
    %1416 = arith.mulf %1415, %1401 : vector<16x16xf32>
    %1417 = arith.addf %1399, %1416 : vector<16x16xf32>
    %c1_295 = arith.constant 1 : index
    %c2_296 = arith.constant 2 : index
    %c0_297 = arith.constant 0 : index
    %1418 = vector.load %arg11[%c1_295, %c2_296, %c0_297] : memref<3x18x18xf32, #tpu.memory_space<vmem>>, vector<1x16x16xf32>
    %1419 = vector.shape_cast %1418 : vector<1x16x16xf32> to vector<16x16xf32>
    %c60_298 = arith.constant 60 : index
    %1420 = memref.load %arg6[%c60_298] : memref<108xf32, #tpu.memory_space<smem>>
    %1421 = vector.broadcast %1420 : f32 to vector<16x16xf32>
    %1422 = arith.mulf %1421, %1419 : vector<16x16xf32>
    %1423 = arith.addf %1405, %1422 : vector<16x16xf32>
    %c61_299 = arith.constant 61 : index
    %1424 = memref.load %arg6[%c61_299] : memref<108xf32, #tpu.memory_space<smem>>
    %1425 = vector.broadcast %1424 : f32 to vector<16x16xf32>
    %1426 = arith.mulf %1425, %1419 : vector<16x16xf32>
    %1427 = arith.addf %1409, %1426 : vector<16x16xf32>
    %c62_300 = arith.constant 62 : index
    %1428 = memref.load %arg6[%c62_300] : memref<108xf32, #tpu.memory_space<smem>>
    %1429 = vector.broadcast %1428 : f32 to vector<16x16xf32>
    %1430 = arith.mulf %1429, %1419 : vector<16x16xf32>
    %1431 = arith.addf %1413, %1430 : vector<16x16xf32>
    %c63_301 = arith.constant 63 : index
    %1432 = memref.load %arg6[%c63_301] : memref<108xf32, #tpu.memory_space<smem>>
    %1433 = vector.broadcast %1432 : f32 to vector<16x16xf32>
    %1434 = arith.mulf %1433, %1419 : vector<16x16xf32>
    %1435 = arith.addf %1417, %1434 : vector<16x16xf32>
    %c1_302 = arith.constant 1 : index
    %c2_303 = arith.constant 2 : index
    %c1_304 = arith.constant 1 : index
    %1436 = vector.load %arg11[%c1_302, %c2_303, %c1_304] : memref<3x18x18xf32, #tpu.memory_space<vmem>>, vector<1x16x16xf32>
    %1437 = vector.shape_cast %1436 : vector<1x16x16xf32> to vector<16x16xf32>
    %c64_305 = arith.constant 64 : index
    %1438 = memref.load %arg6[%c64_305] : memref<108xf32, #tpu.memory_space<smem>>
    %1439 = vector.broadcast %1438 : f32 to vector<16x16xf32>
    %1440 = arith.mulf %1439, %1437 : vector<16x16xf32>
    %1441 = arith.addf %1423, %1440 : vector<16x16xf32>
    %c65_306 = arith.constant 65 : index
    %1442 = memref.load %arg6[%c65_306] : memref<108xf32, #tpu.memory_space<smem>>
    %1443 = vector.broadcast %1442 : f32 to vector<16x16xf32>
    %1444 = arith.mulf %1443, %1437 : vector<16x16xf32>
    %1445 = arith.addf %1427, %1444 : vector<16x16xf32>
    %c66_307 = arith.constant 66 : index
    %1446 = memref.load %arg6[%c66_307] : memref<108xf32, #tpu.memory_space<smem>>
    %1447 = vector.broadcast %1446 : f32 to vector<16x16xf32>
    %1448 = arith.mulf %1447, %1437 : vector<16x16xf32>
    %1449 = arith.addf %1431, %1448 : vector<16x16xf32>
    %c67_308 = arith.constant 67 : index
    %1450 = memref.load %arg6[%c67_308] : memref<108xf32, #tpu.memory_space<smem>>
    %1451 = vector.broadcast %1450 : f32 to vector<16x16xf32>
    %1452 = arith.mulf %1451, %1437 : vector<16x16xf32>
    %1453 = arith.addf %1435, %1452 : vector<16x16xf32>
    %c1_309 = arith.constant 1 : index
    %c2_310 = arith.constant 2 : index
    %c2_311 = arith.constant 2 : index
    %1454 = vector.load %arg11[%c1_309, %c2_310, %c2_311] : memref<3x18x18xf32, #tpu.memory_space<vmem>>, vector<1x16x16xf32>
    %1455 = vector.shape_cast %1454 : vector<1x16x16xf32> to vector<16x16xf32>
    %c68_312 = arith.constant 68 : index
    %1456 = memref.load %arg6[%c68_312] : memref<108xf32, #tpu.memory_space<smem>>
    %1457 = vector.broadcast %1456 : f32 to vector<16x16xf32>
    %1458 = arith.mulf %1457, %1455 : vector<16x16xf32>
    %1459 = arith.addf %1441, %1458 : vector<16x16xf32>
    %c69_313 = arith.constant 69 : index
    %1460 = memref.load %arg6[%c69_313] : memref<108xf32, #tpu.memory_space<smem>>
    %1461 = vector.broadcast %1460 : f32 to vector<16x16xf32>
    %1462 = arith.mulf %1461, %1455 : vector<16x16xf32>
    %1463 = arith.addf %1445, %1462 : vector<16x16xf32>
    %c70_314 = arith.constant 70 : index
    %1464 = memref.load %arg6[%c70_314] : memref<108xf32, #tpu.memory_space<smem>>
    %1465 = vector.broadcast %1464 : f32 to vector<16x16xf32>
    %1466 = arith.mulf %1465, %1455 : vector<16x16xf32>
    %1467 = arith.addf %1449, %1466 : vector<16x16xf32>
    %c71_315 = arith.constant 71 : index
    %1468 = memref.load %arg6[%c71_315] : memref<108xf32, #tpu.memory_space<smem>>
    %1469 = vector.broadcast %1468 : f32 to vector<16x16xf32>
    %1470 = arith.mulf %1469, %1455 : vector<16x16xf32>
    %1471 = arith.addf %1453, %1470 : vector<16x16xf32>
    %c2_316 = arith.constant 2 : index
    %c0_317 = arith.constant 0 : index
    %c0_318 = arith.constant 0 : index
    %1472 = vector.load %arg11[%c2_316, %c0_317, %c0_318] : memref<3x18x18xf32, #tpu.memory_space<vmem>>, vector<1x16x16xf32>
    %1473 = vector.shape_cast %1472 : vector<1x16x16xf32> to vector<16x16xf32>
    %c72_319 = arith.constant 72 : index
    %1474 = memref.load %arg6[%c72_319] : memref<108xf32, #tpu.memory_space<smem>>
    %1475 = vector.broadcast %1474 : f32 to vector<16x16xf32>
    %1476 = arith.mulf %1475, %1473 : vector<16x16xf32>
    %1477 = arith.addf %1459, %1476 : vector<16x16xf32>
    %c73_320 = arith.constant 73 : index
    %1478 = memref.load %arg6[%c73_320] : memref<108xf32, #tpu.memory_space<smem>>
    %1479 = vector.broadcast %1478 : f32 to vector<16x16xf32>
    %1480 = arith.mulf %1479, %1473 : vector<16x16xf32>
    %1481 = arith.addf %1463, %1480 : vector<16x16xf32>
    %c74_321 = arith.constant 74 : index
    %1482 = memref.load %arg6[%c74_321] : memref<108xf32, #tpu.memory_space<smem>>
    %1483 = vector.broadcast %1482 : f32 to vector<16x16xf32>
    %1484 = arith.mulf %1483, %1473 : vector<16x16xf32>
    %1485 = arith.addf %1467, %1484 : vector<16x16xf32>
    %c75_322 = arith.constant 75 : index
    %1486 = memref.load %arg6[%c75_322] : memref<108xf32, #tpu.memory_space<smem>>
    %1487 = vector.broadcast %1486 : f32 to vector<16x16xf32>
    %1488 = arith.mulf %1487, %1473 : vector<16x16xf32>
    %1489 = arith.addf %1471, %1488 : vector<16x16xf32>
    %c2_323 = arith.constant 2 : index
    %c0_324 = arith.constant 0 : index
    %c1_325 = arith.constant 1 : index
    %1490 = vector.load %arg11[%c2_323, %c0_324, %c1_325] : memref<3x18x18xf32, #tpu.memory_space<vmem>>, vector<1x16x16xf32>
    %1491 = vector.shape_cast %1490 : vector<1x16x16xf32> to vector<16x16xf32>
    %c76_326 = arith.constant 76 : index
    %1492 = memref.load %arg6[%c76_326] : memref<108xf32, #tpu.memory_space<smem>>
    %1493 = vector.broadcast %1492 : f32 to vector<16x16xf32>
    %1494 = arith.mulf %1493, %1491 : vector<16x16xf32>
    %1495 = arith.addf %1477, %1494 : vector<16x16xf32>
    %c77_327 = arith.constant 77 : index
    %1496 = memref.load %arg6[%c77_327] : memref<108xf32, #tpu.memory_space<smem>>
    %1497 = vector.broadcast %1496 : f32 to vector<16x16xf32>
    %1498 = arith.mulf %1497, %1491 : vector<16x16xf32>
    %1499 = arith.addf %1481, %1498 : vector<16x16xf32>
    %c78_328 = arith.constant 78 : index
    %1500 = memref.load %arg6[%c78_328] : memref<108xf32, #tpu.memory_space<smem>>
    %1501 = vector.broadcast %1500 : f32 to vector<16x16xf32>
    %1502 = arith.mulf %1501, %1491 : vector<16x16xf32>
    %1503 = arith.addf %1485, %1502 : vector<16x16xf32>
    %c79_329 = arith.constant 79 : index
    %1504 = memref.load %arg6[%c79_329] : memref<108xf32, #tpu.memory_space<smem>>
    %1505 = vector.broadcast %1504 : f32 to vector<16x16xf32>
    %1506 = arith.mulf %1505, %1491 : vector<16x16xf32>
    %1507 = arith.addf %1489, %1506 : vector<16x16xf32>
    %c2_330 = arith.constant 2 : index
    %c0_331 = arith.constant 0 : index
    %c2_332 = arith.constant 2 : index
    %1508 = vector.load %arg11[%c2_330, %c0_331, %c2_332] : memref<3x18x18xf32, #tpu.memory_space<vmem>>, vector<1x16x16xf32>
    %1509 = vector.shape_cast %1508 : vector<1x16x16xf32> to vector<16x16xf32>
    %c80_333 = arith.constant 80 : index
    %1510 = memref.load %arg6[%c80_333] : memref<108xf32, #tpu.memory_space<smem>>
    %1511 = vector.broadcast %1510 : f32 to vector<16x16xf32>
    %1512 = arith.mulf %1511, %1509 : vector<16x16xf32>
    %1513 = arith.addf %1495, %1512 : vector<16x16xf32>
    %c81_334 = arith.constant 81 : index
    %1514 = memref.load %arg6[%c81_334] : memref<108xf32, #tpu.memory_space<smem>>
    %1515 = vector.broadcast %1514 : f32 to vector<16x16xf32>
    %1516 = arith.mulf %1515, %1509 : vector<16x16xf32>
    %1517 = arith.addf %1499, %1516 : vector<16x16xf32>
    %c82_335 = arith.constant 82 : index
    %1518 = memref.load %arg6[%c82_335] : memref<108xf32, #tpu.memory_space<smem>>
    %1519 = vector.broadcast %1518 : f32 to vector<16x16xf32>
    %1520 = arith.mulf %1519, %1509 : vector<16x16xf32>
    %1521 = arith.addf %1503, %1520 : vector<16x16xf32>
    %c83_336 = arith.constant 83 : index
    %1522 = memref.load %arg6[%c83_336] : memref<108xf32, #tpu.memory_space<smem>>
    %1523 = vector.broadcast %1522 : f32 to vector<16x16xf32>
    %1524 = arith.mulf %1523, %1509 : vector<16x16xf32>
    %1525 = arith.addf %1507, %1524 : vector<16x16xf32>
    %c2_337 = arith.constant 2 : index
    %c1_338 = arith.constant 1 : index
    %c0_339 = arith.constant 0 : index
    %1526 = vector.load %arg11[%c2_337, %c1_338, %c0_339] : memref<3x18x18xf32, #tpu.memory_space<vmem>>, vector<1x16x16xf32>
    %1527 = vector.shape_cast %1526 : vector<1x16x16xf32> to vector<16x16xf32>
    %c84_340 = arith.constant 84 : index
    %1528 = memref.load %arg6[%c84_340] : memref<108xf32, #tpu.memory_space<smem>>
    %1529 = vector.broadcast %1528 : f32 to vector<16x16xf32>
    %1530 = arith.mulf %1529, %1527 : vector<16x16xf32>
    %1531 = arith.addf %1513, %1530 : vector<16x16xf32>
    %c85_341 = arith.constant 85 : index
    %1532 = memref.load %arg6[%c85_341] : memref<108xf32, #tpu.memory_space<smem>>
    %1533 = vector.broadcast %1532 : f32 to vector<16x16xf32>
    %1534 = arith.mulf %1533, %1527 : vector<16x16xf32>
    %1535 = arith.addf %1517, %1534 : vector<16x16xf32>
    %c86_342 = arith.constant 86 : index
    %1536 = memref.load %arg6[%c86_342] : memref<108xf32, #tpu.memory_space<smem>>
    %1537 = vector.broadcast %1536 : f32 to vector<16x16xf32>
    %1538 = arith.mulf %1537, %1527 : vector<16x16xf32>
    %1539 = arith.addf %1521, %1538 : vector<16x16xf32>
    %c87_343 = arith.constant 87 : index
    %1540 = memref.load %arg6[%c87_343] : memref<108xf32, #tpu.memory_space<smem>>
    %1541 = vector.broadcast %1540 : f32 to vector<16x16xf32>
    %1542 = arith.mulf %1541, %1527 : vector<16x16xf32>
    %1543 = arith.addf %1525, %1542 : vector<16x16xf32>
    %c2_344 = arith.constant 2 : index
    %c1_345 = arith.constant 1 : index
    %c1_346 = arith.constant 1 : index
    %1544 = vector.load %arg11[%c2_344, %c1_345, %c1_346] : memref<3x18x18xf32, #tpu.memory_space<vmem>>, vector<1x16x16xf32>
    %1545 = vector.shape_cast %1544 : vector<1x16x16xf32> to vector<16x16xf32>
    %c88_347 = arith.constant 88 : index
    %1546 = memref.load %arg6[%c88_347] : memref<108xf32, #tpu.memory_space<smem>>
    %1547 = vector.broadcast %1546 : f32 to vector<16x16xf32>
    %1548 = arith.mulf %1547, %1545 : vector<16x16xf32>
    %1549 = arith.addf %1531, %1548 : vector<16x16xf32>
    %c89_348 = arith.constant 89 : index
    %1550 = memref.load %arg6[%c89_348] : memref<108xf32, #tpu.memory_space<smem>>
    %1551 = vector.broadcast %1550 : f32 to vector<16x16xf32>
    %1552 = arith.mulf %1551, %1545 : vector<16x16xf32>
    %1553 = arith.addf %1535, %1552 : vector<16x16xf32>
    %c90_349 = arith.constant 90 : index
    %1554 = memref.load %arg6[%c90_349] : memref<108xf32, #tpu.memory_space<smem>>
    %1555 = vector.broadcast %1554 : f32 to vector<16x16xf32>
    %1556 = arith.mulf %1555, %1545 : vector<16x16xf32>
    %1557 = arith.addf %1539, %1556 : vector<16x16xf32>
    %c91_350 = arith.constant 91 : index
    %1558 = memref.load %arg6[%c91_350] : memref<108xf32, #tpu.memory_space<smem>>
    %1559 = vector.broadcast %1558 : f32 to vector<16x16xf32>
    %1560 = arith.mulf %1559, %1545 : vector<16x16xf32>
    %1561 = arith.addf %1543, %1560 : vector<16x16xf32>
    %c2_351 = arith.constant 2 : index
    %c1_352 = arith.constant 1 : index
    %c2_353 = arith.constant 2 : index
    %1562 = vector.load %arg11[%c2_351, %c1_352, %c2_353] : memref<3x18x18xf32, #tpu.memory_space<vmem>>, vector<1x16x16xf32>
    %1563 = vector.shape_cast %1562 : vector<1x16x16xf32> to vector<16x16xf32>
    %c92_354 = arith.constant 92 : index
    %1564 = memref.load %arg6[%c92_354] : memref<108xf32, #tpu.memory_space<smem>>
    %1565 = vector.broadcast %1564 : f32 to vector<16x16xf32>
    %1566 = arith.mulf %1565, %1563 : vector<16x16xf32>
    %1567 = arith.addf %1549, %1566 : vector<16x16xf32>
    %c93_355 = arith.constant 93 : index
    %1568 = memref.load %arg6[%c93_355] : memref<108xf32, #tpu.memory_space<smem>>
    %1569 = vector.broadcast %1568 : f32 to vector<16x16xf32>
    %1570 = arith.mulf %1569, %1563 : vector<16x16xf32>
    %1571 = arith.addf %1553, %1570 : vector<16x16xf32>
    %c94_356 = arith.constant 94 : index
    %1572 = memref.load %arg6[%c94_356] : memref<108xf32, #tpu.memory_space<smem>>
    %1573 = vector.broadcast %1572 : f32 to vector<16x16xf32>
    %1574 = arith.mulf %1573, %1563 : vector<16x16xf32>
    %1575 = arith.addf %1557, %1574 : vector<16x16xf32>
    %c95_357 = arith.constant 95 : index
    %1576 = memref.load %arg6[%c95_357] : memref<108xf32, #tpu.memory_space<smem>>
    %1577 = vector.broadcast %1576 : f32 to vector<16x16xf32>
    %1578 = arith.mulf %1577, %1563 : vector<16x16xf32>
    %1579 = arith.addf %1561, %1578 : vector<16x16xf32>
    %c2_358 = arith.constant 2 : index
    %c2_359 = arith.constant 2 : index
    %c0_360 = arith.constant 0 : index
    %1580 = vector.load %arg11[%c2_358, %c2_359, %c0_360] : memref<3x18x18xf32, #tpu.memory_space<vmem>>, vector<1x16x16xf32>
    %1581 = vector.shape_cast %1580 : vector<1x16x16xf32> to vector<16x16xf32>
    %c96_361 = arith.constant 96 : index
    %1582 = memref.load %arg6[%c96_361] : memref<108xf32, #tpu.memory_space<smem>>
    %1583 = vector.broadcast %1582 : f32 to vector<16x16xf32>
    %1584 = arith.mulf %1583, %1581 : vector<16x16xf32>
    %1585 = arith.addf %1567, %1584 : vector<16x16xf32>
    %c97_362 = arith.constant 97 : index
    %1586 = memref.load %arg6[%c97_362] : memref<108xf32, #tpu.memory_space<smem>>
    %1587 = vector.broadcast %1586 : f32 to vector<16x16xf32>
    %1588 = arith.mulf %1587, %1581 : vector<16x16xf32>
    %1589 = arith.addf %1571, %1588 : vector<16x16xf32>
    %c98_363 = arith.constant 98 : index
    %1590 = memref.load %arg6[%c98_363] : memref<108xf32, #tpu.memory_space<smem>>
    %1591 = vector.broadcast %1590 : f32 to vector<16x16xf32>
    %1592 = arith.mulf %1591, %1581 : vector<16x16xf32>
    %1593 = arith.addf %1575, %1592 : vector<16x16xf32>
    %c99_364 = arith.constant 99 : index
    %1594 = memref.load %arg6[%c99_364] : memref<108xf32, #tpu.memory_space<smem>>
    %1595 = vector.broadcast %1594 : f32 to vector<16x16xf32>
    %1596 = arith.mulf %1595, %1581 : vector<16x16xf32>
    %1597 = arith.addf %1579, %1596 : vector<16x16xf32>
    %c2_365 = arith.constant 2 : index
    %c2_366 = arith.constant 2 : index
    %c1_367 = arith.constant 1 : index
    %1598 = vector.load %arg11[%c2_365, %c2_366, %c1_367] : memref<3x18x18xf32, #tpu.memory_space<vmem>>, vector<1x16x16xf32>
    %1599 = vector.shape_cast %1598 : vector<1x16x16xf32> to vector<16x16xf32>
    %c100_368 = arith.constant 100 : index
    %1600 = memref.load %arg6[%c100_368] : memref<108xf32, #tpu.memory_space<smem>>
    %1601 = vector.broadcast %1600 : f32 to vector<16x16xf32>
    %1602 = arith.mulf %1601, %1599 : vector<16x16xf32>
    %1603 = arith.addf %1585, %1602 : vector<16x16xf32>
    %c101_369 = arith.constant 101 : index
    %1604 = memref.load %arg6[%c101_369] : memref<108xf32, #tpu.memory_space<smem>>
    %1605 = vector.broadcast %1604 : f32 to vector<16x16xf32>
    %1606 = arith.mulf %1605, %1599 : vector<16x16xf32>
    %1607 = arith.addf %1589, %1606 : vector<16x16xf32>
    %c102_370 = arith.constant 102 : index
    %1608 = memref.load %arg6[%c102_370] : memref<108xf32, #tpu.memory_space<smem>>
    %1609 = vector.broadcast %1608 : f32 to vector<16x16xf32>
    %1610 = arith.mulf %1609, %1599 : vector<16x16xf32>
    %1611 = arith.addf %1593, %1610 : vector<16x16xf32>
    %c103_371 = arith.constant 103 : index
    %1612 = memref.load %arg6[%c103_371] : memref<108xf32, #tpu.memory_space<smem>>
    %1613 = vector.broadcast %1612 : f32 to vector<16x16xf32>
    %1614 = arith.mulf %1613, %1599 : vector<16x16xf32>
    %1615 = arith.addf %1597, %1614 : vector<16x16xf32>
    %c2_372 = arith.constant 2 : index
    %c2_373 = arith.constant 2 : index
    %c2_374 = arith.constant 2 : index
    %1616 = vector.load %arg11[%c2_372, %c2_373, %c2_374] : memref<3x18x18xf32, #tpu.memory_space<vmem>>, vector<1x16x16xf32>
    %1617 = vector.shape_cast %1616 : vector<1x16x16xf32> to vector<16x16xf32>
    %c104_375 = arith.constant 104 : index
    %1618 = memref.load %arg6[%c104_375] : memref<108xf32, #tpu.memory_space<smem>>
    %1619 = vector.broadcast %1618 : f32 to vector<16x16xf32>
    %1620 = arith.mulf %1619, %1617 : vector<16x16xf32>
    %1621 = arith.addf %1603, %1620 : vector<16x16xf32>
    %c105_376 = arith.constant 105 : index
    %1622 = memref.load %arg6[%c105_376] : memref<108xf32, #tpu.memory_space<smem>>
    %1623 = vector.broadcast %1622 : f32 to vector<16x16xf32>
    %1624 = arith.mulf %1623, %1617 : vector<16x16xf32>
    %1625 = arith.addf %1607, %1624 : vector<16x16xf32>
    %c106_377 = arith.constant 106 : index
    %1626 = memref.load %arg6[%c106_377] : memref<108xf32, #tpu.memory_space<smem>>
    %1627 = vector.broadcast %1626 : f32 to vector<16x16xf32>
    %1628 = arith.mulf %1627, %1617 : vector<16x16xf32>
    %1629 = arith.addf %1611, %1628 : vector<16x16xf32>
    %c107_378 = arith.constant 107 : index
    %1630 = memref.load %arg6[%c107_378] : memref<108xf32, #tpu.memory_space<smem>>
    %1631 = vector.broadcast %1630 : f32 to vector<16x16xf32>
    %1632 = arith.mulf %1631, %1617 : vector<16x16xf32>
    %1633 = arith.addf %1615, %1632 : vector<16x16xf32>
    %1634 = arith.negf %1621 : vector<16x16xf32>
    %1635 = math.exp %1634 : vector<16x16xf32>
    %cst_379 = arith.constant 1.000000e+00 : f32
    %1636 = vector.broadcast %cst_379 : f32 to vector<16x16xf32>
    %1637 = arith.addf %1636, %1635 : vector<16x16xf32>
    %1638 = arith.divf %1636, %1637 : vector<16x16xf32>
    %1639 = arith.mulf %1097, %1638 : vector<16x16xf32>
    %c0_380 = arith.constant 0 : index
    %c0_381 = arith.constant 0 : index
    %c0_382 = arith.constant 0 : index
    %c0_383 = arith.constant 0 : index
    %1640 = vector.load %arg1[%c0_380, %c0_381, %c0_382, %c0_383] : memref<1x4x16x16xf32, #tpu.memory_space<vmem>>, vector<1x1x16x16xf32>
    %1641 = vector.shape_cast %1640 : vector<1x1x16x16xf32> to vector<16x16xf32>
    %1642 = arith.addf %1639, %1641 : vector<16x16xf32>
    %c0_384 = arith.constant 0 : index
    %c0_385 = arith.constant 0 : index
    %c0_386 = arith.constant 0 : index
    %c0_387 = arith.constant 0 : index
    %1643 = vector.load %arg8[%c0_384, %c0_385, %c0_386, %c0_387] : memref<1x4x16x16xf32, #tpu.memory_space<vmem>>, vector<1x1x16x16xf32>
    %1644 = vector.shape_cast %1643 : vector<1x1x16x16xf32> to vector<16x16xf32>
    %1645 = vector.shape_cast %1642 : vector<16x16xf32> to vector<1x1x16x16xf32>
    tpu.vector_store %arg8[%c0_384, %c0_385, %c0_386, %c0_387], %1645 {strides = array<i32>} : memref<1x4x16x16xf32, #tpu.memory_space<vmem>>, vector<1x1x16x16xf32>,
    %1646 = arith.negf %1625 : vector<16x16xf32>
    %1647 = math.exp %1646 : vector<16x16xf32>
    %cst_388 = arith.constant 1.000000e+00 : f32
    %1648 = vector.broadcast %cst_388 : f32 to vector<16x16xf32>
    %1649 = arith.addf %1648, %1647 : vector<16x16xf32>
    %1650 = arith.divf %1648, %1649 : vector<16x16xf32>
    %1651 = arith.mulf %1101, %1650 : vector<16x16xf32>
    %c0_389 = arith.constant 0 : index
    %c1_390 = arith.constant 1 : index
    %c0_391 = arith.constant 0 : index
    %c0_392 = arith.constant 0 : index
    %1652 = vector.load %arg1[%c0_389, %c1_390, %c0_391, %c0_392] : memref<1x4x16x16xf32, #tpu.memory_space<vmem>>, vector<1x1x16x16xf32>
    %1653 = vector.shape_cast %1652 : vector<1x1x16x16xf32> to vector<16x16xf32>
    %1654 = arith.addf %1651, %1653 : vector<16x16xf32>
    %c0_393 = arith.constant 0 : index
    %c1_394 = arith.constant 1 : index
    %c0_395 = arith.constant 0 : index
    %c0_396 = arith.constant 0 : index
    %1655 = vector.load %arg8[%c0_393, %c1_394, %c0_395, %c0_396] : memref<1x4x16x16xf32, #tpu.memory_space<vmem>>, vector<1x1x16x16xf32>
    %1656 = vector.shape_cast %1655 : vector<1x1x16x16xf32> to vector<16x16xf32>
    %1657 = vector.shape_cast %1654 : vector<16x16xf32> to vector<1x1x16x16xf32>
    tpu.vector_store %arg8[%c0_393, %c1_394, %c0_395, %c0_396], %1657 {strides = array<i32>} : memref<1x4x16x16xf32, #tpu.memory_space<vmem>>, vector<1x1x16x16xf32>,
    %1658 = arith.negf %1629 : vector<16x16xf32>
    %1659 = math.exp %1658 : vector<16x16xf32>
    %cst_397 = arith.constant 1.000000e+00 : f32
    %1660 = vector.broadcast %cst_397 : f32 to vector<16x16xf32>
    %1661 = arith.addf %1660, %1659 : vector<16x16xf32>
    %1662 = arith.divf %1660, %1661 : vector<16x16xf32>
    %1663 = arith.mulf %1105, %1662 : vector<16x16xf32>
    %c0_398 = arith.constant 0 : index
    %c2_399 = arith.constant 2 : index
    %c0_400 = arith.constant 0 : index
    %c0_401 = arith.constant 0 : index
    %1664 = vector.load %arg1[%c0_398, %c2_399, %c0_400, %c0_401] : memref<1x4x16x16xf32, #tpu.memory_space<vmem>>, vector<1x1x16x16xf32>
    %1665 = vector.shape_cast %1664 : vector<1x1x16x16xf32> to vector<16x16xf32>
    %1666 = arith.addf %1663, %1665 : vector<16x16xf32>
    %c0_402 = arith.constant 0 : index
    %c2_403 = arith.constant 2 : index
    %c0_404 = arith.constant 0 : index
    %c0_405 = arith.constant 0 : index
    %1667 = vector.load %arg8[%c0_402, %c2_403, %c0_404, %c0_405] : memref<1x4x16x16xf32, #tpu.memory_space<vmem>>, vector<1x1x16x16xf32>
    %1668 = vector.shape_cast %1667 : vector<1x1x16x16xf32> to vector<16x16xf32>
    %1669 = vector.shape_cast %1666 : vector<16x16xf32> to vector<1x1x16x16xf32>
    tpu.vector_store %arg8[%c0_402, %c2_403, %c0_404, %c0_405], %1669 {strides = array<i32>} : memref<1x4x16x16xf32, #tpu.memory_space<vmem>>, vector<1x1x16x16xf32>,
    %1670 = arith.negf %1633 : vector<16x16xf32>
    %1671 = math.exp %1670 : vector<16x16xf32>
    %cst_406 = arith.constant 1.000000e+00 : f32
    %1672 = vector.broadcast %cst_406 : f32 to vector<16x16xf32>
    %1673 = arith.addf %1672, %1671 : vector<16x16xf32>
    %1674 = arith.divf %1672, %1673 : vector<16x16xf32>
    %1675 = arith.mulf %1109, %1674 : vector<16x16xf32>
    %c0_407 = arith.constant 0 : index
    %c3_408 = arith.constant 3 : index
    %c0_409 = arith.constant 0 : index
    %c0_410 = arith.constant 0 : index
    %1676 = vector.load %arg1[%c0_407, %c3_408, %c0_409, %c0_410] : memref<1x4x16x16xf32, #tpu.memory_space<vmem>>, vector<1x1x16x16xf32>
    %1677 = vector.shape_cast %1676 : vector<1x1x16x16xf32> to vector<16x16xf32>
    %1678 = arith.addf %1675, %1677 : vector<16x16xf32>
    %c0_411 = arith.constant 0 : index
    %c3_412 = arith.constant 3 : index
    %c0_413 = arith.constant 0 : index
    %c0_414 = arith.constant 0 : index
    %1679 = vector.load %arg8[%c0_411, %c3_412, %c0_413, %c0_414] : memref<1x4x16x16xf32, #tpu.memory_space<vmem>>, vector<1x1x16x16xf32>
    %1680 = vector.shape_cast %1679 : vector<1x1x16x16xf32> to vector<16x16xf32>
    %1681 = vector.shape_cast %1678 : vector<16x16xf32> to vector<1x1x16x16xf32>
    tpu.vector_store %arg8[%c0_411, %c3_412, %c0_413, %c0_414], %1681 {strides = array<i32>} : memref<1x4x16x16xf32, #tpu.memory_space<vmem>>, vector<1x1x16x16xf32>,
    return
  }
  func.func @transform_0(%arg0: i32) -> (i32, i32, i32, i32) {
    %c0_i32 = arith.constant 0 : i32
    %c0_i32_0 = arith.constant 0 : i32
    %c0_i32_1 = arith.constant 0 : i32
    %c0_i32_2 = arith.constant 0 : i32
    return %arg0, %c0_i32, %c0_i32_0, %c0_i32_1 : i32, i32, i32, i32
  }
  func.func @transform_1(%arg0: i32) -> (i32, i32, i32, i32) {
    %c0_i32 = arith.constant 0 : i32
    %c0_i32_0 = arith.constant 0 : i32
    %c0_i32_1 = arith.constant 0 : i32
    %c0_i32_2 = arith.constant 0 : i32
    return %arg0, %c0_i32, %c0_i32_0, %c0_i32_1 : i32, i32, i32, i32
  }
  func.func @transform_2(%arg0: i32) -> i32 {
    %c0_i32 = arith.constant 0 : i32
    %c0_i32_0 = arith.constant 0 : i32
    return %c0_i32 : i32
  }
  func.func @transform_3(%arg0: i32) -> i32 {
    %c0_i32 = arith.constant 0 : i32
    %c0_i32_0 = arith.constant 0 : i32
    return %c0_i32 : i32
  }
  func.func @transform_4(%arg0: i32) -> i32 {
    %c0_i32 = arith.constant 0 : i32
    %c0_i32_0 = arith.constant 0 : i32
    return %c0_i32 : i32
  }
  func.func @transform_5(%arg0: i32) -> i32 {
    %c0_i32 = arith.constant 0 : i32
    %c0_i32_0 = arith.constant 0 : i32
    return %c0_i32 : i32
  }
  func.func @transform_6(%arg0: i32) -> i32 {
    %c0_i32 = arith.constant 0 : i32
    %c0_i32_0 = arith.constant 0 : i32
    return %c0_i32 : i32
  }
  func.func @transform_7(%arg0: i32) -> (i32, i32, i32, i32) {
    %c0_i32 = arith.constant 0 : i32
    %c0_i32_0 = arith.constant 0 : i32
    %c0_i32_1 = arith.constant 0 : i32
    %c0_i32_2 = arith.constant 0 : i32
    return %arg0, %c0_i32, %c0_i32_0, %c0_i32_1 : i32, i32, i32, i32
  }
  func.func @transform_8(%arg0: i32) -> (i32, i32, i32, i32) {
    %c0_i32 = arith.constant 0 : i32
    %c0_i32_0 = arith.constant 0 : i32
    %c0_i32_1 = arith.constant 0 : i32
    %c0_i32_2 = arith.constant 0 : i32
    return %arg0, %c0_i32, %c0_i32_0, %c0_i32_1 : i32, i32, i32, i32
  }
}

</mosaic_0001>

<llo_original>
// kernel: tpu_custom_call.1
$region0: #{tpu_custom_call.1}
  #allocation0 [shape = 'u32[]', space=smem, size = 0x4, offset = 0x4, fixed_abs, tag = 'smem constant byte address 0x4 - core index']
  #allocation1 [shape = 'u32[144,128]{1,0:T(1,128)}', space=vmem, size = 0x12000, scoped, tag = 'internal scratch']
  #allocation2 [shape = 'f32[4,18,18]{2,1,0:T(8,128)}', space=vmem, size = 0xc000, scoped, tag = 'scratch operand']
  #allocation3 [shape = 'f32[3,18,18]{2,1,0:T(8,128)}', space=vmem, size = 0x9000, scoped, tag = 'scratch operand']
  %s0 = inlined_call_operand.hbm [shape: f32[2,4,16,16], index: 0, kind: input, shape index: {}]
  %s1 = inlined_call_operand.hbm [shape: f32[2,3,16,16], index: 1, kind: input, shape index: {}]
  %s2 = inlined_call_operand.vmem [shape: f32[252], index: 2, kind: input, shape index: {}]
  %s3 = inlined_call_operand.vmem [shape: f32[4], index: 3, kind: input, shape index: {}]
  %s4 = inlined_call_operand.vmem [shape: f32[3], index: 4, kind: input, shape index: {}]
  %s5 = inlined_call_operand.vmem [shape: f32[108], index: 5, kind: input, shape index: {}]
  %s6 = inlined_call_operand.vmem [shape: f32[4], index: 6, kind: input, shape index: {}]
  %s7 = inlined_call_operand.hbm [shape: f32[2,4,16,16], index: 7, kind: output, shape index: {0}]
  %s8 = inlined_call_operand.hbm [shape: f32[2,3,16,16], index: 8, kind: output, shape index: {1}]
  %9 = xla_tuple %s7, %s8
  %s10 = sld [smem:[#allocation0]]
  $region97: #{tpu_custom_call.1} parent=0
    _
  %s12 = ssub.s32 1, %s10
  %s13 = scalar_select 0, %s12, %s10
  $region1: #{tpu_custom_call.1} parent=0
    #allocation4 [shape = 'u8[65536]{0}', space=vmem, size = 0x10000, scoped, tag = 'input window, operand 0']
    #allocation5 [shape = 's32[2]{0}', space=sflag, size = 0x8, scoped, tag = 'scoped memory for tpu_custom_call.1']
    #allocation6 [shape = 's32[2]{0}', space=sflag, size = 0x8, scoped, tag = 'scoped memory for tpu_custom_call.1']
    #allocation7 [shape = 's32[2]{0}', space=sflag, size = 0x8, scoped, tag = 'scoped memory for tpu_custom_call.1']
    #allocation8 [shape = 'u8[49152]{0}', space=vmem, size = 0xc000, scoped, tag = 'input window, operand 1']
    #allocation9 [shape = 's32[2]{0}', space=sflag, size = 0x8, scoped, tag = 'scoped memory for tpu_custom_call.1']
    #allocation10 [shape = 'u8[1024]{0}', space=smem, size = 0x400, scoped, tag = 'input window, operand 2, single buffered']
    #allocation11 [shape = 'u8[512]{0}', space=smem, size = 0x200, scoped, tag = 'input window, operand 3, single buffered']
    #allocation12 [shape = 's32[1]{0}', space=sflag, size = 0x4, scoped, tag = 'scoped memory for tpu_custom_call.1']
    #allocation13 [shape = 'u8[512]{0}', space=smem, size = 0x200, scoped, tag = 'input window, operand 4, single buffered']
    #allocation14 [shape = 'u8[512]{0}', space=smem, size = 0x200, scoped, tag = 'input window, operand 5, single buffered']
    #allocation15 [shape = 's32[1]{0}', space=sflag, size = 0x4, scoped, tag = 'scoped memory for tpu_custom_call.1']
    #allocation16 [shape = 'u8[512]{0}', space=smem, size = 0x200, scoped, tag = 'input window, operand 6, single buffered']
    #allocation17 [shape = 'u8[65536]{0}', space=vmem, size = 0x10000, scoped, tag = 'output window, operand 0']
    #allocation18 [shape = 'u8[49152]{0}', space=vmem, size = 0xc000, scoped, tag = 'output window, operand 1']
    #allocation19 [shape = 's32[2]{0}', space=sflag, size = 0x8, scoped, tag = 'scoped memory for tpu_custom_call.1']
    %14 = vsyncpa [#allocation5], 0
    %s15 = scalar_lea.sflag [#allocation5], 1
    %16 = vsyncpa %s15, 0
    %17 = vsyncpa [#allocation9], 0
    %s18 = scalar_lea.sflag [#allocation9], 1
    %19 = vsyncpa %s18, 0
    %20 = vsyncpa [#allocation7], 0
    %21 = vsyncpa [#allocation12], 0
    %22 = vsyncpa [#allocation15], 0
    %23 = vsyncpa [#allocation6], 0
    %s24 = scalar_lea.sflag [#allocation6], 1
    %25 = vsyncpa %s24, 0
    %26 = vsyncpa [#allocation19], 0
    %s27 = scalar_lea.sflag [#allocation19], 1
    %28 = vsyncpa %s27, 0
    loop: start=0, step=1, limit=4
    $region2: #{tpu_custom_call.1} parent=1 // loop_pre_header
      _
    $region3: #{tpu_custom_call.1} parent=1 // loop_header
      %s30 = sphi 0, %s34
      %p31 = scmp.ge.s32.totalorder %s30, 4
      %s40 = sphi 0, %s42
      %s43 = sphi 0, %s40
      %s44 = sphi 0, %s43
      %s60 = sphi 0, %s44
      %s66 = sphi 0, %s68
      %s69 = sphi 0, %s66
      %s70 = sphi 0, %s69
      %s86 = sphi 0, %s70
      %s90 = sphi 0, %s90
      %s92 = sphi 0, %s90
      %s93 = sphi 0, %s92
      %s107 = sphi 0, %s93
      %s111 = sphi 0, %s111
      %s113 = sphi 0, %s111
      %s114 = sphi 0, %s113
      %s128 = sphi 0, %s114
      %s132 = sphi 0, %s132
      %s134 = sphi 0, %s132
      %s135 = sphi 0, %s134
      %s149 = sphi 0, %s135
      %s153 = sphi 0, %s153
      %s155 = sphi 0, %s153
      %s156 = sphi 0, %s155
      %s170 = sphi 0, %s156
      %s174 = sphi 0, %s174
      %s176 = sphi 0, %s174
      %s177 = sphi 0, %s176
      %s191 = sphi 0, %s177
      %s197 = sphi 0, %s199
      %s200 = sphi 0, %s197
      %s201 = sphi 0, %s200
      %s217 = sphi 0, %s201
      %s223 = sphi 0, %s225
      %s226 = sphi 0, %s223
      %s227 = sphi 0, %s226
      %s243 = sphi 0, %s227
    $region4: #{tpu_custom_call.1} parent=1 // loop_header_branch
      %33 = sbr.rel (%p31) target = $region8
    $region5: #{tpu_custom_call.1} parent=1 // loop_body
      %s35 = ssub.s32 %s30, 1
      %s36 = ssub.s32 %s30, 2
      %s37 = sadd.s32 %s30, 1
      %s38 = ssub.s32 %s30, %s37
      %p39 = scmp.eq.s32.totalorder %s38, 0
      %s41 = sadd.s32 %s40, 1
      %s42 = scalar_select %p39, %s40, %s41
      %p45 = pneg %p39
      %p46 = scmp.eq.s32.totalorder %s30, 1
      %p47 = por %p45, %p46
      %p48 = scmp.ne.s32.totalorder %s40, %s43
      %p49 = scmp.eq.s32.totalorder %s30, 0
      %p50 = por %p48, %p49
      %p51 = scmp.ne.s32.totalorder %s40, %s43
      %p52 = scmp.eq.s32.totalorder %s35, 1
      %p53 = por %p51, %p52
      %p54 = scmp.ne.s32.totalorder %s43, %s44
      %p55 = scmp.eq.s32.totalorder %s35, 0
      %p56 = por %p54, %p55
      %p57 = scmp.ne.s32.totalorder %s43, %s44
      %p58 = scmp.eq.s32.totalorder %s36, 1
      %p59 = por %p57, %p58
      %p61 = scmp.ne.s32.totalorder %s44, %s60
      %p62 = scmp.eq.s32.totalorder %s36, 0
      %p63 = por %p61, %p62
      %s64 = ssub.s32 %s30, %s37
      %p65 = scmp.eq.s32.totalorder %s64, 0
      %s67 = sadd.s32 %s66, 1
      %s68 = scalar_select %p65, %s66, %s67
      %p71 = pneg %p65
      %p72 = scmp.eq.s32.totalorder %s30, 1
      %p73 = por %p71, %p72
      %p74 = scmp.ne.s32.totalorder %s66, %s69
      %p75 = scmp.eq.s32.totalorder %s30, 0
      %p76 = por %p74, %p75
      %p77 = scmp.ne.s32.totalorder %s66, %s69
      %p78 = scmp.eq.s32.totalorder %s35, 1
      %p79 = por %p77, %p78
      %p80 = scmp.ne.s32.totalorder %s69, %s70
      %p81 = scmp.eq.s32.totalorder %s35, 0
      %p82 = por %p80, %p81
      %p83 = scmp.ne.s32.totalorder %s69, %s70
      %p84 = scmp.eq.s32.totalorder %s36, 1
      %p85 = por %p83, %p84
      %p87 = scmp.ne.s32.totalorder %s70, %s86
      %p88 = scmp.eq.s32.totalorder %s36, 0
      %p89 = por %p87, %p88
      %s91 = sadd.s32 %s90, 1
      %p94 = scmp.eq.s32.totalorder %s30, 1
      %p95 = scmp.ne.s32.totalorder %s90, %s92
      %p96 = scmp.eq.s32.totalorder %s30, 0
      %p97 = por %p95, %p96
      %p98 = scmp.ne.s32.totalorder %s90, %s92
      %p99 = scmp.eq.s32.totalorder %s35, 1
      %p100 = por %p98, %p99
      %p101 = scmp.ne.s32.totalorder %s92, %s93
      %p102 = scmp.eq.s32.totalorder %s35, 0
      %p103 = por %p101, %p102
      %p104 = scmp.ne.s32.totalorder %s92, %s93
      %p105 = scmp.eq.s32.totalorder %s36, 1
      %p106 = por %p104, %p105
      %p108 = scmp.ne.s32.totalorder %s93, %s107
      %p109 = scmp.eq.s32.totalorder %s36, 0
      %p110 = por %p108, %p109
      %s112 = sadd.s32 %s111, 1
      %p115 = scmp.eq.s32.totalorder %s30, 1
      %p116 = scmp.ne.s32.totalorder %s111, %s113
      %p117 = scmp.eq.s32.totalorder %s30, 0
      %p118 = por %p116, %p117
      %p119 = scmp.ne.s32.totalorder %s111, %s113
      %p120 = scmp.eq.s32.totalorder %s35, 1
      %p121 = por %p119, %p120
      %p122 = scmp.ne.s32.totalorder %s113, %s114
      %p123 = scmp.eq.s32.totalorder %s35, 0
      %p124 = por %p122, %p123
      %p125 = scmp.ne.s32.totalorder %s113, %s114
      %p126 = scmp.eq.s32.totalorder %s36, 1
      %p127 = por %p125, %p126
      %p129 = scmp.ne.s32.totalorder %s114, %s128
      %p130 = scmp.eq.s32.totalorder %s36, 0
      %p131 = por %p129, %p130
      %s133 = sadd.s32 %s132, 1
      %p136 = scmp.eq.s32.totalorder %s30, 1
      %p137 = scmp.ne.s32.totalorder %s132, %s134
      %p138 = scmp.eq.s32.totalorder %s30, 0
      %p139 = por %p137, %p138
      %p140 = scmp.ne.s32.totalorder %s132, %s134
      %p141 = scmp.eq.s32.totalorder %s35, 1
      %p142 = por %p140, %p141
      %p143 = scmp.ne.s32.totalorder %s134, %s135
      %p144 = scmp.eq.s32.totalorder %s35, 0
      %p145 = por %p143, %p144
      %p146 = scmp.ne.s32.totalorder %s134, %s135
      %p147 = scmp.eq.s32.totalorder %s36, 1
      %p148 = por %p146, %p147
      %p150 = scmp.ne.s32.totalorder %s135, %s149
      %p151 = scmp.eq.s32.totalorder %s36, 0
      %p152 = por %p150, %p151
      %s154 = sadd.s32 %s153, 1
      %p157 = scmp.eq.s32.totalorder %s30, 1
      %p158 = scmp.ne.s32.totalorder %s153, %s155
      %p159 = scmp.eq.s32.totalorder %s30, 0
      %p160 = por %p158, %p159
      %p161 = scmp.ne.s32.totalorder %s153, %s155
      %p162 = scmp.eq.s32.totalorder %s35, 1
      %p163 = por %p161, %p162
      %p164 = scmp.ne.s32.totalorder %s155, %s156
      %p165 = scmp.eq.s32.totalorder %s35, 0
      %p166 = por %p164, %p165
      %p167 = scmp.ne.s32.totalorder %s155, %s156
      %p168 = scmp.eq.s32.totalorder %s36, 1
      %p169 = por %p167, %p168
      %p171 = scmp.ne.s32.totalorder %s156, %s170
      %p172 = scmp.eq.s32.totalorder %s36, 0
      %p173 = por %p171, %p172
      %s175 = sadd.s32 %s174, 1
      %p178 = scmp.eq.s32.totalorder %s30, 1
      %p179 = scmp.ne.s32.totalorder %s174, %s176
      %p180 = scmp.eq.s32.totalorder %s30, 0
      %p181 = por %p179, %p180
      %p182 = scmp.ne.s32.totalorder %s174, %s176
      %p183 = scmp.eq.s32.totalorder %s35, 1
      %p184 = por %p182, %p183
      %p185 = scmp.ne.s32.totalorder %s176, %s177
      %p186 = scmp.eq.s32.totalorder %s35, 0
      %p187 = por %p185, %p186
      %p188 = scmp.ne.s32.totalorder %s176, %s177
      %p189 = scmp.eq.s32.totalorder %s36, 1
      %p190 = por %p188, %p189
      %p192 = scmp.ne.s32.totalorder %s177, %s191
      %p193 = scmp.eq.s32.totalorder %s36, 0
      %p194 = por %p192, %p193
      %s195 = ssub.s32 %s30, %s37
      %p196 = scmp.eq.s32.totalorder %s195, 0
      %s198 = sadd.s32 %s197, 1
      %s199 = scalar_select %p196, %s197, %s198
      %p202 = pneg %p196
      %p203 = scmp.eq.s32.totalorder %s30, 1
      %p204 = por %p202, %p203
      %p205 = scmp.ne.s32.totalorder %s197, %s200
      %p206 = scmp.eq.s32.totalorder %s30, 0
      %p207 = por %p205, %p206
      %p208 = scmp.ne.s32.totalorder %s197, %s200
      %p209 = scmp.eq.s32.totalorder %s35, 1
      %p210 = por %p208, %p209
      %p211 = scmp.ne.s32.totalorder %s200, %s201
      %p212 = scmp.eq.s32.totalorder %s35, 0
      %p213 = por %p211, %p212
      %p214 = scmp.ne.s32.totalorder %s200, %s201
      %p215 = scmp.eq.s32.totalorder %s36, 1
      %p216 = por %p214, %p215
      %p218 = scmp.ne.s32.totalorder %s201, %s217
      %p219 = scmp.eq.s32.totalorder %s36, 0
      %p220 = por %p218, %p219
      %s221 = ssub.s32 %s30, %s37
      %p222 = scmp.eq.s32.totalorder %s221, 0
      %s224 = sadd.s32 %s223, 1
      %s225 = scalar_select %p222, %s223, %s224
      %p228 = pneg %p222
      %p229 = scmp.eq.s32.totalorder %s30, 1
      %p230 = por %p228, %p229
      %p231 = scmp.ne.s32.totalorder %s223, %s226
      %p232 = scmp.eq.s32.totalorder %s30, 0
      %p233 = por %p231, %p232
      %p234 = scmp.ne.s32.totalorder %s223, %s226
      %p235 = scmp.eq.s32.totalorder %s35, 1
      %p236 = por %p234, %p235
      %p237 = scmp.ne.s32.totalorder %s226, %s227
      %p238 = scmp.eq.s32.totalorder %s35, 0
      %p239 = por %p237, %p238
      %p240 = scmp.ne.s32.totalorder %s226, %s227
      %p241 = scmp.eq.s32.totalorder %s36, 1
      %p242 = por %p240, %p241
      %p244 = scmp.ne.s32.totalorder %s227, %s243
      %p245 = scmp.eq.s32.totalorder %s36, 0
      %p246 = por %p244, %p245
      %p247 = scmp.le.s32.totalorder 1, %s30
      %p248 = scmp.lt.s32.totalorder %s30, 3
      %p249 = pnand %p247, %p248
      %p250 = pneg %p249
      // Predicated region
      $region9: #{tpu_custom_call.1} parent=5 // pred_check
        _
      $region10: #{tpu_custom_call.1} parent=5 // pred_check_branch
        %252 = sbr.rel (%p249) target = $region12
      $region11: #{tpu_custom_call.1} parent=5 // pred_region
        %s253 = ssub.s32 %s30, 1
        // Predicated region
        $region13: #{tpu_custom_call.1} parent=11 // pred_check
          %p254 = pneg %p103
        $region14: #{tpu_custom_call.1} parent=11 // pred_check_branch
          %256 = sbr.rel (%p254) target = $region16
        $region15: #{tpu_custom_call.1} parent=11 // pred_region
          %s258 = ssub.s32 32, 32
          %259 = vsyncadd [#allocation7], %s258
          %s261 = sshll.u32 %s2, 4
          %s262 = int_to_ptr.vmem [resolvable:$true] %s261
          %264 = dma.vmem_to_smem %s262, 32, [#allocation10], [#allocation7]
        $region16: #{tpu_custom_call.1} parent=11 // pred_fallthru
          _
        // Predicated region
        $region17: #{tpu_custom_call.1} parent=11 // pred_check
          %p265 = pneg %p124
        $region18: #{tpu_custom_call.1} parent=11 // pred_check_branch
          %267 = sbr.rel (%p265) target = $region20
        $region19: #{tpu_custom_call.1} parent=11 // pred_region
          %s269 = ssub.s32 16, 16
          %270 = vsyncadd [#allocation12], %s269
          %s272 = sshll.u32 %s3, 4
          %s273 = int_to_ptr.vmem [resolvable:$true] %s272
          %275 = dma.vmem_to_smem %s273, 16, [#allocation11], [#allocation12]
        $region20: #{tpu_custom_call.1} parent=11 // pred_fallthru
          _
        // Predicated region
        $region21: #{tpu_custom_call.1} parent=11 // pred_check
          %p276 = pneg %p145
        $region22: #{tpu_custom_call.1} parent=11 // pred_check_branch
          %278 = sbr.rel (%p276) target = $region24
        $region23: #{tpu_custom_call.1} parent=11 // pred_region
          %s280 = ssub.s32 16, 16
          %281 = vsyncadd [#allocation12], %s280
          %s283 = sshll.u32 %s4, 4
          %s284 = int_to_ptr.vmem [resolvable:$true] %s283
          %286 = dma.vmem_to_smem %s284, 16, [#allocation13], [#allocation12]
        $region24: #{tpu_custom_call.1} parent=11 // pred_fallthru
          _
        // Predicated region
        $region25: #{tpu_custom_call.1} parent=11 // pred_check
          %p287 = pneg %p166
        $region26: #{tpu_custom_call.1} parent=11 // pred_check_branch
          %289 = sbr.rel (%p287) target = $region28
        $region27: #{tpu_custom_call.1} parent=11 // pred_region
          %s291 = ssub.s32 16, 16
          %292 = vsyncadd [#allocation15], %s291
          %s294 = sshll.u32 %s5, 4
          %s295 = int_to_ptr.vmem [resolvable:$true] %s294
          %297 = dma.vmem_to_smem %s295, 16, [#allocation14], [#allocation15]
        $region28: #{tpu_custom_call.1} parent=11 // pred_fallthru
          _
        // Predicated region
        $region29: #{tpu_custom_call.1} parent=11 // pred_check
          %p298 = pneg %p187
        $region30: #{tpu_custom_call.1} parent=11 // pred_check_branch
          %300 = sbr.rel (%p298) target = $region32
        $region31: #{tpu_custom_call.1} parent=11 // pred_region
          %s302 = ssub.s32 16, 16
          %303 = vsyncadd [#allocation15], %s302
          %s305 = sshll.u32 %s6, 4
          %s306 = int_to_ptr.vmem [resolvable:$true] %s305
          %308 = dma.vmem_to_smem %s306, 16, [#allocation16], [#allocation15]
        $region32: #{tpu_custom_call.1} parent=11 // pred_fallthru
          _
      $region12: #{tpu_custom_call.1} parent=5 // pred_fallthru
        _
      %p309 = scmp.lt.s32.totalorder %s30, 2
      // Predicated region
      $region33: #{tpu_custom_call.1} parent=5 // pred_check
        %p310 = pneg %p309
      $region34: #{tpu_custom_call.1} parent=5 // pred_check_branch
        %312 = sbr.rel (%p310) target = $region36
      $region35: #{tpu_custom_call.1} parent=5 // pred_region
        // Predicated region
        $region37: #{tpu_custom_call.1} parent=35 // pred_check
          %p313 = pneg %p50
        $region38: #{tpu_custom_call.1} parent=35 // pred_check_branch
          %315 = sbr.rel (%p313) target = $region40
        $region39: #{tpu_custom_call.1} parent=35 // pred_region
          %s316 = sand.u32 %s40, 1
          %s317 = scalar_lea.sflag [#allocation5], %s316
          %s318 = sand.u32 %s40, 1
          %s319 = smul.addr %s318, 64
          %s320 = scalar_lea.vmem [#allocation4], %s319
          %s322 = ssub.s32 1024, 1024
          %323 = vsyncadd %s317, %s322
          %s324 = smul.addr %s30, 8
          %s325 = smul.addr %s324, 128
          %s326 = scalar_lea.hbm %s0, %s325
          %s327 = sshll.u32 %s320, 4
          %s328 = int_to_ptr.vmem [resolvable:$true] %s327
          %333 = dma.hbm_to_vmem [thread:$0]  %s326, 1024, %s328, %s317, 128, 128, 8
        $region40: #{tpu_custom_call.1} parent=35 // pred_fallthru
          _
        // Predicated region
        $region41: #{tpu_custom_call.1} parent=35 // pred_check
          %p334 = pneg %p76
        $region42: #{tpu_custom_call.1} parent=35 // pred_check_branch
          %336 = sbr.rel (%p334) target = $region44
        $region43: #{tpu_custom_call.1} parent=35 // pred_region
          %s337 = sand.u32 %s66, 1
          %s338 = scalar_lea.sflag [#allocation9], %s337
          %s339 = sand.u32 %s66, 1
          %s340 = smul.addr %s339, 48
          %s341 = scalar_lea.vmem [#allocation8], %s340
          %s343 = ssub.s32 768, 768
          %344 = vsyncadd %s338, %s343
          %s345 = smul.addr %s30, 6
          %s346 = smul.addr %s345, 128
          %s347 = scalar_lea.hbm %s1, %s346
          %s348 = sshll.u32 %s341, 4
          %s349 = int_to_ptr.vmem [resolvable:$true] %s348
          %354 = dma.hbm_to_vmem [thread:$0]  %s347, 768, %s349, %s338, 128, 128, 8
        $region44: #{tpu_custom_call.1} parent=35 // pred_fallthru
          _
      $region36: #{tpu_custom_call.1} parent=5 // pred_fallthru
        _
      %p355 = scmp.le.s32.totalorder 1, %s30
      %p356 = scmp.lt.s32.totalorder %s30, 3
      %p357 = pnand %p355, %p356
      %p358 = pneg %p357
      // Predicated region
      $region45: #{tpu_custom_call.1} parent=5 // pred_check
        _
      $region46: #{tpu_custom_call.1} parent=5 // pred_check_branch
        %360 = sbr.rel (%p357) target = $region48
      $region47: #{tpu_custom_call.1} parent=5 // pred_region
        %s361 = ssub.s32 %s30, 1
        %s362 = sand.u32 %s43, 1
        %s363 = scalar_lea.sflag [#allocation5], %s362
        %s364 = sand.u32 %s43, 1
        %s365 = smul.addr %s364, 64
        %s366 = scalar_lea.vmem [#allocation4], %s365
        // Predicated region
        $region49: #{tpu_custom_call.1} parent=47 // pred_check
          %p367 = pneg %p56
        $region50: #{tpu_custom_call.1} parent=47 // pred_check_branch
          %369 = sbr.rel (%p367) target = $region52
        $region51: #{tpu_custom_call.1} parent=47 // pred_region
          %370 = dma.done %s363, 1024
        $region52: #{tpu_custom_call.1} parent=47 // pred_fallthru
          _
        %s371 = sand.u32 %s69, 1
        %s372 = scalar_lea.sflag [#allocation9], %s371
        %s373 = sand.u32 %s69, 1
        %s374 = smul.addr %s373, 48
        %s375 = scalar_lea.vmem [#allocation8], %s374
        // Predicated region
        $region53: #{tpu_custom_call.1} parent=47 // pred_check
          %p376 = pneg %p82
        $region54: #{tpu_custom_call.1} parent=47 // pred_check_branch
          %378 = sbr.rel (%p376) target = $region56
        $region55: #{tpu_custom_call.1} parent=47 // pred_region
          %379 = dma.done %s372, 768
        $region56: #{tpu_custom_call.1} parent=47 // pred_fallthru
          _
        // Predicated region
        $region57: #{tpu_custom_call.1} parent=47 // pred_check
          %p380 = pneg %p103
        $region58: #{tpu_custom_call.1} parent=47 // pred_check_branch
          %382 = sbr.rel (%p380) target = $region60
        $region59: #{tpu_custom_call.1} parent=47 // pred_region
          %383 = dma.done [#allocation7], 32
        $region60: #{tpu_custom_call.1} parent=47 // pred_fallthru
          _
        // Predicated region
        $region61: #{tpu_custom_call.1} parent=47 // pred_check
          %p384 = pneg %p124
        $region62: #{tpu_custom_call.1} parent=47 // pred_check_branch
          %386 = sbr.rel (%p384) target = $region64
        $region63: #{tpu_custom_call.1} parent=47 // pred_region
          %387 = dma.done [#allocation12], 16
        $region64: #{tpu_custom_call.1} parent=47 // pred_fallthru
          _
        // Predicated region
        $region65: #{tpu_custom_call.1} parent=47 // pred_check
          %p388 = pneg %p145
        $region66: #{tpu_custom_call.1} parent=47 // pred_check_branch
          %390 = sbr.rel (%p388) target = $region68
        $region67: #{tpu_custom_call.1} parent=47 // pred_region
          %391 = dma.done [#allocation12], 16
        $region68: #{tpu_custom_call.1} parent=47 // pred_fallthru
          _
        // Predicated region
        $region69: #{tpu_custom_call.1} parent=47 // pred_check
          %p392 = pneg %p166
        $region70: #{tpu_custom_call.1} parent=47 // pred_check_branch
          %394 = sbr.rel (%p392) target = $region72
        $region71: #{tpu_custom_call.1} parent=47 // pred_region
          %395 = dma.done [#allocation15], 16
        $region72: #{tpu_custom_call.1} parent=47 // pred_fallthru
          _
        // Predicated region
        $region73: #{tpu_custom_call.1} parent=47 // pred_check
          %p396 = pneg %p187
        $region74: #{tpu_custom_call.1} parent=47 // pred_check_branch
          %398 = sbr.rel (%p396) target = $region76
        $region75: #{tpu_custom_call.1} parent=47 // pred_region
          %399 = dma.done [#allocation15], 16
        $region76: #{tpu_custom_call.1} parent=47 // pred_fallthru
          _
        %400 = sfence
        %s401 = sand.u32 %s43, 1
        %s402 = scalar_lea.sflag [#allocation5], %s401
        %s403 = sand.u32 %s43, 1
        %s404 = smul.addr %s403, 64
        %s405 = scalar_lea.vmem [#allocation4], %s404
        %p406 = pneg %p56
        %p407 = pneg %p53
        %s408 = sand.u32 %s69, 1
        %s409 = scalar_lea.sflag [#allocation9], %s408
        %s410 = sand.u32 %s69, 1
        %s411 = smul.addr %s410, 48
        %s412 = scalar_lea.vmem [#allocation8], %s411
        %p413 = pneg %p82
        %p414 = pneg %p79
        %p415 = pneg %p103
        %p416 = pneg %p100
        %p417 = pneg %p124
        %p418 = pneg %p121
        %p419 = pneg %p145
        %p420 = pneg %p142
        %p421 = pneg %p166
        %p422 = pneg %p163
        %p423 = pneg %p187
        %p424 = pneg %p184
        %p425 = pneg %p213
        %p426 = pneg %p210
        %s427 = sand.u32 %s200, 1
        %s428 = scalar_lea.sflag [#allocation6], %s427
        %s429 = sand.u32 %s200, 1
        %s430 = smul.addr %s429, 64
        %s431 = scalar_lea.vmem [#allocation17], %s430
        %p432 = pneg %p239
        %p433 = pneg %p236
        %s434 = sand.u32 %s226, 1
        %s435 = scalar_lea.sflag [#allocation19], %s434
        %s436 = sand.u32 %s226, 1
        %s437 = smul.addr %s436, 48
        %s438 = scalar_lea.vmem [#allocation18], %s437
        %vm439 = vcmask 139264
        %440 = vst.msk [vmem:[#allocation2] sm:$0x1] %vm439, 0.0
        %441 = vst.msk [vmem:[#allocation2 + $0x18] sm:$0x1] %vm439, 0.0
        %442 = vst.msk [vmem:[#allocation2 + $0x30] sm:$0x1] %vm439, 0.0
        %443 = vst.msk [vmem:[#allocation2 + $0x48] sm:$0x1] %vm439, 0.0
        %444 = vst.msk [vmem:[#allocation2 + $0x11] sm:$0x1] %vm439, 0.0
        %445 = vst.msk [vmem:[#allocation2 + $0x29] sm:$0x1] %vm439, 0.0
        %446 = vst.msk [vmem:[#allocation2 + $0x41] sm:$0x1] %vm439, 0.0
        %447 = vst.msk [vmem:[#allocation2 + $0x59] sm:$0x1] %vm439, 0.0
        %vm448 = vcmask 7168
        %449 = vst.msk [vmem:[#allocation2 + $0x1] sm:$0xff] %vm448, 0.0
        %450 = vst.msk [vmem:[#allocation2 + $0x9] sm:$0xff] %vm448, 0.0
        %451 = vst.msk [vmem:[#allocation2 + $0x19] sm:$0xff] %vm448, 0.0
        %452 = vst.msk [vmem:[#allocation2 + $0x21] sm:$0xff] %vm448, 0.0
        %453 = vst.msk [vmem:[#allocation2 + $0x31] sm:$0xff] %vm448, 0.0
        %454 = vst.msk [vmem:[#allocation2 + $0x39] sm:$0xff] %vm448, 0.0
        %455 = vst.msk [vmem:[#allocation2 + $0x49] sm:$0xff] %vm448, 0.0
        %456 = vst.msk [vmem:[#allocation2 + $0x51] sm:$0xff] %vm448, 0.0
        %vm457 = vcmask 146568
        %458 = vst.msk [vmem:[#allocation2 + $0x1] sm:$0xff] %vm457, 0.0
        %459 = vst.msk [vmem:[#allocation2 + $0x9] sm:$0xff] %vm457, 0.0
        %460 = vst.msk [vmem:[#allocation2 + $0x19] sm:$0xff] %vm457, 0.0
        %461 = vst.msk [vmem:[#allocation2 + $0x21] sm:$0xff] %vm457, 0.0
        %462 = vst.msk [vmem:[#allocation2 + $0x31] sm:$0xff] %vm457, 0.0
        %463 = vst.msk [vmem:[#allocation2 + $0x39] sm:$0xff] %vm457, 0.0
        %464 = vst.msk [vmem:[#allocation2 + $0x49] sm:$0xff] %vm457, 0.0
        %465 = vst.msk [vmem:[#allocation2 + $0x51] sm:$0xff] %vm457, 0.0
        %v466 = vld [vmem:[%s366] sm:$0xff]
        %v467 = vld [vmem:[%s366 + $0x8] sm:$0xff]
        %v468 = vld [vmem:[%s366 + $0x10] sm:$0xff]
        %v469 = vld [vmem:[%s366 + $0x18] sm:$0xff]
        %v470 = vld [vmem:[%s366 + $0x20] sm:$0xff]
        %v471 = vld [vmem:[%s366 + $0x28] sm:$0xff]
        %v472 = vld [vmem:[%s366 + $0x30] sm:$0xff]
        %v473 = vld [vmem:[%s366 + $0x38] sm:$0xff]
        %482 = vrot.lane.b32.xlu0 %v466, 1
        %v483 = vpop.permute.xlu0 %482
        %484 = vrot.lane.b32.xlu0 %v467, 1
        %v485 = vpop.permute.xlu0 %484
        %486 = vrot.lane.b32.xlu0 %v468, 1
        %v487 = vpop.permute.xlu0 %486
        %488 = vrot.lane.b32.xlu0 %v469, 1
        %v489 = vpop.permute.xlu0 %488
        %490 = vrot.lane.b32.xlu0 %v470, 1
        %v491 = vpop.permute.xlu0 %490
        %492 = vrot.lane.b32.xlu0 %v471, 1
        %v493 = vpop.permute.xlu0 %492
        %494 = vrot.lane.b32.xlu0 %v472, 1
        %v495 = vpop.permute.xlu0 %494
        %496 = vrot.lane.b32.xlu0 %v473, 1
        %v497 = vpop.permute.xlu0 %496
        %vm506 = vcmask 138248
        %507 = vst.msk [vmem:[#allocation2 + $0x1] sm:$0xff] %vm506, %v483
        %508 = vst.msk [vmem:[#allocation2 + $0x9] sm:$0xff] %vm506, %v485
        %509 = vst.msk [vmem:[#allocation2 + $0x19] sm:$0xff] %vm506, %v487
        %510 = vst.msk [vmem:[#allocation2 + $0x21] sm:$0xff] %vm506, %v489
        %511 = vst.msk [vmem:[#allocation2 + $0x31] sm:$0xff] %vm506, %v491
        %512 = vst.msk [vmem:[#allocation2 + $0x39] sm:$0xff] %vm506, %v493
        %513 = vst.msk [vmem:[#allocation2 + $0x49] sm:$0xff] %vm506, %v495
        %514 = vst.msk [vmem:[#allocation2 + $0x51] sm:$0xff] %vm506, %v497
        %515 = vst.msk [vmem:[#allocation3] sm:$0x1] %vm439, 0.0
        %516 = vst.msk [vmem:[#allocation3 + $0x18] sm:$0x1] %vm439, 0.0
        %517 = vst.msk [vmem:[#allocation3 + $0x30] sm:$0x1] %vm439, 0.0
        %518 = vst.msk [vmem:[#allocation3 + $0x11] sm:$0x1] %vm439, 0.0
        %519 = vst.msk [vmem:[#allocation3 + $0x29] sm:$0x1] %vm439, 0.0
        %520 = vst.msk [vmem:[#allocation3 + $0x41] sm:$0x1] %vm439, 0.0
        %521 = vst.msk [vmem:[#allocation3 + $0x1] sm:$0xff] %vm448, 0.0
        %522 = vst.msk [vmem:[#allocation3 + $0x9] sm:$0xff] %vm448, 0.0
        %523 = vst.msk [vmem:[#allocation3 + $0x19] sm:$0xff] %vm448, 0.0
        %524 = vst.msk [vmem:[#allocation3 + $0x21] sm:$0xff] %vm448, 0.0
        %525 = vst.msk [vmem:[#allocation3 + $0x31] sm:$0xff] %vm448, 0.0
        %526 = vst.msk [vmem:[#allocation3 + $0x39] sm:$0xff] %vm448, 0.0
        %527 = vst.msk [vmem:[#allocation3 + $0x1] sm:$0xff] %vm457, 0.0
        %528 = vst.msk [vmem:[#allocation3 + $0x9] sm:$0xff] %vm457, 0.0
        %529 = vst.msk [vmem:[#allocation3 + $0x19] sm:$0xff] %vm457, 0.0
        %530 = vst.msk [vmem:[#allocation3 + $0x21] sm:$0xff] %vm457, 0.0
        %531 = vst.msk [vmem:[#allocation3 + $0x31] sm:$0xff] %vm457, 0.0
        %532 = vst.msk [vmem:[#allocation3 + $0x39] sm:$0xff] %vm457, 0.0
        %s533 = sld [smem:[#allocation11]]
        %v534 = vstv %s533
        %s535 = sld [smem:[#allocation11 + $0x1]]
        %v536 = vstv %s535
        %s537 = sld [smem:[#allocation11 + $0x2]]
        %v538 = vstv %s537
        %s539 = sld [smem:[#allocation11 + $0x3]]
        %v540 = vstv %s539
        %v541 = vld [vmem:[%s375] sm:$0xff]
        %v542 = vld [vmem:[%s375 + $0x8] sm:$0xff]
        %s543 = sld [smem:[#allocation13]]
        %v544 = vstv %s543
        %v545 = vadd.f32 %v541, %v544
        %v546 = vadd.f32 %v542, %v544
        %s547 = scalar_lea.vmem %s375, 16 [#allocation8]
        %v548 = vld [vmem:[%s547] sm:$0xff]
        %v549 = vld [vmem:[%s547 + $0x8] sm:$0xff]
        %s550 = sld [smem:[#allocation13 + $0x1]]
        %v551 = vstv %s550
        %v552 = vadd.f32 %v548, %v551
        %v553 = vadd.f32 %v549, %v551
        %s554 = scalar_lea.vmem %s375, 32 [#allocation8]
        %v555 = vld [vmem:[%s554] sm:$0xff]
        %v556 = vld [vmem:[%s554 + $0x8] sm:$0xff]
        %s557 = sld [smem:[#allocation13 + $0x2]]
        %v558 = vstv %s557
        %v559 = vadd.f32 %v555, %v558
        %v560 = vadd.f32 %v556, %v558
        %v561 = vld [vmem:[#allocation2] sm:$0xff]
        %v562 = vld [vmem:[#allocation2 + $0x8] sm:$0xff]
        %s563 = sld [smem:[#allocation10]]
        %v564 = vstv %s563
        %v565 = vmul.f32 %v564, %v561
        %v566 = vmul.f32 %v564, %v562
        %v567 = vadd.f32 %v534, %v565
        %v568 = vadd.f32 %v534, %v566
        %s569 = sld [smem:[#allocation10 + $0x1]]
        %v570 = vstv %s569
        %v571 = vmul.f32 %v570, %v561
        %v572 = vmul.f32 %v570, %v562
        %v573 = vadd.f32 %v536, %v571
        %v574 = vadd.f32 %v536, %v572
        %s575 = sld [smem:[#allocation10 + $0x2]]
        %v576 = vstv %s575
        %v577 = vmul.f32 %v576, %v561
        %v578 = vmul.f32 %v576, %v562
        %v579 = vadd.f32 %v538, %v577
        %v580 = vadd.f32 %v538, %v578
        %s581 = sld [smem:[#allocation10 + $0x3]]
        %v582 = vstv %s581
        %v583 = vmul.f32 %v582, %v561
        %v584 = vmul.f32 %v582, %v562
        %v585 = vadd.f32 %v540, %v583
        %v586 = vadd.f32 %v540, %v584
        %s587 = sld [smem:[#allocation10 + $0x4]]
        %v588 = vstv %s587
        %v589 = vmul.f32 %v588, %v561
        %v590 = vmul.f32 %v588, %v562
        %v591 = vadd.f32 %v545, %v589
        %v592 = vadd.f32 %v546, %v590
        %s593 = sld [smem:[#allocation10 + $0x5]]
        %v594 = vstv %s593
        %v595 = vmul.f32 %v594, %v561
        %v596 = vmul.f32 %v594, %v562
        %v597 = vadd.f32 %v552, %v595
        %v598 = vadd.f32 %v553, %v596
        %s599 = sld [smem:[#allocation10 + $0x6]]
        %v600 = vstv %s599
        %v601 = vmul.f32 %v600, %v561
        %v602 = vmul.f32 %v600, %v562
        %v603 = vadd.f32 %v559, %v601
        %v604 = vadd.f32 %v560, %v602
        %s605 = sld [smem:[#allocation10 + $0x7]]
        %v606 = vstv %s605
        %v607 = vmul.f32 %v606, %v561
        %v608 = vmul.f32 %v606, %v562
        %611 = vrot.lane.b32.xlu0 %v607, 127
        %v612 = vpop.permute.xlu0 %611
        %613 = vrot.lane.b32.xlu0 %v608, 127
        %v614 = vpop.permute.xlu0 %613
        %v617 = vadd.f32 %v567, %v612
        %v618 = vadd.f32 %v568, %v614
        %s619 = sld [smem:[#allocation10 + $0x8]]
        %v620 = vstv %s619
        %v621 = vmul.f32 %v620, %v561
        %v622 = vmul.f32 %v620, %v562
        %625 = vrot.lane.b32.xlu0 %v621, 127
        %v626 = vpop.permute.xlu0 %625
        %627 = vrot.lane.b32.xlu0 %v622, 127
        %v628 = vpop.permute.xlu0 %627
        %v631 = vadd.f32 %v573, %v626
        %v632 = vadd.f32 %v574, %v628
        %s633 = sld [smem:[#allocation10 + $0x9]]
        %v634 = vstv %s633
        %v635 = vmul.f32 %v634, %v561
        %v636 = vmul.f32 %v634, %v562
        %639 = vrot.lane.b32.xlu0 %v635, 127
        %v640 = vpop.permute.xlu0 %639
        %641 = vrot.lane.b32.xlu0 %v636, 127
        %v642 = vpop.permute.xlu0 %641
        %v645 = vadd.f32 %v579, %v640
        %v646 = vadd.f32 %v580, %v642
        %s647 = sld [smem:[#allocation10 + $0xa]]
        %v648 = vstv %s647
        %v649 = vmul.f32 %v648, %v561
        %v650 = vmul.f32 %v648, %v562
        %653 = vrot.lane.b32.xlu0 %v649, 127
        %v654 = vpop.permute.xlu0 %653
        %655 = vrot.lane.b32.xlu0 %v650, 127
        %v656 = vpop.permute.xlu0 %655
        %v659 = vadd.f32 %v585, %v654
        %v660 = vadd.f32 %v586, %v656
        %s661 = sld [smem:[#allocation10 + $0xb]]
        %v662 = vstv %s661
        %v663 = vmul.f32 %v662, %v561
        %v664 = vmul.f32 %v662, %v562
        %667 = vrot.lane.b32.xlu0 %v663, 127
        %v668 = vpop.permute.xlu0 %667
        %669 = vrot.lane.b32.xlu0 %v664, 127
        %v670 = vpop.permute.xlu0 %669
        %v673 = vadd.f32 %v591, %v668
        %v674 = vadd.f32 %v592, %v670
        %s675 = sld [smem:[#allocation10 + $0xc]]
        %v676 = vstv %s675
        %v677 = vmul.f32 %v676, %v561
        %v678 = vmul.f32 %v676, %v562
        %681 = vrot.lane.b32.xlu0 %v677, 127
        %v682 = vpop.permute.xlu0 %681
        %683 = vrot.lane.b32.xlu0 %v678, 127
        %v684 = vpop.permute.xlu0 %683
        %v687 = vadd.f32 %v597, %v682
        %v688 = vadd.f32 %v598, %v684
        %s689 = sld [smem:[#allocation10 + $0xd]]
        %v690 = vstv %s689
        %v691 = vmul.f32 %v690, %v561
        %v692 = vmul.f32 %v690, %v562
        %695 = vrot.lane.b32.xlu0 %v691, 127
        %v696 = vpop.permute.xlu0 %695
        %697 = vrot.lane.b32.xlu0 %v692, 127
        %v698 = vpop.permute.xlu0 %697
        %v701 = vadd.f32 %v603, %v696
        %v702 = vadd.f32 %v604, %v698
        %s703 = sld [smem:[#allocation10 + $0xe]]
        %v704 = vstv %s703
        %v705 = vmul.f32 %v704, %v561
        %v706 = vmul.f32 %v704, %v562
        %709 = vrot.lane.b32.xlu0 %v705, 126
        %v710 = vpop.permute.xlu0 %709
        %711 = vrot.lane.b32.xlu0 %v706, 126
        %v712 = vpop.permute.xlu0 %711
        %v715 = vadd.f32 %v617, %v710
        %v716 = vadd.f32 %v618, %v712
        %s717 = sld [smem:[#allocation10 + $0xf]]
        %v718 = vstv %s717
        %v719 = vmul.f32 %v718, %v561
        %v720 = vmul.f32 %v718, %v562
        %723 = vrot.lane.b32.xlu0 %v719, 126
        %v724 = vpop.permute.xlu0 %723
        %725 = vrot.lane.b32.xlu0 %v720, 126
        %v726 = vpop.permute.xlu0 %725
        %v729 = vadd.f32 %v631, %v724
        %v730 = vadd.f32 %v632, %v726
        %s731 = sld [smem:[#allocation10 + $0x10]]
        %v732 = vstv %s731
        %v733 = vmul.f32 %v732, %v561
        %v734 = vmul.f32 %v732, %v562
        %737 = vrot.lane.b32.xlu0 %v733, 126
        %v738 = vpop.permute.xlu0 %737
        %739 = vrot.lane.b32.xlu0 %v734, 126
        %v740 = vpop.permute.xlu0 %739
        %v743 = vadd.f32 %v645, %v738
        %v744 = vadd.f32 %v646, %v740
        %s745 = sld [smem:[#allocation10 + $0x11]]
        %v746 = vstv %s745
        %v747 = vmul.f32 %v746, %v561
        %v748 = vmul.f32 %v746, %v562
        %751 = vrot.lane.b32.xlu0 %v747, 126
        %v752 = vpop.permute.xlu0 %751
        %753 = vrot.lane.b32.xlu0 %v748, 126
        %v754 = vpop.permute.xlu0 %753
        %v757 = vadd.f32 %v659, %v752
        %v758 = vadd.f32 %v660, %v754
        %s759 = sld [smem:[#allocation10 + $0x12]]
        %v760 = vstv %s759
        %v761 = vmul.f32 %v760, %v561
        %v762 = vmul.f32 %v760, %v562
        %765 = vrot.lane.b32.xlu0 %v761, 126
        %v766 = vpop.permute.xlu0 %765
        %767 = vrot.lane.b32.xlu0 %v762, 126
        %v768 = vpop.permute.xlu0 %767
        %v771 = vadd.f32 %v673, %v766
        %v772 = vadd.f32 %v674, %v768
        %s773 = sld [smem:[#allocation10 + $0x13]]
        %v774 = vstv %s773
        %v775 = vmul.f32 %v774, %v561
        %v776 = vmul.f32 %v774, %v562
        %779 = vrot.lane.b32.xlu0 %v775, 126
        %v780 = vpop.permute.xlu0 %779
        %781 = vrot.lane.b32.xlu0 %v776, 126
        %v782 = vpop.permute.xlu0 %781
        %v785 = vadd.f32 %v687, %v780
        %v786 = vadd.f32 %v688, %v782
        %s787 = sld [smem:[#allocation10 + $0x14]]
        %v788 = vstv %s787
        %v789 = vmul.f32 %v788, %v561
        %v790 = vmul.f32 %v788, %v562
        %793 = vrot.lane.b32.xlu0 %v789, 126
        %v794 = vpop.permute.xlu0 %793
        %795 = vrot.lane.b32.xlu0 %v790, 126
        %v796 = vpop.permute.xlu0 %795
        %v799 = vadd.f32 %v701, %v794
        %v800 = vadd.f32 %v702, %v796
        %v801 = vld [vmem:[#allocation2 + $0x1] sm:$0xff]
        %v802 = vld [vmem:[#allocation2 + $0x9] sm:$0xff]
        %s803 = sld [smem:[#allocation10 + $0x15]]
        %v804 = vstv %s803
        %v805 = vmul.f32 %v804, %v801
        %v806 = vmul.f32 %v804, %v802
        %v807 = vadd.f32 %v715, %v805
        %v808 = vadd.f32 %v716, %v806
        %s809 = sld [smem:[#allocation10 + $0x16]]
        %v810 = vstv %s809
        %v811 = vmul.f32 %v810, %v801
        %v812 = vmul.f32 %v810, %v802
        %v813 = vadd.f32 %v729, %v811
        %v814 = vadd.f32 %v730, %v812
        %s815 = sld [smem:[#allocation10 + $0x17]]
        %v816 = vstv %s815
        %v817 = vmul.f32 %v816, %v801
        %v818 = vmul.f32 %v816, %v802
        %v819 = vadd.f32 %v743, %v817
        %v820 = vadd.f32 %v744, %v818
        %s821 = sld [smem:[#allocation10 + $0x18]]
        %v822 = vstv %s821
        %v823 = vmul.f32 %v822, %v801
        %v824 = vmul.f32 %v822, %v802
        %v825 = vadd.f32 %v757, %v823
        %v826 = vadd.f32 %v758, %v824
        %s827 = sld [smem:[#allocation10 + $0x19]]
        %v828 = vstv %s827
        %v829 = vmul.f32 %v828, %v801
        %v830 = vmul.f32 %v828, %v802
        %v831 = vadd.f32 %v771, %v829
        %v832 = vadd.f32 %v772, %v830
        %s833 = sld [smem:[#allocation10 + $0x1a]]
        %v834 = vstv %s833
        %v835 = vmul.f32 %v834, %v801
        %v836 = vmul.f32 %v834, %v802
        %v837 = vadd.f32 %v785, %v835
        %v838 = vadd.f32 %v786, %v836
        %s839 = sld [smem:[#allocation10 + $0x1b]]
        %v840 = vstv %s839
        %v841 = vmul.f32 %v840, %v801
        %v842 = vmul.f32 %v840, %v802
        %v843 = vadd.f32 %v799, %v841
        %v844 = vadd.f32 %v800, %v842
        %s845 = sld [smem:[#allocation10 + $0x1c]]
        %v846 = vstv %s845
        %v847 = vmul.f32 %v846, %v801
        %v848 = vmul.f32 %v846, %v802
        %851 = vrot.lane.b32.xlu0 %v847, 127
        %v852 = vpop.permute.xlu0 %851
        %853 = vrot.lane.b32.xlu0 %v848, 127
        %v854 = vpop.permute.xlu0 %853
        %v857 = vadd.f32 %v807, %v852
        %v858 = vadd.f32 %v808, %v854
        %s859 = sld [smem:[#allocation10 + $0x1d]]
        %v860 = vstv %s859
        %v861 = vmul.f32 %v860, %v801
        %v862 = vmul.f32 %v860, %v802
        %865 = vrot.lane.b32.xlu0 %v861, 127
        %v866 = vpop.permute.xlu0 %865
        %867 = vrot.lane.b32.xlu0 %v862, 127
        %v868 = vpop.permute.xlu0 %867
        %v871 = vadd.f32 %v813, %v866
        %v872 = vadd.f32 %v814, %v868
        %s873 = sld [smem:[#allocation10 + $0x1e]]
        %v874 = vstv %s873
        %v875 = vmul.f32 %v874, %v801
        %v876 = vmul.f32 %v874, %v802
        %879 = vrot.lane.b32.xlu0 %v875, 127
        %v880 = vpop.permute.xlu0 %879
        %881 = vrot.lane.b32.xlu0 %v876, 127
        %v882 = vpop.permute.xlu0 %881
        %v885 = vadd.f32 %v819, %v880
        %v886 = vadd.f32 %v820, %v882
        %s887 = sld [smem:[#allocation10 + $0x1f]]
        %v888 = vstv %s887
        %v889 = vmul.f32 %v888, %v801
        %v890 = vmul.f32 %v888, %v802
        %893 = vrot.lane.b32.xlu0 %v889, 127
        %v894 = vpop.permute.xlu0 %893
        %895 = vrot.lane.b32.xlu0 %v890, 127
        %v896 = vpop.permute.xlu0 %895
        %v899 = vadd.f32 %v825, %v894
        %v900 = vadd.f32 %v826, %v896
        %s901 = sld [smem:[#allocation10 + $0x20]]
        %v902 = vstv %s901
        %v903 = vmul.f32 %v902, %v801
        %v904 = vmul.f32 %v902, %v802
        %907 = vrot.lane.b32.xlu0 %v903, 127
        %v908 = vpop.permute.xlu0 %907
        %909 = vrot.lane.b32.xlu0 %v904, 127
        %v910 = vpop.permute.xlu0 %909
        %v913 = vadd.f32 %v831, %v908
        %v914 = vadd.f32 %v832, %v910
        %s915 = sld [smem:[#allocation10 + $0x21]]
        %v916 = vstv %s915
        %v917 = vmul.f32 %v916, %v801
        %v918 = vmul.f32 %v916, %v802
        %921 = vrot.lane.b32.xlu0 %v917, 127
        %v922 = vpop.permute.xlu0 %921
        %923 = vrot.lane.b32.xlu0 %v918, 127
        %v924 = vpop.permute.xlu0 %923
        %v927 = vadd.f32 %v837, %v922
        %v928 = vadd.f32 %v838, %v924
        %s929 = sld [smem:[#allocation10 + $0x22]]
        %v930 = vstv %s929
        %v931 = vmul.f32 %v930, %v801
        %v932 = vmul.f32 %v930, %v802
        %935 = vrot.lane.b32.xlu0 %v931, 127
        %v936 = vpop.permute.xlu0 %935
        %937 = vrot.lane.b32.xlu0 %v932, 127
        %v938 = vpop.permute.xlu0 %937
        %v941 = vadd.f32 %v843, %v936
        %v942 = vadd.f32 %v844, %v938
        %s943 = sld [smem:[#allocation10 + $0x23]]
        %v944 = vstv %s943
        %v945 = vmul.f32 %v944, %v801
        %v946 = vmul.f32 %v944, %v802
        %949 = vrot.lane.b32.xlu0 %v945, 126
        %v950 = vpop.permute.xlu0 %949
        %951 = vrot.lane.b32.xlu0 %v946, 126
        %v952 = vpop.permute.xlu0 %951
        %v955 = vadd.f32 %v857, %v950
        %v956 = vadd.f32 %v858, %v952
        %s957 = sld [smem:[#allocation10 + $0x24]]
        %v958 = vstv %s957
        %v959 = vmul.f32 %v958, %v801
        %v960 = vmul.f32 %v958, %v802
        %963 = vrot.lane.b32.xlu0 %v959, 126
        %v964 = vpop.permute.xlu0 %963
        %965 = vrot.lane.b32.xlu0 %v960, 126
        %v966 = vpop.permute.xlu0 %965
        %v969 = vadd.f32 %v871, %v964
        %v970 = vadd.f32 %v872, %v966
        %s971 = sld [smem:[#allocation10 + $0x25]]
        %v972 = vstv %s971
        %v973 = vmul.f32 %v972, %v801
        %v974 = vmul.f32 %v972, %v802
        %977 = vrot.lane.b32.xlu0 %v973, 126
        %v978 = vpop.permute.xlu0 %977
        %979 = vrot.lane.b32.xlu0 %v974, 126
        %v980 = vpop.permute.xlu0 %979
        %v983 = vadd.f32 %v885, %v978
        %v984 = vadd.f32 %v886, %v980
        %s985 = sld [smem:[#allocation10 + $0x26]]
        %v986 = vstv %s985
        %v987 = vmul.f32 %v986, %v801
        %v988 = vmul.f32 %v986, %v802
        %991 = vrot.lane.b32.xlu0 %v987, 126
        %v992 = vpop.permute.xlu0 %991
        %993 = vrot.lane.b32.xlu0 %v988, 126
        %v994 = vpop.permute.xlu0 %993
        %v997 = vadd.f32 %v899, %v992
        %v998 = vadd.f32 %v900, %v994
        %s999 = sld [smem:[#allocation10 + $0x27]]
        %v1000 = vstv %s999
        %v1001 = vmul.f32 %v1000, %v801
        %v1002 = vmul.f32 %v1000, %v802
        %1005 = vrot.lane.b32.xlu0 %v1001, 126
        %v1006 = vpop.permute.xlu0 %1005
        %1007 = vrot.lane.b32.xlu0 %v1002, 126
        %v1008 = vpop.permute.xlu0 %1007
        %v1011 = vadd.f32 %v913, %v1006
        %v1012 = vadd.f32 %v914, %v1008
        %s1013 = sld [smem:[#allocation10 + $0x28]]
        %v1014 = vstv %s1013
        %v1015 = vmul.f32 %v1014, %v801
        %v1016 = vmul.f32 %v1014, %v802
        %1019 = vrot.lane.b32.xlu0 %v1015, 126
        %v1020 = vpop.permute.xlu0 %1019
        %1021 = vrot.lane.b32.xlu0 %v1016, 126
        %v1022 = vpop.permute.xlu0 %1021
        %v1025 = vadd.f32 %v927, %v1020
        %v1026 = vadd.f32 %v928, %v1022
        %s1027 = sld [smem:[#allocation10 + $0x29]]
        %v1028 = vstv %s1027
        %v1029 = vmul.f32 %v1028, %v801
        %v1030 = vmul.f32 %v1028, %v802
        %1033 = vrot.lane.b32.xlu0 %v1029, 126
        %v1034 = vpop.permute.xlu0 %1033
        %1035 = vrot.lane.b32.xlu0 %v1030, 126
        %v1036 = vpop.permute.xlu0 %1035
        %v1039 = vadd.f32 %v941, %v1034
        %v1040 = vadd.f32 %v942, %v1036
        %v1041 = vld [vmem:[#allocation2 + $0x2] sm:$0xff]
        %v1042 = vld [vmem:[#allocation2 + $0xa] sm:$0xff]
        %s1043 = sld [smem:[#allocation10 + $0x2a]]
        %v1044 = vstv %s1043
        %v1045 = vmul.f32 %v1044, %v1041
        %v1046 = vmul.f32 %v1044, %v1042
        %v1047 = vadd.f32 %v955, %v1045
        %v1048 = vadd.f32 %v956, %v1046
        %s1049 = sld [smem:[#allocation10 + $0x2b]]
        %v1050 = vstv %s1049
        %v1051 = vmul.f32 %v1050, %v1041
        %v1052 = vmul.f32 %v1050, %v1042
        %v1053 = vadd.f32 %v969, %v1051
        %v1054 = vadd.f32 %v970, %v1052
        %s1055 = sld [smem:[#allocation10 + $0x2c]]
        %v1056 = vstv %s1055
        %v1057 = vmul.f32 %v1056, %v1041
        %v1058 = vmul.f32 %v1056, %v1042
        %v1059 = vadd.f32 %v983, %v1057
        %v1060 = vadd.f32 %v984, %v1058
        %s1061 = sld [smem:[#allocation10 + $0x2d]]
        %v1062 = vstv %s1061
        %v1063 = vmul.f32 %v1062, %v1041
        %v1064 = vmul.f32 %v1062, %v1042
        %v1065 = vadd.f32 %v997, %v1063
        %v1066 = vadd.f32 %v998, %v1064
        %s1067 = sld [smem:[#allocation10 + $0x2e]]
        %v1068 = vstv %s1067
        %v1069 = vmul.f32 %v1068, %v1041
        %v1070 = vmul.f32 %v1068, %v1042
        %v1071 = vadd.f32 %v1011, %v1069
        %v1072 = vadd.f32 %v1012, %v1070
        %s1073 = sld [smem:[#allocation10 + $0x2f]]
        %v1074 = vstv %s1073
        %v1075 = vmul.f32 %v1074, %v1041
        %v1076 = vmul.f32 %v1074, %v1042
        %v1077 = vadd.f32 %v1025, %v1075
        %v1078 = vadd.f32 %v1026, %v1076
        %s1079 = sld [smem:[#allocation10 + $0x30]]
        %v1080 = vstv %s1079
        %v1081 = vmul.f32 %v1080, %v1041
        %v1082 = vmul.f32 %v1080, %v1042
        %v1083 = vadd.f32 %v1039, %v1081
        %v1084 = vadd.f32 %v1040, %v1082
        %s1085 = sld [smem:[#allocation10 + $0x31]]
        %v1086 = vstv %s1085
        %v1087 = vmul.f32 %v1086, %v1041
        %v1088 = vmul.f32 %v1086, %v1042
        %1091 = vrot.lane.b32.xlu0 %v1087, 127
        %v1092 = vpop.permute.xlu0 %1091
        %1093 = vrot.lane.b32.xlu0 %v1088, 127
        %v1094 = vpop.permute.xlu0 %1093
        %v1097 = vadd.f32 %v1047, %v1092
        %v1098 = vadd.f32 %v1048, %v1094
        %s1099 = sld [smem:[#allocation10 + $0x32]]
        %v1100 = vstv %s1099
        %v1101 = vmul.f32 %v1100, %v1041
        %v1102 = vmul.f32 %v1100, %v1042
        %1105 = vrot.lane.b32.xlu0 %v1101, 127
        %v1106 = vpop.permute.xlu0 %1105
        %1107 = vrot.lane.b32.xlu0 %v1102, 127
        %v1108 = vpop.permute.xlu0 %1107
        %v1111 = vadd.f32 %v1053, %v1106
        %v1112 = vadd.f32 %v1054, %v1108
        %s1113 = sld [smem:[#allocation10 + $0x33]]
        %v1114 = vstv %s1113
        %v1115 = vmul.f32 %v1114, %v1041
        %v1116 = vmul.f32 %v1114, %v1042
        %1119 = vrot.lane.b32.xlu0 %v1115, 127
        %v1120 = vpop.permute.xlu0 %1119
        %1121 = vrot.lane.b32.xlu0 %v1116, 127
        %v1122 = vpop.permute.xlu0 %1121
        %v1125 = vadd.f32 %v1059, %v1120
        %v1126 = vadd.f32 %v1060, %v1122
        %s1127 = sld [smem:[#allocation10 + $0x34]]
        %v1128 = vstv %s1127
        %v1129 = vmul.f32 %v1128, %v1041
        %v1130 = vmul.f32 %v1128, %v1042
        %1133 = vrot.lane.b32.xlu0 %v1129, 127
        %v1134 = vpop.permute.xlu0 %1133
        %1135 = vrot.lane.b32.xlu0 %v1130, 127
        %v1136 = vpop.permute.xlu0 %1135
        %v1139 = vadd.f32 %v1065, %v1134
        %v1140 = vadd.f32 %v1066, %v1136
        %s1141 = sld [smem:[#allocation10 + $0x35]]
        %v1142 = vstv %s1141
        %v1143 = vmul.f32 %v1142, %v1041
        %v1144 = vmul.f32 %v1142, %v1042
        %1147 = vrot.lane.b32.xlu0 %v1143, 127
        %v1148 = vpop.permute.xlu0 %1147
        %1149 = vrot.lane.b32.xlu0 %v1144, 127
        %v1150 = vpop.permute.xlu0 %1149
        %v1153 = vadd.f32 %v1071, %v1148
        %v1154 = vadd.f32 %v1072, %v1150
        %s1155 = sld [smem:[#allocation10 + $0x36]]
        %v1156 = vstv %s1155
        %v1157 = vmul.f32 %v1156, %v1041
        %v1158 = vmul.f32 %v1156, %v1042
        %1161 = vrot.lane.b32.xlu0 %v1157, 127
        %v1162 = vpop.permute.xlu0 %1161
        %1163 = vrot.lane.b32.xlu0 %v1158, 127
        %v1164 = vpop.permute.xlu0 %1163
        %v1167 = vadd.f32 %v1077, %v1162
        %v1168 = vadd.f32 %v1078, %v1164
        %s1169 = sld [smem:[#allocation10 + $0x37]]
        %v1170 = vstv %s1169
        %v1171 = vmul.f32 %v1170, %v1041
        %v1172 = vmul.f32 %v1170, %v1042
        %1175 = vrot.lane.b32.xlu0 %v1171, 127
        %v1176 = vpop.permute.xlu0 %1175
        %1177 = vrot.lane.b32.xlu0 %v1172, 127
        %v1178 = vpop.permute.xlu0 %1177
        %v1181 = vadd.f32 %v1083, %v1176
        %v1182 = vadd.f32 %v1084, %v1178
        %s1183 = sld [smem:[#allocation10 + $0x38]]
        %v1184 = vstv %s1183
        %v1185 = vmul.f32 %v1184, %v1041
        %v1186 = vmul.f32 %v1184, %v1042
        %1189 = vrot.lane.b32.xlu0 %v1185, 126
        %v1190 = vpop.permute.xlu0 %1189
        %1191 = vrot.lane.b32.xlu0 %v1186, 126
        %v1192 = vpop.permute.xlu0 %1191
        %v1195 = vadd.f32 %v1097, %v1190
        %v1196 = vadd.f32 %v1098, %v1192
        %s1197 = sld [smem:[#allocation10 + $0x39]]
        %v1198 = vstv %s1197
        %v1199 = vmul.f32 %v1198, %v1041
        %v1200 = vmul.f32 %v1198, %v1042
        %1203 = vrot.lane.b32.xlu0 %v1199, 126
        %v1204 = vpop.permute.xlu0 %1203
        %1205 = vrot.lane.b32.xlu0 %v1200, 126
        %v1206 = vpop.permute.xlu0 %1205
        %v1209 = vadd.f32 %v1111, %v1204
        %v1210 = vadd.f32 %v1112, %v1206
        %s1211 = sld [smem:[#allocation10 + $0x3a]]
        %v1212 = vstv %s1211
        %v1213 = vmul.f32 %v1212, %v1041
        %v1214 = vmul.f32 %v1212, %v1042
        %1217 = vrot.lane.b32.xlu0 %v1213, 126
        %v1218 = vpop.permute.xlu0 %1217
        %1219 = vrot.lane.b32.xlu0 %v1214, 126
        %v1220 = vpop.permute.xlu0 %1219
        %v1223 = vadd.f32 %v1125, %v1218
        %v1224 = vadd.f32 %v1126, %v1220
        %s1225 = sld [smem:[#allocation10 + $0x3b]]
        %v1226 = vstv %s1225
        %v1227 = vmul.f32 %v1226, %v1041
        %v1228 = vmul.f32 %v1226, %v1042
        %1231 = vrot.lane.b32.xlu0 %v1227, 126
        %v1232 = vpop.permute.xlu0 %1231
        %1233 = vrot.lane.b32.xlu0 %v1228, 126
        %v1234 = vpop.permute.xlu0 %1233
        %v1237 = vadd.f32 %v1139, %v1232
        %v1238 = vadd.f32 %v1140, %v1234
        %s1239 = sld [smem:[#allocation10 + $0x3c]]
        %v1240 = vstv %s1239
        %v1241 = vmul.f32 %v1240, %v1041
        %v1242 = vmul.f32 %v1240, %v1042
        %1245 = vrot.lane.b32.xlu0 %v1241, 126
        %v1246 = vpop.permute.xlu0 %1245
        %1247 = vrot.lane.b32.xlu0 %v1242, 126
        %v1248 = vpop.permute.xlu0 %1247
        %v1251 = vadd.f32 %v1153, %v1246
        %v1252 = vadd.f32 %v1154, %v1248
        %s1253 = sld [smem:[#allocation10 + $0x3d]]
        %v1254 = vstv %s1253
        %v1255 = vmul.f32 %v1254, %v1041
        %v1256 = vmul.f32 %v1254, %v1042
        %1259 = vrot.lane.b32.xlu0 %v1255, 126
        %v1260 = vpop.permute.xlu0 %1259
        %1261 = vrot.lane.b32.xlu0 %v1256, 126
        %v1262 = vpop.permute.xlu0 %1261
        %v1265 = vadd.f32 %v1167, %v1260
        %v1266 = vadd.f32 %v1168, %v1262
        %s1267 = sld [smem:[#allocation10 + $0x3e]]
        %v1268 = vstv %s1267
        %v1269 = vmul.f32 %v1268, %v1041
        %v1270 = vmul.f32 %v1268, %v1042
        %1273 = vrot.lane.b32.xlu0 %v1269, 126
        %v1274 = vpop.permute.xlu0 %1273
        %1275 = vrot.lane.b32.xlu0 %v1270, 126
        %v1276 = vpop.permute.xlu0 %1275
        %v1279 = vadd.f32 %v1181, %v1274
        %v1280 = vadd.f32 %v1182, %v1276
        %s1281 = scalar_lea.vmem [#allocation2], 24
        %v1282 = vld [vmem:[%s1281] sm:$0xff]
        %v1283 = vld [vmem:[%s1281 + $0x8] sm:$0xff]
        %s1284 = sld [smem:[#allocation10 + $0x3f]]
        %v1285 = vstv %s1284
        %v1286 = vmul.f32 %v1285, %v1282
        %v1287 = vmul.f32 %v1285, %v1283
        %v1288 = vadd.f32 %v1195, %v1286
        %v1289 = vadd.f32 %v1196, %v1287
        %s1290 = sld [smem:[#allocation10 + $0x40]]
        %v1291 = vstv %s1290
        %v1292 = vmul.f32 %v1291, %v1282
        %v1293 = vmul.f32 %v1291, %v1283
        %v1294 = vadd.f32 %v1209, %v1292
        %v1295 = vadd.f32 %v1210, %v1293
        %s1296 = sld [smem:[#allocation10 + $0x41]]
        %v1297 = vstv %s1296
        %v1298 = vmul.f32 %v1297, %v1282
        %v1299 = vmul.f32 %v1297, %v1283
        %v1300 = vadd.f32 %v1223, %v1298
        %v1301 = vadd.f32 %v1224, %v1299
        %s1302 = sld [smem:[#allocation10 + $0x42]]
        %v1303 = vstv %s1302
        %v1304 = vmul.f32 %v1303, %v1282
        %v1305 = vmul.f32 %v1303, %v1283
        %v1306 = vadd.f32 %v1237, %v1304
        %v1307 = vadd.f32 %v1238, %v1305
        %s1308 = sld [smem:[#allocation10 + $0x43]]
        %v1309 = vstv %s1308
        %v1310 = vmul.f32 %v1309, %v1282
        %v1311 = vmul.f32 %v1309, %v1283
        %v1312 = vadd.f32 %v1251, %v1310
        %v1313 = vadd.f32 %v1252, %v1311
        %s1314 = sld [smem:[#allocation10 + $0x44]]
        %v1315 = vstv %s1314
        %v1316 = vmul.f32 %v1315, %v1282
        %v1317 = vmul.f32 %v1315, %v1283
        %v1318 = vadd.f32 %v1265, %v1316
        %v1319 = vadd.f32 %v1266, %v1317
        %s1320 = sld [smem:[#allocation10 + $0x45]]
        %v1321 = vstv %s1320
        %v1322 = vmul.f32 %v1321, %v1282
        %v1323 = vmul.f32 %v1321, %v1283
        %v1324 = vadd.f32 %v1279, %v1322
        %v1325 = vadd.f32 %v1280, %v1323
        %s1326 = sld [smem:[#allocation10 + $0x46]]
        %v1327 = vstv %s1326
        %v1328 = vmul.f32 %v1327, %v1282
        %v1329 = vmul.f32 %v1327, %v1283
        %1332 = vrot.lane.b32.xlu0 %v1328, 127
        %v1333 = vpop.permute.xlu0 %1332
        %1334 = vrot.lane.b32.xlu0 %v1329, 127
        %v1335 = vpop.permute.xlu0 %1334
        %v1338 = vadd.f32 %v1288, %v1333
        %v1339 = vadd.f32 %v1289, %v1335
        %s1340 = sld [smem:[#allocation10 + $0x47]]
        %v1341 = vstv %s1340
        %v1342 = vmul.f32 %v1341, %v1282
        %v1343 = vmul.f32 %v1341, %v1283
        %1346 = vrot.lane.b32.xlu0 %v1342, 127
        %v1347 = vpop.permute.xlu0 %1346
        %1348 = vrot.lane.b32.xlu0 %v1343, 127
        %v1349 = vpop.permute.xlu0 %1348
        %v1352 = vadd.f32 %v1294, %v1347
        %v1353 = vadd.f32 %v1295, %v1349
        %s1354 = sld [smem:[#allocation10 + $0x48]]
        %v1355 = vstv %s1354
        %v1356 = vmul.f32 %v1355, %v1282
        %v1357 = vmul.f32 %v1355, %v1283
        %1360 = vrot.lane.b32.xlu0 %v1356, 127
        %v1361 = vpop.permute.xlu0 %1360
        %1362 = vrot.lane.b32.xlu0 %v1357, 127
        %v1363 = vpop.permute.xlu0 %1362
        %v1366 = vadd.f32 %v1300, %v1361
        %v1367 = vadd.f32 %v1301, %v1363
        %s1368 = sld [smem:[#allocation10 + $0x49]]
        %v1369 = vstv %s1368
        %v1370 = vmul.f32 %v1369, %v1282
        %v1371 = vmul.f32 %v1369, %v1283
        %1374 = vrot.lane.b32.xlu0 %v1370, 127
        %v1375 = vpop.permute.xlu0 %1374
        %1376 = vrot.lane.b32.xlu0 %v1371, 127
        %v1377 = vpop.permute.xlu0 %1376
        %v1380 = vadd.f32 %v1306, %v1375
        %v1381 = vadd.f32 %v1307, %v1377
        %s1382 = sld [smem:[#allocation10 + $0x4a]]
        %v1383 = vstv %s1382
        %v1384 = vmul.f32 %v1383, %v1282
        %v1385 = vmul.f32 %v1383, %v1283
        %1388 = vrot.lane.b32.xlu0 %v1384, 127
        %v1389 = vpop.permute.xlu0 %1388
        %1390 = vrot.lane.b32.xlu0 %v1385, 127
        %v1391 = vpop.permute.xlu0 %1390
        %v1394 = vadd.f32 %v1312, %v1389
        %v1395 = vadd.f32 %v1313, %v1391
        %s1396 = sld [smem:[#allocation10 + $0x4b]]
        %v1397 = vstv %s1396
        %v1398 = vmul.f32 %v1397, %v1282
        %v1399 = vmul.f32 %v1397, %v1283
        %1402 = vrot.lane.b32.xlu0 %v1398, 127
        %v1403 = vpop.permute.xlu0 %1402
        %1404 = vrot.lane.b32.xlu0 %v1399, 127
        %v1405 = vpop.permute.xlu0 %1404
        %v1408 = vadd.f32 %v1318, %v1403
        %v1409 = vadd.f32 %v1319, %v1405
        %s1410 = sld [smem:[#allocation10 + $0x4c]]
        %v1411 = vstv %s1410
        %v1412 = vmul.f32 %v1411, %v1282
        %v1413 = vmul.f32 %v1411, %v1283
        %1416 = vrot.lane.b32.xlu0 %v1412, 127
        %v1417 = vpop.permute.xlu0 %1416
        %1418 = vrot.lane.b32.xlu0 %v1413, 127
        %v1419 = vpop.permute.xlu0 %1418
        %v1422 = vadd.f32 %v1324, %v1417
        %v1423 = vadd.f32 %v1325, %v1419
        %s1424 = sld [smem:[#allocation10 + $0x4d]]
        %v1425 = vstv %s1424
        %v1426 = vmul.f32 %v1425, %v1282
        %v1427 = vmul.f32 %v1425, %v1283
        %1430 = vrot.lane.b32.xlu0 %v1426, 126
        %v1431 = vpop.permute.xlu0 %1430
        %1432 = vrot.lane.b32.xlu0 %v1427, 126
        %v1433 = vpop.permute.xlu0 %1432
        %v1436 = vadd.f32 %v1338, %v1431
        %v1437 = vadd.f32 %v1339, %v1433
        %s1438 = sld [smem:[#allocation10 + $0x4e]]
        %v1439 = vstv %s1438
        %v1440 = vmul.f32 %v1439, %v1282
        %v1441 = vmul.f32 %v1439, %v1283
        %1444 = vrot.lane.b32.xlu0 %v1440, 126
        %v1445 = vpop.permute.xlu0 %1444
        %1446 = vrot.lane.b32.xlu0 %v1441, 126
        %v1447 = vpop.permute.xlu0 %1446
        %v1450 = vadd.f32 %v1352, %v1445
        %v1451 = vadd.f32 %v1353, %v1447
        %s1452 = sld [smem:[#allocation10 + $0x4f]]
        %v1453 = vstv %s1452
        %v1454 = vmul.f32 %v1453, %v1282
        %v1455 = vmul.f32 %v1453, %v1283
        %1458 = vrot.lane.b32.xlu0 %v1454, 126
        %v1459 = vpop.permute.xlu0 %1458
        %1460 = vrot.lane.b32.xlu0 %v1455, 126
        %v1461 = vpop.permute.xlu0 %1460
        %v1464 = vadd.f32 %v1366, %v1459
        %v1465 = vadd.f32 %v1367, %v1461
        %s1466 = sld [smem:[#allocation10 + $0x50]]
        %v1467 = vstv %s1466
        %v1468 = vmul.f32 %v1467, %v1282
        %v1469 = vmul.f32 %v1467, %v1283
        %1472 = vrot.lane.b32.xlu0 %v1468, 126
        %v1473 = vpop.permute.xlu0 %1472
        %1474 = vrot.lane.b32.xlu0 %v1469, 126
        %v1475 = vpop.permute.xlu0 %1474
        %v1478 = vadd.f32 %v1380, %v1473
        %v1479 = vadd.f32 %v1381, %v1475
        %s1480 = sld [smem:[#allocation10 + $0x51]]
        %v1481 = vstv %s1480
        %v1482 = vmul.f32 %v1481, %v1282
        %v1483 = vmul.f32 %v1481, %v1283
        %1486 = vrot.lane.b32.xlu0 %v1482, 126
        %v1487 = vpop.permute.xlu0 %1486
        %1488 = vrot.lane.b32.xlu0 %v1483, 126
        %v1489 = vpop.permute.xlu0 %1488
        %v1492 = vadd.f32 %v1394, %v1487
        %v1493 = vadd.f32 %v1395, %v1489
        %s1494 = sld [smem:[#allocation10 + $0x52]]
        %v1495 = vstv %s1494
        %v1496 = vmul.f32 %v1495, %v1282
        %v1497 = vmul.f32 %v1495, %v1283
        %1500 = vrot.lane.b32.xlu0 %v1496, 126
        %v1501 = vpop.permute.xlu0 %1500
        %1502 = vrot.lane.b32.xlu0 %v1497, 126
        %v1503 = vpop.permute.xlu0 %1502
        %v1506 = vadd.f32 %v1408, %v1501
        %v1507 = vadd.f32 %v1409, %v1503
        %s1508 = sld [smem:[#allocation10 + $0x53]]
        %v1509 = vstv %s1508
        %v1510 = vmul.f32 %v1509, %v1282
        %v1511 = vmul.f32 %v1509, %v1283
        %1514 = vrot.lane.b32.xlu0 %v1510, 126
        %v1515 = vpop.permute.xlu0 %1514
        %1516 = vrot.lane.b32.xlu0 %v1511, 126
        %v1517 = vpop.permute.xlu0 %1516
        %v1520 = vadd.f32 %v1422, %v1515
        %v1521 = vadd.f32 %v1423, %v1517
        %v1522 = vld [vmem:[%s1281 + $0x1] sm:$0xff]
        %v1523 = vld [vmem:[%s1281 + $0x9] sm:$0xff]
        %s1524 = sld [smem:[#allocation10 + $0x54]]
        %v1525 = vstv %s1524
        %v1526 = vmul.f32 %v1525, %v1522
        %v1527 = vmul.f32 %v1525, %v1523
        %v1528 = vadd.f32 %v1436, %v1526
        %v1529 = vadd.f32 %v1437, %v1527
        %s1530 = sld [smem:[#allocation10 + $0x55]]
        %v1531 = vstv %s1530
        %v1532 = vmul.f32 %v1531, %v1522
        %v1533 = vmul.f32 %v1531, %v1523
        %v1534 = vadd.f32 %v1450, %v1532
        %v1535 = vadd.f32 %v1451, %v1533
        %s1536 = sld [smem:[#allocation10 + $0x56]]
        %v1537 = vstv %s1536
        %v1538 = vmul.f32 %v1537, %v1522
        %v1539 = vmul.f32 %v1537, %v1523
        %v1540 = vadd.f32 %v1464, %v1538
        %v1541 = vadd.f32 %v1465, %v1539
        %s1542 = sld [smem:[#allocation10 + $0x57]]
        %v1543 = vstv %s1542
        %v1544 = vmul.f32 %v1543, %v1522
        %v1545 = vmul.f32 %v1543, %v1523
        %v1546 = vadd.f32 %v1478, %v1544
        %v1547 = vadd.f32 %v1479, %v1545
        %s1548 = sld [smem:[#allocation10 + $0x58]]
        %v1549 = vstv %s1548
        %v1550 = vmul.f32 %v1549, %v1522
        %v1551 = vmul.f32 %v1549, %v1523
        %v1552 = vadd.f32 %v1492, %v1550
        %v1553 = vadd.f32 %v1493, %v1551
        %s1554 = sld [smem:[#allocation10 + $0x59]]
        %v1555 = vstv %s1554
        %v1556 = vmul.f32 %v1555, %v1522
        %v1557 = vmul.f32 %v1555, %v1523
        %v1558 = vadd.f32 %v1506, %v1556
        %v1559 = vadd.f32 %v1507, %v1557
        %s1560 = sld [smem:[#allocation10 + $0x5a]]
        %v1561 = vstv %s1560
        %v1562 = vmul.f32 %v1561, %v1522
        %v1563 = vmul.f32 %v1561, %v1523
        %v1564 = vadd.f32 %v1520, %v1562
        %v1565 = vadd.f32 %v1521, %v1563
        %s1566 = sld [smem:[#allocation10 + $0x5b]]
        %v1567 = vstv %s1566
        %v1568 = vmul.f32 %v1567, %v1522
        %v1569 = vmul.f32 %v1567, %v1523
        %1572 = vrot.lane.b32.xlu0 %v1568, 127
        %v1573 = vpop.permute.xlu0 %1572
        %1574 = vrot.lane.b32.xlu0 %v1569, 127
        %v1575 = vpop.permute.xlu0 %1574
        %v1578 = vadd.f32 %v1528, %v1573
        %v1579 = vadd.f32 %v1529, %v1575
        %s1580 = sld [smem:[#allocation10 + $0x5c]]
        %v1581 = vstv %s1580
        %v1582 = vmul.f32 %v1581, %v1522
        %v1583 = vmul.f32 %v1581, %v1523
        %1586 = vrot.lane.b32.xlu0 %v1582, 127
        %v1587 = vpop.permute.xlu0 %1586
        %1588 = vrot.lane.b32.xlu0 %v1583, 127
        %v1589 = vpop.permute.xlu0 %1588
        %v1592 = vadd.f32 %v1534, %v1587
        %v1593 = vadd.f32 %v1535, %v1589
        %s1594 = sld [smem:[#allocation10 + $0x5d]]
        %v1595 = vstv %s1594
        %v1596 = vmul.f32 %v1595, %v1522
        %v1597 = vmul.f32 %v1595, %v1523
        %1600 = vrot.lane.b32.xlu0 %v1596, 127
        %v1601 = vpop.permute.xlu0 %1600
        %1602 = vrot.lane.b32.xlu0 %v1597, 127
        %v1603 = vpop.permute.xlu0 %1602
        %v1606 = vadd.f32 %v1540, %v1601
        %v1607 = vadd.f32 %v1541, %v1603
        %s1608 = sld [smem:[#allocation10 + $0x5e]]
        %v1609 = vstv %s1608
        %v1610 = vmul.f32 %v1609, %v1522
        %v1611 = vmul.f32 %v1609, %v1523
        %1614 = vrot.lane.b32.xlu0 %v1610, 127
        %v1615 = vpop.permute.xlu0 %1614
        %1616 = vrot.lane.b32.xlu0 %v1611, 127
        %v1617 = vpop.permute.xlu0 %1616
        %v1620 = vadd.f32 %v1546, %v1615
        %v1621 = vadd.f32 %v1547, %v1617
        %s1622 = sld [smem:[#allocation10 + $0x5f]]
        %v1623 = vstv %s1622
        %v1624 = vmul.f32 %v1623, %v1522
        %v1625 = vmul.f32 %v1623, %v1523
        %1628 = vrot.lane.b32.xlu0 %v1624, 127
        %v1629 = vpop.permute.xlu0 %1628
        %1630 = vrot.lane.b32.xlu0 %v1625, 127
        %v1631 = vpop.permute.xlu0 %1630
        %v1634 = vadd.f32 %v1552, %v1629
        %v1635 = vadd.f32 %v1553, %v1631
        %s1636 = sld [smem:[#allocation10 + $0x60]]
        %v1637 = vstv %s1636
        %v1638 = vmul.f32 %v1637, %v1522
        %v1639 = vmul.f32 %v1637, %v1523
        %1642 = vrot.lane.b32.xlu0 %v1638, 127
        %v1643 = vpop.permute.xlu0 %1642
        %1644 = vrot.lane.b32.xlu0 %v1639, 127
        %v1645 = vpop.permute.xlu0 %1644
        %v1648 = vadd.f32 %v1558, %v1643
        %v1649 = vadd.f32 %v1559, %v1645
        %s1650 = sld [smem:[#allocation10 + $0x61]]
        %v1651 = vstv %s1650
        %v1652 = vmul.f32 %v1651, %v1522
        %v1653 = vmul.f32 %v1651, %v1523
        %1656 = vrot.lane.b32.xlu0 %v1652, 127
        %v1657 = vpop.permute.xlu0 %1656
        %1658 = vrot.lane.b32.xlu0 %v1653, 127
        %v1659 = vpop.permute.xlu0 %1658
        %v1662 = vadd.f32 %v1564, %v1657
        %v1663 = vadd.f32 %v1565, %v1659
        %s1664 = sld [smem:[#allocation10 + $0x62]]
        %v1665 = vstv %s1664
        %v1666 = vmul.f32 %v1665, %v1522
        %v1667 = vmul.f32 %v1665, %v1523
        %1670 = vrot.lane.b32.xlu0 %v1666, 126
        %v1671 = vpop.permute.xlu0 %1670
        %1672 = vrot.lane.b32.xlu0 %v1667, 126
        %v1673 = vpop.permute.xlu0 %1672
        %v1676 = vadd.f32 %v1578, %v1671
        %v1677 = vadd.f32 %v1579, %v1673
        %s1678 = sld [smem:[#allocation10 + $0x63]]
        %v1679 = vstv %s1678
        %v1680 = vmul.f32 %v1679, %v1522
        %v1681 = vmul.f32 %v1679, %v1523
        %1684 = vrot.lane.b32.xlu0 %v1680, 126
        %v1685 = vpop.permute.xlu0 %1684
        %1686 = vrot.lane.b32.xlu0 %v1681, 126
        %v1687 = vpop.permute.xlu0 %1686
        %v1690 = vadd.f32 %v1592, %v1685
        %v1691 = vadd.f32 %v1593, %v1687
        %s1692 = sld [smem:[#allocation10 + $0x64]]
        %v1693 = vstv %s1692
        %v1694 = vmul.f32 %v1693, %v1522
        %v1695 = vmul.f32 %v1693, %v1523
        %1698 = vrot.lane.b32.xlu0 %v1694, 126
        %v1699 = vpop.permute.xlu0 %1698
        %1700 = vrot.lane.b32.xlu0 %v1695, 126
        %v1701 = vpop.permute.xlu0 %1700
        %v1704 = vadd.f32 %v1606, %v1699
        %v1705 = vadd.f32 %v1607, %v1701
        %s1706 = sld [smem:[#allocation10 + $0x65]]
        %v1707 = vstv %s1706
        %v1708 = vmul.f32 %v1707, %v1522
        %v1709 = vmul.f32 %v1707, %v1523
        %1712 = vrot.lane.b32.xlu0 %v1708, 126
        %v1713 = vpop.permute.xlu0 %1712
        %1714 = vrot.lane.b32.xlu0 %v1709, 126
        %v1715 = vpop.permute.xlu0 %1714
        %v1718 = vadd.f32 %v1620, %v1713
        %v1719 = vadd.f32 %v1621, %v1715
        %s1720 = sld [smem:[#allocation10 + $0x66]]
        %v1721 = vstv %s1720
        %v1722 = vmul.f32 %v1721, %v1522
        %v1723 = vmul.f32 %v1721, %v1523
        %1726 = vrot.lane.b32.xlu0 %v1722, 126
        %v1727 = vpop.permute.xlu0 %1726
        %1728 = vrot.lane.b32.xlu0 %v1723, 126
        %v1729 = vpop.permute.xlu0 %1728
        %v1732 = vadd.f32 %v1634, %v1727
        %v1733 = vadd.f32 %v1635, %v1729
        %s1734 = sld [smem:[#allocation10 + $0x67]]
        %v1735 = vstv %s1734
        %v1736 = vmul.f32 %v1735, %v1522
        %v1737 = vmul.f32 %v1735, %v1523
        %1740 = vrot.lane.b32.xlu0 %v1736, 126
        %v1741 = vpop.permute.xlu0 %1740
        %1742 = vrot.lane.b32.xlu0 %v1737, 126
        %v1743 = vpop.permute.xlu0 %1742
        %v1746 = vadd.f32 %v1648, %v1741
        %v1747 = vadd.f32 %v1649, %v1743
        %s1748 = sld [smem:[#allocation10 + $0x68]]
        %v1749 = vstv %s1748
        %v1750 = vmul.f32 %v1749, %v1522
        %v1751 = vmul.f32 %v1749, %v1523
        %1754 = vrot.lane.b32.xlu0 %v1750, 126
        %v1755 = vpop.permute.xlu0 %1754
        %1756 = vrot.lane.b32.xlu0 %v1751, 126
        %v1757 = vpop.permute.xlu0 %1756
        %v1760 = vadd.f32 %v1662, %v1755
        %v1761 = vadd.f32 %v1663, %v1757
        %v1762 = vld [vmem:[%s1281 + $0x2] sm:$0xff]
        %v1763 = vld [vmem:[%s1281 + $0xa] sm:$0xff]
        %s1764 = sld [smem:[#allocation10 + $0x69]]
        %v1765 = vstv %s1764
        %v1766 = vmul.f32 %v1765, %v1762
        %v1767 = vmul.f32 %v1765, %v1763
        %v1768 = vadd.f32 %v1676, %v1766
        %v1769 = vadd.f32 %v1677, %v1767
        %s1770 = sld [smem:[#allocation10 + $0x6a]]
        %v1771 = vstv %s1770
        %v1772 = vmul.f32 %v1771, %v1762
        %v1773 = vmul.f32 %v1771, %v1763
        %v1774 = vadd.f32 %v1690, %v1772
        %v1775 = vadd.f32 %v1691, %v1773
        %s1776 = sld [smem:[#allocation10 + $0x6b]]
        %v1777 = vstv %s1776
        %v1778 = vmul.f32 %v1777, %v1762
        %v1779 = vmul.f32 %v1777, %v1763
        %v1780 = vadd.f32 %v1704, %v1778
        %v1781 = vadd.f32 %v1705, %v1779
        %s1782 = sld [smem:[#allocation10 + $0x6c]]
        %v1783 = vstv %s1782
        %v1784 = vmul.f32 %v1783, %v1762
        %v1785 = vmul.f32 %v1783, %v1763
        %v1786 = vadd.f32 %v1718, %v1784
        %v1787 = vadd.f32 %v1719, %v1785
        %s1788 = sld [smem:[#allocation10 + $0x6d]]
        %v1789 = vstv %s1788
        %v1790 = vmul.f32 %v1789, %v1762
        %v1791 = vmul.f32 %v1789, %v1763
        %v1792 = vadd.f32 %v1732, %v1790
        %v1793 = vadd.f32 %v1733, %v1791
        %s1794 = sld [smem:[#allocation10 + $0x6e]]
        %v1795 = vstv %s1794
        %v1796 = vmul.f32 %v1795, %v1762
        %v1797 = vmul.f32 %v1795, %v1763
        %v1798 = vadd.f32 %v1746, %v1796
        %v1799 = vadd.f32 %v1747, %v1797
        %s1800 = sld [smem:[#allocation10 + $0x6f]]
        %v1801 = vstv %s1800
        %v1802 = vmul.f32 %v1801, %v1762
        %v1803 = vmul.f32 %v1801, %v1763
        %v1804 = vadd.f32 %v1760, %v1802
        %v1805 = vadd.f32 %v1761, %v1803
        %s1806 = sld [smem:[#allocation10 + $0x70]]
        %v1807 = vstv %s1806
        %v1808 = vmul.f32 %v1807, %v1762
        %v1809 = vmul.f32 %v1807, %v1763
        %1812 = vrot.lane.b32.xlu0 %v1808, 127
        %v1813 = vpop.permute.xlu0 %1812
        %1814 = vrot.lane.b32.xlu0 %v1809, 127
        %v1815 = vpop.permute.xlu0 %1814
        %v1818 = vadd.f32 %v1768, %v1813
        %v1819 = vadd.f32 %v1769, %v1815
        %s1820 = sld [smem:[#allocation10 + $0x71]]
        %v1821 = vstv %s1820
        %v1822 = vmul.f32 %v1821, %v1762
        %v1823 = vmul.f32 %v1821, %v1763
        %1826 = vrot.lane.b32.xlu0 %v1822, 127
        %v1827 = vpop.permute.xlu0 %1826
        %1828 = vrot.lane.b32.xlu0 %v1823, 127
        %v1829 = vpop.permute.xlu0 %1828
        %v1832 = vadd.f32 %v1774, %v1827
        %v1833 = vadd.f32 %v1775, %v1829
        %s1834 = sld [smem:[#allocation10 + $0x72]]
        %v1835 = vstv %s1834
        %v1836 = vmul.f32 %v1835, %v1762
        %v1837 = vmul.f32 %v1835, %v1763
        %1840 = vrot.lane.b32.xlu0 %v1836, 127
        %v1841 = vpop.permute.xlu0 %1840
        %1842 = vrot.lane.b32.xlu0 %v1837, 127
        %v1843 = vpop.permute.xlu0 %1842
        %v1846 = vadd.f32 %v1780, %v1841
        %v1847 = vadd.f32 %v1781, %v1843
        %s1848 = sld [smem:[#allocation10 + $0x73]]
        %v1849 = vstv %s1848
        %v1850 = vmul.f32 %v1849, %v1762
        %v1851 = vmul.f32 %v1849, %v1763
        %1854 = vrot.lane.b32.xlu0 %v1850, 127
        %v1855 = vpop.permute.xlu0 %1854
        %1856 = vrot.lane.b32.xlu0 %v1851, 127
        %v1857 = vpop.permute.xlu0 %1856
        %v1860 = vadd.f32 %v1786, %v1855
        %v1861 = vadd.f32 %v1787, %v1857
        %s1862 = sld [smem:[#allocation10 + $0x74]]
        %v1863 = vstv %s1862
        %v1864 = vmul.f32 %v1863, %v1762
        %v1865 = vmul.f32 %v1863, %v1763
        %1868 = vrot.lane.b32.xlu0 %v1864, 127
        %v1869 = vpop.permute.xlu0 %1868
        %1870 = vrot.lane.b32.xlu0 %v1865, 127
        %v1871 = vpop.permute.xlu0 %1870
        %v1874 = vadd.f32 %v1792, %v1869
        %v1875 = vadd.f32 %v1793, %v1871
        %s1876 = sld [smem:[#allocation10 + $0x75]]
        %v1877 = vstv %s1876
        %v1878 = vmul.f32 %v1877, %v1762
        %v1879 = vmul.f32 %v1877, %v1763
        %1882 = vrot.lane.b32.xlu0 %v1878, 127
        %v1883 = vpop.permute.xlu0 %1882
        %1884 = vrot.lane.b32.xlu0 %v1879, 127
        %v1885 = vpop.permute.xlu0 %1884
        %v1888 = vadd.f32 %v1798, %v1883
        %v1889 = vadd.f32 %v1799, %v1885
        %s1890 = sld [smem:[#allocation10 + $0x76]]
        %v1891 = vstv %s1890
        %v1892 = vmul.f32 %v1891, %v1762
        %v1893 = vmul.f32 %v1891, %v1763
        %1896 = vrot.lane.b32.xlu0 %v1892, 127
        %v1897 = vpop.permute.xlu0 %1896
        %1898 = vrot.lane.b32.xlu0 %v1893, 127
        %v1899 = vpop.permute.xlu0 %1898
        %v1902 = vadd.f32 %v1804, %v1897
        %v1903 = vadd.f32 %v1805, %v1899
        %s1904 = sld [smem:[#allocation10 + $0x77]]
        %v1905 = vstv %s1904
        %v1906 = vmul.f32 %v1905, %v1762
        %v1907 = vmul.f32 %v1905, %v1763
        %1910 = vrot.lane.b32.xlu0 %v1906, 126
        %v1911 = vpop.permute.xlu0 %1910
        %1912 = vrot.lane.b32.xlu0 %v1907, 126
        %v1913 = vpop.permute.xlu0 %1912
        %v1916 = vadd.f32 %v1818, %v1911
        %v1917 = vadd.f32 %v1819, %v1913
        %s1918 = sld [smem:[#allocation10 + $0x78]]
        %v1919 = vstv %s1918
        %v1920 = vmul.f32 %v1919, %v1762
        %v1921 = vmul.f32 %v1919, %v1763
        %1924 = vrot.lane.b32.xlu0 %v1920, 126
        %v1925 = vpop.permute.xlu0 %1924
        %1926 = vrot.lane.b32.xlu0 %v1921, 126
        %v1927 = vpop.permute.xlu0 %1926
        %v1930 = vadd.f32 %v1832, %v1925
        %v1931 = vadd.f32 %v1833, %v1927
        %s1932 = sld [smem:[#allocation10 + $0x79]]
        %v1933 = vstv %s1932
        %v1934 = vmul.f32 %v1933, %v1762
        %v1935 = vmul.f32 %v1933, %v1763
        %1938 = vrot.lane.b32.xlu0 %v1934, 126
        %v1939 = vpop.permute.xlu0 %1938
        %1940 = vrot.lane.b32.xlu0 %v1935, 126
        %v1941 = vpop.permute.xlu0 %1940
        %v1944 = vadd.f32 %v1846, %v1939
        %v1945 = vadd.f32 %v1847, %v1941
        %s1946 = sld [smem:[#allocation10 + $0x7a]]
        %v1947 = vstv %s1946
        %v1948 = vmul.f32 %v1947, %v1762
        %v1949 = vmul.f32 %v1947, %v1763
        %1952 = vrot.lane.b32.xlu0 %v1948, 126
        %v1953 = vpop.permute.xlu0 %1952
        %1954 = vrot.lane.b32.xlu0 %v1949, 126
        %v1955 = vpop.permute.xlu0 %1954
        %v1958 = vadd.f32 %v1860, %v1953
        %v1959 = vadd.f32 %v1861, %v1955
        %s1960 = sld [smem:[#allocation10 + $0x7b]]
        %v1961 = vstv %s1960
        %v1962 = vmul.f32 %v1961, %v1762
        %v1963 = vmul.f32 %v1961, %v1763
        %1966 = vrot.lane.b32.xlu0 %v1962, 126
        %v1967 = vpop.permute.xlu0 %1966
        %1968 = vrot.lane.b32.xlu0 %v1963, 126
        %v1969 = vpop.permute.xlu0 %1968
        %v1972 = vadd.f32 %v1874, %v1967
        %v1973 = vadd.f32 %v1875, %v1969
        %s1974 = sld [smem:[#allocation10 + $0x7c]]
        %v1975 = vstv %s1974
        %v1976 = vmul.f32 %v1975, %v1762
        %v1977 = vmul.f32 %v1975, %v1763
        %1980 = vrot.lane.b32.xlu0 %v1976, 126
        %v1981 = vpop.permute.xlu0 %1980
        %1982 = vrot.lane.b32.xlu0 %v1977, 126
        %v1983 = vpop.permute.xlu0 %1982
        %v1986 = vadd.f32 %v1888, %v1981
        %v1987 = vadd.f32 %v1889, %v1983
        %s1988 = sld [smem:[#allocation10 + $0x7d]]
        %v1989 = vstv %s1988
        %v1990 = vmul.f32 %v1989, %v1762
        %v1991 = vmul.f32 %v1989, %v1763
        %1994 = vrot.lane.b32.xlu0 %v1990, 126
        %v1995 = vpop.permute.xlu0 %1994
        %1996 = vrot.lane.b32.xlu0 %v1991, 126
        %v1997 = vpop.permute.xlu0 %1996
        %v2000 = vadd.f32 %v1902, %v1995
        %v2001 = vadd.f32 %v1903, %v1997
        %s2002 = scalar_lea.vmem [#allocation2], 48
        %v2003 = vld [vmem:[%s2002] sm:$0xff]
        %v2004 = vld [vmem:[%s2002 + $0x8] sm:$0xff]
        %s2005 = sld [smem:[#allocation10 + $0x7e]]
        %v2006 = vstv %s2005
        %v2007 = vmul.f32 %v2006, %v2003
        %v2008 = vmul.f32 %v2006, %v2004
        %v2009 = vadd.f32 %v1916, %v2007
        %v2010 = vadd.f32 %v1917, %v2008
        %s2011 = sld [smem:[#allocation10 + $0x7f]]
        %v2012 = vstv %s2011
        %v2013 = vmul.f32 %v2012, %v2003
        %v2014 = vmul.f32 %v2012, %v2004
        %v2015 = vadd.f32 %v1930, %v2013
        %v2016 = vadd.f32 %v1931, %v2014
        %s2017 = sld [smem:[#allocation10 + $0x80]]
        %v2018 = vstv %s2017
        %v2019 = vmul.f32 %v2018, %v2003
        %v2020 = vmul.f32 %v2018, %v2004
        %v2021 = vadd.f32 %v1944, %v2019
        %v2022 = vadd.f32 %v1945, %v2020
        %s2023 = sld [smem:[#allocation10 + $0x81]]
        %v2024 = vstv %s2023
        %v2025 = vmul.f32 %v2024, %v2003
        %v2026 = vmul.f32 %v2024, %v2004
        %v2027 = vadd.f32 %v1958, %v2025
        %v2028 = vadd.f32 %v1959, %v2026
        %s2029 = sld [smem:[#allocation10 + $0x82]]
        %v2030 = vstv %s2029
        %v2031 = vmul.f32 %v2030, %v2003
        %v2032 = vmul.f32 %v2030, %v2004
        %v2033 = vadd.f32 %v1972, %v2031
        %v2034 = vadd.f32 %v1973, %v2032
        %s2035 = sld [smem:[#allocation10 + $0x83]]
        %v2036 = vstv %s2035
        %v2037 = vmul.f32 %v2036, %v2003
        %v2038 = vmul.f32 %v2036, %v2004
        %v2039 = vadd.f32 %v1986, %v2037
        %v2040 = vadd.f32 %v1987, %v2038
        %s2041 = sld [smem:[#allocation10 + $0x84]]
        %v2042 = vstv %s2041
        %v2043 = vmul.f32 %v2042, %v2003
        %v2044 = vmul.f32 %v2042, %v2004
        %v2045 = vadd.f32 %v2000, %v2043
        %v2046 = vadd.f32 %v2001, %v2044
        %s2047 = sld [smem:[#allocation10 + $0x85]]
        %v2048 = vstv %s2047
        %v2049 = vmul.f32 %v2048, %v2003
        %v2050 = vmul.f32 %v2048, %v2004
        %2053 = vrot.lane.b32.xlu0 %v2049, 127
        %v2054 = vpop.permute.xlu0 %2053
        %2055 = vrot.lane.b32.xlu0 %v2050, 127
        %v2056 = vpop.permute.xlu0 %2055
        %v2059 = vadd.f32 %v2009, %v2054
        %v2060 = vadd.f32 %v2010, %v2056
        %s2061 = sld [smem:[#allocation10 + $0x86]]
        %v2062 = vstv %s2061
        %v2063 = vmul.f32 %v2062, %v2003
        %v2064 = vmul.f32 %v2062, %v2004
        %2067 = vrot.lane.b32.xlu0 %v2063, 127
        %v2068 = vpop.permute.xlu0 %2067
        %2069 = vrot.lane.b32.xlu0 %v2064, 127
        %v2070 = vpop.permute.xlu0 %2069
        %v2073 = vadd.f32 %v2015, %v2068
        %v2074 = vadd.f32 %v2016, %v2070
        %s2075 = sld [smem:[#allocation10 + $0x87]]
        %v2076 = vstv %s2075
        %v2077 = vmul.f32 %v2076, %v2003
        %v2078 = vmul.f32 %v2076, %v2004
        %2081 = vrot.lane.b32.xlu0 %v2077, 127
        %v2082 = vpop.permute.xlu0 %2081
        %2083 = vrot.lane.b32.xlu0 %v2078, 127
        %v2084 = vpop.permute.xlu0 %2083
        %v2087 = vadd.f32 %v2021, %v2082
        %v2088 = vadd.f32 %v2022, %v2084
        %s2089 = sld [smem:[#allocation10 + $0x88]]
        %v2090 = vstv %s2089
        %v2091 = vmul.f32 %v2090, %v2003
        %v2092 = vmul.f32 %v2090, %v2004
        %2095 = vrot.lane.b32.xlu0 %v2091, 127
        %v2096 = vpop.permute.xlu0 %2095
        %2097 = vrot.lane.b32.xlu0 %v2092, 127
        %v2098 = vpop.permute.xlu0 %2097
        %v2101 = vadd.f32 %v2027, %v2096
        %v2102 = vadd.f32 %v2028, %v2098
        %s2103 = sld [smem:[#allocation10 + $0x89]]
        %v2104 = vstv %s2103
        %v2105 = vmul.f32 %v2104, %v2003
        %v2106 = vmul.f32 %v2104, %v2004
        %2109 = vrot.lane.b32.xlu0 %v2105, 127
        %v2110 = vpop.permute.xlu0 %2109
        %2111 = vrot.lane.b32.xlu0 %v2106, 127
        %v2112 = vpop.permute.xlu0 %2111
        %v2115 = vadd.f32 %v2033, %v2110
        %v2116 = vadd.f32 %v2034, %v2112
        %s2117 = sld [smem:[#allocation10 + $0x8a]]
        %v2118 = vstv %s2117
        %v2119 = vmul.f32 %v2118, %v2003
        %v2120 = vmul.f32 %v2118, %v2004
        %2123 = vrot.lane.b32.xlu0 %v2119, 127
        %v2124 = vpop.permute.xlu0 %2123
        %2125 = vrot.lane.b32.xlu0 %v2120, 127
        %v2126 = vpop.permute.xlu0 %2125
        %v2129 = vadd.f32 %v2039, %v2124
        %v2130 = vadd.f32 %v2040, %v2126
        %s2131 = sld [smem:[#allocation10 + $0x8b]]
        %v2132 = vstv %s2131
        %v2133 = vmul.f32 %v2132, %v2003
        %v2134 = vmul.f32 %v2132, %v2004
        %2137 = vrot.lane.b32.xlu0 %v2133, 127
        %v2138 = vpop.permute.xlu0 %2137
        %2139 = vrot.lane.b32.xlu0 %v2134, 127
        %v2140 = vpop.permute.xlu0 %2139
        %v2143 = vadd.f32 %v2045, %v2138
        %v2144 = vadd.f32 %v2046, %v2140
        %s2145 = sld [smem:[#allocation10 + $0x8c]]
        %v2146 = vstv %s2145
        %v2147 = vmul.f32 %v2146, %v2003
        %v2148 = vmul.f32 %v2146, %v2004
        %2151 = vrot.lane.b32.xlu0 %v2147, 126
        %v2152 = vpop.permute.xlu0 %2151
        %2153 = vrot.lane.b32.xlu0 %v2148, 126
        %v2154 = vpop.permute.xlu0 %2153
        %v2157 = vadd.f32 %v2059, %v2152
        %v2158 = vadd.f32 %v2060, %v2154
        %s2159 = sld [smem:[#allocation10 + $0x8d]]
        %v2160 = vstv %s2159
        %v2161 = vmul.f32 %v2160, %v2003
        %v2162 = vmul.f32 %v2160, %v2004
        %2165 = vrot.lane.b32.xlu0 %v2161, 126
        %v2166 = vpop.permute.xlu0 %2165
        %2167 = vrot.lane.b32.xlu0 %v2162, 126
        %v2168 = vpop.permute.xlu0 %2167
        %v2171 = vadd.f32 %v2073, %v2166
        %v2172 = vadd.f32 %v2074, %v2168
        %s2173 = sld [smem:[#allocation10 + $0x8e]]
        %v2174 = vstv %s2173
        %v2175 = vmul.f32 %v2174, %v2003
        %v2176 = vmul.f32 %v2174, %v2004
        %2179 = vrot.lane.b32.xlu0 %v2175, 126
        %v2180 = vpop.permute.xlu0 %2179
        %2181 = vrot.lane.b32.xlu0 %v2176, 126
        %v2182 = vpop.permute.xlu0 %2181
        %v2185 = vadd.f32 %v2087, %v2180
        %v2186 = vadd.f32 %v2088, %v2182
        %s2187 = sld [smem:[#allocation10 + $0x8f]]
        %v2188 = vstv %s2187
        %v2189 = vmul.f32 %v2188, %v2003
        %v2190 = vmul.f32 %v2188, %v2004
        %2193 = vrot.lane.b32.xlu0 %v2189, 126
        %v2194 = vpop.permute.xlu0 %2193
        %2195 = vrot.lane.b32.xlu0 %v2190, 126
        %v2196 = vpop.permute.xlu0 %2195
        %v2199 = vadd.f32 %v2101, %v2194
        %v2200 = vadd.f32 %v2102, %v2196
        %s2201 = sld [smem:[#allocation10 + $0x90]]
        %v2202 = vstv %s2201
        %v2203 = vmul.f32 %v2202, %v2003
        %v2204 = vmul.f32 %v2202, %v2004
        %2207 = vrot.lane.b32.xlu0 %v2203, 126
        %v2208 = vpop.permute.xlu0 %2207
        %2209 = vrot.lane.b32.xlu0 %v2204, 126
        %v2210 = vpop.permute.xlu0 %2209
        %v2213 = vadd.f32 %v2115, %v2208
        %v2214 = vadd.f32 %v2116, %v2210
        %s2215 = sld [smem:[#allocation10 + $0x91]]
        %v2216 = vstv %s2215
        %v2217 = vmul.f32 %v2216, %v2003
        %v2218 = vmul.f32 %v2216, %v2004
        %2221 = vrot.lane.b32.xlu0 %v2217, 126
        %v2222 = vpop.permute.xlu0 %2221
        %2223 = vrot.lane.b32.xlu0 %v2218, 126
        %v2224 = vpop.permute.xlu0 %2223
        %v2227 = vadd.f32 %v2129, %v2222
        %v2228 = vadd.f32 %v2130, %v2224
        %s2229 = sld [smem:[#allocation10 + $0x92]]
        %v2230 = vstv %s2229
        %v2231 = vmul.f32 %v2230, %v2003
        %v2232 = vmul.f32 %v2230, %v2004
        %2235 = vrot.lane.b32.xlu0 %v2231, 126
        %v2236 = vpop.permute.xlu0 %2235
        %2237 = vrot.lane.b32.xlu0 %v2232, 126
        %v2238 = vpop.permute.xlu0 %2237
        %v2241 = vadd.f32 %v2143, %v2236
        %v2242 = vadd.f32 %v2144, %v2238
        %v2243 = vld [vmem:[%s2002 + $0x1] sm:$0xff]
        %v2244 = vld [vmem:[%s2002 + $0x9] sm:$0xff]
        %s2245 = sld [smem:[#allocation10 + $0x93]]
        %v2246 = vstv %s2245
        %v2247 = vmul.f32 %v2246, %v2243
        %v2248 = vmul.f32 %v2246, %v2244
        %v2249 = vadd.f32 %v2157, %v2247
        %v2250 = vadd.f32 %v2158, %v2248
        %s2251 = sld [smem:[#allocation10 + $0x94]]
        %v2252 = vstv %s2251
        %v2253 = vmul.f32 %v2252, %v2243
        %v2254 = vmul.f32 %v2252, %v2244
        %v2255 = vadd.f32 %v2171, %v2253
        %v2256 = vadd.f32 %v2172, %v2254
        %s2257 = sld [smem:[#allocation10 + $0x95]]
        %v2258 = vstv %s2257
        %v2259 = vmul.f32 %v2258, %v2243
        %v2260 = vmul.f32 %v2258, %v2244
        %v2261 = vadd.f32 %v2185, %v2259
        %v2262 = vadd.f32 %v2186, %v2260
        %s2263 = sld [smem:[#allocation10 + $0x96]]
        %v2264 = vstv %s2263
        %v2265 = vmul.f32 %v2264, %v2243
        %v2266 = vmul.f32 %v2264, %v2244
        %v2267 = vadd.f32 %v2199, %v2265
        %v2268 = vadd.f32 %v2200, %v2266
        %s2269 = sld [smem:[#allocation10 + $0x97]]
        %v2270 = vstv %s2269
        %v2271 = vmul.f32 %v2270, %v2243
        %v2272 = vmul.f32 %v2270, %v2244
        %v2273 = vadd.f32 %v2213, %v2271
        %v2274 = vadd.f32 %v2214, %v2272
        %s2275 = sld [smem:[#allocation10 + $0x98]]
        %v2276 = vstv %s2275
        %v2277 = vmul.f32 %v2276, %v2243
        %v2278 = vmul.f32 %v2276, %v2244
        %v2279 = vadd.f32 %v2227, %v2277
        %v2280 = vadd.f32 %v2228, %v2278
        %s2281 = sld [smem:[#allocation10 + $0x99]]
        %v2282 = vstv %s2281
        %v2283 = vmul.f32 %v2282, %v2243
        %v2284 = vmul.f32 %v2282, %v2244
        %v2285 = vadd.f32 %v2241, %v2283
        %v2286 = vadd.f32 %v2242, %v2284
        %s2287 = sld [smem:[#allocation10 + $0x9a]]
        %v2288 = vstv %s2287
        %v2289 = vmul.f32 %v2288, %v2243
        %v2290 = vmul.f32 %v2288, %v2244
        %2293 = vrot.lane.b32.xlu0 %v2289, 127
        %v2294 = vpop.permute.xlu0 %2293
        %2295 = vrot.lane.b32.xlu0 %v2290, 127
        %v2296 = vpop.permute.xlu0 %2295
        %v2299 = vadd.f32 %v2249, %v2294
        %v2300 = vadd.f32 %v2250, %v2296
        %s2301 = sld [smem:[#allocation10 + $0x9b]]
        %v2302 = vstv %s2301
        %v2303 = vmul.f32 %v2302, %v2243
        %v2304 = vmul.f32 %v2302, %v2244
        %2307 = vrot.lane.b32.xlu0 %v2303, 127
        %v2308 = vpop.permute.xlu0 %2307
        %2309 = vrot.lane.b32.xlu0 %v2304, 127
        %v2310 = vpop.permute.xlu0 %2309
        %v2313 = vadd.f32 %v2255, %v2308
        %v2314 = vadd.f32 %v2256, %v2310
        %s2315 = sld [smem:[#allocation10 + $0x9c]]
        %v2316 = vstv %s2315
        %v2317 = vmul.f32 %v2316, %v2243
        %v2318 = vmul.f32 %v2316, %v2244
        %2321 = vrot.lane.b32.xlu0 %v2317, 127
        %v2322 = vpop.permute.xlu0 %2321
        %2323 = vrot.lane.b32.xlu0 %v2318, 127
        %v2324 = vpop.permute.xlu0 %2323
        %v2327 = vadd.f32 %v2261, %v2322
        %v2328 = vadd.f32 %v2262, %v2324
        %s2329 = sld [smem:[#allocation10 + $0x9d]]
        %v2330 = vstv %s2329
        %v2331 = vmul.f32 %v2330, %v2243
        %v2332 = vmul.f32 %v2330, %v2244
        %2335 = vrot.lane.b32.xlu0 %v2331, 127
        %v2336 = vpop.permute.xlu0 %2335
        %2337 = vrot.lane.b32.xlu0 %v2332, 127
        %v2338 = vpop.permute.xlu0 %2337
        %v2341 = vadd.f32 %v2267, %v2336
        %v2342 = vadd.f32 %v2268, %v2338
        %s2343 = sld [smem:[#allocation10 + $0x9e]]
        %v2344 = vstv %s2343
        %v2345 = vmul.f32 %v2344, %v2243
        %v2346 = vmul.f32 %v2344, %v2244
        %2349 = vrot.lane.b32.xlu0 %v2345, 127
        %v2350 = vpop.permute.xlu0 %2349
        %2351 = vrot.lane.b32.xlu0 %v2346, 127
        %v2352 = vpop.permute.xlu0 %2351
        %v2355 = vadd.f32 %v2273, %v2350
        %v2356 = vadd.f32 %v2274, %v2352
        %s2357 = sld [smem:[#allocation10 + $0x9f]]
        %v2358 = vstv %s2357
        %v2359 = vmul.f32 %v2358, %v2243
        %v2360 = vmul.f32 %v2358, %v2244
        %2363 = vrot.lane.b32.xlu0 %v2359, 127
        %v2364 = vpop.permute.xlu0 %2363
        %2365 = vrot.lane.b32.xlu0 %v2360, 127
        %v2366 = vpop.permute.xlu0 %2365
        %v2369 = vadd.f32 %v2279, %v2364
        %v2370 = vadd.f32 %v2280, %v2366
        %s2371 = sld [smem:[#allocation10 + $0xa0]]
        %v2372 = vstv %s2371
        %v2373 = vmul.f32 %v2372, %v2243
        %v2374 = vmul.f32 %v2372, %v2244
        %2377 = vrot.lane.b32.xlu0 %v2373, 127
        %v2378 = vpop.permute.xlu0 %2377
        %2379 = vrot.lane.b32.xlu0 %v2374, 127
        %v2380 = vpop.permute.xlu0 %2379
        %v2383 = vadd.f32 %v2285, %v2378
        %v2384 = vadd.f32 %v2286, %v2380
        %s2385 = sld [smem:[#allocation10 + $0xa1]]
        %v2386 = vstv %s2385
        %v2387 = vmul.f32 %v2386, %v2243
        %v2388 = vmul.f32 %v2386, %v2244
        %2391 = vrot.lane.b32.xlu0 %v2387, 126
        %v2392 = vpop.permute.xlu0 %2391
        %2393 = vrot.lane.b32.xlu0 %v2388, 126
        %v2394 = vpop.permute.xlu0 %2393
        %v2397 = vadd.f32 %v2299, %v2392
        %v2398 = vadd.f32 %v2300, %v2394
        %s2399 = sld [smem:[#allocation10 + $0xa2]]
        %v2400 = vstv %s2399
        %v2401 = vmul.f32 %v2400, %v2243
        %v2402 = vmul.f32 %v2400, %v2244
        %2405 = vrot.lane.b32.xlu0 %v2401, 126
        %v2406 = vpop.permute.xlu0 %2405
        %2407 = vrot.lane.b32.xlu0 %v2402, 126
        %v2408 = vpop.permute.xlu0 %2407
        %v2411 = vadd.f32 %v2313, %v2406
        %v2412 = vadd.f32 %v2314, %v2408
        %s2413 = sld [smem:[#allocation10 + $0xa3]]
        %v2414 = vstv %s2413
        %v2415 = vmul.f32 %v2414, %v2243
        %v2416 = vmul.f32 %v2414, %v2244
        %2419 = vrot.lane.b32.xlu0 %v2415, 126
        %v2420 = vpop.permute.xlu0 %2419
        %2421 = vrot.lane.b32.xlu0 %v2416, 126
        %v2422 = vpop.permute.xlu0 %2421
        %v2425 = vadd.f32 %v2327, %v2420
        %v2426 = vadd.f32 %v2328, %v2422
        %s2427 = sld [smem:[#allocation10 + $0xa4]]
        %v2428 = vstv %s2427
        %v2429 = vmul.f32 %v2428, %v2243
        %v2430 = vmul.f32 %v2428, %v2244
        %2433 = vrot.lane.b32.xlu0 %v2429, 126
        %v2434 = vpop.permute.xlu0 %2433
        %2435 = vrot.lane.b32.xlu0 %v2430, 126
        %v2436 = vpop.permute.xlu0 %2435
        %v2439 = vadd.f32 %v2341, %v2434
        %v2440 = vadd.f32 %v2342, %v2436
        %s2441 = sld [smem:[#allocation10 + $0xa5]]
        %v2442 = vstv %s2441
        %v2443 = vmul.f32 %v2442, %v2243
        %v2444 = vmul.f32 %v2442, %v2244
        %2447 = vrot.lane.b32.xlu0 %v2443, 126
        %v2448 = vpop.permute.xlu0 %2447
        %2449 = vrot.lane.b32.xlu0 %v2444, 126
        %v2450 = vpop.permute.xlu0 %2449
        %v2453 = vadd.f32 %v2355, %v2448
        %v2454 = vadd.f32 %v2356, %v2450
        %s2455 = sld [smem:[#allocation10 + $0xa6]]
        %v2456 = vstv %s2455
        %v2457 = vmul.f32 %v2456, %v2243
        %v2458 = vmul.f32 %v2456, %v2244
        %2461 = vrot.lane.b32.xlu0 %v2457, 126
        %v2462 = vpop.permute.xlu0 %2461
        %2463 = vrot.lane.b32.xlu0 %v2458, 126
        %v2464 = vpop.permute.xlu0 %2463
        %v2467 = vadd.f32 %v2369, %v2462
        %v2468 = vadd.f32 %v2370, %v2464
        %s2469 = sld [smem:[#allocation10 + $0xa7]]
        %v2470 = vstv %s2469
        %v2471 = vmul.f32 %v2470, %v2243
        %v2472 = vmul.f32 %v2470, %v2244
        %2475 = vrot.lane.b32.xlu0 %v2471, 126
        %v2476 = vpop.permute.xlu0 %2475
        %2477 = vrot.lane.b32.xlu0 %v2472, 126
        %v2478 = vpop.permute.xlu0 %2477
        %v2481 = vadd.f32 %v2383, %v2476
        %v2482 = vadd.f32 %v2384, %v2478
        %v2483 = vld [vmem:[%s2002 + $0x2] sm:$0xff]
        %v2484 = vld [vmem:[%s2002 + $0xa] sm:$0xff]
        %s2485 = sld [smem:[#allocation10 + $0xa8]]
        %v2486 = vstv %s2485
        %v2487 = vmul.f32 %v2486, %v2483
        %v2488 = vmul.f32 %v2486, %v2484
        %v2489 = vadd.f32 %v2397, %v2487
        %v2490 = vadd.f32 %v2398, %v2488
        %s2491 = sld [smem:[#allocation10 + $0xa9]]
        %v2492 = vstv %s2491
        %v2493 = vmul.f32 %v2492, %v2483
        %v2494 = vmul.f32 %v2492, %v2484
        %v2495 = vadd.f32 %v2411, %v2493
        %v2496 = vadd.f32 %v2412, %v2494
        %s2497 = sld [smem:[#allocation10 + $0xaa]]
        %v2498 = vstv %s2497
        %v2499 = vmul.f32 %v2498, %v2483
        %v2500 = vmul.f32 %v2498, %v2484
        %v2501 = vadd.f32 %v2425, %v2499
        %v2502 = vadd.f32 %v2426, %v2500
        %s2503 = sld [smem:[#allocation10 + $0xab]]
        %v2504 = vstv %s2503
        %v2505 = vmul.f32 %v2504, %v2483
        %v2506 = vmul.f32 %v2504, %v2484
        %v2507 = vadd.f32 %v2439, %v2505
        %v2508 = vadd.f32 %v2440, %v2506
        %s2509 = sld [smem:[#allocation10 + $0xac]]
        %v2510 = vstv %s2509
        %v2511 = vmul.f32 %v2510, %v2483
        %v2512 = vmul.f32 %v2510, %v2484
        %v2513 = vadd.f32 %v2453, %v2511
        %v2514 = vadd.f32 %v2454, %v2512
        %s2515 = sld [smem:[#allocation10 + $0xad]]
        %v2516 = vstv %s2515
        %v2517 = vmul.f32 %v2516, %v2483
        %v2518 = vmul.f32 %v2516, %v2484
        %v2519 = vadd.f32 %v2467, %v2517
        %v2520 = vadd.f32 %v2468, %v2518
        %s2521 = sld [smem:[#allocation10 + $0xae]]
        %v2522 = vstv %s2521
        %v2523 = vmul.f32 %v2522, %v2483
        %v2524 = vmul.f32 %v2522, %v2484
        %v2525 = vadd.f32 %v2481, %v2523
        %v2526 = vadd.f32 %v2482, %v2524
        %s2527 = sld [smem:[#allocation10 + $0xaf]]
        %v2528 = vstv %s2527
        %v2529 = vmul.f32 %v2528, %v2483
        %v2530 = vmul.f32 %v2528, %v2484
        %2533 = vrot.lane.b32.xlu0 %v2529, 127
        %v2534 = vpop.permute.xlu0 %2533
        %2535 = vrot.lane.b32.xlu0 %v2530, 127
        %v2536 = vpop.permute.xlu0 %2535
        %v2539 = vadd.f32 %v2489, %v2534
        %v2540 = vadd.f32 %v2490, %v2536
        %s2541 = sld [smem:[#allocation10 + $0xb0]]
        %v2542 = vstv %s2541
        %v2543 = vmul.f32 %v2542, %v2483
        %v2544 = vmul.f32 %v2542, %v2484
        %2547 = vrot.lane.b32.xlu0 %v2543, 127
        %v2548 = vpop.permute.xlu0 %2547
        %2549 = vrot.lane.b32.xlu0 %v2544, 127
        %v2550 = vpop.permute.xlu0 %2549
        %v2553 = vadd.f32 %v2495, %v2548
        %v2554 = vadd.f32 %v2496, %v2550
        %s2555 = sld [smem:[#allocation10 + $0xb1]]
        %v2556 = vstv %s2555
        %v2557 = vmul.f32 %v2556, %v2483
        %v2558 = vmul.f32 %v2556, %v2484
        %2561 = vrot.lane.b32.xlu0 %v2557, 127
        %v2562 = vpop.permute.xlu0 %2561
        %2563 = vrot.lane.b32.xlu0 %v2558, 127
        %v2564 = vpop.permute.xlu0 %2563
        %v2567 = vadd.f32 %v2501, %v2562
        %v2568 = vadd.f32 %v2502, %v2564
        %s2569 = sld [smem:[#allocation10 + $0xb2]]
        %v2570 = vstv %s2569
        %v2571 = vmul.f32 %v2570, %v2483
        %v2572 = vmul.f32 %v2570, %v2484
        %2575 = vrot.lane.b32.xlu0 %v2571, 127
        %v2576 = vpop.permute.xlu0 %2575
        %2577 = vrot.lane.b32.xlu0 %v2572, 127
        %v2578 = vpop.permute.xlu0 %2577
        %v2581 = vadd.f32 %v2507, %v2576
        %v2582 = vadd.f32 %v2508, %v2578
        %s2583 = sld [smem:[#allocation10 + $0xb3]]
        %v2584 = vstv %s2583
        %v2585 = vmul.f32 %v2584, %v2483
        %v2586 = vmul.f32 %v2584, %v2484
        %2589 = vrot.lane.b32.xlu0 %v2585, 127
        %v2590 = vpop.permute.xlu0 %2589
        %2591 = vrot.lane.b32.xlu0 %v2586, 127
        %v2592 = vpop.permute.xlu0 %2591
        %v2595 = vadd.f32 %v2513, %v2590
        %v2596 = vadd.f32 %v2514, %v2592
        %s2597 = sld [smem:[#allocation10 + $0xb4]]
        %v2598 = vstv %s2597
        %v2599 = vmul.f32 %v2598, %v2483
        %v2600 = vmul.f32 %v2598, %v2484
        %2603 = vrot.lane.b32.xlu0 %v2599, 127
        %v2604 = vpop.permute.xlu0 %2603
        %2605 = vrot.lane.b32.xlu0 %v2600, 127
        %v2606 = vpop.permute.xlu0 %2605
        %v2609 = vadd.f32 %v2519, %v2604
        %v2610 = vadd.f32 %v2520, %v2606
        %s2611 = sld [smem:[#allocation10 + $0xb5]]
        %v2612 = vstv %s2611
        %v2613 = vmul.f32 %v2612, %v2483
        %v2614 = vmul.f32 %v2612, %v2484
        %2617 = vrot.lane.b32.xlu0 %v2613, 127
        %v2618 = vpop.permute.xlu0 %2617
        %2619 = vrot.lane.b32.xlu0 %v2614, 127
        %v2620 = vpop.permute.xlu0 %2619
        %v2623 = vadd.f32 %v2525, %v2618
        %v2624 = vadd.f32 %v2526, %v2620
        %s2625 = sld [smem:[#allocation10 + $0xb6]]
        %v2626 = vstv %s2625
        %v2627 = vmul.f32 %v2626, %v2483
        %v2628 = vmul.f32 %v2626, %v2484
        %2631 = vrot.lane.b32.xlu0 %v2627, 126
        %v2632 = vpop.permute.xlu0 %2631
        %2633 = vrot.lane.b32.xlu0 %v2628, 126
        %v2634 = vpop.permute.xlu0 %2633
        %v2637 = vadd.f32 %v2539, %v2632
        %v2638 = vadd.f32 %v2540, %v2634
        %s2639 = sld [smem:[#allocation10 + $0xb7]]
        %v2640 = vstv %s2639
        %v2641 = vmul.f32 %v2640, %v2483
        %v2642 = vmul.f32 %v2640, %v2484
        %2645 = vrot.lane.b32.xlu0 %v2641, 126
        %v2646 = vpop.permute.xlu0 %2645
        %2647 = vrot.lane.b32.xlu0 %v2642, 126
        %v2648 = vpop.permute.xlu0 %2647
        %v2651 = vadd.f32 %v2553, %v2646
        %v2652 = vadd.f32 %v2554, %v2648
        %s2653 = sld [smem:[#allocation10 + $0xb8]]
        %v2654 = vstv %s2653
        %v2655 = vmul.f32 %v2654, %v2483
        %v2656 = vmul.f32 %v2654, %v2484
        %2659 = vrot.lane.b32.xlu0 %v2655, 126
        %v2660 = vpop.permute.xlu0 %2659
        %2661 = vrot.lane.b32.xlu0 %v2656, 126
        %v2662 = vpop.permute.xlu0 %2661
        %v2665 = vadd.f32 %v2567, %v2660
        %v2666 = vadd.f32 %v2568, %v2662
        %s2667 = sld [smem:[#allocation10 + $0xb9]]
        %v2668 = vstv %s2667
        %v2669 = vmul.f32 %v2668, %v2483
        %v2670 = vmul.f32 %v2668, %v2484
        %2673 = vrot.lane.b32.xlu0 %v2669, 126
        %v2674 = vpop.permute.xlu0 %2673
        %2675 = vrot.lane.b32.xlu0 %v2670, 126
        %v2676 = vpop.permute.xlu0 %2675
        %v2679 = vadd.f32 %v2581, %v2674
        %v2680 = vadd.f32 %v2582, %v2676
        %s2681 = sld [smem:[#allocation10 + $0xba]]
        %v2682 = vstv %s2681
        %v2683 = vmul.f32 %v2682, %v2483
        %v2684 = vmul.f32 %v2682, %v2484
        %2687 = vrot.lane.b32.xlu0 %v2683, 126
        %v2688 = vpop.permute.xlu0 %2687
        %2689 = vrot.lane.b32.xlu0 %v2684, 126
        %v2690 = vpop.permute.xlu0 %2689
        %v2693 = vadd.f32 %v2595, %v2688
        %v2694 = vadd.f32 %v2596, %v2690
        %s2695 = sld [smem:[#allocation10 + $0xbb]]
        %v2696 = vstv %s2695
        %v2697 = vmul.f32 %v2696, %v2483
        %v2698 = vmul.f32 %v2696, %v2484
        %2701 = vrot.lane.b32.xlu0 %v2697, 126
        %v2702 = vpop.permute.xlu0 %2701
        %2703 = vrot.lane.b32.xlu0 %v2698, 126
        %v2704 = vpop.permute.xlu0 %2703
        %v2707 = vadd.f32 %v2609, %v2702
        %v2708 = vadd.f32 %v2610, %v2704
        %s2709 = sld [smem:[#allocation10 + $0xbc]]
        %v2710 = vstv %s2709
        %v2711 = vmul.f32 %v2710, %v2483
        %v2712 = vmul.f32 %v2710, %v2484
        %2715 = vrot.lane.b32.xlu0 %v2711, 126
        %v2716 = vpop.permute.xlu0 %2715
        %2717 = vrot.lane.b32.xlu0 %v2712, 126
        %v2718 = vpop.permute.xlu0 %2717
        %v2721 = vadd.f32 %v2623, %v2716
        %v2722 = vadd.f32 %v2624, %v2718
        %s2723 = scalar_lea.vmem [#allocation2], 72
        %v2724 = vld [vmem:[%s2723] sm:$0xff]
        %v2725 = vld [vmem:[%s2723 + $0x8] sm:$0xff]
        %s2726 = sld [smem:[#allocation10 + $0xbd]]
        %v2727 = vstv %s2726
        %v2728 = vmul.f32 %v2727, %v2724
        %v2729 = vmul.f32 %v2727, %v2725
        %v2730 = vadd.f32 %v2637, %v2728
        %v2731 = vadd.f32 %v2638, %v2729
        %s2732 = sld [smem:[#allocation10 + $0xbe]]
        %v2733 = vstv %s2732
        %v2734 = vmul.f32 %v2733, %v2724
        %v2735 = vmul.f32 %v2733, %v2725
        %v2736 = vadd.f32 %v2651, %v2734
        %v2737 = vadd.f32 %v2652, %v2735
        %s2738 = sld [smem:[#allocation10 + $0xbf]]
        %v2739 = vstv %s2738
        %v2740 = vmul.f32 %v2739, %v2724
        %v2741 = vmul.f32 %v2739, %v2725
        %v2742 = vadd.f32 %v2665, %v2740
        %v2743 = vadd.f32 %v2666, %v2741
        %s2744 = sld [smem:[#allocation10 + $0xc0]]
        %v2745 = vstv %s2744
        %v2746 = vmul.f32 %v2745, %v2724
        %v2747 = vmul.f32 %v2745, %v2725
        %v2748 = vadd.f32 %v2679, %v2746
        %v2749 = vadd.f32 %v2680, %v2747
        %s2750 = sld [smem:[#allocation10 + $0xc1]]
        %v2751 = vstv %s2750
        %v2752 = vmul.f32 %v2751, %v2724
        %v2753 = vmul.f32 %v2751, %v2725
        %v2754 = vadd.f32 %v2693, %v2752
        %v2755 = vadd.f32 %v2694, %v2753
        %s2756 = sld [smem:[#allocation10 + $0xc2]]
        %v2757 = vstv %s2756
        %v2758 = vmul.f32 %v2757, %v2724
        %v2759 = vmul.f32 %v2757, %v2725
        %v2760 = vadd.f32 %v2707, %v2758
        %v2761 = vadd.f32 %v2708, %v2759
        %s2762 = sld [smem:[#allocation10 + $0xc3]]
        %v2763 = vstv %s2762
        %v2764 = vmul.f32 %v2763, %v2724
        %v2765 = vmul.f32 %v2763, %v2725
        %v2766 = vadd.f32 %v2721, %v2764
        %v2767 = vadd.f32 %v2722, %v2765
        %s2768 = sld [smem:[#allocation10 + $0xc4]]
        %v2769 = vstv %s2768
        %v2770 = vmul.f32 %v2769, %v2724
        %v2771 = vmul.f32 %v2769, %v2725
        %2774 = vrot.lane.b32.xlu0 %v2770, 127
        %v2775 = vpop.permute.xlu0 %2774
        %2776 = vrot.lane.b32.xlu0 %v2771, 127
        %v2777 = vpop.permute.xlu0 %2776
        %v2780 = vadd.f32 %v2730, %v2775
        %v2781 = vadd.f32 %v2731, %v2777
        %s2782 = sld [smem:[#allocation10 + $0xc5]]
        %v2783 = vstv %s2782
        %v2784 = vmul.f32 %v2783, %v2724
        %v2785 = vmul.f32 %v2783, %v2725
        %2788 = vrot.lane.b32.xlu0 %v2784, 127
        %v2789 = vpop.permute.xlu0 %2788
        %2790 = vrot.lane.b32.xlu0 %v2785, 127
        %v2791 = vpop.permute.xlu0 %2790
        %v2794 = vadd.f32 %v2736, %v2789
        %v2795 = vadd.f32 %v2737, %v2791
        %s2796 = sld [smem:[#allocation10 + $0xc6]]
        %v2797 = vstv %s2796
        %v2798 = vmul.f32 %v2797, %v2724
        %v2799 = vmul.f32 %v2797, %v2725
        %2802 = vrot.lane.b32.xlu0 %v2798, 127
        %v2803 = vpop.permute.xlu0 %2802
        %2804 = vrot.lane.b32.xlu0 %v2799, 127
        %v2805 = vpop.permute.xlu0 %2804
        %v2808 = vadd.f32 %v2742, %v2803
        %v2809 = vadd.f32 %v2743, %v2805
        %s2810 = sld [smem:[#allocation10 + $0xc7]]
        %v2811 = vstv %s2810
        %v2812 = vmul.f32 %v2811, %v2724
        %v2813 = vmul.f32 %v2811, %v2725
        %2816 = vrot.lane.b32.xlu0 %v2812, 127
        %v2817 = vpop.permute.xlu0 %2816
        %2818 = vrot.lane.b32.xlu0 %v2813, 127
        %v2819 = vpop.permute.xlu0 %2818
        %v2822 = vadd.f32 %v2748, %v2817
        %v2823 = vadd.f32 %v2749, %v2819
        %s2824 = sld [smem:[#allocation10 + $0xc8]]
        %v2825 = vstv %s2824
        %v2826 = vmul.f32 %v2825, %v2724
        %v2827 = vmul.f32 %v2825, %v2725
        %2830 = vrot.lane.b32.xlu0 %v2826, 127
        %v2831 = vpop.permute.xlu0 %2830
        %2832 = vrot.lane.b32.xlu0 %v2827, 127
        %v2833 = vpop.permute.xlu0 %2832
        %v2836 = vadd.f32 %v2754, %v2831
        %v2837 = vadd.f32 %v2755, %v2833
        %s2838 = sld [smem:[#allocation10 + $0xc9]]
        %v2839 = vstv %s2838
        %v2840 = vmul.f32 %v2839, %v2724
        %v2841 = vmul.f32 %v2839, %v2725
        %2844 = vrot.lane.b32.xlu0 %v2840, 127
        %v2845 = vpop.permute.xlu0 %2844
        %2846 = vrot.lane.b32.xlu0 %v2841, 127
        %v2847 = vpop.permute.xlu0 %2846
        %v2850 = vadd.f32 %v2760, %v2845
        %v2851 = vadd.f32 %v2761, %v2847
        %s2852 = sld [smem:[#allocation10 + $0xca]]
        %v2853 = vstv %s2852
        %v2854 = vmul.f32 %v2853, %v2724
        %v2855 = vmul.f32 %v2853, %v2725
        %2858 = vrot.lane.b32.xlu0 %v2854, 127
        %v2859 = vpop.permute.xlu0 %2858
        %2860 = vrot.lane.b32.xlu0 %v2855, 127
        %v2861 = vpop.permute.xlu0 %2860
        %v2864 = vadd.f32 %v2766, %v2859
        %v2865 = vadd.f32 %v2767, %v2861
        %s2866 = sld [smem:[#allocation10 + $0xcb]]
        %v2867 = vstv %s2866
        %v2868 = vmul.f32 %v2867, %v2724
        %v2869 = vmul.f32 %v2867, %v2725
        %2872 = vrot.lane.b32.xlu0 %v2868, 126
        %v2873 = vpop.permute.xlu0 %2872
        %2874 = vrot.lane.b32.xlu0 %v2869, 126
        %v2875 = vpop.permute.xlu0 %2874
        %v2878 = vadd.f32 %v2780, %v2873
        %v2879 = vadd.f32 %v2781, %v2875
        %s2880 = sld [smem:[#allocation10 + $0xcc]]
        %v2881 = vstv %s2880
        %v2882 = vmul.f32 %v2881, %v2724
        %v2883 = vmul.f32 %v2881, %v2725
        %2886 = vrot.lane.b32.xlu0 %v2882, 126
        %v2887 = vpop.permute.xlu0 %2886
        %2888 = vrot.lane.b32.xlu0 %v2883, 126
        %v2889 = vpop.permute.xlu0 %2888
        %v2892 = vadd.f32 %v2794, %v2887
        %v2893 = vadd.f32 %v2795, %v2889
        %s2894 = sld [smem:[#allocation10 + $0xcd]]
        %v2895 = vstv %s2894
        %v2896 = vmul.f32 %v2895, %v2724
        %v2897 = vmul.f32 %v2895, %v2725
        %2900 = vrot.lane.b32.xlu0 %v2896, 126
        %v2901 = vpop.permute.xlu0 %2900
        %2902 = vrot.lane.b32.xlu0 %v2897, 126
        %v2903 = vpop.permute.xlu0 %2902
        %v2906 = vadd.f32 %v2808, %v2901
        %v2907 = vadd.f32 %v2809, %v2903
        %s2908 = sld [smem:[#allocation10 + $0xce]]
        %v2909 = vstv %s2908
        %v2910 = vmul.f32 %v2909, %v2724
        %v2911 = vmul.f32 %v2909, %v2725
        %2914 = vrot.lane.b32.xlu0 %v2910, 126
        %v2915 = vpop.permute.xlu0 %2914
        %2916 = vrot.lane.b32.xlu0 %v2911, 126
        %v2917 = vpop.permute.xlu0 %2916
        %v2920 = vadd.f32 %v2822, %v2915
        %v2921 = vadd.f32 %v2823, %v2917
        %s2922 = sld [smem:[#allocation10 + $0xcf]]
        %v2923 = vstv %s2922
        %v2924 = vmul.f32 %v2923, %v2724
        %v2925 = vmul.f32 %v2923, %v2725
        %2928 = vrot.lane.b32.xlu0 %v2924, 126
        %v2929 = vpop.permute.xlu0 %2928
        %2930 = vrot.lane.b32.xlu0 %v2925, 126
        %v2931 = vpop.permute.xlu0 %2930
        %v2934 = vadd.f32 %v2836, %v2929
        %v2935 = vadd.f32 %v2837, %v2931
        %s2936 = sld [smem:[#allocation10 + $0xd0]]
        %v2937 = vstv %s2936
        %v2938 = vmul.f32 %v2937, %v2724
        %v2939 = vmul.f32 %v2937, %v2725
        %2942 = vrot.lane.b32.xlu0 %v2938, 126
        %v2943 = vpop.permute.xlu0 %2942
        %2944 = vrot.lane.b32.xlu0 %v2939, 126
        %v2945 = vpop.permute.xlu0 %2944
        %v2948 = vadd.f32 %v2850, %v2943
        %v2949 = vadd.f32 %v2851, %v2945
        %s2950 = sld [smem:[#allocation10 + $0xd1]]
        %v2951 = vstv %s2950
        %v2952 = vmul.f32 %v2951, %v2724
        %v2953 = vmul.f32 %v2951, %v2725
        %2956 = vrot.lane.b32.xlu0 %v2952, 126
        %v2957 = vpop.permute.xlu0 %2956
        %2958 = vrot.lane.b32.xlu0 %v2953, 126
        %v2959 = vpop.permute.xlu0 %2958
        %v2962 = vadd.f32 %v2864, %v2957
        %v2963 = vadd.f32 %v2865, %v2959
        %v2964 = vld [vmem:[%s2723 + $0x1] sm:$0xff]
        %v2965 = vld [vmem:[%s2723 + $0x9] sm:$0xff]
        %s2966 = sld [smem:[#allocation10 + $0xd2]]
        %v2967 = vstv %s2966
        %v2968 = vmul.f32 %v2967, %v2964
        %v2969 = vmul.f32 %v2967, %v2965
        %v2970 = vadd.f32 %v2878, %v2968
        %v2971 = vadd.f32 %v2879, %v2969
        %s2972 = sld [smem:[#allocation10 + $0xd3]]
        %v2973 = vstv %s2972
        %v2974 = vmul.f32 %v2973, %v2964
        %v2975 = vmul.f32 %v2973, %v2965
        %v2976 = vadd.f32 %v2892, %v2974
        %v2977 = vadd.f32 %v2893, %v2975
        %s2978 = sld [smem:[#allocation10 + $0xd4]]
        %v2979 = vstv %s2978
        %v2980 = vmul.f32 %v2979, %v2964
        %v2981 = vmul.f32 %v2979, %v2965
        %v2982 = vadd.f32 %v2906, %v2980
        %v2983 = vadd.f32 %v2907, %v2981
        %s2984 = sld [smem:[#allocation10 + $0xd5]]
        %v2985 = vstv %s2984
        %v2986 = vmul.f32 %v2985, %v2964
        %v2987 = vmul.f32 %v2985, %v2965
        %v2988 = vadd.f32 %v2920, %v2986
        %v2989 = vadd.f32 %v2921, %v2987
        %s2990 = sld [smem:[#allocation10 + $0xd6]]
        %v2991 = vstv %s2990
        %v2992 = vmul.f32 %v2991, %v2964
        %v2993 = vmul.f32 %v2991, %v2965
        %v2994 = vadd.f32 %v2934, %v2992
        %v2995 = vadd.f32 %v2935, %v2993
        %s2996 = sld [smem:[#allocation10 + $0xd7]]
        %v2997 = vstv %s2996
        %v2998 = vmul.f32 %v2997, %v2964
        %v2999 = vmul.f32 %v2997, %v2965
        %v3000 = vadd.f32 %v2948, %v2998
        %v3001 = vadd.f32 %v2949, %v2999
        %s3002 = sld [smem:[#allocation10 + $0xd8]]
        %v3003 = vstv %s3002
        %v3004 = vmul.f32 %v3003, %v2964
        %v3005 = vmul.f32 %v3003, %v2965
        %v3006 = vadd.f32 %v2962, %v3004
        %v3007 = vadd.f32 %v2963, %v3005
        %s3008 = sld [smem:[#allocation10 + $0xd9]]
        %v3009 = vstv %s3008
        %v3010 = vmul.f32 %v3009, %v2964
        %v3011 = vmul.f32 %v3009, %v2965
        %3014 = vrot.lane.b32.xlu0 %v3010, 127
        %v3015 = vpop.permute.xlu0 %3014
        %3016 = vrot.lane.b32.xlu0 %v3011, 127
        %v3017 = vpop.permute.xlu0 %3016
        %v3020 = vadd.f32 %v2970, %v3015
        %v3021 = vadd.f32 %v2971, %v3017
        %s3022 = sld [smem:[#allocation10 + $0xda]]
        %v3023 = vstv %s3022
        %v3024 = vmul.f32 %v3023, %v2964
        %v3025 = vmul.f32 %v3023, %v2965
        %3028 = vrot.lane.b32.xlu0 %v3024, 127
        %v3029 = vpop.permute.xlu0 %3028
        %3030 = vrot.lane.b32.xlu0 %v3025, 127
        %v3031 = vpop.permute.xlu0 %3030
        %v3034 = vadd.f32 %v2976, %v3029
        %v3035 = vadd.f32 %v2977, %v3031
        %s3036 = sld [smem:[#allocation10 + $0xdb]]
        %v3037 = vstv %s3036
        %v3038 = vmul.f32 %v3037, %v2964
        %v3039 = vmul.f32 %v3037, %v2965
        %3042 = vrot.lane.b32.xlu0 %v3038, 127
        %v3043 = vpop.permute.xlu0 %3042
        %3044 = vrot.lane.b32.xlu0 %v3039, 127
        %v3045 = vpop.permute.xlu0 %3044
        %v3048 = vadd.f32 %v2982, %v3043
        %v3049 = vadd.f32 %v2983, %v3045
        %s3050 = sld [smem:[#allocation10 + $0xdc]]
        %v3051 = vstv %s3050
        %v3052 = vmul.f32 %v3051, %v2964
        %v3053 = vmul.f32 %v3051, %v2965
        %3056 = vrot.lane.b32.xlu0 %v3052, 127
        %v3057 = vpop.permute.xlu0 %3056
        %3058 = vrot.lane.b32.xlu0 %v3053, 127
        %v3059 = vpop.permute.xlu0 %3058
        %v3062 = vadd.f32 %v2988, %v3057
        %v3063 = vadd.f32 %v2989, %v3059
        %s3064 = sld [smem:[#allocation10 + $0xdd]]
        %v3065 = vstv %s3064
        %v3066 = vmul.f32 %v3065, %v2964
        %v3067 = vmul.f32 %v3065, %v2965
        %3070 = vrot.lane.b32.xlu0 %v3066, 127
        %v3071 = vpop.permute.xlu0 %3070
        %3072 = vrot.lane.b32.xlu0 %v3067, 127
        %v3073 = vpop.permute.xlu0 %3072
        %v3076 = vadd.f32 %v2994, %v3071
        %v3077 = vadd.f32 %v2995, %v3073
        %s3078 = sld [smem:[#allocation10 + $0xde]]
        %v3079 = vstv %s3078
        %v3080 = vmul.f32 %v3079, %v2964
        %v3081 = vmul.f32 %v3079, %v2965
        %3084 = vrot.lane.b32.xlu0 %v3080, 127
        %v3085 = vpop.permute.xlu0 %3084
        %3086 = vrot.lane.b32.xlu0 %v3081, 127
        %v3087 = vpop.permute.xlu0 %3086
        %v3090 = vadd.f32 %v3000, %v3085
        %v3091 = vadd.f32 %v3001, %v3087
        %s3092 = sld [smem:[#allocation10 + $0xdf]]
        %v3093 = vstv %s3092
        %v3094 = vmul.f32 %v3093, %v2964
        %v3095 = vmul.f32 %v3093, %v2965
        %3098 = vrot.lane.b32.xlu0 %v3094, 127
        %v3099 = vpop.permute.xlu0 %3098
        %3100 = vrot.lane.b32.xlu0 %v3095, 127
        %v3101 = vpop.permute.xlu0 %3100
        %v3104 = vadd.f32 %v3006, %v3099
        %v3105 = vadd.f32 %v3007, %v3101
        %s3106 = sld [smem:[#allocation10 + $0xe0]]
        %v3107 = vstv %s3106
        %v3108 = vmul.f32 %v3107, %v2964
        %v3109 = vmul.f32 %v3107, %v2965
        %3112 = vrot.lane.b32.xlu0 %v3108, 126
        %v3113 = vpop.permute.xlu0 %3112
        %3114 = vrot.lane.b32.xlu0 %v3109, 126
        %v3115 = vpop.permute.xlu0 %3114
        %v3118 = vadd.f32 %v3020, %v3113
        %v3119 = vadd.f32 %v3021, %v3115
        %s3120 = sld [smem:[#allocation10 + $0xe1]]
        %v3121 = vstv %s3120
        %v3122 = vmul.f32 %v3121, %v2964
        %v3123 = vmul.f32 %v3121, %v2965
        %3126 = vrot.lane.b32.xlu0 %v3122, 126
        %v3127 = vpop.permute.xlu0 %3126
        %3128 = vrot.lane.b32.xlu0 %v3123, 126
        %v3129 = vpop.permute.xlu0 %3128
        %v3132 = vadd.f32 %v3034, %v3127
        %v3133 = vadd.f32 %v3035, %v3129
        %s3134 = sld [smem:[#allocation10 + $0xe2]]
        %v3135 = vstv %s3134
        %v3136 = vmul.f32 %v3135, %v2964
        %v3137 = vmul.f32 %v3135, %v2965
        %3140 = vrot.lane.b32.xlu0 %v3136, 126
        %v3141 = vpop.permute.xlu0 %3140
        %3142 = vrot.lane.b32.xlu0 %v3137, 126
        %v3143 = vpop.permute.xlu0 %3142
        %v3146 = vadd.f32 %v3048, %v3141
        %v3147 = vadd.f32 %v3049, %v3143
        %s3148 = sld [smem:[#allocation10 + $0xe3]]
        %v3149 = vstv %s3148
        %v3150 = vmul.f32 %v3149, %v2964
        %v3151 = vmul.f32 %v3149, %v2965
        %3154 = vrot.lane.b32.xlu0 %v3150, 126
        %v3155 = vpop.permute.xlu0 %3154
        %3156 = vrot.lane.b32.xlu0 %v3151, 126
        %v3157 = vpop.permute.xlu0 %3156
        %v3160 = vadd.f32 %v3062, %v3155
        %v3161 = vadd.f32 %v3063, %v3157
        %s3162 = sld [smem:[#allocation10 + $0xe4]]
        %v3163 = vstv %s3162
        %v3164 = vmul.f32 %v3163, %v2964
        %v3165 = vmul.f32 %v3163, %v2965
        %3168 = vrot.lane.b32.xlu0 %v3164, 126
        %v3169 = vpop.permute.xlu0 %3168
        %3170 = vrot.lane.b32.xlu0 %v3165, 126
        %v3171 = vpop.permute.xlu0 %3170
        %v3174 = vadd.f32 %v3076, %v3169
        %v3175 = vadd.f32 %v3077, %v3171
        %s3176 = sld [smem:[#allocation10 + $0xe5]]
        %v3177 = vstv %s3176
        %v3178 = vmul.f32 %v3177, %v2964
        %v3179 = vmul.f32 %v3177, %v2965
        %3182 = vrot.lane.b32.xlu0 %v3178, 126
        %v3183 = vpop.permute.xlu0 %3182
        %3184 = vrot.lane.b32.xlu0 %v3179, 126
        %v3185 = vpop.permute.xlu0 %3184
        %v3188 = vadd.f32 %v3090, %v3183
        %v3189 = vadd.f32 %v3091, %v3185
        %s3190 = sld [smem:[#allocation10 + $0xe6]]
        %v3191 = vstv %s3190
        %v3192 = vmul.f32 %v3191, %v2964
        %v3193 = vmul.f32 %v3191, %v2965
        %3196 = vrot.lane.b32.xlu0 %v3192, 126
        %v3197 = vpop.permute.xlu0 %3196
        %3198 = vrot.lane.b32.xlu0 %v3193, 126
        %v3199 = vpop.permute.xlu0 %3198
        %v3202 = vadd.f32 %v3104, %v3197
        %v3203 = vadd.f32 %v3105, %v3199
        %v3204 = vld [vmem:[%s2723 + $0x2] sm:$0xff]
        %v3205 = vld [vmem:[%s2723 + $0xa] sm:$0xff]
        %s3206 = sld [smem:[#allocation10 + $0xe7]]
        %v3207 = vstv %s3206
        %v3208 = vmul.f32 %v3207, %v3204
        %v3209 = vmul.f32 %v3207, %v3205
        %v3210 = vadd.f32 %v3118, %v3208
        %v3211 = vadd.f32 %v3119, %v3209
        %s3212 = sld [smem:[#allocation10 + $0xe8]]
        %v3213 = vstv %s3212
        %v3214 = vmul.f32 %v3213, %v3204
        %v3215 = vmul.f32 %v3213, %v3205
        %v3216 = vadd.f32 %v3132, %v3214
        %v3217 = vadd.f32 %v3133, %v3215
        %s3218 = sld [smem:[#allocation10 + $0xe9]]
        %v3219 = vstv %s3218
        %v3220 = vmul.f32 %v3219, %v3204
        %v3221 = vmul.f32 %v3219, %v3205
        %v3222 = vadd.f32 %v3146, %v3220
        %v3223 = vadd.f32 %v3147, %v3221
        %s3224 = sld [smem:[#allocation10 + $0xea]]
        %v3225 = vstv %s3224
        %v3226 = vmul.f32 %v3225, %v3204
        %v3227 = vmul.f32 %v3225, %v3205
        %v3228 = vadd.f32 %v3160, %v3226
        %v3229 = vadd.f32 %v3161, %v3227
        %s3230 = sld [smem:[#allocation10 + $0xeb]]
        %v3231 = vstv %s3230
        %v3232 = vmul.f32 %v3231, %v3204
        %v3233 = vmul.f32 %v3231, %v3205
        %v3234 = vadd.f32 %v3174, %v3232
        %v3235 = vadd.f32 %v3175, %v3233
        %s3236 = sld [smem:[#allocation10 + $0xec]]
        %v3237 = vstv %s3236
        %v3238 = vmul.f32 %v3237, %v3204
        %v3239 = vmul.f32 %v3237, %v3205
        %v3240 = vadd.f32 %v3188, %v3238
        %v3241 = vadd.f32 %v3189, %v3239
        %s3242 = sld [smem:[#allocation10 + $0xed]]
        %v3243 = vstv %s3242
        %v3244 = vmul.f32 %v3243, %v3204
        %v3245 = vmul.f32 %v3243, %v3205
        %v3246 = vadd.f32 %v3202, %v3244
        %v3247 = vadd.f32 %v3203, %v3245
        %s3248 = sld [smem:[#allocation10 + $0xee]]
        %v3249 = vstv %s3248
        %v3250 = vmul.f32 %v3249, %v3204
        %v3251 = vmul.f32 %v3249, %v3205
        %3254 = vrot.lane.b32.xlu0 %v3250, 127
        %v3255 = vpop.permute.xlu0 %3254
        %3256 = vrot.lane.b32.xlu0 %v3251, 127
        %v3257 = vpop.permute.xlu0 %3256
        %v3260 = vadd.f32 %v3210, %v3255
        %v3261 = vadd.f32 %v3211, %v3257
        %s3262 = sld [smem:[#allocation10 + $0xef]]
        %v3263 = vstv %s3262
        %v3264 = vmul.f32 %v3263, %v3204
        %v3265 = vmul.f32 %v3263, %v3205
        %3268 = vrot.lane.b32.xlu0 %v3264, 127
        %v3269 = vpop.permute.xlu0 %3268
        %3270 = vrot.lane.b32.xlu0 %v3265, 127
        %v3271 = vpop.permute.xlu0 %3270
        %v3274 = vadd.f32 %v3216, %v3269
        %v3275 = vadd.f32 %v3217, %v3271
        %s3276 = sld [smem:[#allocation10 + $0xf0]]
        %v3277 = vstv %s3276
        %v3278 = vmul.f32 %v3277, %v3204
        %v3279 = vmul.f32 %v3277, %v3205
        %3282 = vrot.lane.b32.xlu0 %v3278, 127
        %v3283 = vpop.permute.xlu0 %3282
        %3284 = vrot.lane.b32.xlu0 %v3279, 127
        %v3285 = vpop.permute.xlu0 %3284
        %v3288 = vadd.f32 %v3222, %v3283
        %v3289 = vadd.f32 %v3223, %v3285
        %s3290 = sld [smem:[#allocation10 + $0xf1]]
        %v3291 = vstv %s3290
        %v3292 = vmul.f32 %v3291, %v3204
        %v3293 = vmul.f32 %v3291, %v3205
        %3296 = vrot.lane.b32.xlu0 %v3292, 127
        %v3297 = vpop.permute.xlu0 %3296
        %3298 = vrot.lane.b32.xlu0 %v3293, 127
        %v3299 = vpop.permute.xlu0 %3298
        %v3302 = vadd.f32 %v3228, %v3297
        %v3303 = vadd.f32 %v3229, %v3299
        %s3304 = sld [smem:[#allocation10 + $0xf2]]
        %v3305 = vstv %s3304
        %v3306 = vmul.f32 %v3305, %v3204
        %v3307 = vmul.f32 %v3305, %v3205
        %3310 = vrot.lane.b32.xlu0 %v3306, 127
        %v3311 = vpop.permute.xlu0 %3310
        %3312 = vrot.lane.b32.xlu0 %v3307, 127
        %v3313 = vpop.permute.xlu0 %3312
        %v3316 = vadd.f32 %v3234, %v3311
        %v3317 = vadd.f32 %v3235, %v3313
        %s3318 = sld [smem:[#allocation10 + $0xf3]]
        %v3319 = vstv %s3318
        %v3320 = vmul.f32 %v3319, %v3204
        %v3321 = vmul.f32 %v3319, %v3205
        %3324 = vrot.lane.b32.xlu0 %v3320, 127
        %v3325 = vpop.permute.xlu0 %3324
        %3326 = vrot.lane.b32.xlu0 %v3321, 127
        %v3327 = vpop.permute.xlu0 %3326
        %v3330 = vadd.f32 %v3240, %v3325
        %v3331 = vadd.f32 %v3241, %v3327
        %s3332 = sld [smem:[#allocation10 + $0xf4]]
        %v3333 = vstv %s3332
        %v3334 = vmul.f32 %v3333, %v3204
        %v3335 = vmul.f32 %v3333, %v3205
        %3338 = vrot.lane.b32.xlu0 %v3334, 127
        %v3339 = vpop.permute.xlu0 %3338
        %3340 = vrot.lane.b32.xlu0 %v3335, 127
        %v3341 = vpop.permute.xlu0 %3340
        %v3344 = vadd.f32 %v3246, %v3339
        %v3345 = vadd.f32 %v3247, %v3341
        %s3346 = sld [smem:[#allocation10 + $0xf5]]
        %v3347 = vstv %s3346
        %v3348 = vmul.f32 %v3347, %v3204
        %v3349 = vmul.f32 %v3347, %v3205
        %3352 = vrot.lane.b32.xlu0 %v3348, 126
        %v3353 = vpop.permute.xlu0 %3352
        %3354 = vrot.lane.b32.xlu0 %v3349, 126
        %v3355 = vpop.permute.xlu0 %3354
        %v3358 = vadd.f32 %v3260, %v3353
        %v3359 = vadd.f32 %v3261, %v3355
        %s3360 = sld [smem:[#allocation10 + $0xf6]]
        %v3361 = vstv %s3360
        %v3362 = vmul.f32 %v3361, %v3204
        %v3363 = vmul.f32 %v3361, %v3205
        %3366 = vrot.lane.b32.xlu0 %v3362, 126
        %v3367 = vpop.permute.xlu0 %3366
        %3368 = vrot.lane.b32.xlu0 %v3363, 126
        %v3369 = vpop.permute.xlu0 %3368
        %v3372 = vadd.f32 %v3274, %v3367
        %v3373 = vadd.f32 %v3275, %v3369
        %s3374 = sld [smem:[#allocation10 + $0xf7]]
        %v3375 = vstv %s3374
        %v3376 = vmul.f32 %v3375, %v3204
        %v3377 = vmul.f32 %v3375, %v3205
        %3380 = vrot.lane.b32.xlu0 %v3376, 126
        %v3381 = vpop.permute.xlu0 %3380
        %3382 = vrot.lane.b32.xlu0 %v3377, 126
        %v3383 = vpop.permute.xlu0 %3382
        %v3386 = vadd.f32 %v3288, %v3381
        %v3387 = vadd.f32 %v3289, %v3383
        %s3388 = sld [smem:[#allocation10 + $0xf8]]
        %v3389 = vstv %s3388
        %v3390 = vmul.f32 %v3389, %v3204
        %v3391 = vmul.f32 %v3389, %v3205
        %3394 = vrot.lane.b32.xlu0 %v3390, 126
        %v3395 = vpop.permute.xlu0 %3394
        %3396 = vrot.lane.b32.xlu0 %v3391, 126
        %v3397 = vpop.permute.xlu0 %3396
        %v3400 = vadd.f32 %v3302, %v3395
        %v3401 = vadd.f32 %v3303, %v3397
        %s3402 = sld [smem:[#allocation10 + $0xf9]]
        %v3403 = vstv %s3402
        %v3404 = vmul.f32 %v3403, %v3204
        %v3405 = vmul.f32 %v3403, %v3205
        %3408 = vrot.lane.b32.xlu0 %v3404, 126
        %v3409 = vpop.permute.xlu0 %3408
        %3410 = vrot.lane.b32.xlu0 %v3405, 126
        %v3411 = vpop.permute.xlu0 %3410
        %v3414 = vadd.f32 %v3316, %v3409
        %v3415 = vadd.f32 %v3317, %v3411
        %s3416 = sld [smem:[#allocation10 + $0xfa]]
        %v3417 = vstv %s3416
        %v3418 = vmul.f32 %v3417, %v3204
        %v3419 = vmul.f32 %v3417, %v3205
        %3422 = vrot.lane.b32.xlu0 %v3418, 126
        %v3423 = vpop.permute.xlu0 %3422
        %3424 = vrot.lane.b32.xlu0 %v3419, 126
        %v3425 = vpop.permute.xlu0 %3424
        %v3428 = vadd.f32 %v3330, %v3423
        %v3429 = vadd.f32 %v3331, %v3425
        %s3430 = sld [smem:[#allocation10 + $0xfb]]
        %v3431 = vstv %s3430
        %v3432 = vmul.f32 %v3431, %v3204
        %v3433 = vmul.f32 %v3431, %v3205
        %3436 = vrot.lane.b32.xlu0 %v3432, 126
        %v3437 = vpop.permute.xlu0 %3436
        %3438 = vrot.lane.b32.xlu0 %v3433, 126
        %v3439 = vpop.permute.xlu0 %3438
        %v3442 = vadd.f32 %v3344, %v3437
        %v3443 = vadd.f32 %v3345, %v3439
        %vm3444 = vcmask 130048
        %3445 = vst.msk [vmem:[%s438] sm:$0xff] %vm3444, %v3414
        %3446 = vst.msk [vmem:[%s438 + $0x8] sm:$0xff] %vm3444, %v3415
        %3449 = vrot.lane.b32.xlu0 %v3414, 1
        %v3450 = vpop.permute.xlu0 %3449
        %3451 = vrot.lane.b32.xlu0 %v3415, 1
        %v3452 = vpop.permute.xlu0 %3451
        %3455 = vst.msk [vmem:[#allocation3 + $0x1] sm:$0xff] %vm506, %v3450
        %3456 = vst.msk [vmem:[#allocation3 + $0x9] sm:$0xff] %vm506, %v3452
        %s3457 = scalar_lea.vmem %s438, 16 [#allocation18]
        %3458 = vst.msk [vmem:[%s3457] sm:$0xff] %vm3444, %v3428
        %3459 = vst.msk [vmem:[%s3457 + $0x8] sm:$0xff] %vm3444, %v3429
        %3462 = vrot.lane.b32.xlu0 %v3428, 1
        %v3463 = vpop.permute.xlu0 %3462
        %3464 = vrot.lane.b32.xlu0 %v3429, 1
        %v3465 = vpop.permute.xlu0 %3464
        %s3468 = scalar_lea.vmem [#allocation3], 24
        %3469 = vst.msk [vmem:[%s3468 + $0x1] sm:$0xff] %vm506, %v3463
        %3470 = vst.msk [vmem:[%s3468 + $0x9] sm:$0xff] %vm506, %v3465
        %s3471 = scalar_lea.vmem %s438, 32 [#allocation18]
        %3472 = vst.msk [vmem:[%s3471] sm:$0xff] %vm3444, %v3442
        %3473 = vst.msk [vmem:[%s3471 + $0x8] sm:$0xff] %vm3444, %v3443
        %3476 = vrot.lane.b32.xlu0 %v3442, 1
        %v3477 = vpop.permute.xlu0 %3476
        %3478 = vrot.lane.b32.xlu0 %v3443, 1
        %v3479 = vpop.permute.xlu0 %3478
        %s3482 = scalar_lea.vmem [#allocation3], 48
        %3483 = vst.msk [vmem:[%s3482 + $0x1] sm:$0xff] %vm506, %v3477
        %3484 = vst.msk [vmem:[%s3482 + $0x9] sm:$0xff] %vm506, %v3479
        %s3485 = sld [smem:[#allocation16]]
        %v3486 = vstv %s3485
        %s3487 = sld [smem:[#allocation16 + $0x1]]
        %v3488 = vstv %s3487
        %s3489 = sld [smem:[#allocation16 + $0x2]]
        %v3490 = vstv %s3489
        %s3491 = sld [smem:[#allocation16 + $0x3]]
        %v3492 = vstv %s3491
        %v3493 = vld [vmem:[#allocation3] sm:$0xff]
        %v3494 = vld [vmem:[#allocation3 + $0x8] sm:$0xff]
        %s3495 = sld [smem:[#allocation14]]
        %v3496 = vstv %s3495
        %v3497 = vmul.f32 %v3496, %v3493
        %v3498 = vmul.f32 %v3496, %v3494
        %v3499 = vadd.f32 %v3486, %v3497
        %v3500 = vadd.f32 %v3486, %v3498
        %s3501 = sld [smem:[#allocation14 + $0x1]]
        %v3502 = vstv %s3501
        %v3503 = vmul.f32 %v3502, %v3493
        %v3504 = vmul.f32 %v3502, %v3494
        %v3505 = vadd.f32 %v3488, %v3503
        %v3506 = vadd.f32 %v3488, %v3504
        %s3507 = sld [smem:[#allocation14 + $0x2]]
        %v3508 = vstv %s3507
        %v3509 = vmul.f32 %v3508, %v3493
        %v3510 = vmul.f32 %v3508, %v3494
        %v3511 = vadd.f32 %v3490, %v3509
        %v3512 = vadd.f32 %v3490, %v3510
        %s3513 = sld [smem:[#allocation14 + $0x3]]
        %v3514 = vstv %s3513
        %v3515 = vmul.f32 %v3514, %v3493
        %v3516 = vmul.f32 %v3514, %v3494
        %v3517 = vadd.f32 %v3492, %v3515
        %v3518 = vadd.f32 %v3492, %v3516
        %s3519 = sld [smem:[#allocation14 + $0x4]]
        %v3520 = vstv %s3519
        %v3521 = vmul.f32 %v3520, %v3493
        %v3522 = vmul.f32 %v3520, %v3494
        %3525 = vrot.lane.b32.xlu0 %v3521, 127
        %v3526 = vpop.permute.xlu0 %3525
        %3527 = vrot.lane.b32.xlu0 %v3522, 127
        %v3528 = vpop.permute.xlu0 %3527
        %v3531 = vadd.f32 %v3499, %v3526
        %v3532 = vadd.f32 %v3500, %v3528
        %s3533 = sld [smem:[#allocation14 + $0x5]]
        %v3534 = vstv %s3533
        %v3535 = vmul.f32 %v3534, %v3493
        %v3536 = vmul.f32 %v3534, %v3494
        %3539 = vrot.lane.b32.xlu0 %v3535, 127
        %v3540 = vpop.permute.xlu0 %3539
        %3541 = vrot.lane.b32.xlu0 %v3536, 127
        %v3542 = vpop.permute.xlu0 %3541
        %v3545 = vadd.f32 %v3505, %v3540
        %v3546 = vadd.f32 %v3506, %v3542
        %s3547 = sld [smem:[#allocation14 + $0x6]]
        %v3548 = vstv %s3547
        %v3549 = vmul.f32 %v3548, %v3493
        %v3550 = vmul.f32 %v3548, %v3494
        %3553 = vrot.lane.b32.xlu0 %v3549, 127
        %v3554 = vpop.permute.xlu0 %3553
        %3555 = vrot.lane.b32.xlu0 %v3550, 127
        %v3556 = vpop.permute.xlu0 %3555
        %v3559 = vadd.f32 %v3511, %v3554
        %v3560 = vadd.f32 %v3512, %v3556
        %s3561 = sld [smem:[#allocation14 + $0x7]]
        %v3562 = vstv %s3561
        %v3563 = vmul.f32 %v3562, %v3493
        %v3564 = vmul.f32 %v3562, %v3494
        %3567 = vrot.lane.b32.xlu0 %v3563, 127
        %v3568 = vpop.permute.xlu0 %3567
        %3569 = vrot.lane.b32.xlu0 %v3564, 127
        %v3570 = vpop.permute.xlu0 %3569
        %v3573 = vadd.f32 %v3517, %v3568
        %v3574 = vadd.f32 %v3518, %v3570
        %s3575 = sld [smem:[#allocation14 + $0x8]]
        %v3576 = vstv %s3575
        %v3577 = vmul.f32 %v3576, %v3493
        %v3578 = vmul.f32 %v3576, %v3494
        %3581 = vrot.lane.b32.xlu0 %v3577, 126
        %v3582 = vpop.permute.xlu0 %3581
        %3583 = vrot.lane.b32.xlu0 %v3578, 126
        %v3584 = vpop.permute.xlu0 %3583
        %v3587 = vadd.f32 %v3531, %v3582
        %v3588 = vadd.f32 %v3532, %v3584
        %s3589 = sld [smem:[#allocation14 + $0x9]]
        %v3590 = vstv %s3589
        %v3591 = vmul.f32 %v3590, %v3493
        %v3592 = vmul.f32 %v3590, %v3494
        %3595 = vrot.lane.b32.xlu0 %v3591, 126
        %v3596 = vpop.permute.xlu0 %3595
        %3597 = vrot.lane.b32.xlu0 %v3592, 126
        %v3598 = vpop.permute.xlu0 %3597
        %v3601 = vadd.f32 %v3545, %v3596
        %v3602 = vadd.f32 %v3546, %v3598
        %s3603 = sld [smem:[#allocation14 + $0xa]]
        %v3604 = vstv %s3603
        %v3605 = vmul.f32 %v3604, %v3493
        %v3606 = vmul.f32 %v3604, %v3494
        %3609 = vrot.lane.b32.xlu0 %v3605, 126
        %v3610 = vpop.permute.xlu0 %3609
        %3611 = vrot.lane.b32.xlu0 %v3606, 126
        %v3612 = vpop.permute.xlu0 %3611
        %v3615 = vadd.f32 %v3559, %v3610
        %v3616 = vadd.f32 %v3560, %v3612
        %s3617 = sld [smem:[#allocation14 + $0xb]]
        %v3618 = vstv %s3617
        %v3619 = vmul.f32 %v3618, %v3493
        %v3620 = vmul.f32 %v3618, %v3494
        %3623 = vrot.lane.b32.xlu0 %v3619, 126
        %v3624 = vpop.permute.xlu0 %3623
        %3625 = vrot.lane.b32.xlu0 %v3620, 126
        %v3626 = vpop.permute.xlu0 %3625
        %v3629 = vadd.f32 %v3573, %v3624
        %v3630 = vadd.f32 %v3574, %v3626
        %v3631 = vld [vmem:[#allocation3 + $0x1] sm:$0xff]
        %v3632 = vld [vmem:[#allocation3 + $0x9] sm:$0xff]
        %s3633 = sld [smem:[#allocation14 + $0xc]]
        %v3634 = vstv %s3633
        %v3635 = vmul.f32 %v3634, %v3631
        %v3636 = vmul.f32 %v3634, %v3632
        %v3637 = vadd.f32 %v3587, %v3635
        %v3638 = vadd.f32 %v3588, %v3636
        %s3639 = sld [smem:[#allocation14 + $0xd]]
        %v3640 = vstv %s3639
        %v3641 = vmul.f32 %v3640, %v3631
        %v3642 = vmul.f32 %v3640, %v3632
        %v3643 = vadd.f32 %v3601, %v3641
        %v3644 = vadd.f32 %v3602, %v3642
        %s3645 = sld [smem:[#allocation14 + $0xe]]
        %v3646 = vstv %s3645
        %v3647 = vmul.f32 %v3646, %v3631
        %v3648 = vmul.f32 %v3646, %v3632
        %v3649 = vadd.f32 %v3615, %v3647
        %v3650 = vadd.f32 %v3616, %v3648
        %s3651 = sld [smem:[#allocation14 + $0xf]]
        %v3652 = vstv %s3651
        %v3653 = vmul.f32 %v3652, %v3631
        %v3654 = vmul.f32 %v3652, %v3632
        %v3655 = vadd.f32 %v3629, %v3653
        %v3656 = vadd.f32 %v3630, %v3654
        %s3657 = sld [smem:[#allocation14 + $0x10]]
        %v3658 = vstv %s3657
        %v3659 = vmul.f32 %v3658, %v3631
        %v3660 = vmul.f32 %v3658, %v3632
        %3663 = vrot.lane.b32.xlu0 %v3659, 127
        %v3664 = vpop.permute.xlu0 %3663
        %3665 = vrot.lane.b32.xlu0 %v3660, 127
        %v3666 = vpop.permute.xlu0 %3665
        %v3669 = vadd.f32 %v3637, %v3664
        %v3670 = vadd.f32 %v3638, %v3666
        %s3671 = sld [smem:[#allocation14 + $0x11]]
        %v3672 = vstv %s3671
        %v3673 = vmul.f32 %v3672, %v3631
        %v3674 = vmul.f32 %v3672, %v3632
        %3677 = vrot.lane.b32.xlu0 %v3673, 127
        %v3678 = vpop.permute.xlu0 %3677
        %3679 = vrot.lane.b32.xlu0 %v3674, 127
        %v3680 = vpop.permute.xlu0 %3679
        %v3683 = vadd.f32 %v3643, %v3678
        %v3684 = vadd.f32 %v3644, %v3680
        %s3685 = sld [smem:[#allocation14 + $0x12]]
        %v3686 = vstv %s3685
        %v3687 = vmul.f32 %v3686, %v3631
        %v3688 = vmul.f32 %v3686, %v3632
        %3691 = vrot.lane.b32.xlu0 %v3687, 127
        %v3692 = vpop.permute.xlu0 %3691
        %3693 = vrot.lane.b32.xlu0 %v3688, 127
        %v3694 = vpop.permute.xlu0 %3693
        %v3697 = vadd.f32 %v3649, %v3692
        %v3698 = vadd.f32 %v3650, %v3694
        %s3699 = sld [smem:[#allocation14 + $0x13]]
        %v3700 = vstv %s3699
        %v3701 = vmul.f32 %v3700, %v3631
        %v3702 = vmul.f32 %v3700, %v3632
        %3705 = vrot.lane.b32.xlu0 %v3701, 127
        %v3706 = vpop.permute.xlu0 %3705
        %3707 = vrot.lane.b32.xlu0 %v3702, 127
        %v3708 = vpop.permute.xlu0 %3707
        %v3711 = vadd.f32 %v3655, %v3706
        %v3712 = vadd.f32 %v3656, %v3708
        %s3713 = sld [smem:[#allocation14 + $0x14]]
        %v3714 = vstv %s3713
        %v3715 = vmul.f32 %v3714, %v3631
        %v3716 = vmul.f32 %v3714, %v3632
        %3719 = vrot.lane.b32.xlu0 %v3715, 126
        %v3720 = vpop.permute.xlu0 %3719
        %3721 = vrot.lane.b32.xlu0 %v3716, 126
        %v3722 = vpop.permute.xlu0 %3721
        %v3725 = vadd.f32 %v3669, %v3720
        %v3726 = vadd.f32 %v3670, %v3722
        %s3727 = sld [smem:[#allocation14 + $0x15]]
        %v3728 = vstv %s3727
        %v3729 = vmul.f32 %v3728, %v3631
        %v3730 = vmul.f32 %v3728, %v3632
        %3733 = vrot.lane.b32.xlu0 %v3729, 126
        %v3734 = vpop.permute.xlu0 %3733
        %3735 = vrot.lane.b32.xlu0 %v3730, 126
        %v3736 = vpop.permute.xlu0 %3735
        %v3739 = vadd.f32 %v3683, %v3734
        %v3740 = vadd.f32 %v3684, %v3736
        %s3741 = sld [smem:[#allocation14 + $0x16]]
        %v3742 = vstv %s3741
        %v3743 = vmul.f32 %v3742, %v3631
        %v3744 = vmul.f32 %v3742, %v3632
        %3747 = vrot.lane.b32.xlu0 %v3743, 126
        %v3748 = vpop.permute.xlu0 %3747
        %3749 = vrot.lane.b32.xlu0 %v3744, 126
        %v3750 = vpop.permute.xlu0 %3749
        %v3753 = vadd.f32 %v3697, %v3748
        %v3754 = vadd.f32 %v3698, %v3750
        %s3755 = sld [smem:[#allocation14 + $0x17]]
        %v3756 = vstv %s3755
        %v3757 = vmul.f32 %v3756, %v3631
        %v3758 = vmul.f32 %v3756, %v3632
        %3761 = vrot.lane.b32.xlu0 %v3757, 126
        %v3762 = vpop.permute.xlu0 %3761
        %3763 = vrot.lane.b32.xlu0 %v3758, 126
        %v3764 = vpop.permute.xlu0 %3763
        %v3767 = vadd.f32 %v3711, %v3762
        %v3768 = vadd.f32 %v3712, %v3764
        %v3769 = vld [vmem:[#allocation3 + $0x2] sm:$0xff]
        %v3770 = vld [vmem:[#allocation3 + $0xa] sm:$0xff]
        %s3771 = sld [smem:[#allocation14 + $0x18]]
        %v3772 = vstv %s3771
        %v3773 = vmul.f32 %v3772, %v3769
        %v3774 = vmul.f32 %v3772, %v3770
        %v3775 = vadd.f32 %v3725, %v3773
        %v3776 = vadd.f32 %v3726, %v3774
        %s3777 = sld [smem:[#allocation14 + $0x19]]
        %v3778 = vstv %s3777
        %v3779 = vmul.f32 %v3778, %v3769
        %v3780 = vmul.f32 %v3778, %v3770
        %v3781 = vadd.f32 %v3739, %v3779
        %v3782 = vadd.f32 %v3740, %v3780
        %s3783 = sld [smem:[#allocation14 + $0x1a]]
        %v3784 = vstv %s3783
        %v3785 = vmul.f32 %v3784, %v3769
        %v3786 = vmul.f32 %v3784, %v3770
        %v3787 = vadd.f32 %v3753, %v3785
        %v3788 = vadd.f32 %v3754, %v3786
        %s3789 = sld [smem:[#allocation14 + $0x1b]]
        %v3790 = vstv %s3789
        %v3791 = vmul.f32 %v3790, %v3769
        %v3792 = vmul.f32 %v3790, %v3770
        %v3793 = vadd.f32 %v3767, %v3791
        %v3794 = vadd.f32 %v3768, %v3792
        %s3795 = sld [smem:[#allocation14 + $0x1c]]
        %v3796 = vstv %s3795
        %v3797 = vmul.f32 %v3796, %v3769
        %v3798 = vmul.f32 %v3796, %v3770
        %3801 = vrot.lane.b32.xlu0 %v3797, 127
        %v3802 = vpop.permute.xlu0 %3801
        %3803 = vrot.lane.b32.xlu0 %v3798, 127
        %v3804 = vpop.permute.xlu0 %3803
        %v3807 = vadd.f32 %v3775, %v3802
        %v3808 = vadd.f32 %v3776, %v3804
        %s3809 = sld [smem:[#allocation14 + $0x1d]]
        %v3810 = vstv %s3809
        %v3811 = vmul.f32 %v3810, %v3769
        %v3812 = vmul.f32 %v3810, %v3770
        %3815 = vrot.lane.b32.xlu0 %v3811, 127
        %v3816 = vpop.permute.xlu0 %3815
        %3817 = vrot.lane.b32.xlu0 %v3812, 127
        %v3818 = vpop.permute.xlu0 %3817
        %v3821 = vadd.f32 %v3781, %v3816
        %v3822 = vadd.f32 %v3782, %v3818
        %s3823 = sld [smem:[#allocation14 + $0x1e]]
        %v3824 = vstv %s3823
        %v3825 = vmul.f32 %v3824, %v3769
        %v3826 = vmul.f32 %v3824, %v3770
        %3829 = vrot.lane.b32.xlu0 %v3825, 127
        %v3830 = vpop.permute.xlu0 %3829
        %3831 = vrot.lane.b32.xlu0 %v3826, 127
        %v3832 = vpop.permute.xlu0 %3831
        %v3835 = vadd.f32 %v3787, %v3830
        %v3836 = vadd.f32 %v3788, %v3832
        %s3837 = sld [smem:[#allocation14 + $0x1f]]
        %v3838 = vstv %s3837
        %v3839 = vmul.f32 %v3838, %v3769
        %v3840 = vmul.f32 %v3838, %v3770
        %3843 = vrot.lane.b32.xlu0 %v3839, 127
        %v3844 = vpop.permute.xlu0 %3843
        %3845 = vrot.lane.b32.xlu0 %v3840, 127
        %v3846 = vpop.permute.xlu0 %3845
        %v3849 = vadd.f32 %v3793, %v3844
        %v3850 = vadd.f32 %v3794, %v3846
        %s3851 = sld [smem:[#allocation14 + $0x20]]
        %v3852 = vstv %s3851
        %v3853 = vmul.f32 %v3852, %v3769
        %v3854 = vmul.f32 %v3852, %v3770
        %3857 = vrot.lane.b32.xlu0 %v3853, 126
        %v3858 = vpop.permute.xlu0 %3857
        %3859 = vrot.lane.b32.xlu0 %v3854, 126
        %v3860 = vpop.permute.xlu0 %3859
        %v3863 = vadd.f32 %v3807, %v3858
        %v3864 = vadd.f32 %v3808, %v3860
        %s3865 = sld [smem:[#allocation14 + $0x21]]
        %v3866 = vstv %s3865
        %v3867 = vmul.f32 %v3866, %v3769
        %v3868 = vmul.f32 %v3866, %v3770
        %3871 = vrot.lane.b32.xlu0 %v3867, 126
        %v3872 = vpop.permute.xlu0 %3871
        %3873 = vrot.lane.b32.xlu0 %v3868, 126
        %v3874 = vpop.permute.xlu0 %3873
        %v3877 = vadd.f32 %v3821, %v3872
        %v3878 = vadd.f32 %v3822, %v3874
        %s3879 = sld [smem:[#allocation14 + $0x22]]
        %v3880 = vstv %s3879
        %v3881 = vmul.f32 %v3880, %v3769
        %v3882 = vmul.f32 %v3880, %v3770
        %3885 = vrot.lane.b32.xlu0 %v3881, 126
        %v3886 = vpop.permute.xlu0 %3885
        %3887 = vrot.lane.b32.xlu0 %v3882, 126
        %v3888 = vpop.permute.xlu0 %3887
        %v3891 = vadd.f32 %v3835, %v3886
        %v3892 = vadd.f32 %v3836, %v3888
        %s3893 = sld [smem:[#allocation14 + $0x23]]
        %v3894 = vstv %s3893
        %v3895 = vmul.f32 %v3894, %v3769
        %v3896 = vmul.f32 %v3894, %v3770
        %3899 = vrot.lane.b32.xlu0 %v3895, 126
        %v3900 = vpop.permute.xlu0 %3899
        %3901 = vrot.lane.b32.xlu0 %v3896, 126
        %v3902 = vpop.permute.xlu0 %3901
        %v3905 = vadd.f32 %v3849, %v3900
        %v3906 = vadd.f32 %v3850, %v3902
        %v3907 = vld [vmem:[%s3468] sm:$0xff]
        %v3908 = vld [vmem:[%s3468 + $0x8] sm:$0xff]
        %s3909 = sld [smem:[#allocation14 + $0x24]]
        %v3910 = vstv %s3909
        %v3911 = vmul.f32 %v3910, %v3907
        %v3912 = vmul.f32 %v3910, %v3908
        %v3913 = vadd.f32 %v3863, %v3911
        %v3914 = vadd.f32 %v3864, %v3912
        %s3915 = sld [smem:[#allocation14 + $0x25]]
        %v3916 = vstv %s3915
        %v3917 = vmul.f32 %v3916, %v3907
        %v3918 = vmul.f32 %v3916, %v3908
        %v3919 = vadd.f32 %v3877, %v3917
        %v3920 = vadd.f32 %v3878, %v3918
        %s3921 = sld [smem:[#allocation14 + $0x26]]
        %v3922 = vstv %s3921
        %v3923 = vmul.f32 %v3922, %v3907
        %v3924 = vmul.f32 %v3922, %v3908
        %v3925 = vadd.f32 %v3891, %v3923
        %v3926 = vadd.f32 %v3892, %v3924
        %s3927 = sld [smem:[#allocation14 + $0x27]]
        %v3928 = vstv %s3927
        %v3929 = vmul.f32 %v3928, %v3907
        %v3930 = vmul.f32 %v3928, %v3908
        %v3931 = vadd.f32 %v3905, %v3929
        %v3932 = vadd.f32 %v3906, %v3930
        %s3933 = sld [smem:[#allocation14 + $0x28]]
        %v3934 = vstv %s3933
        %v3935 = vmul.f32 %v3934, %v3907
        %v3936 = vmul.f32 %v3934, %v3908
        %3939 = vrot.lane.b32.xlu0 %v3935, 127
        %v3940 = vpop.permute.xlu0 %3939
        %3941 = vrot.lane.b32.xlu0 %v3936, 127
        %v3942 = vpop.permute.xlu0 %3941
        %v3945 = vadd.f32 %v3913, %v3940
        %v3946 = vadd.f32 %v3914, %v3942
        %s3947 = sld [smem:[#allocation14 + $0x29]]
        %v3948 = vstv %s3947
        %v3949 = vmul.f32 %v3948, %v3907
        %v3950 = vmul.f32 %v3948, %v3908
        %3953 = vrot.lane.b32.xlu0 %v3949, 127
        %v3954 = vpop.permute.xlu0 %3953
        %3955 = vrot.lane.b32.xlu0 %v3950, 127
        %v3956 = vpop.permute.xlu0 %3955
        %v3959 = vadd.f32 %v3919, %v3954
        %v3960 = vadd.f32 %v3920, %v3956
        %s3961 = sld [smem:[#allocation14 + $0x2a]]
        %v3962 = vstv %s3961
        %v3963 = vmul.f32 %v3962, %v3907
        %v3964 = vmul.f32 %v3962, %v3908
        %3967 = vrot.lane.b32.xlu0 %v3963, 127
        %v3968 = vpop.permute.xlu0 %3967
        %3969 = vrot.lane.b32.xlu0 %v3964, 127
        %v3970 = vpop.permute.xlu0 %3969
        %v3973 = vadd.f32 %v3925, %v3968
        %v3974 = vadd.f32 %v3926, %v3970
        %s3975 = sld [smem:[#allocation14 + $0x2b]]
        %v3976 = vstv %s3975
        %v3977 = vmul.f32 %v3976, %v3907
        %v3978 = vmul.f32 %v3976, %v3908
        %3981 = vrot.lane.b32.xlu0 %v3977, 127
        %v3982 = vpop.permute.xlu0 %3981
        %3983 = vrot.lane.b32.xlu0 %v3978, 127
        %v3984 = vpop.permute.xlu0 %3983
        %v3987 = vadd.f32 %v3931, %v3982
        %v3988 = vadd.f32 %v3932, %v3984
        %s3989 = sld [smem:[#allocation14 + $0x2c]]
        %v3990 = vstv %s3989
        %v3991 = vmul.f32 %v3990, %v3907
        %v3992 = vmul.f32 %v3990, %v3908
        %3995 = vrot.lane.b32.xlu0 %v3991, 126
        %v3996 = vpop.permute.xlu0 %3995
        %3997 = vrot.lane.b32.xlu0 %v3992, 126
        %v3998 = vpop.permute.xlu0 %3997
        %v4001 = vadd.f32 %v3945, %v3996
        %v4002 = vadd.f32 %v3946, %v3998
        %s4003 = sld [smem:[#allocation14 + $0x2d]]
        %v4004 = vstv %s4003
        %v4005 = vmul.f32 %v4004, %v3907
        %v4006 = vmul.f32 %v4004, %v3908
        %4009 = vrot.lane.b32.xlu0 %v4005, 126
        %v4010 = vpop.permute.xlu0 %4009
        %4011 = vrot.lane.b32.xlu0 %v4006, 126
        %v4012 = vpop.permute.xlu0 %4011
        %v4015 = vadd.f32 %v3959, %v4010
        %v4016 = vadd.f32 %v3960, %v4012
        %s4017 = sld [smem:[#allocation14 + $0x2e]]
        %v4018 = vstv %s4017
        %v4019 = vmul.f32 %v4018, %v3907
        %v4020 = vmul.f32 %v4018, %v3908
        %4023 = vrot.lane.b32.xlu0 %v4019, 126
        %v4024 = vpop.permute.xlu0 %4023
        %4025 = vrot.lane.b32.xlu0 %v4020, 126
        %v4026 = vpop.permute.xlu0 %4025
        %v4029 = vadd.f32 %v3973, %v4024
        %v4030 = vadd.f32 %v3974, %v4026
        %s4031 = sld [smem:[#allocation14 + $0x2f]]
        %v4032 = vstv %s4031
        %v4033 = vmul.f32 %v4032, %v3907
        %v4034 = vmul.f32 %v4032, %v3908
        %4037 = vrot.lane.b32.xlu0 %v4033, 126
        %v4038 = vpop.permute.xlu0 %4037
        %4039 = vrot.lane.b32.xlu0 %v4034, 126
        %v4040 = vpop.permute.xlu0 %4039
        %v4043 = vadd.f32 %v3987, %v4038
        %v4044 = vadd.f32 %v3988, %v4040
        %v4045 = vld [vmem:[%s3468 + $0x1] sm:$0xff]
        %v4046 = vld [vmem:[%s3468 + $0x9] sm:$0xff]
        %s4047 = sld [smem:[#allocation14 + $0x30]]
        %v4048 = vstv %s4047
        %v4049 = vmul.f32 %v4048, %v4045
        %v4050 = vmul.f32 %v4048, %v4046
        %v4051 = vadd.f32 %v4001, %v4049
        %v4052 = vadd.f32 %v4002, %v4050
        %s4053 = sld [smem:[#allocation14 + $0x31]]
        %v4054 = vstv %s4053
        %v4055 = vmul.f32 %v4054, %v4045
        %v4056 = vmul.f32 %v4054, %v4046
        %v4057 = vadd.f32 %v4015, %v4055
        %v4058 = vadd.f32 %v4016, %v4056
        %s4059 = sld [smem:[#allocation14 + $0x32]]
        %v4060 = vstv %s4059
        %v4061 = vmul.f32 %v4060, %v4045
        %v4062 = vmul.f32 %v4060, %v4046
        %v4063 = vadd.f32 %v4029, %v4061
        %v4064 = vadd.f32 %v4030, %v4062
        %s4065 = sld [smem:[#allocation14 + $0x33]]
        %v4066 = vstv %s4065
        %v4067 = vmul.f32 %v4066, %v4045
        %v4068 = vmul.f32 %v4066, %v4046
        %v4069 = vadd.f32 %v4043, %v4067
        %v4070 = vadd.f32 %v4044, %v4068
        %s4071 = sld [smem:[#allocation14 + $0x34]]
        %v4072 = vstv %s4071
        %v4073 = vmul.f32 %v4072, %v4045
        %v4074 = vmul.f32 %v4072, %v4046
        %4077 = vrot.lane.b32.xlu0 %v4073, 127
        %v4078 = vpop.permute.xlu0 %4077
        %4079 = vrot.lane.b32.xlu0 %v4074, 127
        %v4080 = vpop.permute.xlu0 %4079
        %v4083 = vadd.f32 %v4051, %v4078
        %v4084 = vadd.f32 %v4052, %v4080
        %s4085 = sld [smem:[#allocation14 + $0x35]]
        %v4086 = vstv %s4085
        %v4087 = vmul.f32 %v4086, %v4045
        %v4088 = vmul.f32 %v4086, %v4046
        %4091 = vrot.lane.b32.xlu0 %v4087, 127
        %v4092 = vpop.permute.xlu0 %4091
        %4093 = vrot.lane.b32.xlu0 %v4088, 127
        %v4094 = vpop.permute.xlu0 %4093
        %v4097 = vadd.f32 %v4057, %v4092
        %v4098 = vadd.f32 %v4058, %v4094
        %s4099 = sld [smem:[#allocation14 + $0x36]]
        %v4100 = vstv %s4099
        %v4101 = vmul.f32 %v4100, %v4045
        %v4102 = vmul.f32 %v4100, %v4046
        %4105 = vrot.lane.b32.xlu0 %v4101, 127
        %v4106 = vpop.permute.xlu0 %4105
        %4107 = vrot.lane.b32.xlu0 %v4102, 127
        %v4108 = vpop.permute.xlu0 %4107
        %v4111 = vadd.f32 %v4063, %v4106
        %v4112 = vadd.f32 %v4064, %v4108
        %s4113 = sld [smem:[#allocation14 + $0x37]]
        %v4114 = vstv %s4113
        %v4115 = vmul.f32 %v4114, %v4045
        %v4116 = vmul.f32 %v4114, %v4046
        %4119 = vrot.lane.b32.xlu0 %v4115, 127
        %v4120 = vpop.permute.xlu0 %4119
        %4121 = vrot.lane.b32.xlu0 %v4116, 127
        %v4122 = vpop.permute.xlu0 %4121
        %v4125 = vadd.f32 %v4069, %v4120
        %v4126 = vadd.f32 %v4070, %v4122
        %s4127 = sld [smem:[#allocation14 + $0x38]]
        %v4128 = vstv %s4127
        %v4129 = vmul.f32 %v4128, %v4045
        %v4130 = vmul.f32 %v4128, %v4046
        %4133 = vrot.lane.b32.xlu0 %v4129, 126
        %v4134 = vpop.permute.xlu0 %4133
        %4135 = vrot.lane.b32.xlu0 %v4130, 126
        %v4136 = vpop.permute.xlu0 %4135
        %v4139 = vadd.f32 %v4083, %v4134
        %v4140 = vadd.f32 %v4084, %v4136
        %s4141 = sld [smem:[#allocation14 + $0x39]]
        %v4142 = vstv %s4141
        %v4143 = vmul.f32 %v4142, %v4045
        %v4144 = vmul.f32 %v4142, %v4046
        %4147 = vrot.lane.b32.xlu0 %v4143, 126
        %v4148 = vpop.permute.xlu0 %4147
        %4149 = vrot.lane.b32.xlu0 %v4144, 126
        %v4150 = vpop.permute.xlu0 %4149
        %v4153 = vadd.f32 %v4097, %v4148
        %v4154 = vadd.f32 %v4098, %v4150
        %s4155 = sld [smem:[#allocation14 + $0x3a]]
        %v4156 = vstv %s4155
        %v4157 = vmul.f32 %v4156, %v4045
        %v4158 = vmul.f32 %v4156, %v4046
        %4161 = vrot.lane.b32.xlu0 %v4157, 126
        %v4162 = vpop.permute.xlu0 %4161
        %4163 = vrot.lane.b32.xlu0 %v4158, 126
        %v4164 = vpop.permute.xlu0 %4163
        %v4167 = vadd.f32 %v4111, %v4162
        %v4168 = vadd.f32 %v4112, %v4164
        %s4169 = sld [smem:[#allocation14 + $0x3b]]
        %v4170 = vstv %s4169
        %v4171 = vmul.f32 %v4170, %v4045
        %v4172 = vmul.f32 %v4170, %v4046
        %4175 = vrot.lane.b32.xlu0 %v4171, 126
        %v4176 = vpop.permute.xlu0 %4175
        %4177 = vrot.lane.b32.xlu0 %v4172, 126
        %v4178 = vpop.permute.xlu0 %4177
        %v4181 = vadd.f32 %v4125, %v4176
        %v4182 = vadd.f32 %v4126, %v4178
        %v4183 = vld [vmem:[%s3468 + $0x2] sm:$0xff]
        %v4184 = vld [vmem:[%s3468 + $0xa] sm:$0xff]
        %s4185 = sld [smem:[#allocation14 + $0x3c]]
        %v4186 = vstv %s4185
        %v4187 = vmul.f32 %v4186, %v4183
        %v4188 = vmul.f32 %v4186, %v4184
        %v4189 = vadd.f32 %v4139, %v4187
        %v4190 = vadd.f32 %v4140, %v4188
        %s4191 = sld [smem:[#allocation14 + $0x3d]]
        %v4192 = vstv %s4191
        %v4193 = vmul.f32 %v4192, %v4183
        %v4194 = vmul.f32 %v4192, %v4184
        %v4195 = vadd.f32 %v4153, %v4193
        %v4196 = vadd.f32 %v4154, %v4194
        %s4197 = sld [smem:[#allocation14 + $0x3e]]
        %v4198 = vstv %s4197
        %v4199 = vmul.f32 %v4198, %v4183
        %v4200 = vmul.f32 %v4198, %v4184
        %v4201 = vadd.f32 %v4167, %v4199
        %v4202 = vadd.f32 %v4168, %v4200
        %s4203 = sld [smem:[#allocation14 + $0x3f]]
        %v4204 = vstv %s4203
        %v4205 = vmul.f32 %v4204, %v4183
        %v4206 = vmul.f32 %v4204, %v4184
        %v4207 = vadd.f32 %v4181, %v4205
        %v4208 = vadd.f32 %v4182, %v4206
        %s4209 = sld [smem:[#allocation14 + $0x40]]
        %v4210 = vstv %s4209
        %v4211 = vmul.f32 %v4210, %v4183
        %v4212 = vmul.f32 %v4210, %v4184
        %4215 = vrot.lane.b32.xlu0 %v4211, 127
        %v4216 = vpop.permute.xlu0 %4215
        %4217 = vrot.lane.b32.xlu0 %v4212, 127
        %v4218 = vpop.permute.xlu0 %4217
        %v4221 = vadd.f32 %v4189, %v4216
        %v4222 = vadd.f32 %v4190, %v4218
        %s4223 = sld [smem:[#allocation14 + $0x41]]
        %v4224 = vstv %s4223
        %v4225 = vmul.f32 %v4224, %v4183
        %v4226 = vmul.f32 %v4224, %v4184
        %4229 = vrot.lane.b32.xlu0 %v4225, 127
        %v4230 = vpop.permute.xlu0 %4229
        %4231 = vrot.lane.b32.xlu0 %v4226, 127
        %v4232 = vpop.permute.xlu0 %4231
        %v4235 = vadd.f32 %v4195, %v4230
        %v4236 = vadd.f32 %v4196, %v4232
        %s4237 = sld [smem:[#allocation14 + $0x42]]
        %v4238 = vstv %s4237
        %v4239 = vmul.f32 %v4238, %v4183
        %v4240 = vmul.f32 %v4238, %v4184
        %4243 = vrot.lane.b32.xlu0 %v4239, 127
        %v4244 = vpop.permute.xlu0 %4243
        %4245 = vrot.lane.b32.xlu0 %v4240, 127
        %v4246 = vpop.permute.xlu0 %4245
        %v4249 = vadd.f32 %v4201, %v4244
        %v4250 = vadd.f32 %v4202, %v4246
        %s4251 = sld [smem:[#allocation14 + $0x43]]
        %v4252 = vstv %s4251
        %v4253 = vmul.f32 %v4252, %v4183
        %v4254 = vmul.f32 %v4252, %v4184
        %4257 = vrot.lane.b32.xlu0 %v4253, 127
        %v4258 = vpop.permute.xlu0 %4257
        %4259 = vrot.lane.b32.xlu0 %v4254, 127
        %v4260 = vpop.permute.xlu0 %4259
        %v4263 = vadd.f32 %v4207, %v4258
        %v4264 = vadd.f32 %v4208, %v4260
        %s4265 = sld [smem:[#allocation14 + $0x44]]
        %v4266 = vstv %s4265
        %v4267 = vmul.f32 %v4266, %v4183
        %v4268 = vmul.f32 %v4266, %v4184
        %4271 = vrot.lane.b32.xlu0 %v4267, 126
        %v4272 = vpop.permute.xlu0 %4271
        %4273 = vrot.lane.b32.xlu0 %v4268, 126
        %v4274 = vpop.permute.xlu0 %4273
        %v4277 = vadd.f32 %v4221, %v4272
        %v4278 = vadd.f32 %v4222, %v4274
        %s4279 = sld [smem:[#allocation14 + $0x45]]
        %v4280 = vstv %s4279
        %v4281 = vmul.f32 %v4280, %v4183
        %v4282 = vmul.f32 %v4280, %v4184
        %4285 = vrot.lane.b32.xlu0 %v4281, 126
        %v4286 = vpop.permute.xlu0 %4285
        %4287 = vrot.lane.b32.xlu0 %v4282, 126
        %v4288 = vpop.permute.xlu0 %4287
        %v4291 = vadd.f32 %v4235, %v4286
        %v4292 = vadd.f32 %v4236, %v4288
        %s4293 = sld [smem:[#allocation14 + $0x46]]
        %v4294 = vstv %s4293
        %v4295 = vmul.f32 %v4294, %v4183
        %v4296 = vmul.f32 %v4294, %v4184
        %4299 = vrot.lane.b32.xlu0 %v4295, 126
        %v4300 = vpop.permute.xlu0 %4299
        %4301 = vrot.lane.b32.xlu0 %v4296, 126
        %v4302 = vpop.permute.xlu0 %4301
        %v4305 = vadd.f32 %v4249, %v4300
        %v4306 = vadd.f32 %v4250, %v4302
        %s4307 = sld [smem:[#allocation14 + $0x47]]
        %v4308 = vstv %s4307
        %v4309 = vmul.f32 %v4308, %v4183
        %v4310 = vmul.f32 %v4308, %v4184
        %4313 = vrot.lane.b32.xlu0 %v4309, 126
        %v4314 = vpop.permute.xlu0 %4313
        %4315 = vrot.lane.b32.xlu0 %v4310, 126
        %v4316 = vpop.permute.xlu0 %4315
        %v4319 = vadd.f32 %v4263, %v4314
        %v4320 = vadd.f32 %v4264, %v4316
        %v4321 = vld [vmem:[%s3482] sm:$0xff]
        %v4322 = vld [vmem:[%s3482 + $0x8] sm:$0xff]
        %s4323 = sld [smem:[#allocation14 + $0x48]]
        %v4324 = vstv %s4323
        %v4325 = vmul.f32 %v4324, %v4321
        %v4326 = vmul.f32 %v4324, %v4322
        %v4327 = vadd.f32 %v4277, %v4325
        %v4328 = vadd.f32 %v4278, %v4326
        %s4329 = sld [smem:[#allocation14 + $0x49]]
        %v4330 = vstv %s4329
        %v4331 = vmul.f32 %v4330, %v4321
        %v4332 = vmul.f32 %v4330, %v4322
        %v4333 = vadd.f32 %v4291, %v4331
        %v4334 = vadd.f32 %v4292, %v4332
        %s4335 = sld [smem:[#allocation14 + $0x4a]]
        %v4336 = vstv %s4335
        %v4337 = vmul.f32 %v4336, %v4321
        %v4338 = vmul.f32 %v4336, %v4322
        %v4339 = vadd.f32 %v4305, %v4337
        %v4340 = vadd.f32 %v4306, %v4338
        %s4341 = sld [smem:[#allocation14 + $0x4b]]
        %v4342 = vstv %s4341
        %v4343 = vmul.f32 %v4342, %v4321
        %v4344 = vmul.f32 %v4342, %v4322
        %v4345 = vadd.f32 %v4319, %v4343
        %v4346 = vadd.f32 %v4320, %v4344
        %s4347 = sld [smem:[#allocation14 + $0x4c]]
        %v4348 = vstv %s4347
        %v4349 = vmul.f32 %v4348, %v4321
        %v4350 = vmul.f32 %v4348, %v4322
        %4353 = vrot.lane.b32.xlu0 %v4349, 127
        %v4354 = vpop.permute.xlu0 %4353
        %4355 = vrot.lane.b32.xlu0 %v4350, 127
        %v4356 = vpop.permute.xlu0 %4355
        %v4359 = vadd.f32 %v4327, %v4354
        %v4360 = vadd.f32 %v4328, %v4356
        %s4361 = sld [smem:[#allocation14 + $0x4d]]
        %v4362 = vstv %s4361
        %v4363 = vmul.f32 %v4362, %v4321
        %v4364 = vmul.f32 %v4362, %v4322
        %4367 = vrot.lane.b32.xlu0 %v4363, 127
        %v4368 = vpop.permute.xlu0 %4367
        %4369 = vrot.lane.b32.xlu0 %v4364, 127
        %v4370 = vpop.permute.xlu0 %4369
        %v4373 = vadd.f32 %v4333, %v4368
        %v4374 = vadd.f32 %v4334, %v4370
        %s4375 = sld [smem:[#allocation14 + $0x4e]]
        %v4376 = vstv %s4375
        %v4377 = vmul.f32 %v4376, %v4321
        %v4378 = vmul.f32 %v4376, %v4322
        %4381 = vrot.lane.b32.xlu0 %v4377, 127
        %v4382 = vpop.permute.xlu0 %4381
        %4383 = vrot.lane.b32.xlu0 %v4378, 127
        %v4384 = vpop.permute.xlu0 %4383
        %v4387 = vadd.f32 %v4339, %v4382
        %v4388 = vadd.f32 %v4340, %v4384
        %s4389 = sld [smem:[#allocation14 + $0x4f]]
        %v4390 = vstv %s4389
        %v4391 = vmul.f32 %v4390, %v4321
        %v4392 = vmul.f32 %v4390, %v4322
        %4395 = vrot.lane.b32.xlu0 %v4391, 127
        %v4396 = vpop.permute.xlu0 %4395
        %4397 = vrot.lane.b32.xlu0 %v4392, 127
        %v4398 = vpop.permute.xlu0 %4397
        %v4401 = vadd.f32 %v4345, %v4396
        %v4402 = vadd.f32 %v4346, %v4398
        %s4403 = sld [smem:[#allocation14 + $0x50]]
        %v4404 = vstv %s4403
        %v4405 = vmul.f32 %v4404, %v4321
        %v4406 = vmul.f32 %v4404, %v4322
        %4409 = vrot.lane.b32.xlu0 %v4405, 126
        %v4410 = vpop.permute.xlu0 %4409
        %4411 = vrot.lane.b32.xlu0 %v4406, 126
        %v4412 = vpop.permute.xlu0 %4411
        %v4415 = vadd.f32 %v4359, %v4410
        %v4416 = vadd.f32 %v4360, %v4412
        %s4417 = sld [smem:[#allocation14 + $0x51]]
        %v4418 = vstv %s4417
        %v4419 = vmul.f32 %v4418, %v4321
        %v4420 = vmul.f32 %v4418, %v4322
        %4423 = vrot.lane.b32.xlu0 %v4419, 126
        %v4424 = vpop.permute.xlu0 %4423
        %4425 = vrot.lane.b32.xlu0 %v4420, 126
        %v4426 = vpop.permute.xlu0 %4425
        %v4429 = vadd.f32 %v4373, %v4424
        %v4430 = vadd.f32 %v4374, %v4426
        %s4431 = sld [smem:[#allocation14 + $0x52]]
        %v4432 = vstv %s4431
        %v4433 = vmul.f32 %v4432, %v4321
        %v4434 = vmul.f32 %v4432, %v4322
        %4437 = vrot.lane.b32.xlu0 %v4433, 126
        %v4438 = vpop.permute.xlu0 %4437
        %4439 = vrot.lane.b32.xlu0 %v4434, 126
        %v4440 = vpop.permute.xlu0 %4439
        %v4443 = vadd.f32 %v4387, %v4438
        %v4444 = vadd.f32 %v4388, %v4440
        %s4445 = sld [smem:[#allocation14 + $0x53]]
        %v4446 = vstv %s4445
        %v4447 = vmul.f32 %v4446, %v4321
        %v4448 = vmul.f32 %v4446, %v4322
        %4451 = vrot.lane.b32.xlu0 %v4447, 126
        %v4452 = vpop.permute.xlu0 %4451
        %4453 = vrot.lane.b32.xlu0 %v4448, 126
        %v4454 = vpop.permute.xlu0 %4453
        %v4457 = vadd.f32 %v4401, %v4452
        %v4458 = vadd.f32 %v4402, %v4454
        %v4459 = vld [vmem:[%s3482 + $0x1] sm:$0xff]
        %v4460 = vld [vmem:[%s3482 + $0x9] sm:$0xff]
        %s4461 = sld [smem:[#allocation14 + $0x54]]
        %v4462 = vstv %s4461
        %v4463 = vmul.f32 %v4462, %v4459
        %v4464 = vmul.f32 %v4462, %v4460
        %v4465 = vadd.f32 %v4415, %v4463
        %v4466 = vadd.f32 %v4416, %v4464
        %s4467 = sld [smem:[#allocation14 + $0x55]]
        %v4468 = vstv %s4467
        %v4469 = vmul.f32 %v4468, %v4459
        %v4470 = vmul.f32 %v4468, %v4460
        %v4471 = vadd.f32 %v4429, %v4469
        %v4472 = vadd.f32 %v4430, %v4470
        %s4473 = sld [smem:[#allocation14 + $0x56]]
        %v4474 = vstv %s4473
        %v4475 = vmul.f32 %v4474, %v4459
        %v4476 = vmul.f32 %v4474, %v4460
        %v4477 = vadd.f32 %v4443, %v4475
        %v4478 = vadd.f32 %v4444, %v4476
        %s4479 = sld [smem:[#allocation14 + $0x57]]
        %v4480 = vstv %s4479
        %v4481 = vmul.f32 %v4480, %v4459
        %v4482 = vmul.f32 %v4480, %v4460
        %v4483 = vadd.f32 %v4457, %v4481
        %v4484 = vadd.f32 %v4458, %v4482
        %s4485 = sld [smem:[#allocation14 + $0x58]]
        %v4486 = vstv %s4485
        %v4487 = vmul.f32 %v4486, %v4459
        %v4488 = vmul.f32 %v4486, %v4460
        %4491 = vrot.lane.b32.xlu0 %v4487, 127
        %v4492 = vpop.permute.xlu0 %4491
        %4493 = vrot.lane.b32.xlu0 %v4488, 127
        %v4494 = vpop.permute.xlu0 %4493
        %v4497 = vadd.f32 %v4465, %v4492
        %v4498 = vadd.f32 %v4466, %v4494
        %s4499 = sld [smem:[#allocation14 + $0x59]]
        %v4500 = vstv %s4499
        %v4501 = vmul.f32 %v4500, %v4459
        %v4502 = vmul.f32 %v4500, %v4460
        %4505 = vrot.lane.b32.xlu0 %v4501, 127
        %v4506 = vpop.permute.xlu0 %4505
        %4507 = vrot.lane.b32.xlu0 %v4502, 127
        %v4508 = vpop.permute.xlu0 %4507
        %v4511 = vadd.f32 %v4471, %v4506
        %v4512 = vadd.f32 %v4472, %v4508
        %s4513 = sld [smem:[#allocation14 + $0x5a]]
        %v4514 = vstv %s4513
        %v4515 = vmul.f32 %v4514, %v4459
        %v4516 = vmul.f32 %v4514, %v4460
        %4519 = vrot.lane.b32.xlu0 %v4515, 127
        %v4520 = vpop.permute.xlu0 %4519
        %4521 = vrot.lane.b32.xlu0 %v4516, 127
        %v4522 = vpop.permute.xlu0 %4521
        %v4525 = vadd.f32 %v4477, %v4520
        %v4526 = vadd.f32 %v4478, %v4522
        %s4527 = sld [smem:[#allocation14 + $0x5b]]
        %v4528 = vstv %s4527
        %v4529 = vmul.f32 %v4528, %v4459
        %v4530 = vmul.f32 %v4528, %v4460
        %4533 = vrot.lane.b32.xlu0 %v4529, 127
        %v4534 = vpop.permute.xlu0 %4533
        %4535 = vrot.lane.b32.xlu0 %v4530, 127
        %v4536 = vpop.permute.xlu0 %4535
        %v4539 = vadd.f32 %v4483, %v4534
        %v4540 = vadd.f32 %v4484, %v4536
        %s4541 = sld [smem:[#allocation14 + $0x5c]]
        %v4542 = vstv %s4541
        %v4543 = vmul.f32 %v4542, %v4459
        %v4544 = vmul.f32 %v4542, %v4460
        %4547 = vrot.lane.b32.xlu0 %v4543, 126
        %v4548 = vpop.permute.xlu0 %4547
        %4549 = vrot.lane.b32.xlu0 %v4544, 126
        %v4550 = vpop.permute.xlu0 %4549
        %v4553 = vadd.f32 %v4497, %v4548
        %v4554 = vadd.f32 %v4498, %v4550
        %s4555 = sld [smem:[#allocation14 + $0x5d]]
        %v4556 = vstv %s4555
        %v4557 = vmul.f32 %v4556, %v4459
        %v4558 = vmul.f32 %v4556, %v4460
        %4561 = vrot.lane.b32.xlu0 %v4557, 126
        %v4562 = vpop.permute.xlu0 %4561
        %4563 = vrot.lane.b32.xlu0 %v4558, 126
        %v4564 = vpop.permute.xlu0 %4563
        %v4567 = vadd.f32 %v4511, %v4562
        %v4568 = vadd.f32 %v4512, %v4564
        %s4569 = sld [smem:[#allocation14 + $0x5e]]
        %v4570 = vstv %s4569
        %v4571 = vmul.f32 %v4570, %v4459
        %v4572 = vmul.f32 %v4570, %v4460
        %4575 = vrot.lane.b32.xlu0 %v4571, 126
        %v4576 = vpop.permute.xlu0 %4575
        %4577 = vrot.lane.b32.xlu0 %v4572, 126
        %v4578 = vpop.permute.xlu0 %4577
        %v4581 = vadd.f32 %v4525, %v4576
        %v4582 = vadd.f32 %v4526, %v4578
        %s4583 = sld [smem:[#allocation14 + $0x5f]]
        %v4584 = vstv %s4583
        %v4585 = vmul.f32 %v4584, %v4459
        %v4586 = vmul.f32 %v4584, %v4460
        %4589 = vrot.lane.b32.xlu0 %v4585, 126
        %v4590 = vpop.permute.xlu0 %4589
        %4591 = vrot.lane.b32.xlu0 %v4586, 126
        %v4592 = vpop.permute.xlu0 %4591
        %v4595 = vadd.f32 %v4539, %v4590
        %v4596 = vadd.f32 %v4540, %v4592
        %v4597 = vld [vmem:[%s3482 + $0x2] sm:$0xff]
        %v4598 = vld [vmem:[%s3482 + $0xa] sm:$0xff]
        %s4599 = sld [smem:[#allocation14 + $0x60]]
        %v4600 = vstv %s4599
        %v4601 = vmul.f32 %v4600, %v4597
        %v4602 = vmul.f32 %v4600, %v4598
        %v4603 = vadd.f32 %v4553, %v4601
        %v4604 = vadd.f32 %v4554, %v4602
        %s4605 = sld [smem:[#allocation14 + $0x61]]
        %v4606 = vstv %s4605
        %v4607 = vmul.f32 %v4606, %v4597
        %v4608 = vmul.f32 %v4606, %v4598
        %v4609 = vadd.f32 %v4567, %v4607
        %v4610 = vadd.f32 %v4568, %v4608
        %s4611 = sld [smem:[#allocation14 + $0x62]]
        %v4612 = vstv %s4611
        %v4613 = vmul.f32 %v4612, %v4597
        %v4614 = vmul.f32 %v4612, %v4598
        %v4615 = vadd.f32 %v4581, %v4613
        %v4616 = vadd.f32 %v4582, %v4614
        %s4617 = sld [smem:[#allocation14 + $0x63]]
        %v4618 = vstv %s4617
        %v4619 = vmul.f32 %v4618, %v4597
        %v4620 = vmul.f32 %v4618, %v4598
        %v4621 = vadd.f32 %v4595, %v4619
        %v4622 = vadd.f32 %v4596, %v4620
        %s4623 = sld [smem:[#allocation14 + $0x64]]
        %v4624 = vstv %s4623
        %v4625 = vmul.f32 %v4624, %v4597
        %v4626 = vmul.f32 %v4624, %v4598
        %4629 = vrot.lane.b32.xlu0 %v4625, 127
        %v4630 = vpop.permute.xlu0 %4629
        %4631 = vrot.lane.b32.xlu0 %v4626, 127
        %v4632 = vpop.permute.xlu0 %4631
        %v4635 = vadd.f32 %v4603, %v4630
        %v4636 = vadd.f32 %v4604, %v4632
        %s4637 = sld [smem:[#allocation14 + $0x65]]
        %v4638 = vstv %s4637
        %v4639 = vmul.f32 %v4638, %v4597
        %v4640 = vmul.f32 %v4638, %v4598
        %4643 = vrot.lane.b32.xlu0 %v4639, 127
        %v4644 = vpop.permute.xlu0 %4643
        %4645 = vrot.lane.b32.xlu0 %v4640, 127
        %v4646 = vpop.permute.xlu0 %4645
        %v4649 = vadd.f32 %v4609, %v4644
        %v4650 = vadd.f32 %v4610, %v4646
        %s4651 = sld [smem:[#allocation14 + $0x66]]
        %v4652 = vstv %s4651
        %v4653 = vmul.f32 %v4652, %v4597
        %v4654 = vmul.f32 %v4652, %v4598
        %4657 = vrot.lane.b32.xlu0 %v4653, 127
        %v4658 = vpop.permute.xlu0 %4657
        %4659 = vrot.lane.b32.xlu0 %v4654, 127
        %v4660 = vpop.permute.xlu0 %4659
        %v4663 = vadd.f32 %v4615, %v4658
        %v4664 = vadd.f32 %v4616, %v4660
        %s4665 = sld [smem:[#allocation14 + $0x67]]
        %v4666 = vstv %s4665
        %v4667 = vmul.f32 %v4666, %v4597
        %v4668 = vmul.f32 %v4666, %v4598
        %4671 = vrot.lane.b32.xlu0 %v4667, 127
        %v4672 = vpop.permute.xlu0 %4671
        %4673 = vrot.lane.b32.xlu0 %v4668, 127
        %v4674 = vpop.permute.xlu0 %4673
        %v4677 = vadd.f32 %v4621, %v4672
        %v4678 = vadd.f32 %v4622, %v4674
        %s4679 = sld [smem:[#allocation14 + $0x68]]
        %v4680 = vstv %s4679
        %v4681 = vmul.f32 %v4680, %v4597
        %v4682 = vmul.f32 %v4680, %v4598
        %4685 = vrot.lane.b32.xlu0 %v4681, 126
        %v4686 = vpop.permute.xlu0 %4685
        %4687 = vrot.lane.b32.xlu0 %v4682, 126
        %v4688 = vpop.permute.xlu0 %4687
        %v4691 = vadd.f32 %v4635, %v4686
        %v4692 = vadd.f32 %v4636, %v4688
        %s4693 = sld [smem:[#allocation14 + $0x69]]
        %v4694 = vstv %s4693
        %v4695 = vmul.f32 %v4694, %v4597
        %v4696 = vmul.f32 %v4694, %v4598
        %4699 = vrot.lane.b32.xlu0 %v4695, 126
        %v4700 = vpop.permute.xlu0 %4699
        %4701 = vrot.lane.b32.xlu0 %v4696, 126
        %v4702 = vpop.permute.xlu0 %4701
        %v4705 = vadd.f32 %v4649, %v4700
        %v4706 = vadd.f32 %v4650, %v4702
        %s4707 = sld [smem:[#allocation14 + $0x6a]]
        %v4708 = vstv %s4707
        %v4709 = vmul.f32 %v4708, %v4597
        %v4710 = vmul.f32 %v4708, %v4598
        %4713 = vrot.lane.b32.xlu0 %v4709, 126
        %v4714 = vpop.permute.xlu0 %4713
        %4715 = vrot.lane.b32.xlu0 %v4710, 126
        %v4716 = vpop.permute.xlu0 %4715
        %v4719 = vadd.f32 %v4663, %v4714
        %v4720 = vadd.f32 %v4664, %v4716
        %s4721 = sld [smem:[#allocation14 + $0x6b]]
        %v4722 = vstv %s4721
        %v4723 = vmul.f32 %v4722, %v4597
        %v4724 = vmul.f32 %v4722, %v4598
        %4727 = vrot.lane.b32.xlu0 %v4723, 126
        %v4728 = vpop.permute.xlu0 %4727
        %4729 = vrot.lane.b32.xlu0 %v4724, 126
        %v4730 = vpop.permute.xlu0 %4729
        %v4733 = vadd.f32 %v4677, %v4728
        %v4734 = vadd.f32 %v4678, %v4730
        %v4735 = vxor.u32 %v4691, 2147483648
        %v4736 = vxor.u32 %v4692, 2147483648
        %v4737 = vmul.f32 %v4735, 1.442695
        %v4738 = vpow.pop %v4737
        %v4739 = vmul.f32 %v4736, 1.442695
        %v4740 = vpow.pop %v4739
        %v4741 = vadd.f32 %v4738, 1.0
        %v4742 = vadd.f32 %v4740, 1.0
        %v4743 = vrcp.pop %v4741
        %v4744 = vmul.f32 1.0, %v4743
        %v4745 = vrcp.pop %v4742
        %v4746 = vmul.f32 1.0, %v4745
        %v4747 = vmul.f32 %v3358, %v4744
        %v4748 = vmul.f32 %v3359, %v4746
        %v4749 = vld [vmem:[%s366] sm:$0xff]
        %v4750 = vld [vmem:[%s366 + $0x8] sm:$0xff]
        %v4751 = vadd.f32 %v4747, %v4749
        %v4752 = vadd.f32 %v4748, %v4750
        %4753 = vst.msk [vmem:[%s431] sm:$0xff] %vm3444, %v4751
        %4754 = vst.msk [vmem:[%s431 + $0x8] sm:$0xff] %vm3444, %v4752
        %v4755 = vxor.u32 %v4705, 2147483648
        %v4756 = vxor.u32 %v4706, 2147483648
        %v4757 = vmul.f32 %v4755, 1.442695
        %v4758 = vpow.pop %v4757
        %v4759 = vmul.f32 %v4756, 1.442695
        %v4760 = vpow.pop %v4759
        %v4761 = vadd.f32 %v4758, 1.0
        %v4762 = vadd.f32 %v4760, 1.0
        %v4763 = vrcp.pop %v4761
        %v4764 = vmul.f32 1.0, %v4763
        %v4765 = vrcp.pop %v4762
        %v4766 = vmul.f32 1.0, %v4765
        %v4767 = vmul.f32 %v3372, %v4764
        %v4768 = vmul.f32 %v3373, %v4766
        %s4769 = scalar_lea.vmem %s366, 16 [#allocation4]
        %v4770 = vld [vmem:[%s4769] sm:$0xff]
        %v4771 = vld [vmem:[%s4769 + $0x8] sm:$0xff]
        %v4772 = vadd.f32 %v4767, %v4770
        %v4773 = vadd.f32 %v4768, %v4771
        %s4774 = scalar_lea.vmem %s431, 16 [#allocation17]
        %4775 = vst.msk [vmem:[%s4774] sm:$0xff] %vm3444, %v4772
        %4776 = vst.msk [vmem:[%s4774 + $0x8] sm:$0xff] %vm3444, %v4773
        %v4777 = vxor.u32 %v4719, 2147483648
        %v4778 = vxor.u32 %v4720, 2147483648
        %v4779 = vmul.f32 %v4777, 1.442695
        %v4780 = vpow.pop %v4779
        %v4781 = vmul.f32 %v4778, 1.442695
        %v4782 = vpow.pop %v4781
        %v4783 = vadd.f32 %v4780, 1.0
        %v4784 = vadd.f32 %v4782, 1.0
        %v4785 = vrcp.pop %v4783
        %v4786 = vmul.f32 1.0, %v4785
        %v4787 = vrcp.pop %v4784
        %v4788 = vmul.f32 1.0, %v4787
        %v4789 = vmul.f32 %v3386, %v4786
        %v4790 = vmul.f32 %v3387, %v4788
        %s4791 = scalar_lea.vmem %s366, 32 [#allocation4]
        %v4792 = vld [vmem:[%s4791] sm:$0xff]
        %v4793 = vld [vmem:[%s4791 + $0x8] sm:$0xff]
        %v4794 = vadd.f32 %v4789, %v4792
        %v4795 = vadd.f32 %v4790, %v4793
        %s4796 = scalar_lea.vmem %s431, 32 [#allocation17]
        %4797 = vst.msk [vmem:[%s4796] sm:$0xff] %vm3444, %v4794
        %4798 = vst.msk [vmem:[%s4796 + $0x8] sm:$0xff] %vm3444, %v4795
        %v4799 = vxor.u32 %v4733, 2147483648
        %v4800 = vxor.u32 %v4734, 2147483648
        %v4801 = vmul.f32 %v4799, 1.442695
        %v4802 = vpow.pop %v4801
        %v4803 = vmul.f32 %v4800, 1.442695
        %v4804 = vpow.pop %v4803
        %v4805 = vadd.f32 %v4802, 1.0
        %v4806 = vadd.f32 %v4804, 1.0
        %v4807 = vrcp.pop %v4805
        %v4808 = vmul.f32 1.0, %v4807
        %v4809 = vrcp.pop %v4806
        %v4810 = vmul.f32 1.0, %v4809
        %v4811 = vmul.f32 %v3400, %v4808
        %v4812 = vmul.f32 %v3401, %v4810
        %s4813 = scalar_lea.vmem %s366, 48 [#allocation4]
        %v4814 = vld [vmem:[%s4813] sm:$0xff]
        %v4815 = vld [vmem:[%s4813 + $0x8] sm:$0xff]
        %v4816 = vadd.f32 %v4811, %v4814
        %v4817 = vadd.f32 %v4812, %v4815
        %s4818 = scalar_lea.vmem %s431, 48 [#allocation17]
        %4819 = vst.msk [vmem:[%s4818] sm:$0xff] %vm3444, %v4816
        %4820 = vst.msk [vmem:[%s4818 + $0x8] sm:$0xff] %vm3444, %v4817
        %s4821 = sand.u32 %s200, 1
        %s4822 = scalar_lea.sflag [#allocation6], %s4821
        %s4823 = sand.u32 %s200, 1
        %s4824 = smul.addr %s4823, 64
        %s4825 = scalar_lea.vmem [#allocation17], %s4824
        %s4826 = sand.u32 %s226, 1
        %s4827 = scalar_lea.sflag [#allocation19], %s4826
        %s4828 = sand.u32 %s226, 1
        %s4829 = smul.addr %s4828, 48
        %s4830 = scalar_lea.vmem [#allocation18], %s4829
        // Predicated region
        $region77: #{tpu_custom_call.1} parent=47 // pred_check
          %p4831 = pneg %p210
        $region78: #{tpu_custom_call.1} parent=47 // pred_check_branch
          %4833 = sbr.rel (%p4831) target = $region80
        $region79: #{tpu_custom_call.1} parent=47 // pred_region
          %s4835 = ssub.s32 1024, 1024
          %4836 = vsyncadd %s4822, %s4835
          %s4837 = smul.addr %s35, 8
          %s4838 = smul.addr %s4837, 128
          %s4839 = scalar_lea.hbm %s7, %s4838
          %s4840 = sshll.u32 %s4825, 4
          %s4841 = int_to_ptr.vmem [resolvable:$true] %s4840
          %4846 = dma.vmem_to_hbm [thread:$0]  %s4841, 1024, %s4839, %s4822, 128, 128, 8
        $region80: #{tpu_custom_call.1} parent=47 // pred_fallthru
          _
        // Predicated region
        $region81: #{tpu_custom_call.1} parent=47 // pred_check
          %p4847 = pneg %p236
        $region82: #{tpu_custom_call.1} parent=47 // pred_check_branch
          %4849 = sbr.rel (%p4847) target = $region84
        $region83: #{tpu_custom_call.1} parent=47 // pred_region
          %s4851 = ssub.s32 768, 768
          %4852 = vsyncadd %s4827, %s4851
          %s4853 = smul.addr %s35, 6
          %s4854 = smul.addr %s4853, 128
          %s4855 = scalar_lea.hbm %s8, %s4854
          %s4856 = sshll.u32 %s4830, 4
          %s4857 = int_to_ptr.vmem [resolvable:$true] %s4856
          %4862 = dma.vmem_to_hbm [thread:$0]  %s4857, 768, %s4855, %s4827, 128, 128, 8
        $region84: #{tpu_custom_call.1} parent=47 // pred_fallthru
          _
      $region48: #{tpu_custom_call.1} parent=5 // pred_fallthru
        _
      %p4863 = scmp.le.s32.totalorder 2, %s30
      // Predicated region
      $region85: #{tpu_custom_call.1} parent=5 // pred_check
        %p4864 = pneg %p4863
      $region86: #{tpu_custom_call.1} parent=5 // pred_check_branch
        %4866 = sbr.rel (%p4864) target = $region88
      $region87: #{tpu_custom_call.1} parent=5 // pred_region
        %s4867 = ssub.s32 %s30, 2
        // Predicated region
        $region89: #{tpu_custom_call.1} parent=87 // pred_check
          %p4868 = pneg %p216
        $region90: #{tpu_custom_call.1} parent=87 // pred_check_branch
          %4870 = sbr.rel (%p4868) target = $region92
        $region91: #{tpu_custom_call.1} parent=87 // pred_region
          %s4871 = sand.u32 %s201, 1
          %s4872 = scalar_lea.sflag [#allocation6], %s4871
          %s4873 = sand.u32 %s201, 1
          %s4874 = smul.addr %s4873, 64
          %s4875 = scalar_lea.vmem [#allocation17], %s4874
          %4876 = dma.done %s4872, 1024
        $region92: #{tpu_custom_call.1} parent=87 // pred_fallthru
          _
        // Predicated region
        $region93: #{tpu_custom_call.1} parent=87 // pred_check
          %p4877 = pneg %p242
        $region94: #{tpu_custom_call.1} parent=87 // pred_check_branch
          %4879 = sbr.rel (%p4877) target = $region96
        $region95: #{tpu_custom_call.1} parent=87 // pred_region
          %s4880 = sand.u32 %s227, 1
          %s4881 = scalar_lea.sflag [#allocation19], %s4880
          %s4882 = sand.u32 %s227, 1
          %s4883 = smul.addr %s4882, 48
          %s4884 = scalar_lea.vmem [#allocation18], %s4883
          %4885 = dma.done %s4881, 768
        $region96: #{tpu_custom_call.1} parent=87 // pred_fallthru
          _
      $region88: #{tpu_custom_call.1} parent=5 // pred_fallthru
        _
    $region6: #{tpu_custom_call.1} parent=1 // loop_footer
      %s34 = sadd.s32 1, %s30
    $region7: #{tpu_custom_call.1} parent=1 // loop_footer_branch
      %29 = sbr.rel target = $region3
    $region8: #{tpu_custom_call.1} parent=1 // loop_exit
      _
    %4886 = vsyncpa [#allocation5], 1
    %s4887 = scalar_lea.sflag [#allocation5], 1
    %4888 = vsyncpa %s4887, 1
    %4889 = vsyncpa [#allocation9], 1
    %s4890 = scalar_lea.sflag [#allocation9], 1
    %4891 = vsyncpa %s4890, 1
    %4892 = vsyncpa [#allocation6], 1
    %s4893 = scalar_lea.sflag [#allocation6], 1
    %4894 = vsyncpa %s4893, 1
    %4895 = vsyncpa [#allocation19], 1
    %s4896 = scalar_lea.sflag [#allocation19], 1
    %4897 = vsyncpa %s4896, 1
    %4898 = vsyncpa [#allocation7], 1
    %s4899 = scalar_lea.sflag [#allocation7], 1
    %4900 = vsyncpa %s4899, 1
    %4901 = vsyncpa [#allocation12], 1
    %4902 = vsyncpa [#allocation15], 1

</llo_original>
